<compile_context>
chip_gen: v7x
topology: tpu7x:2x2x1
jax: 0.10.0
libtpu: 0.0.40
codegen_flags: <defaults>
</compile_context>

<pallas_src>
import functools

import jax
import jax.numpy as jnp
from jax.experimental import pallas as pl
from jax.experimental.pallas import tpu as pltpu


def _vmem_capacity_bytes():
    try:
        info = pltpu.get_tpu_info()
        cap = int(getattr(info, "vmem_capacity_bytes", 0))
        if cap > 0:
            return cap
    except Exception:
        pass
    return 128 << 20


# ------------------------------------------------------------------------------------
# Fused kernel: every flow of the ResidualCouplingBlock for one batch element.
# Grid = (B, n_flows); the half-channel outputs (oa_ref, ob_ref) stay resident in VMEM
# across the (innermost, "arbitrary") flow axis and act as the running coupling state.
# ------------------------------------------------------------------------------------
def _block_kernel(xa_ref, xb_ref, xm_ref, bias_ts_ref, bias_fh_ref, b_post_ref,
                  w_pre_ref, w_in_t_ref, w_in_s_ref, w_res_ref, w_skip_ref,
                  w_post_ref, oa_ref, ob_ref, *,
                  hidden, n_layers, kernel_size, dilation_rate, n_flows, reverse):
    f = pl.program_id(1)
    T = xa_ref.shape[0]
    H = hidden
    nl = n_layers
    cdtype = w_pre_ref.dtype            # matmul operand dtype (bf16 or f32)

    # Load the input halves into the resident output state once per batch element.
    @pl.when(f == 0)
    def _init():
        oa_ref[...] = xa_ref[...]
        ob_ref[...] = xb_ref[...]

    mask = xm_ref[...]                  # (T, 1)

    # Original flow index (the grid walks flows forward; reverse undoes them
    # back-to-front).  Its parity decides which resident half drives the coupling
    # (the inter-flow channel Flip was absorbed into the odd flows' weights).
    jf = (n_flows - 1 - f) if reverse else f
    is_even = (jf % 2) == 0

    # Predicated select of the driving half (1 vselect/vreg); the untouched half is
    # read directly inside the parity-gated epilogue, never blended.
    driving = jnp.where(is_even, oa_ref[...], ob_ref[...])

    # Packed flow-constant biases: row 0 = b_pre, rows 1..nl = b_res, nl+1..2nl = b_skip.
    bf = bias_fh_ref[jf]                # (1 + 2*nl, H) f32
    # Packed per-(batch, flow) gate biases (cond 1x1 conv + b_in, folded in the wrapper):
    # rows 0..nl-1 = tanh gate, rows nl..2nl-1 = sigmoid gate.
    bts = bias_ts_ref[jf]               # (2*nl, H) f32

    # pre 1x1 conv == matmul over channels
    h = (jnp.dot(driving.astype(cdtype), w_pre_ref[jf],
                 preferred_element_type=jnp.float32)
         + bf[0:1, :]) * mask           # (T, H) f32

    out_acc = jnp.zeros((T, H), jnp.float32)      # WN skip accumulator
    for i in range(nl):                           # static unroll over WN layers
        d = dilation_rate ** i
        p = ((kernel_size - 1) * d) // 2
        h_c = h.astype(cdtype)
        if kernel_size == 1:
            slab = h_c
        else:
            # Dilated-conv taps built in-register from a zero-padded copy of h (no VMEM
            # pad-scratch round trip), concatenated along lanes so each gate is ONE deep
            # (T, k*H) @ (k*H, H) MXU matmul.
            zpad = jnp.zeros((p, H), cdtype)
            hp = jnp.concatenate([zpad, h_c, zpad], axis=0)          # (T + 2p, H)
            slab = jnp.concatenate(
                [hp[tap * d:tap * d + T, :] for tap in range(kernel_size)],
                axis=1)                                              # (T, k*H)

        wi = jf * nl + i
        x_t = (jnp.dot(slab, w_in_t_ref[wi], preferred_element_type=jnp.float32)
               + bts[i:i + 1, :])
        x_s = (jnp.dot(slab, w_in_s_ref[wi], preferred_element_type=jnp.float32)
               + bts[nl + i:nl + i + 1, :])
        # commons.fused_add_tanh_sigmoid_multiply; sigmoid via tanh (one EUP op kind)
        acts = jnp.tanh(x_t) * (0.5 * jnp.tanh(0.5 * x_s) + 0.5)
        acts_c = acts.astype(cdtype)
        out_acc = out_acc + (jnp.dot(acts_c, w_skip_ref[wi],
                                     preferred_element_type=jnp.float32)
                             + bf[1 + nl + i:2 + nl + i, :])
        if i < nl - 1:
            res = (jnp.dot(acts_c, w_res_ref[wi],
                           preferred_element_type=jnp.float32)
                   + bf[1 + i:2 + i, :])
            h = (h + res) * mask        # mask required: conv boundary correctness

    # post 1x1 conv (mean_only=True -> m = stats, logs = 0).  `out_acc * mask` is
    # redundant: the post conv is per-timestep and m_stats gets the mask below.
    m_stats = (jnp.dot(out_acc.astype(cdtype), w_post_ref[jf],
                       preferred_element_type=jnp.float32)
               + b_post_ref[jf]) * mask                              # (T, halfp)

    @pl.when(is_even)
    def _update_second_half():
        if reverse:
            ob_ref[...] = (ob_ref[...] - m_stats) * mask
        else:
            ob_ref[...] = ob_ref[...] * mask + m_stats

    @pl.when(jnp.logical_not(is_even))
    def _update_first_half():
        if reverse:
            oa_ref[...] = (oa_ref[...] - m_stats) * mask
        else:
            oa_ref[...] = oa_ref[...] * mask + m_stats


# ------------------------------------------------------------------------------------
# Parameter preparation (done once): stack per-flow weights, absorb the inter-flow Flip
# into odd flows' pre/post weights, split w_in / res_skip into gate / res / skip parts,
# pack the small biases, pad the half-channel axis to a lane-dense width, and cast the
# matmul operands to `matmul_dtype`.
# ------------------------------------------------------------------------------------
def prepare_block_params(flow_params, cfg, matmul_dtype=jnp.bfloat16, lane_multiple=128):
    H = cfg["hidden_channels"]
    nl = cfg["n_layers"]
    k = cfg["kernel_size"]
    half = flow_params[0]["w_pre"].shape[0]
    halfp = ((half + lane_multiple - 1) // lane_multiple) * lane_multiple
    nf = len(flow_params)

    w_pre, w_post, b_post, bias_fh = [], [], [], []
    w_in_t, w_in_s, b_in = [], [], []
    w_res, w_skip = [], []
    w_cond, b_cond = [], []
    for i, p in enumerate(flow_params):
        wp, wo, bo = p["w_pre"], p["w_post"], p["b_post"]
        if i % 2 == 1:
            # Absorb the channel Flip around odd flows: the driving half is the stored
            # second half (handled by flow parity in the kernel); its channel reversal
            # goes into w_pre's rows, and the reversal of the produced mean goes into
            # w_post's columns / b_post.
            wp = wp[::-1, :]
            wo = wo[:, ::-1]
            bo = bo[:, ::-1]
        # lane-dense padding of the half-channel axis
        wp = jnp.pad(wp, ((0, halfp - half), (0, 0)))
        wo = jnp.pad(wo, ((0, 0), (0, halfp - half)))
        bo = jnp.pad(bo, ((0, 0), (0, halfp - half)))
        w_pre.append(wp)
        w_post.append(wo)
        b_post.append(bo)

        wi = p["w_in"].reshape(nl, k * H, 2 * H)      # conv taps concatenated along K
        w_in_t.append(wi[:, :, :H])
        w_in_s.append(wi[:, :, H:])
        b_in.append(p["b_in"])                        # (nl, 1, 2H)

        wrs, brs = p["w_rs"], p["b_rs"]
        w_res.append(wrs[:, :, :H])                   # last-layer slot present, unused
        w_skip.append(jnp.concatenate([wrs[:-1, :, H:], wrs[-1:, :, :H]], axis=0))
        b_res = brs[:, 0, :H]
        b_skip = jnp.concatenate([brs[:-1, 0, H:], brs[-1:, 0, :H]], axis=0)
        bias_fh.append(jnp.concatenate([p["b_pre"], b_res, b_skip], axis=0))

        w_cond.append(p["w_cond"])
        b_cond.append(p["b_cond"])

    def stk(xs, dt=None):
        a = jnp.stack(xs)
        return a if dt is None else a.astype(dt)

    return {
        "w_pre": stk(w_pre, matmul_dtype),                            # (nf, halfp, H)
        "w_in_t": stk(w_in_t, matmul_dtype).reshape(nf * nl, k * H, H),
        "w_in_s": stk(w_in_s, matmul_dtype).reshape(nf * nl, k * H, H),
        "w_res": stk(w_res, matmul_dtype).reshape(nf * nl, H, H),
        "w_skip": stk(w_skip, matmul_dtype).reshape(nf * nl, H, H),
        "w_post": stk(w_post, matmul_dtype),                          # (nf, H, halfp)
        "b_post": stk(b_post),                                        # (nf, 1, halfp)
        "bias_fh": stk(bias_fh),                                      # (nf, 1+2nl, H)
        "b_in": stk(b_in),                                            # (nf, nl, 1, 2H)
        "w_cond": stk(w_cond),                                        # (nf, gin, 2H*nl)
        "b_cond": stk(b_cond),                                        # (nf, 1, 2H*nl)
    }


# ------------------------------------------------------------------------------------
# Wrapper: ResidualCouplingBlock.forward ([RCL(mean_only) + Flip] * n_flows) fused into
# a single pallas_call (Flip absorbed into the prepared weights).
# ------------------------------------------------------------------------------------
def residual_coupling_block(x, x_mask, g, prepared, cfg, reverse=False):
    B, T, C = x.shape
    half = C // 2
    H = cfg["hidden_channels"]
    nl = cfg["n_layers"]
    k = cfg["kernel_size"]
    dr = cfg["dilation_rate"]
    assert k % 2 == 1, "kernel_size must be odd ('same'-padded dilated conv)"
    nf = prepared["w_pre"].shape[0]
    halfp = prepared["w_pre"].shape[1]          # lane-dense padded half width
    cdtype = prepared["w_pre"].dtype
    Tp = ((T + 7) // 8) * 8                     # sublane-aligned time extent

    # odd n_flows leaves one residual global Flip (handled on the unpadded channels)
    if reverse and (nf % 2 == 1):
        x = jnp.flip(x, axis=-1)

    xa = x[..., :half]
    xb = x[..., half:]
    xm = x_mask.astype(jnp.float32)
    if halfp != half:
        cpad = ((0, 0), (0, 0), (0, halfp - half))
        xa = jnp.pad(xa, cpad)
        xb = jnp.pad(xb, cpad)
    if Tp != T:
        tpad = ((0, 0), (0, Tp - T), (0, 0))
        xa = jnp.pad(xa, tpad)
        xb = jnp.pad(xb, tpad)
        xm = jnp.pad(xm, tpad)

    # cond 1x1 conv precompute: fold (g @ w_cond + b_cond) and b_in into one
    # per-(batch, flow, layer, gate) bias.  w_cond never enters VMEM.
    g2 = g[:, 0, :]                                                   # (B, gin)
    g_all = (jnp.einsum("bg,fgc->bfc", g2, prepared["w_cond"])
             + prepared["b_cond"][None, :, 0, :])                     # (B, nf, 2*H*nl)
    bias = g_all.reshape(B, nf, nl, 2 * H) + prepared["b_in"][None, :, :, 0, :]
    bias_ts = jnp.concatenate([bias[..., :H], bias[..., H:]], axis=2)  # (B, nf, 2nl, H)
    bias_ts = bias_ts.astype(jnp.float32)

    kernel = functools.partial(
        _block_kernel, hidden=H, n_layers=nl, kernel_size=k, dilation_rate=dr,
        n_flows=nf, reverse=reverse)

    per_b3 = lambda b, f: (b, 0, 0)
    per_b4 = lambda b, f: (b, 0, 0, 0)
    const3 = lambda b, f: (0, 0, 0)

    in_specs = [
        pl.BlockSpec((None, Tp, halfp), per_b3),        # xa
        pl.BlockSpec((None, Tp, halfp), per_b3),        # xb
        pl.BlockSpec((None, Tp, 1), per_b3),            # mask
        pl.BlockSpec((None, nf, 2 * nl, H), per_b4),    # bias_ts (cond + b_in)
        # Flow-constant blocks: the block index never changes, so each is DMA'd once.
        pl.BlockSpec((nf, 1 + 2 * nl, H), const3),      # bias_fh (b_pre | b_res | b_skip)
        pl.BlockSpec((nf, 1, halfp), const3),           # b_post
        pl.BlockSpec((nf, halfp, H), const3),           # w_pre
        pl.BlockSpec((nf * nl, k * H, H), const3),      # w_in_t
        pl.BlockSpec((nf * nl, k * H, H), const3),      # w_in_s
        pl.BlockSpec((nf * nl, H, H), const3),          # w_res
        pl.BlockSpec((nf * nl, H, H), const3),          # w_skip
        pl.BlockSpec((nf, H, halfp), const3),           # w_post
    ]
    out_specs = [
        pl.BlockSpec((None, Tp, halfp), per_b3),
        pl.BlockSpec((None, Tp, halfp), per_b3),
    ]

    # Explicit VMEM budget: double-buffered activation blocks + the hoisted weight stack
    # + in-kernel temporaries, capped at 85% of physical VMEM for compiler headroom.
    itm = jnp.dtype(cdtype).itemsize
    est = (
        2 * 4 * (2 * Tp * halfp + Tp + nf * 2 * nl * H)                 # inputs
        + 2 * 4 * (2 * Tp * halfp)                                      # outputs
        + 2 * itm * nf * (halfp * H + 2 * nl * k * H * H
                          + 2 * nl * H * H + H * halfp)                 # weights
        + 2 * 4 * nf * ((1 + 2 * nl) * H + halfp)                       # small biases
        + 4 * Tp * (3 * halfp + 8 * H) + itm * Tp * (k + 3) * H         # temporaries
        + (8 << 20)                                                     # headroom
    )
    vmem_bytes = int(min(max(est, 32 << 20), int(_vmem_capacity_bytes() * 0.85)))

    oa, ob = pl.pallas_call(
        kernel,
        out_shape=(jax.ShapeDtypeStruct((B, Tp, halfp), jnp.float32),
                   jax.ShapeDtypeStruct((B, Tp, halfp), jnp.float32)),
        grid=(B, nf),
        in_specs=in_specs,
        out_specs=out_specs,
        compiler_params=pltpu.CompilerParams(
            dimension_semantics=("parallel", "arbitrary"),
            vmem_limit_bytes=vmem_bytes),
    )(xa, xb, xm, bias_ts,
      prepared["bias_fh"], prepared["b_post"],
      prepared["w_pre"], prepared["w_in_t"], prepared["w_in_s"],
      prepared["w_res"], prepared["w_skip"], prepared["w_post"])

    out = jnp.concatenate([oa[:, :T, :half], ob[:, :T, :half]], axis=-1)
    if (not reverse) and (nf % 2 == 1):
        out = jnp.flip(out, axis=-1)
    return out


# ------------------------------------------------------------------------------------
# Pure-JAX reference (original per-flow math with explicit Flips) for correctness.
# ------------------------------------------------------------------------------------
def _ref_coupling(x, x_mask, g, p, cfg, reverse=False):
    C = x.shape[-1]
    half = C // 2
    H = cfg["hidden_channels"]
    nl = cfg["n_layers"]
    k = cfg["kernel_size"]
    dr = cfg["dilation_rate"]
    T = x.shape[1]
    x0, x1 = x[..., :half], x[..., half:]
    h = (x0 @ p["w_pre"] + p["b_pre"]) * x_mask
    g_all = g @ p["w_cond"] + p["b_cond"]
    out = jnp.zeros_like(h)
    for i in range(nl):
        d = dr ** i
        pd = (k * d - d) // 2
        hp = jnp.pad(h, ((0, 0), (pd, pd), (0, 0)))
        x_in = sum(hp[:, tap * d:tap * d + T, :] @ p["w_in"][i * k + tap]
                   for tap in range(k))
        x_in = x_in + p["b_in"][i] + g_all[:, :, i * 2 * H:(i + 1) * 2 * H]
        acts = jnp.tanh(x_in[..., :H]) * jax.nn.sigmoid(x_in[..., H:])
        rs = acts @ p["w_rs"][i] + p["b_rs"][i]
        if i < nl - 1:
            h = (h + rs[..., :H]) * x_mask
            out = out + rs[..., H:]
        else:
            out = out + rs[..., :H]
    out = out * x_mask
    m = (out @ p["w_post"] + p["b_post"]) * x_mask
    x1n = (m + x1 * x_mask) if not reverse else ((x1 - m) * x_mask)
    return jnp.concatenate([x0, x1n], axis=-1)


def _ref_block(x, x_mask, g, flow_params, cfg, reverse=False):
    if not reverse:
        for p in flow_params:
            x = _ref_coupling(x, x_mask, g, p, cfg, reverse=False)
            x = jnp.flip(x, axis=-1)
    else:
        for p in reversed(flow_params):
            x = jnp.flip(x, axis=-1)
            x = _ref_coupling(x, x_mask, g, p, cfg, reverse=True)
    return x


# ------------------------------------------------------------------------------------
# Deterministic parameter init (shapes follow the module __init__; values synthetic).
# ------------------------------------------------------------------------------------
def init_flow_params(key, cfg):
    C = cfg["channels"]
    half = C // 2
    H = cfg["hidden_channels"]
    nl = cfg["n_layers"]
    k = cfg["kernel_size"]
    gin = cfg["gin_channels"]
    ks = jax.random.split(key, 10)
    s = 0.1
    w_rs = s * jax.random.normal(ks[6], (nl, H, 2 * H), jnp.float32)
    b_rs = s * jax.random.normal(ks[7], (nl, 1, 2 * H), jnp.float32)
    # last WN layer's res_skip conv only has H output channels -> zero the padding
    w_rs = w_rs.at[-1, :, H:].set(0.0)
    b_rs = b_rs.at[-1, :, H:].set(0.0)
    return {
        "w_pre":  s * jax.random.normal(ks[0], (half, H), jnp.float32),
        "b_pre":  s * jax.random.normal(ks[1], (1, H), jnp.float32),
        "w_cond": s * jax.random.normal(ks[2], (gin, 2 * H * nl), jnp.float32),
        "b_cond": s * jax.random.normal(ks[3], (1, 2 * H * nl), jnp.float32),
        "w_in":   s * jax.random.normal(ks[4], (nl * k, H, 2 * H), jnp.float32),
        "b_in":   s * jax.random.normal(ks[5], (nl, 1, 2 * H), jnp.float32),
        "w_rs":   w_rs,
        "b_rs":   b_rs,
        # NOTE: the PyTorch module zero-inits `post`; random values here exercise the
        # coupling transform non-trivially (same forward semantics).
        "w_post": s * jax.random.normal(ks[8], (H, half), jnp.float32),
        "b_post": s * jax.random.normal(ks[9], (1, half), jnp.float32),
    }


if __name__ == "__main__":
    # Full-precision f32 matmuls for both the pure-JAX reference and the kernel dots,
    # so the strict-tolerance comparison is meaningful.
    jax.config.update("jax_default_matmul_precision", "highest")
    master = jax.random.PRNGKey(0)
    k1, k2 = jax.random.split(master)

    # ---- Case 1: dilation_rate=1, even n_flows; strict f32 check + bf16 fast path ----
    cfg1 = dict(channels=4, hidden_channels=32, kernel_size=3, dilation_rate=1,
                n_layers=2, n_flows=2, gin_channels=8)
    B1, T1 = 2, 16
    kx, kg, kp = jax.random.split(k1, 3)
    x1 = jax.random.normal(kx, (B1, T1, cfg1["channels"]), jnp.float32)
    lengths1 = jnp.array([T1, T1 - 5])
    m1 = (jnp.arange(T1)[None, :] < lengths1[:, None]).astype(jnp.float32)[..., None]
    g1 = jax.random.normal(kg, (B1, 1, cfg1["gin_channels"]), jnp.float32)
    fp1 = [init_flow_params(kk, cfg1) for kk in jax.random.split(kp, cfg1["n_flows"])]

    ref_fwd1 = _ref_block(x1, m1, g1, fp1, cfg1, reverse=False)
    ref_rev1 = _ref_block(ref_fwd1, m1, g1, fp1, cfg1, reverse=True)

    prep1 = prepare_block_params(fp1, cfg1, matmul_dtype=jnp.float32)
    out_fwd1 = jax.block_until_ready(
        residual_coupling_block(x1, m1, g1, prep1, cfg1, reverse=False))
    assert out_fwd1.shape == x1.shape and out_fwd1.dtype == x1.dtype
    err = float(jnp.max(jnp.abs(out_fwd1 - ref_fwd1)))
    assert err < 2e-3, f"fwd f32 mismatch: {err}"
    out_rev1 = jax.block_until_ready(
        residual_coupling_block(out_fwd1, m1, g1, prep1, cfg1, reverse=True))
    err = float(jnp.max(jnp.abs(out_rev1 - ref_rev1)))
    assert err < 2e-3, f"rev f32 mismatch: {err}"

    prep1_16 = prepare_block_params(fp1, cfg1, matmul_dtype=jnp.bfloat16)
    out_fwd1_16 = jax.block_until_ready(
        residual_coupling_block(x1, m1, g1, prep1_16, cfg1, reverse=False))
    err = float(jnp.max(jnp.abs(out_fwd1_16 - ref_fwd1)))
    assert err < 5e-2, f"fwd bf16 mismatch: {err}"

    # ---- Case 2: dilation_rate=2, ODD n_flows (flip-absorption / parity path), f32 ----
    cfg2 = dict(channels=4, hidden_channels=16, kernel_size=3, dilation_rate=2,
                n_layers=3, n_flows=3, gin_channels=4)
    B2, T2 = 1, 24
    kx, kg, kp = jax.random.split(k2, 3)
    x2 = jax.random.normal(kx, (B2, T2, cfg2["channels"]), jnp.float32)
    m2 = (jnp.arange(T2)[None, :] < jnp.array([T2 - 7])[:, None]
          ).astype(jnp.float32)[..., None]
    g2 = jax.random.normal(kg, (B2, 1, cfg2["gin_channels"]), jnp.float32)
    fp2 = [init_flow_params(kk, cfg2) for kk in jax.random.split(kp, cfg2["n_flows"])]

    ref_fwd2 = _ref_block(x2, m2, g2, fp2, cfg2, reverse=False)
    ref_rev2 = _ref_block(ref_fwd2, m2, g2, fp2, cfg2, reverse=True)
    prep2 = prepare_block_params(fp2, cfg2, matmul_dtype=jnp.float32)
    out_fwd2 = jax.block_until_ready(
        residual_coupling_block(x2, m2, g2, prep2, cfg2, reverse=False))
    err = float(jnp.max(jnp.abs(out_fwd2 - ref_fwd2)))
    assert err < 2e-3, f"fwd f32 (odd flows, dilated) mismatch: {err}"
    out_rev2 = jax.block_until_ready(
        residual_coupling_block(out_fwd2, m2, g2, prep2, cfg2, reverse=True))
    err = float(jnp.max(jnp.abs(out_rev2 - ref_rev2)))
    assert err < 2e-3, f"rev f32 (odd flows, dilated) mismatch: {err}"

    print("KERNEL_OK")
</pallas_src>

<mosaic_0001>
module attributes {stable_mosaic.version = 11 : i64} {
  func.func @_block_kernel(%arg0: i32, %arg1: i32, %arg2: memref<1x16x128xf32, #tpu.memory_space<vmem>>, %arg3: memref<1x16x128xf32, #tpu.memory_space<vmem>>, %arg4: memref<1x16x1xf32, #tpu.memory_space<vmem>>, %arg5: memref<1x2x4x32xf32, #tpu.memory_space<vmem>>, %arg6: memref<2x5x32xf32, #tpu.memory_space<vmem>>, %arg7: memref<2x1x128xf32, #tpu.memory_space<vmem>>, %arg8: memref<2x128x32xf32, #tpu.memory_space<vmem>>, %arg9: memref<4x96x32xf32, #tpu.memory_space<vmem>>, %arg10: memref<4x96x32xf32, #tpu.memory_space<vmem>>, %arg11: memref<4x32x32xf32, #tpu.memory_space<vmem>>, %arg12: memref<4x32x32xf32, #tpu.memory_space<vmem>>, %arg13: memref<2x32x128xf32, #tpu.memory_space<vmem>>, %arg14: memref<1x16x128xf32, #tpu.memory_space<vmem>>, %arg15: memref<1x16x128xf32, #tpu.memory_space<vmem>>) attributes {dimension_semantics = [#tpu.dimension_semantics<parallel>, #tpu.dimension_semantics<arbitrary>], iteration_bounds = array<i64: 2, 2>, scalar_prefetch = 0 : i64, scratch_operands = 0 : i64, tpu.core_type = #tpu.core_type<tc>, window_params = [{transform_indices = @transform_0, window_bounds = array<i64: 1, 16, 128>}, {transform_indices = @transform_1, window_bounds = array<i64: 1, 16, 128>}, {transform_indices = @transform_2, window_bounds = array<i64: 1, 16, 1>}, {transform_indices = @transform_3, window_bounds = array<i64: 1, 2, 4, 32>}, {pipeline_mode = #tpu.pipeline_mode<synchronous>, transform_indices = @transform_4, window_bounds = array<i64: 2, 5, 32>}, {pipeline_mode = #tpu.pipeline_mode<synchronous>, transform_indices = @transform_5, window_bounds = array<i64: 2, 1, 128>}, {pipeline_mode = #tpu.pipeline_mode<synchronous>, transform_indices = @transform_6, window_bounds = array<i64: 2, 128, 32>}, {pipeline_mode = #tpu.pipeline_mode<synchronous>, transform_indices = @transform_7, window_bounds = array<i64: 4, 96, 32>}, {pipeline_mode = #tpu.pipeline_mode<synchronous>, transform_indices = @transform_8, window_bounds = array<i64: 4, 96, 32>}, {pipeline_mode = #tpu.pipeline_mode<synchronous>, transform_indices = @transform_9, window_bounds = array<i64: 4, 32, 32>}, {pipeline_mode = #tpu.pipeline_mode<synchronous>, transform_indices = @transform_10, window_bounds = array<i64: 4, 32, 32>}, {pipeline_mode = #tpu.pipeline_mode<synchronous>, transform_indices = @transform_11, window_bounds = array<i64: 2, 32, 128>}, {transform_indices = @transform_12, window_bounds = array<i64: 1, 16, 128>}, {transform_indices = @transform_13, window_bounds = array<i64: 1, 16, 128>}]} {
    %c0_i32 = arith.constant 0 : i32
    %0 = arith.cmpi eq, %arg1, %c0_i32 : i32
    %1 = arith.extui %0 : i1 to i32
    %c0_i32_0 = arith.constant 0 : i32
    %2 = arith.cmpi ne, %1, %c0_i32_0 : i32
    scf.if %2 {
      %c0_62 = arith.constant 0 : index
      %c0_63 = arith.constant 0 : index
      %c0_64 = arith.constant 0 : index
      %141 = vector.load %arg2[%c0_62, %c0_63, %c0_64] : memref<1x16x128xf32, #tpu.memory_space<vmem>>, vector<1x16x128xf32>
      %142 = vector.shape_cast %141 : vector<1x16x128xf32> to vector<16x128xf32>
      %c0_65 = arith.constant 0 : index
      %c0_66 = arith.constant 0 : index
      %c0_67 = arith.constant 0 : index
      %143 = vector.load %arg14[%c0_65, %c0_66, %c0_67] : memref<1x16x128xf32, #tpu.memory_space<vmem>>, vector<1x16x128xf32>
      %144 = vector.shape_cast %143 : vector<1x16x128xf32> to vector<16x128xf32>
      %145 = vector.shape_cast %142 : vector<16x128xf32> to vector<1x16x128xf32>
      tpu.vector_store %arg14[%c0_65, %c0_66, %c0_67], %145 {strides = array<i32>} : memref<1x16x128xf32, #tpu.memory_space<vmem>>, vector<1x16x128xf32>,
      %c0_68 = arith.constant 0 : index
      %c0_69 = arith.constant 0 : index
      %c0_70 = arith.constant 0 : index
      %146 = vector.load %arg3[%c0_68, %c0_69, %c0_70] : memref<1x16x128xf32, #tpu.memory_space<vmem>>, vector<1x16x128xf32>
      %147 = vector.shape_cast %146 : vector<1x16x128xf32> to vector<16x128xf32>
      %c0_71 = arith.constant 0 : index
      %c0_72 = arith.constant 0 : index
      %c0_73 = arith.constant 0 : index
      %148 = vector.load %arg15[%c0_71, %c0_72, %c0_73] : memref<1x16x128xf32, #tpu.memory_space<vmem>>, vector<1x16x128xf32>
      %149 = vector.shape_cast %148 : vector<1x16x128xf32> to vector<16x128xf32>
      %150 = vector.shape_cast %147 : vector<16x128xf32> to vector<1x16x128xf32>
      tpu.vector_store %arg15[%c0_71, %c0_72, %c0_73], %150 {strides = array<i32>} : memref<1x16x128xf32, #tpu.memory_space<vmem>>, vector<1x16x128xf32>,
    } else {
    }
    %c0 = arith.constant 0 : index
    %c0_1 = arith.constant 0 : index
    %c0_2 = arith.constant 0 : index
    %3 = vector.load %arg4[%c0, %c0_1, %c0_2] : memref<1x16x1xf32, #tpu.memory_space<vmem>>, vector<1x16x1xf32>
    %4 = vector.shape_cast %3 : vector<1x16x1xf32> to vector<16x1xf32>
    %c2_i32 = arith.constant 2 : i32
    %c0_i32_3 = arith.constant 0 : i32
    %5 = arith.cmpi eq, %c2_i32, %c0_i32_3 : i32
    %c1_i32 = arith.constant 1 : i32
    %6 = arith.select %5, %c1_i32, %c2_i32 : i32
    %7 = arith.remsi %arg1, %6 : i32
    %c0_i32_4 = arith.constant 0 : i32
    %8 = arith.cmpi ne, %7, %c0_i32_4 : i32
    %c0_i32_5 = arith.constant 0 : i32
    %9 = arith.cmpi slt, %7, %c0_i32_5 : i32
    %c0_i32_6 = arith.constant 0 : i32
    %10 = arith.cmpi slt, %6, %c0_i32_6 : i32
    %11 = arith.xori %9, %10 : i1
    %12 = arith.andi %11, %8 : i1
    %13 = arith.addi %7, %6 : i32
    %14 = arith.select %12, %13, %7 : i32
    %c0_i32_7 = arith.constant 0 : i32
    %15 = arith.cmpi eq, %14, %c0_i32_7 : i32
    %c0_8 = arith.constant 0 : index
    %c0_9 = arith.constant 0 : index
    %c0_10 = arith.constant 0 : index
    %16 = vector.load %arg14[%c0_8, %c0_9, %c0_10] : memref<1x16x128xf32, #tpu.memory_space<vmem>>, vector<1x16x128xf32>
    %17 = vector.shape_cast %16 : vector<1x16x128xf32> to vector<16x128xf32>
    %c0_11 = arith.constant 0 : index
    %c0_12 = arith.constant 0 : index
    %c0_13 = arith.constant 0 : index
    %18 = vector.load %arg15[%c0_11, %c0_12, %c0_13] : memref<1x16x128xf32, #tpu.memory_space<vmem>>, vector<1x16x128xf32>
    %19 = vector.shape_cast %18 : vector<1x16x128xf32> to vector<16x128xf32>
    %20 = arith.select %15, %17, %19 : vector<16x128xf32>
    %21 = arith.index_cast %arg1 : i32 to index
    %c0_14 = arith.constant 0 : index
    %c0_15 = arith.constant 0 : index
    %22 = vector.load %arg6[%21, %c0_14, %c0_15] : memref<2x5x32xf32, #tpu.memory_space<vmem>>, vector<1x5x32xf32>
    %23 = vector.shape_cast %22 : vector<1x5x32xf32> to vector<5x32xf32>
    %c0_16 = arith.constant 0 : index
    %24 = arith.index_cast %arg1 : i32 to index
    %c0_17 = arith.constant 0 : index
    %c0_18 = arith.constant 0 : index
    %25 = vector.load %arg5[%c0_16, %24, %c0_17, %c0_18] : memref<1x2x4x32xf32, #tpu.memory_space<vmem>>, vector<1x1x4x32xf32>
    %26 = vector.shape_cast %25 : vector<1x1x4x32xf32> to vector<4x32xf32>
    %27 = arith.index_cast %arg1 : i32 to index
    %c0_19 = arith.constant 0 : index
    %c0_20 = arith.constant 0 : index
    %28 = vector.load %arg8[%27, %c0_19, %c0_20] : memref<2x128x32xf32, #tpu.memory_space<vmem>>, vector<1x128x32xf32>
    %29 = vector.shape_cast %28 : vector<1x128x32xf32> to vector<128x32xf32>
    %cst = arith.constant dense<0.000000e+00> : vector<16x32xf32>
    %30 = tpu.matmul %20, %29, %cst {dimension_numbers = #tpu.dot_dimension_numbers<[1], [0], [0], [1], [0, 0, 1, 1], [], []>, precision = #tpu.contract_precision<fp32>} : vector<16x128xf32>, vector<128x32xf32>, vector<16x32xf32> -> vector<16x32xf32>
    %31 = vector.extract_strided_slice %23 {offsets = [0, 0], sizes = [1, 32], strides = [1, 1]} : vector<5x32xf32> to vector<1x32xf32>
    %32 = vector.broadcast %31 : vector<1x32xf32> to vector<16x32xf32>
    %33 = arith.addf %30, %32 : vector<16x32xf32>
    %34 = vector.broadcast %4 : vector<16x1xf32> to vector<16x32xf32>
    %35 = arith.mulf %33, %34 : vector<16x32xf32>
    %cst_21 = arith.constant 0.000000e+00 : f32
    %36 = vector.broadcast %cst_21 : f32 to vector<16x32xf32>
    %cst_22 = arith.constant 0.000000e+00 : f32
    %37 = vector.broadcast %cst_22 : f32 to vector<1x32xf32>
    %38 = tpu.concatenate %37, %35, %37 in 0 : vector<1x32xf32>, vector<16x32xf32>, vector<1x32xf32> -> vector<18x32xf32>
    %39 = vector.extract_strided_slice %38 {offsets = [0, 0], sizes = [16, 32], strides = [1, 1]} : vector<18x32xf32> to vector<16x32xf32>
    %40 = vector.extract_strided_slice %38 {offsets = [1, 0], sizes = [16, 32], strides = [1, 1]} : vector<18x32xf32> to vector<16x32xf32>
    %41 = vector.extract_strided_slice %38 {offsets = [2, 0], sizes = [16, 32], strides = [1, 1]} : vector<18x32xf32> to vector<16x32xf32>
    %42 = tpu.concatenate %39, %40, %41 in 1 : vector<16x32xf32>, vector<16x32xf32>, vector<16x32xf32> -> vector<16x96xf32>
    %c2_i32_23 = arith.constant 2 : i32
    %43 = arith.muli %arg1, %c2_i32_23 : i32
    %c0_i32_24 = arith.constant 0 : i32
    %44 = arith.addi %43, %c0_i32_24 : i32
    %45 = arith.index_cast %44 : i32 to index
    %c0_25 = arith.constant 0 : index
    %c0_26 = arith.constant 0 : index
    %46 = vector.load %arg9[%45, %c0_25, %c0_26] : memref<4x96x32xf32, #tpu.memory_space<vmem>>, vector<1x96x32xf32>
    %47 = vector.shape_cast %46 : vector<1x96x32xf32> to vector<96x32xf32>
    %cst_27 = arith.constant dense<0.000000e+00> : vector<16x32xf32>
    %48 = tpu.matmul %42, %47, %cst_27 {dimension_numbers = #tpu.dot_dimension_numbers<[1], [0], [0], [1], [0, 0, 1, 1], [], []>, precision = #tpu.contract_precision<fp32>} : vector<16x96xf32>, vector<96x32xf32>, vector<16x32xf32> -> vector<16x32xf32>
    %49 = vector.extract_strided_slice %26 {offsets = [0, 0], sizes = [1, 32], strides = [1, 1]} : vector<4x32xf32> to vector<1x32xf32>
    %50 = vector.broadcast %49 : vector<1x32xf32> to vector<16x32xf32>
    %51 = arith.addf %48, %50 : vector<16x32xf32>
    %52 = arith.index_cast %44 : i32 to index
    %c0_28 = arith.constant 0 : index
    %c0_29 = arith.constant 0 : index
    %53 = vector.load %arg10[%52, %c0_28, %c0_29] : memref<4x96x32xf32, #tpu.memory_space<vmem>>, vector<1x96x32xf32>
    %54 = vector.shape_cast %53 : vector<1x96x32xf32> to vector<96x32xf32>
    %cst_30 = arith.constant dense<0.000000e+00> : vector<16x32xf32>
    %55 = tpu.matmul %42, %54, %cst_30 {dimension_numbers = #tpu.dot_dimension_numbers<[1], [0], [0], [1], [0, 0, 1, 1], [], []>, precision = #tpu.contract_precision<fp32>} : vector<16x96xf32>, vector<96x32xf32>, vector<16x32xf32> -> vector<16x32xf32>
    %56 = vector.extract_strided_slice %26 {offsets = [2, 0], sizes = [1, 32], strides = [1, 1]} : vector<4x32xf32> to vector<1x32xf32>
    %57 = vector.broadcast %56 : vector<1x32xf32> to vector<16x32xf32>
    %58 = arith.addf %55, %57 : vector<16x32xf32>
    %59 = math.tanh %51 : vector<16x32xf32>
    %cst_31 = arith.constant 5.000000e-01 : f32
    %60 = vector.broadcast %cst_31 : f32 to vector<16x32xf32>
    %61 = arith.mulf %60, %58 : vector<16x32xf32>
    %62 = math.tanh %61 : vector<16x32xf32>
    %cst_32 = arith.constant 5.000000e-01 : f32
    %63 = vector.broadcast %cst_32 : f32 to vector<16x32xf32>
    %64 = arith.mulf %63, %62 : vector<16x32xf32>
    %cst_33 = arith.constant 5.000000e-01 : f32
    %65 = vector.broadcast %cst_33 : f32 to vector<16x32xf32>
    %66 = arith.addf %64, %65 : vector<16x32xf32>
    %67 = arith.mulf %59, %66 : vector<16x32xf32>
    %68 = arith.index_cast %44 : i32 to index
    %c0_34 = arith.constant 0 : index
    %c0_35 = arith.constant 0 : index
    %69 = vector.load %arg12[%68, %c0_34, %c0_35] : memref<4x32x32xf32, #tpu.memory_space<vmem>>, vector<1x32x32xf32>
    %70 = vector.shape_cast %69 : vector<1x32x32xf32> to vector<32x32xf32>
    %cst_36 = arith.constant dense<0.000000e+00> : vector<16x32xf32>
    %71 = tpu.matmul %67, %70, %cst_36 {dimension_numbers = #tpu.dot_dimension_numbers<[1], [0], [0], [1], [0, 0, 1, 1], [], []>, precision = #tpu.contract_precision<fp32>} : vector<16x32xf32>, vector<32x32xf32>, vector<16x32xf32> -> vector<16x32xf32>
    %72 = vector.extract_strided_slice %23 {offsets = [3, 0], sizes = [1, 32], strides = [1, 1]} : vector<5x32xf32> to vector<1x32xf32>
    %73 = vector.broadcast %72 : vector<1x32xf32> to vector<16x32xf32>
    %74 = arith.addf %71, %73 : vector<16x32xf32>
    %75 = arith.addf %36, %74 : vector<16x32xf32>
    %76 = arith.index_cast %44 : i32 to index
    %c0_37 = arith.constant 0 : index
    %c0_38 = arith.constant 0 : index
    %77 = vector.load %arg11[%76, %c0_37, %c0_38] : memref<4x32x32xf32, #tpu.memory_space<vmem>>, vector<1x32x32xf32>
    %78 = vector.shape_cast %77 : vector<1x32x32xf32> to vector<32x32xf32>
    %cst_39 = arith.constant dense<0.000000e+00> : vector<16x32xf32>
    %79 = tpu.matmul %67, %78, %cst_39 {dimension_numbers = #tpu.dot_dimension_numbers<[1], [0], [0], [1], [0, 0, 1, 1], [], []>, precision = #tpu.contract_precision<fp32>} : vector<16x32xf32>, vector<32x32xf32>, vector<16x32xf32> -> vector<16x32xf32>
    %80 = vector.extract_strided_slice %23 {offsets = [1, 0], sizes = [1, 32], strides = [1, 1]} : vector<5x32xf32> to vector<1x32xf32>
    %81 = vector.broadcast %80 : vector<1x32xf32> to vector<16x32xf32>
    %82 = arith.addf %79, %81 : vector<16x32xf32>
    %83 = arith.addf %35, %82 : vector<16x32xf32>
    %84 = vector.broadcast %4 : vector<16x1xf32> to vector<16x32xf32>
    %85 = arith.mulf %83, %84 : vector<16x32xf32>
    %cst_40 = arith.constant 0.000000e+00 : f32
    %86 = vector.broadcast %cst_40 : f32 to vector<1x32xf32>
    %87 = tpu.concatenate %86, %85, %86 in 0 : vector<1x32xf32>, vector<16x32xf32>, vector<1x32xf32> -> vector<18x32xf32>
    %88 = vector.extract_strided_slice %87 {offsets = [0, 0], sizes = [16, 32], strides = [1, 1]} : vector<18x32xf32> to vector<16x32xf32>
    %89 = vector.extract_strided_slice %87 {offsets = [1, 0], sizes = [16, 32], strides = [1, 1]} : vector<18x32xf32> to vector<16x32xf32>
    %90 = vector.extract_strided_slice %87 {offsets = [2, 0], sizes = [16, 32], strides = [1, 1]} : vector<18x32xf32> to vector<16x32xf32>
    %91 = tpu.concatenate %88, %89, %90 in 1 : vector<16x32xf32>, vector<16x32xf32>, vector<16x32xf32> -> vector<16x96xf32>
    %c2_i32_41 = arith.constant 2 : i32
    %92 = arith.muli %arg1, %c2_i32_41 : i32
    %c1_i32_42 = arith.constant 1 : i32
    %93 = arith.addi %92, %c1_i32_42 : i32
    %94 = arith.index_cast %93 : i32 to index
    %c0_43 = arith.constant 0 : index
    %c0_44 = arith.constant 0 : index
    %95 = vector.load %arg9[%94, %c0_43, %c0_44] : memref<4x96x32xf32, #tpu.memory_space<vmem>>, vector<1x96x32xf32>
    %96 = vector.shape_cast %95 : vector<1x96x32xf32> to vector<96x32xf32>
    %cst_45 = arith.constant dense<0.000000e+00> : vector<16x32xf32>
    %97 = tpu.matmul %91, %96, %cst_45 {dimension_numbers = #tpu.dot_dimension_numbers<[1], [0], [0], [1], [0, 0, 1, 1], [], []>, precision = #tpu.contract_precision<fp32>} : vector<16x96xf32>, vector<96x32xf32>, vector<16x32xf32> -> vector<16x32xf32>
    %98 = vector.extract_strided_slice %26 {offsets = [1, 0], sizes = [1, 32], strides = [1, 1]} : vector<4x32xf32> to vector<1x32xf32>
    %99 = vector.broadcast %98 : vector<1x32xf32> to vector<16x32xf32>
    %100 = arith.addf %97, %99 : vector<16x32xf32>
    %101 = arith.index_cast %93 : i32 to index
    %c0_46 = arith.constant 0 : index
    %c0_47 = arith.constant 0 : index
    %102 = vector.load %arg10[%101, %c0_46, %c0_47] : memref<4x96x32xf32, #tpu.memory_space<vmem>>, vector<1x96x32xf32>
    %103 = vector.shape_cast %102 : vector<1x96x32xf32> to vector<96x32xf32>
    %cst_48 = arith.constant dense<0.000000e+00> : vector<16x32xf32>
    %104 = tpu.matmul %91, %103, %cst_48 {dimension_numbers = #tpu.dot_dimension_numbers<[1], [0], [0], [1], [0, 0, 1, 1], [], []>, precision = #tpu.contract_precision<fp32>} : vector<16x96xf32>, vector<96x32xf32>, vector<16x32xf32> -> vector<16x32xf32>
    %105 = vector.extract_strided_slice %26 {offsets = [3, 0], sizes = [1, 32], strides = [1, 1]} : vector<4x32xf32> to vector<1x32xf32>
    %106 = vector.broadcast %105 : vector<1x32xf32> to vector<16x32xf32>
    %107 = arith.addf %104, %106 : vector<16x32xf32>
    %108 = math.tanh %100 : vector<16x32xf32>
    %cst_49 = arith.constant 5.000000e-01 : f32
    %109 = vector.broadcast %cst_49 : f32 to vector<16x32xf32>
    %110 = arith.mulf %109, %107 : vector<16x32xf32>
    %111 = math.tanh %110 : vector<16x32xf32>
    %cst_50 = arith.constant 5.000000e-01 : f32
    %112 = vector.broadcast %cst_50 : f32 to vector<16x32xf32>
    %113 = arith.mulf %112, %111 : vector<16x32xf32>
    %cst_51 = arith.constant 5.000000e-01 : f32
    %114 = vector.broadcast %cst_51 : f32 to vector<16x32xf32>
    %115 = arith.addf %113, %114 : vector<16x32xf32>
    %116 = arith.mulf %108, %115 : vector<16x32xf32>
    %117 = arith.index_cast %93 : i32 to index
    %c0_52 = arith.constant 0 : index
    %c0_53 = arith.constant 0 : index
    %118 = vector.load %arg12[%117, %c0_52, %c0_53] : memref<4x32x32xf32, #tpu.memory_space<vmem>>, vector<1x32x32xf32>
    %119 = vector.shape_cast %118 : vector<1x32x32xf32> to vector<32x32xf32>
    %cst_54 = arith.constant dense<0.000000e+00> : vector<16x32xf32>
    %120 = tpu.matmul %116, %119, %cst_54 {dimension_numbers = #tpu.dot_dimension_numbers<[1], [0], [0], [1], [0, 0, 1, 1], [], []>, precision = #tpu.contract_precision<fp32>} : vector<16x32xf32>, vector<32x32xf32>, vector<16x32xf32> -> vector<16x32xf32>
    %121 = vector.extract_strided_slice %23 {offsets = [4, 0], sizes = [1, 32], strides = [1, 1]} : vector<5x32xf32> to vector<1x32xf32>
    %122 = vector.broadcast %121 : vector<1x32xf32> to vector<16x32xf32>
    %123 = arith.addf %120, %122 : vector<16x32xf32>
    %124 = arith.addf %75, %123 : vector<16x32xf32>
    %125 = arith.index_cast %arg1 : i32 to index
    %c0_55 = arith.constant 0 : index
    %c0_56 = arith.constant 0 : index
    %126 = vector.load %arg13[%125, %c0_55, %c0_56] : memref<2x32x128xf32, #tpu.memory_space<vmem>>, vector<1x32x128xf32>
    %127 = vector.shape_cast %126 : vector<1x32x128xf32> to vector<32x128xf32>
    %cst_57 = arith.constant dense<0.000000e+00> : vector<16x128xf32>
    %128 = tpu.matmul %124, %127, %cst_57 {dimension_numbers = #tpu.dot_dimension_numbers<[1], [0], [0], [1], [0, 0, 1, 1], [], []>, precision = #tpu.contract_precision<fp32>} : vector<16x32xf32>, vector<32x128xf32>, vector<16x128xf32> -> vector<16x128xf32>
    %129 = arith.index_cast %arg1 : i32 to index
    %c0_58 = arith.constant 0 : index
    %c0_59 = arith.constant 0 : index
    %130 = vector.load %arg7[%129, %c0_58, %c0_59] : memref<2x1x128xf32, #tpu.memory_space<vmem>>, vector<1x1x128xf32>
    %131 = vector.shape_cast %130 : vector<1x1x128xf32> to vector<1x128xf32>
    %132 = vector.broadcast %131 : vector<1x128xf32> to vector<16x128xf32>
    %133 = arith.addf %128, %132 : vector<16x128xf32>
    %134 = vector.broadcast %4 : vector<16x1xf32> to vector<16x128xf32>
    %135 = arith.mulf %133, %134 : vector<16x128xf32>
    %136 = arith.extui %15 : i1 to i32
    %c0_i32_60 = arith.constant 0 : i32
    %137 = arith.cmpi ne, %136, %c0_i32_60 : i32
    scf.if %137 {
      %c0_62 = arith.constant 0 : index
      %c0_63 = arith.constant 0 : index
      %c0_64 = arith.constant 0 : index
      %141 = vector.load %arg15[%c0_62, %c0_63, %c0_64] : memref<1x16x128xf32, #tpu.memory_space<vmem>>, vector<1x16x128xf32>
      %142 = vector.shape_cast %141 : vector<1x16x128xf32> to vector<16x128xf32>
      %143 = vector.broadcast %4 : vector<16x1xf32> to vector<16x128xf32>
      %144 = arith.mulf %142, %143 : vector<16x128xf32>
      %145 = arith.addf %144, %135 : vector<16x128xf32>
      %c0_65 = arith.constant 0 : index
      %c0_66 = arith.constant 0 : index
      %c0_67 = arith.constant 0 : index
      %146 = vector.load %arg15[%c0_65, %c0_66, %c0_67] : memref<1x16x128xf32, #tpu.memory_space<vmem>>, vector<1x16x128xf32>
      %147 = vector.shape_cast %146 : vector<1x16x128xf32> to vector<16x128xf32>
      %148 = vector.shape_cast %145 : vector<16x128xf32> to vector<1x16x128xf32>
      tpu.vector_store %arg15[%c0_65, %c0_66, %c0_67], %148 {strides = array<i32>} : memref<1x16x128xf32, #tpu.memory_space<vmem>>, vector<1x16x128xf32>,
    } else {
    }
    %true = arith.constant true
    %138 = arith.xori %15, %true : i1
    %139 = arith.extui %138 : i1 to i32
    %c0_i32_61 = arith.constant 0 : i32
    %140 = arith.cmpi ne, %139, %c0_i32_61 : i32
    scf.if %140 {
      %c0_62 = arith.constant 0 : index
      %c0_63 = arith.constant 0 : index
      %c0_64 = arith.constant 0 : index
      %141 = vector.load %arg14[%c0_62, %c0_63, %c0_64] : memref<1x16x128xf32, #tpu.memory_space<vmem>>, vector<1x16x128xf32>
      %142 = vector.shape_cast %141 : vector<1x16x128xf32> to vector<16x128xf32>
      %143 = vector.broadcast %4 : vector<16x1xf32> to vector<16x128xf32>
      %144 = arith.mulf %142, %143 : vector<16x128xf32>
      %145 = arith.addf %144, %135 : vector<16x128xf32>
      %c0_65 = arith.constant 0 : index
      %c0_66 = arith.constant 0 : index
      %c0_67 = arith.constant 0 : index
      %146 = vector.load %arg14[%c0_65, %c0_66, %c0_67] : memref<1x16x128xf32, #tpu.memory_space<vmem>>, vector<1x16x128xf32>
      %147 = vector.shape_cast %146 : vector<1x16x128xf32> to vector<16x128xf32>
      %148 = vector.shape_cast %145 : vector<16x128xf32> to vector<1x16x128xf32>
      tpu.vector_store %arg14[%c0_65, %c0_66, %c0_67], %148 {strides = array<i32>} : memref<1x16x128xf32, #tpu.memory_space<vmem>>, vector<1x16x128xf32>,
    } else {
    }
    return
  }
  func.func @transform_0(%arg0: i32, %arg1: i32) -> (i32, i32, i32) {
    %c0_i32 = arith.constant 0 : i32
    %c0_i32_0 = arith.constant 0 : i32
    %c0_i32_1 = arith.constant 0 : i32
    return %arg0, %c0_i32, %c0_i32_0 : i32, i32, i32
  }
  func.func @transform_1(%arg0: i32, %arg1: i32) -> (i32, i32, i32) {
    %c0_i32 = arith.constant 0 : i32
    %c0_i32_0 = arith.constant 0 : i32
    %c0_i32_1 = arith.constant 0 : i32
    return %arg0, %c0_i32, %c0_i32_0 : i32, i32, i32
  }
  func.func @transform_2(%arg0: i32, %arg1: i32) -> (i32, i32, i32) {
    %c0_i32 = arith.constant 0 : i32
    %c0_i32_0 = arith.constant 0 : i32
    %c0_i32_1 = arith.constant 0 : i32
    return %arg0, %c0_i32, %c0_i32_0 : i32, i32, i32
  }
  func.func @transform_3(%arg0: i32, %arg1: i32) -> (i32, i32, i32, i32) {
    %c0_i32 = arith.constant 0 : i32
    %c0_i32_0 = arith.constant 0 : i32
    %c0_i32_1 = arith.constant 0 : i32
    %c0_i32_2 = arith.constant 0 : i32
    return %arg0, %c0_i32, %c0_i32_0, %c0_i32_1 : i32, i32, i32, i32
  }
  func.func @transform_4(%arg0: i32, %arg1: i32) -> (i32, i32, i32) {
    %c0_i32 = arith.constant 0 : i32
    %c0_i32_0 = arith.constant 0 : i32
    %c0_i32_1 = arith.constant 0 : i32
    %c0_i32_2 = arith.constant 0 : i32
    return %c0_i32, %c0_i32_0, %c0_i32_1 : i32, i32, i32
  }
  func.func @transform_5(%arg0: i32, %arg1: i32) -> (i32, i32, i32) {
    %c0_i32 = arith.constant 0 : i32
    %c0_i32_0 = arith.constant 0 : i32
    %c0_i32_1 = arith.constant 0 : i32
    %c0_i32_2 = arith.constant 0 : i32
    return %c0_i32, %c0_i32_0, %c0_i32_1 : i32, i32, i32
  }
  func.func @transform_6(%arg0: i32, %arg1: i32) -> (i32, i32, i32) {
    %c0_i32 = arith.constant 0 : i32
    %c0_i32_0 = arith.constant 0 : i32
    %c0_i32_1 = arith.constant 0 : i32
    %c0_i32_2 = arith.constant 0 : i32
    return %c0_i32, %c0_i32_0, %c0_i32_1 : i32, i32, i32
  }
  func.func @transform_7(%arg0: i32, %arg1: i32) -> (i32, i32, i32) {
    %c0_i32 = arith.constant 0 : i32
    %c0_i32_0 = arith.constant 0 : i32
    %c0_i32_1 = arith.constant 0 : i32
    %c0_i32_2 = arith.constant 0 : i32
    return %c0_i32, %c0_i32_0, %c0_i32_1 : i32, i32, i32
  }
  func.func @transform_8(%arg0: i32, %arg1: i32) -> (i32, i32, i32) {
    %c0_i32 = arith.constant 0 : i32
    %c0_i32_0 = arith.constant 0 : i32
    %c0_i32_1 = arith.constant 0 : i32
    %c0_i32_2 = arith.constant 0 : i32
    return %c0_i32, %c0_i32_0, %c0_i32_1 : i32, i32, i32
  }
  func.func @transform_9(%arg0: i32, %arg1: i32) -> (i32, i32, i32) {
    %c0_i32 = arith.constant 0 : i32
    %c0_i32_0 = arith.constant 0 : i32
    %c0_i32_1 = arith.constant 0 : i32
    %c0_i32_2 = arith.constant 0 : i32
    return %c0_i32, %c0_i32_0, %c0_i32_1 : i32, i32, i32
  }
  func.func @transform_10(%arg0: i32, %arg1: i32) -> (i32, i32, i32) {
    %c0_i32 = arith.constant 0 : i32
    %c0_i32_0 = arith.constant 0 : i32
    %c0_i32_1 = arith.constant 0 : i32
    %c0_i32_2 = arith.constant 0 : i32
    return %c0_i32, %c0_i32_0, %c0_i32_1 : i32, i32, i32
  }
  func.func @transform_11(%arg0: i32, %arg1: i32) -> (i32, i32, i32) {
    %c0_i32 = arith.constant 0 : i32
    %c0_i32_0 = arith.constant 0 : i32
    %c0_i32_1 = arith.constant 0 : i32
    %c0_i32_2 = arith.constant 0 : i32
    return %c0_i32, %c0_i32_0, %c0_i32_1 : i32, i32, i32
  }
  func.func @transform_12(%arg0: i32, %arg1: i32) -> (i32, i32, i32) {
    %c0_i32 = arith.constant 0 : i32
    %c0_i32_0 = arith.constant 0 : i32
    %c0_i32_1 = arith.constant 0 : i32
    return %arg0, %c0_i32, %c0_i32_0 : i32, i32, i32
  }
  func.func @transform_13(%arg0: i32, %arg1: i32) -> (i32, i32, i32) {
    %c0_i32 = arith.constant 0 : i32
    %c0_i32_0 = arith.constant 0 : i32
    %c0_i32_1 = arith.constant 0 : i32
    return %arg0, %c0_i32, %c0_i32_0 : i32, i32, i32
  }
}

</mosaic_0001>

<llo_original>
// kernel: tpu_custom_call.1
$region0: #{tpu_custom_call.1}
  #allocation0 [shape = 'u32[]', space=smem, size = 0x4, offset = 0x4, fixed_abs, tag = 'smem constant byte address 0x4 - core index']
  #allocation1 [shape = 'u32[144,128]{1,0:T(1,128)}', space=vmem, size = 0x12000, scoped, tag = 'internal scratch']
  %s0 = inlined_call_operand.vmem [shape: f32[2,16,128], index: 0, kind: input, shape index: {}]
  %s1 = inlined_call_operand.vmem [shape: f32[2,16,128], index: 1, kind: input, shape index: {}]
  %s2 = inlined_call_operand.vmem [shape: f32[2,16,1], index: 2, kind: input, shape index: {}]
  %s3 = inlined_call_operand.vmem [shape: f32[2,2,4,32], index: 3, kind: input, shape index: {}]
  %s4 = inlined_call_operand.vmem [shape: f32[2,5,32], index: 4, kind: input, shape index: {}]
  %s5 = inlined_call_operand.vmem [shape: f32[2,1,128], index: 5, kind: input, shape index: {}]
  %s6 = inlined_call_operand.vmem [shape: f32[2,128,32], index: 6, kind: input, shape index: {}]
  %s7 = inlined_call_operand.vmem [shape: f32[4,96,32], index: 7, kind: input, shape index: {}]
  %s8 = inlined_call_operand.vmem [shape: f32[4,96,32], index: 8, kind: input, shape index: {}]
  %s9 = inlined_call_operand.vmem [shape: f32[4,32,32], index: 9, kind: input, shape index: {}]
  %s10 = inlined_call_operand.vmem [shape: f32[4,32,32], index: 10, kind: input, shape index: {}]
  %s11 = inlined_call_operand.vmem [shape: f32[2,32,128], index: 11, kind: input, shape index: {}]
  %s12 = inlined_call_operand.hbm [shape: f32[2,16,128], index: 12, kind: output, shape index: {0}]
  %s13 = inlined_call_operand.hbm [shape: f32[2,16,128], index: 13, kind: output, shape index: {1}]
  %14 = xla_tuple %s12, %s13
  %s15 = sld [smem:[#allocation0]]
  $region101: #{tpu_custom_call.1} parent=0
    _
  %s17 = ssub.s32 1, %s15
  %s18 = scalar_select 0, %s17, %s15
  $region1: #{tpu_custom_call.1} parent=0
    #allocation2 [shape = 'u8[16384]{0}', space=vmem, size = 0x4000, scoped, tag = 'output window, operand 0']
    #allocation3 [shape = 's32[2]{0}', space=sflag, size = 0x8, scoped, tag = 'scoped memory for tpu_custom_call.1']
    #allocation4 [shape = 'u8[16384]{0}', space=vmem, size = 0x4000, scoped, tag = 'output window, operand 1']
    #allocation5 [shape = 's32[2]{0}', space=sflag, size = 0x8, scoped, tag = 'scoped memory for tpu_custom_call.1']
    %19 = vsyncpa [#allocation3], 0
    %s20 = scalar_lea.sflag [#allocation3], 1
    %21 = vsyncpa %s20, 0
    %22 = vsyncpa [#allocation5], 0
    %s23 = scalar_lea.sflag [#allocation5], 1
    %24 = vsyncpa %s23, 0
    loop: start=0, step=1, limit=6
    $region2: #{tpu_custom_call.1} parent=1 // loop_pre_header
      _
    $region3: #{tpu_custom_call.1} parent=1 // loop_header
      %s26 = sphi 0, %s30
      %p27 = scmp.ge.s32.totalorder %s26, 6
      %s33 = sphi 0, %s45
      %s34 = sphi 0, %s41
      %s35 = sphi 0, %s33
      %s36 = sphi 0, %s34
      %s37 = sphi 0, %s35
      %s38 = sphi 0, %s36
      %s48 = sphi 0, %s50
      %s51 = sphi 0, %s48
      %s52 = sphi 0, %s51
      %s68 = sphi 0, %s52
      %s74 = sphi 0, %s76
      %s77 = sphi 0, %s74
      %s78 = sphi 0, %s77
      %s94 = sphi 0, %s78
      %s100 = sphi 0, %s102
      %s103 = sphi 0, %s100
      %s104 = sphi 0, %s103
      %s120 = sphi 0, %s104
      %s126 = sphi 0, %s128
      %s129 = sphi 0, %s126
      %s130 = sphi 0, %s129
      %s146 = sphi 0, %s130
      %s150 = sphi 0, %s150
      %s152 = sphi 0, %s150
      %s153 = sphi 0, %s152
      %s167 = sphi 0, %s153
      %s171 = sphi 0, %s171
      %s173 = sphi 0, %s171
      %s174 = sphi 0, %s173
      %s188 = sphi 0, %s174
      %s192 = sphi 0, %s192
      %s194 = sphi 0, %s192
      %s195 = sphi 0, %s194
      %s209 = sphi 0, %s195
      %s213 = sphi 0, %s213
      %s215 = sphi 0, %s213
      %s216 = sphi 0, %s215
      %s230 = sphi 0, %s216
      %s234 = sphi 0, %s234
      %s236 = sphi 0, %s234
      %s237 = sphi 0, %s236
      %s251 = sphi 0, %s237
      %s255 = sphi 0, %s255
      %s257 = sphi 0, %s255
      %s258 = sphi 0, %s257
      %s272 = sphi 0, %s258
      %s276 = sphi 0, %s276
      %s278 = sphi 0, %s276
      %s279 = sphi 0, %s278
      %s293 = sphi 0, %s279
      %s297 = sphi 0, %s297
      %s299 = sphi 0, %s297
      %s300 = sphi 0, %s299
      %s314 = sphi 0, %s300
      %s320 = sphi 0, %s322
      %s323 = sphi 0, %s320
      %s324 = sphi 0, %s323
      %s340 = sphi 0, %s324
      %s346 = sphi 0, %s348
      %s349 = sphi 0, %s346
      %s350 = sphi 0, %s349
      %s366 = sphi 0, %s350
    $region4: #{tpu_custom_call.1} parent=1 // loop_header_branch
      %29 = sbr.rel (%p27) target = $region8
    $region5: #{tpu_custom_call.1} parent=1 // loop_body
      %s31 = ssub.s32 %s26, 1
      %s32 = ssub.s32 %s26, 2
      %s39 = sadd.s32 1, %s34
      %p40 = scmp.ge.s32.totalorder %s39, 2
      %s41 = scalar_select %p40, 0, %s39
      %s42 = sadd.s32 1, %s33
      %s43 = scalar_select %p40, %s42, %s33
      %p44 = scmp.ge.s32.totalorder %s43, 2
      %s45 = scalar_select %p44, 0, %s43
      %s46 = ssub.s32 %s33, %s45
      %p47 = scmp.eq.s32.totalorder %s46, 0
      %s49 = sadd.s32 %s48, 1
      %s50 = scalar_select %p47, %s48, %s49
      %p53 = pneg %p47
      %p54 = scmp.eq.s32.totalorder %s26, 3
      %p55 = por %p53, %p54
      %p56 = scmp.ne.s32.totalorder %s48, %s51
      %p57 = scmp.eq.s32.totalorder %s26, 0
      %p58 = por %p56, %p57
      %p59 = scmp.ne.s32.totalorder %s48, %s51
      %p60 = scmp.eq.s32.totalorder %s31, 3
      %p61 = por %p59, %p60
      %p62 = scmp.ne.s32.totalorder %s51, %s52
      %p63 = scmp.eq.s32.totalorder %s31, 0
      %p64 = por %p62, %p63
      %p65 = scmp.ne.s32.totalorder %s51, %s52
      %p66 = scmp.eq.s32.totalorder %s32, 3
      %p67 = por %p65, %p66
      %p69 = scmp.ne.s32.totalorder %s52, %s68
      %p70 = scmp.eq.s32.totalorder %s32, 0
      %p71 = por %p69, %p70
      %s72 = ssub.s32 %s33, %s45
      %p73 = scmp.eq.s32.totalorder %s72, 0
      %s75 = sadd.s32 %s74, 1
      %s76 = scalar_select %p73, %s74, %s75
      %p79 = pneg %p73
      %p80 = scmp.eq.s32.totalorder %s26, 3
      %p81 = por %p79, %p80
      %p82 = scmp.ne.s32.totalorder %s74, %s77
      %p83 = scmp.eq.s32.totalorder %s26, 0
      %p84 = por %p82, %p83
      %p85 = scmp.ne.s32.totalorder %s74, %s77
      %p86 = scmp.eq.s32.totalorder %s31, 3
      %p87 = por %p85, %p86
      %p88 = scmp.ne.s32.totalorder %s77, %s78
      %p89 = scmp.eq.s32.totalorder %s31, 0
      %p90 = por %p88, %p89
      %p91 = scmp.ne.s32.totalorder %s77, %s78
      %p92 = scmp.eq.s32.totalorder %s32, 3
      %p93 = por %p91, %p92
      %p95 = scmp.ne.s32.totalorder %s78, %s94
      %p96 = scmp.eq.s32.totalorder %s32, 0
      %p97 = por %p95, %p96
      %s98 = ssub.s32 %s33, %s45
      %p99 = scmp.eq.s32.totalorder %s98, 0
      %s101 = sadd.s32 %s100, 1
      %s102 = scalar_select %p99, %s100, %s101
      %p105 = pneg %p99
      %p106 = scmp.eq.s32.totalorder %s26, 3
      %p107 = por %p105, %p106
      %p108 = scmp.ne.s32.totalorder %s100, %s103
      %p109 = scmp.eq.s32.totalorder %s26, 0
      %p110 = por %p108, %p109
      %p111 = scmp.ne.s32.totalorder %s100, %s103
      %p112 = scmp.eq.s32.totalorder %s31, 3
      %p113 = por %p111, %p112
      %p114 = scmp.ne.s32.totalorder %s103, %s104
      %p115 = scmp.eq.s32.totalorder %s31, 0
      %p116 = por %p114, %p115
      %p117 = scmp.ne.s32.totalorder %s103, %s104
      %p118 = scmp.eq.s32.totalorder %s32, 3
      %p119 = por %p117, %p118
      %p121 = scmp.ne.s32.totalorder %s104, %s120
      %p122 = scmp.eq.s32.totalorder %s32, 0
      %p123 = por %p121, %p122
      %s124 = ssub.s32 %s33, %s45
      %p125 = scmp.eq.s32.totalorder %s124, 0
      %s127 = sadd.s32 %s126, 1
      %s128 = scalar_select %p125, %s126, %s127
      %p131 = pneg %p125
      %p132 = scmp.eq.s32.totalorder %s26, 3
      %p133 = por %p131, %p132
      %p134 = scmp.ne.s32.totalorder %s126, %s129
      %p135 = scmp.eq.s32.totalorder %s26, 0
      %p136 = por %p134, %p135
      %p137 = scmp.ne.s32.totalorder %s126, %s129
      %p138 = scmp.eq.s32.totalorder %s31, 3
      %p139 = por %p137, %p138
      %p140 = scmp.ne.s32.totalorder %s129, %s130
      %p141 = scmp.eq.s32.totalorder %s31, 0
      %p142 = por %p140, %p141
      %p143 = scmp.ne.s32.totalorder %s129, %s130
      %p144 = scmp.eq.s32.totalorder %s32, 3
      %p145 = por %p143, %p144
      %p147 = scmp.ne.s32.totalorder %s130, %s146
      %p148 = scmp.eq.s32.totalorder %s32, 0
      %p149 = por %p147, %p148
      %s151 = sadd.s32 %s150, 1
      %p154 = scmp.eq.s32.totalorder %s26, 3
      %p155 = scmp.ne.s32.totalorder %s150, %s152
      %p156 = scmp.eq.s32.totalorder %s26, 0
      %p157 = por %p155, %p156
      %p158 = scmp.ne.s32.totalorder %s150, %s152
      %p159 = scmp.eq.s32.totalorder %s31, 3
      %p160 = por %p158, %p159
      %p161 = scmp.ne.s32.totalorder %s152, %s153
      %p162 = scmp.eq.s32.totalorder %s31, 0
      %p163 = por %p161, %p162
      %p164 = scmp.ne.s32.totalorder %s152, %s153
      %p165 = scmp.eq.s32.totalorder %s32, 3
      %p166 = por %p164, %p165
      %p168 = scmp.ne.s32.totalorder %s153, %s167
      %p169 = scmp.eq.s32.totalorder %s32, 0
      %p170 = por %p168, %p169
      %s172 = sadd.s32 %s171, 1
      %p175 = scmp.eq.s32.totalorder %s26, 3
      %p176 = scmp.ne.s32.totalorder %s171, %s173
      %p177 = scmp.eq.s32.totalorder %s26, 0
      %p178 = por %p176, %p177
      %p179 = scmp.ne.s32.totalorder %s171, %s173
      %p180 = scmp.eq.s32.totalorder %s31, 3
      %p181 = por %p179, %p180
      %p182 = scmp.ne.s32.totalorder %s173, %s174
      %p183 = scmp.eq.s32.totalorder %s31, 0
      %p184 = por %p182, %p183
      %p185 = scmp.ne.s32.totalorder %s173, %s174
      %p186 = scmp.eq.s32.totalorder %s32, 3
      %p187 = por %p185, %p186
      %p189 = scmp.ne.s32.totalorder %s174, %s188
      %p190 = scmp.eq.s32.totalorder %s32, 0
      %p191 = por %p189, %p190
      %s193 = sadd.s32 %s192, 1
      %p196 = scmp.eq.s32.totalorder %s26, 3
      %p197 = scmp.ne.s32.totalorder %s192, %s194
      %p198 = scmp.eq.s32.totalorder %s26, 0
      %p199 = por %p197, %p198
      %p200 = scmp.ne.s32.totalorder %s192, %s194
      %p201 = scmp.eq.s32.totalorder %s31, 3
      %p202 = por %p200, %p201
      %p203 = scmp.ne.s32.totalorder %s194, %s195
      %p204 = scmp.eq.s32.totalorder %s31, 0
      %p205 = por %p203, %p204
      %p206 = scmp.ne.s32.totalorder %s194, %s195
      %p207 = scmp.eq.s32.totalorder %s32, 3
      %p208 = por %p206, %p207
      %p210 = scmp.ne.s32.totalorder %s195, %s209
      %p211 = scmp.eq.s32.totalorder %s32, 0
      %p212 = por %p210, %p211
      %s214 = sadd.s32 %s213, 1
      %p217 = scmp.eq.s32.totalorder %s26, 3
      %p218 = scmp.ne.s32.totalorder %s213, %s215
      %p219 = scmp.eq.s32.totalorder %s26, 0
      %p220 = por %p218, %p219
      %p221 = scmp.ne.s32.totalorder %s213, %s215
      %p222 = scmp.eq.s32.totalorder %s31, 3
      %p223 = por %p221, %p222
      %p224 = scmp.ne.s32.totalorder %s215, %s216
      %p225 = scmp.eq.s32.totalorder %s31, 0
      %p226 = por %p224, %p225
      %p227 = scmp.ne.s32.totalorder %s215, %s216
      %p228 = scmp.eq.s32.totalorder %s32, 3
      %p229 = por %p227, %p228
      %p231 = scmp.ne.s32.totalorder %s216, %s230
      %p232 = scmp.eq.s32.totalorder %s32, 0
      %p233 = por %p231, %p232
      %s235 = sadd.s32 %s234, 1
      %p238 = scmp.eq.s32.totalorder %s26, 3
      %p239 = scmp.ne.s32.totalorder %s234, %s236
      %p240 = scmp.eq.s32.totalorder %s26, 0
      %p241 = por %p239, %p240
      %p242 = scmp.ne.s32.totalorder %s234, %s236
      %p243 = scmp.eq.s32.totalorder %s31, 3
      %p244 = por %p242, %p243
      %p245 = scmp.ne.s32.totalorder %s236, %s237
      %p246 = scmp.eq.s32.totalorder %s31, 0
      %p247 = por %p245, %p246
      %p248 = scmp.ne.s32.totalorder %s236, %s237
      %p249 = scmp.eq.s32.totalorder %s32, 3
      %p250 = por %p248, %p249
      %p252 = scmp.ne.s32.totalorder %s237, %s251
      %p253 = scmp.eq.s32.totalorder %s32, 0
      %p254 = por %p252, %p253
      %s256 = sadd.s32 %s255, 1
      %p259 = scmp.eq.s32.totalorder %s26, 3
      %p260 = scmp.ne.s32.totalorder %s255, %s257
      %p261 = scmp.eq.s32.totalorder %s26, 0
      %p262 = por %p260, %p261
      %p263 = scmp.ne.s32.totalorder %s255, %s257
      %p264 = scmp.eq.s32.totalorder %s31, 3
      %p265 = por %p263, %p264
      %p266 = scmp.ne.s32.totalorder %s257, %s258
      %p267 = scmp.eq.s32.totalorder %s31, 0
      %p268 = por %p266, %p267
      %p269 = scmp.ne.s32.totalorder %s257, %s258
      %p270 = scmp.eq.s32.totalorder %s32, 3
      %p271 = por %p269, %p270
      %p273 = scmp.ne.s32.totalorder %s258, %s272
      %p274 = scmp.eq.s32.totalorder %s32, 0
      %p275 = por %p273, %p274
      %s277 = sadd.s32 %s276, 1
      %p280 = scmp.eq.s32.totalorder %s26, 3
      %p281 = scmp.ne.s32.totalorder %s276, %s278
      %p282 = scmp.eq.s32.totalorder %s26, 0
      %p283 = por %p281, %p282
      %p284 = scmp.ne.s32.totalorder %s276, %s278
      %p285 = scmp.eq.s32.totalorder %s31, 3
      %p286 = por %p284, %p285
      %p287 = scmp.ne.s32.totalorder %s278, %s279
      %p288 = scmp.eq.s32.totalorder %s31, 0
      %p289 = por %p287, %p288
      %p290 = scmp.ne.s32.totalorder %s278, %s279
      %p291 = scmp.eq.s32.totalorder %s32, 3
      %p292 = por %p290, %p291
      %p294 = scmp.ne.s32.totalorder %s279, %s293
      %p295 = scmp.eq.s32.totalorder %s32, 0
      %p296 = por %p294, %p295
      %s298 = sadd.s32 %s297, 1
      %p301 = scmp.eq.s32.totalorder %s26, 3
      %p302 = scmp.ne.s32.totalorder %s297, %s299
      %p303 = scmp.eq.s32.totalorder %s26, 0
      %p304 = por %p302, %p303
      %p305 = scmp.ne.s32.totalorder %s297, %s299
      %p306 = scmp.eq.s32.totalorder %s31, 3
      %p307 = por %p305, %p306
      %p308 = scmp.ne.s32.totalorder %s299, %s300
      %p309 = scmp.eq.s32.totalorder %s31, 0
      %p310 = por %p308, %p309
      %p311 = scmp.ne.s32.totalorder %s299, %s300
      %p312 = scmp.eq.s32.totalorder %s32, 3
      %p313 = por %p311, %p312
      %p315 = scmp.ne.s32.totalorder %s300, %s314
      %p316 = scmp.eq.s32.totalorder %s32, 0
      %p317 = por %p315, %p316
      %s318 = ssub.s32 %s33, %s45
      %p319 = scmp.eq.s32.totalorder %s318, 0
      %s321 = sadd.s32 %s320, 1
      %s322 = scalar_select %p319, %s320, %s321
      %p325 = pneg %p319
      %p326 = scmp.eq.s32.totalorder %s26, 3
      %p327 = por %p325, %p326
      %p328 = scmp.ne.s32.totalorder %s320, %s323
      %p329 = scmp.eq.s32.totalorder %s26, 0
      %p330 = por %p328, %p329
      %p331 = scmp.ne.s32.totalorder %s320, %s323
      %p332 = scmp.eq.s32.totalorder %s31, 3
      %p333 = por %p331, %p332
      %p334 = scmp.ne.s32.totalorder %s323, %s324
      %p335 = scmp.eq.s32.totalorder %s31, 0
      %p336 = por %p334, %p335
      %p337 = scmp.ne.s32.totalorder %s323, %s324
      %p338 = scmp.eq.s32.totalorder %s32, 3
      %p339 = por %p337, %p338
      %p341 = scmp.ne.s32.totalorder %s324, %s340
      %p342 = scmp.eq.s32.totalorder %s32, 0
      %p343 = por %p341, %p342
      %s344 = ssub.s32 %s33, %s45
      %p345 = scmp.eq.s32.totalorder %s344, 0
      %s347 = sadd.s32 %s346, 1
      %s348 = scalar_select %p345, %s346, %s347
      %p351 = pneg %p345
      %p352 = scmp.eq.s32.totalorder %s26, 3
      %p353 = por %p351, %p352
      %p354 = scmp.ne.s32.totalorder %s346, %s349
      %p355 = scmp.eq.s32.totalorder %s26, 0
      %p356 = por %p354, %p355
      %p357 = scmp.ne.s32.totalorder %s346, %s349
      %p358 = scmp.eq.s32.totalorder %s31, 3
      %p359 = por %p357, %p358
      %p360 = scmp.ne.s32.totalorder %s349, %s350
      %p361 = scmp.eq.s32.totalorder %s31, 0
      %p362 = por %p360, %p361
      %p363 = scmp.ne.s32.totalorder %s349, %s350
      %p364 = scmp.eq.s32.totalorder %s32, 3
      %p365 = por %p363, %p364
      %p367 = scmp.ne.s32.totalorder %s350, %s366
      %p368 = scmp.eq.s32.totalorder %s32, 0
      %p369 = por %p367, %p368
      %p370 = scmp.le.s32.totalorder 1, %s26
      %p371 = scmp.lt.s32.totalorder %s26, 5
      %p372 = pnand %p370, %p371
      %p373 = pneg %p372
      // Predicated region
      $region9: #{tpu_custom_call.1} parent=5 // pred_check
        _
      $region10: #{tpu_custom_call.1} parent=5 // pred_check_branch
        %375 = sbr.rel (%p372) target = $region12
      $region11: #{tpu_custom_call.1} parent=5 // pred_region
        %s376 = ssub.s32 %s26, 1
        // Predicated region
        $region13: #{tpu_custom_call.1} parent=11 // pred_check
          %p377 = pneg %p163
        $region14: #{tpu_custom_call.1} parent=11 // pred_check_branch
          %379 = sbr.rel (%p377) target = $region16
        $region15: #{tpu_custom_call.1} parent=11 // pred_region
          _
        $region16: #{tpu_custom_call.1} parent=11 // pred_fallthru
          _
        // Predicated region
        $region17: #{tpu_custom_call.1} parent=11 // pred_check
          %p380 = pneg %p184
        $region18: #{tpu_custom_call.1} parent=11 // pred_check_branch
          %382 = sbr.rel (%p380) target = $region20
        $region19: #{tpu_custom_call.1} parent=11 // pred_region
          _
        $region20: #{tpu_custom_call.1} parent=11 // pred_fallthru
          _
        // Predicated region
        $region21: #{tpu_custom_call.1} parent=11 // pred_check
          %p383 = pneg %p205
        $region22: #{tpu_custom_call.1} parent=11 // pred_check_branch
          %385 = sbr.rel (%p383) target = $region24
        $region23: #{tpu_custom_call.1} parent=11 // pred_region
          _
        $region24: #{tpu_custom_call.1} parent=11 // pred_fallthru
          _
        // Predicated region
        $region25: #{tpu_custom_call.1} parent=11 // pred_check
          %p386 = pneg %p226
        $region26: #{tpu_custom_call.1} parent=11 // pred_check_branch
          %388 = sbr.rel (%p386) target = $region28
        $region27: #{tpu_custom_call.1} parent=11 // pred_region
          _
        $region28: #{tpu_custom_call.1} parent=11 // pred_fallthru
          _
        // Predicated region
        $region29: #{tpu_custom_call.1} parent=11 // pred_check
          %p389 = pneg %p247
        $region30: #{tpu_custom_call.1} parent=11 // pred_check_branch
          %391 = sbr.rel (%p389) target = $region32
        $region31: #{tpu_custom_call.1} parent=11 // pred_region
          _
        $region32: #{tpu_custom_call.1} parent=11 // pred_fallthru
          _
        // Predicated region
        $region33: #{tpu_custom_call.1} parent=11 // pred_check
          %p392 = pneg %p268
        $region34: #{tpu_custom_call.1} parent=11 // pred_check_branch
          %394 = sbr.rel (%p392) target = $region36
        $region35: #{tpu_custom_call.1} parent=11 // pred_region
          _
        $region36: #{tpu_custom_call.1} parent=11 // pred_fallthru
          _
        // Predicated region
        $region37: #{tpu_custom_call.1} parent=11 // pred_check
          %p395 = pneg %p289
        $region38: #{tpu_custom_call.1} parent=11 // pred_check_branch
          %397 = sbr.rel (%p395) target = $region40
        $region39: #{tpu_custom_call.1} parent=11 // pred_region
          _
        $region40: #{tpu_custom_call.1} parent=11 // pred_fallthru
          _
        // Predicated region
        $region41: #{tpu_custom_call.1} parent=11 // pred_check
          %p398 = pneg %p310
        $region42: #{tpu_custom_call.1} parent=11 // pred_check_branch
          %400 = sbr.rel (%p398) target = $region44
        $region43: #{tpu_custom_call.1} parent=11 // pred_region
          _
        $region44: #{tpu_custom_call.1} parent=11 // pred_fallthru
          _
      $region12: #{tpu_custom_call.1} parent=5 // pred_fallthru
        _
      %p401 = scmp.lt.s32.totalorder %s26, 4
      // Predicated region
      $region45: #{tpu_custom_call.1} parent=5 // pred_check
        %p402 = pneg %p401
      $region46: #{tpu_custom_call.1} parent=5 // pred_check_branch
        %404 = sbr.rel (%p402) target = $region48
      $region47: #{tpu_custom_call.1} parent=5 // pred_region
        // Predicated region
        $region49: #{tpu_custom_call.1} parent=47 // pred_check
          %p405 = pneg %p58
        $region50: #{tpu_custom_call.1} parent=47 // pred_check_branch
          %407 = sbr.rel (%p405) target = $region52
        $region51: #{tpu_custom_call.1} parent=47 // pred_region
          %p408 = scmp.lt.s32.totalorder %s33, 1
          %s409 = scalar_select %p408, %s33, 1
          %s410 = smul.addr %s409, 2
          %s411 = smul.addr %s410, 8
          %s412 = scalar_lea.vmem %s0, %s411
        $region52: #{tpu_custom_call.1} parent=47 // pred_fallthru
          _
        // Predicated region
        $region53: #{tpu_custom_call.1} parent=47 // pred_check
          %p413 = pneg %p84
        $region54: #{tpu_custom_call.1} parent=47 // pred_check_branch
          %415 = sbr.rel (%p413) target = $region56
        $region55: #{tpu_custom_call.1} parent=47 // pred_region
          %p416 = scmp.lt.s32.totalorder %s33, 1
          %s417 = scalar_select %p416, %s33, 1
          %s418 = smul.addr %s417, 2
          %s419 = smul.addr %s418, 8
          %s420 = scalar_lea.vmem %s1, %s419
        $region56: #{tpu_custom_call.1} parent=47 // pred_fallthru
          _
        // Predicated region
        $region57: #{tpu_custom_call.1} parent=47 // pred_check
          %p421 = pneg %p110
        $region58: #{tpu_custom_call.1} parent=47 // pred_check_branch
          %423 = sbr.rel (%p421) target = $region60
        $region59: #{tpu_custom_call.1} parent=47 // pred_region
          %p424 = scmp.lt.s32.totalorder %s33, 1
          %s425 = scalar_select %p424, %s33, 1
          %s426 = smul.addr %s425, 2
          %s427 = smul.addr %s426, 8
          %s428 = scalar_lea.vmem %s2, %s427
        $region60: #{tpu_custom_call.1} parent=47 // pred_fallthru
          _
        // Predicated region
        $region61: #{tpu_custom_call.1} parent=47 // pred_check
          %p429 = pneg %p136
        $region62: #{tpu_custom_call.1} parent=47 // pred_check_branch
          %431 = sbr.rel (%p429) target = $region64
        $region63: #{tpu_custom_call.1} parent=47 // pred_region
          %p432 = scmp.lt.s32.totalorder %s33, 1
          %s433 = scalar_select %p432, %s33, 1
          %s434 = smul.addr %s433, 2
          %s435 = smul.addr %s434, 4
          %s436 = scalar_lea.vmem %s3, %s435
        $region64: #{tpu_custom_call.1} parent=47 // pred_fallthru
          _
      $region48: #{tpu_custom_call.1} parent=5 // pred_fallthru
        _
      %p437 = scmp.le.s32.totalorder 1, %s26
      %p438 = scmp.lt.s32.totalorder %s26, 5
      %p439 = pnand %p437, %p438
      %p440 = pneg %p439
      // Predicated region
      $region65: #{tpu_custom_call.1} parent=5 // pred_check
        _
      $region66: #{tpu_custom_call.1} parent=5 // pred_check_branch
        %442 = sbr.rel (%p439) target = $region68
      $region67: #{tpu_custom_call.1} parent=5 // pred_region
        %s443 = ssub.s32 %s26, 1
        %p444 = scmp.lt.s32.totalorder %s35, 1
        %s445 = scalar_select %p444, %s35, 1
        %s446 = smul.addr %s445, 2
        %s447 = smul.addr %s446, 8
        %s448 = scalar_lea.vmem %s0, %s447
        %p449 = pneg %p64
        %p450 = pneg %p61
        %p451 = scmp.lt.s32.totalorder %s35, 1
        %s452 = scalar_select %p451, %s35, 1
        %s453 = smul.addr %s452, 2
        %s454 = smul.addr %s453, 8
        %s455 = scalar_lea.vmem %s1, %s454
        %p456 = pneg %p90
        %p457 = pneg %p87
        %p458 = scmp.lt.s32.totalorder %s35, 1
        %s459 = scalar_select %p458, %s35, 1
        %s460 = smul.addr %s459, 2
        %s461 = smul.addr %s460, 8
        %s462 = scalar_lea.vmem %s2, %s461
        %p463 = pneg %p116
        %p464 = pneg %p113
        %p465 = scmp.lt.s32.totalorder %s35, 1
        %s466 = scalar_select %p465, %s35, 1
        %s467 = smul.addr %s466, 2
        %s468 = smul.addr %s467, 4
        %s469 = scalar_lea.vmem %s3, %s468
        %p470 = pneg %p142
        %p471 = pneg %p139
        %p472 = pneg %p163
        %p473 = pneg %p160
        %p474 = pneg %p184
        %p475 = pneg %p181
        %p476 = pneg %p205
        %p477 = pneg %p202
        %p478 = pneg %p226
        %p479 = pneg %p223
        %p480 = pneg %p247
        %p481 = pneg %p244
        %p482 = pneg %p268
        %p483 = pneg %p265
        %p484 = pneg %p289
        %p485 = pneg %p286
        %p486 = pneg %p310
        %p487 = pneg %p307
        %p488 = pneg %p336
        %p489 = pneg %p333
        %s490 = sand.u32 %s323, 1
        %s491 = scalar_lea.sflag [#allocation3], %s490
        %s492 = sand.u32 %s323, 1
        %s493 = smul.addr %s492, 16
        %s494 = scalar_lea.vmem [#allocation2], %s493
        %p495 = pneg %p362
        %p496 = pneg %p359
        %s497 = sand.u32 %s349, 1
        %s498 = scalar_lea.sflag [#allocation5], %s497
        %s499 = sand.u32 %s349, 1
        %s500 = smul.addr %s499, 16
        %s501 = scalar_lea.vmem [#allocation4], %s500
        %p502 = scmp.lt.s32.totalorder %s35, 1
        %s503 = scalar_select %p502, %s35, 1
        %s504 = smul.addr %s503, 2
        %s505 = smul.addr %s504, 8
        %s506 = scalar_lea.vmem %s0, %s505
        %p507 = scmp.lt.s32.totalorder %s35, 1
        %s508 = scalar_select %p507, %s35, 1
        %s509 = smul.addr %s508, 2
        %s510 = smul.addr %s509, 8
        %s511 = scalar_lea.vmem %s1, %s510
        %p512 = scmp.lt.s32.totalorder %s35, 1
        %s513 = scalar_select %p512, %s35, 1
        %s514 = smul.addr %s513, 2
        %s515 = smul.addr %s514, 8
        %s516 = scalar_lea.vmem %s2, %s515
        %p517 = scmp.lt.s32.totalorder %s35, 1
        %s518 = scalar_select %p517, %s35, 1
        %s519 = smul.addr %s518, 2
        %s520 = smul.addr %s519, 4
        %s521 = scalar_lea.vmem %s3, %s520
        %p522 = scmp.eq.s32.totalorder %s36, 0
        // Predicated region
        $region69: #{tpu_custom_call.1} parent=67 // pred_check
          %p523 = pneg %p522
        $region70: #{tpu_custom_call.1} parent=67 // pred_check_branch
          %525 = sbr.rel (%p523) target = $region72
        $region71: #{tpu_custom_call.1} parent=67 // pred_region
          %v526 = vld [vmem:[%s506] sm:$0xff]
          %v527 = vld [vmem:[%s506 + $0x8] sm:$0xff]
          %528 = vst [vmem:[%s494] sm:$0xff] %v526
          %529 = vst [vmem:[%s494 + $0x8] sm:$0xff] %v527
          %v530 = vld [vmem:[%s511] sm:$0xff]
          %v531 = vld [vmem:[%s511 + $0x8] sm:$0xff]
          %532 = vst [vmem:[%s501] sm:$0xff] %v530
          %533 = vst [vmem:[%s501 + $0x8] sm:$0xff] %v531
        $region72: #{tpu_custom_call.1} parent=67 // pred_fallthru
          _
        %v534 = vld [vmem:[%s516] sm:$0xff]
        %v535 = vld [vmem:[%s516 + $0x8] sm:$0xff]
        %p536 = scmp.lt.s32.totalorder %s36, 0
        %s537 = ssub.s32 0, %s36
        %s538 = scalar_select %p536, %s537, %s36
        %s539 = sand.u32 %s538, 1
        %s540 = ssub.s32 0, %s539
        %s541 = scalar_select %p536, %s540, %s539
        %p542 = scmp.ne.s32.totalorder %s541, 0
        %p543 = scmp.lt.s32.totalorder %s541, 0
        %p544 = pnand %p543, %p542
        %p545 = pneg %p544
        %s546 = sadd.s32 %s541, 2
        %s547 = scalar_select %p545, %s546, %s541
        %p548 = scmp.eq.s32.totalorder %s547, 0
        %v549 = vld [vmem:[%s494] sm:$0xff]
        %v550 = vld [vmem:[%s494 + $0x8] sm:$0xff]
        %v551 = vld [vmem:[%s501] sm:$0xff]
        %v552 = vld [vmem:[%s501 + $0x8] sm:$0xff]
        %s553 = scalar_select %p548, 1, 0
        %v554 = vstv %s553
        %vm555 = vcmp.eq.s32.totalorder %v554, 1
        %v556 = vsel %vm555, %v549, %v551
        %v557 = vsel %vm555, %v550, %v552
        %s558 = smul.u32 %s36, 8
        %s559 = scalar_lea.vmem %s4, %s558
        %v560 = vld [vmem:[%s559] sm:$0x1f]
        %s561 = smul.u32 %s36, 4
        %s562 = scalar_lea.vmem %s521, %s561
        %v563 = vld [vmem:[%s562] sm:$0xf]
        %s564 = smul.u32 %s36, 128
        %s565 = scalar_lea.vmem %s6, %s564
        %v566 = vld [vmem:[%s565] sm:$0xff]
        %v567 = vld [vmem:[%s565 + $0x8] sm:$0xff]
        %v568 = vld [vmem:[%s565 + $0x10] sm:$0xff]
        %v569 = vld [vmem:[%s565 + $0x18] sm:$0xff]
        %v570 = vld [vmem:[%s565 + $0x20] sm:$0xff]
        %v571 = vld [vmem:[%s565 + $0x28] sm:$0xff]
        %v572 = vld [vmem:[%s565 + $0x30] sm:$0xff]
        %v573 = vld [vmem:[%s565 + $0x38] sm:$0xff]
        %v574 = vld [vmem:[%s565 + $0x40] sm:$0xff]
        %v575 = vld [vmem:[%s565 + $0x48] sm:$0xff]
        %v576 = vld [vmem:[%s565 + $0x50] sm:$0xff]
        %v577 = vld [vmem:[%s565 + $0x58] sm:$0xff]
        %v578 = vld [vmem:[%s565 + $0x60] sm:$0xff]
        %v579 = vld [vmem:[%s565 + $0x68] sm:$0xff]
        %v580 = vld [vmem:[%s565 + $0x70] sm:$0xff]
        %v581 = vld [vmem:[%s565 + $0x78] sm:$0xff]
        %v582 = vlaneseq
        %v583 = vshrl.u32 %v582, 7
        %v584 = vsub.s32 0, %v583
        %v585 = vrot.slane %v560, %v584
        %586 = vmatprep.subr.mxu0 0.0
        %v587 = vand.u32 %v566, 4294901760
        %588 = vmatpush1.msra.mxu0 %v587
        %589 = vmatprep.subr.mxu0 0.0
        %v590 = vand.u32 %v567, 4294901760
        %591 = vmatpush1.msra.mxu0 %v590
        %592 = vmatprep.subr.mxu0 0.0
        %v593 = vand.u32 %v568, 4294901760
        %594 = vmatpush1.msra.mxu0 %v593
        %595 = vmatprep.subr.mxu0 0.0
        %v596 = vand.u32 %v569, 4294901760
        %597 = vmatpush1.msra.mxu0 %v596
        %598 = vmatprep.subr.mxu0 0.0
        %v599 = vand.u32 %v570, 4294901760
        %600 = vmatpush1.msra.mxu0 %v599
        %601 = vmatprep.subr.mxu0 0.0
        %v602 = vand.u32 %v571, 4294901760
        %603 = vmatpush1.msra.mxu0 %v602
        %604 = vmatprep.subr.mxu0 0.0
        %v605 = vand.u32 %v572, 4294901760
        %606 = vmatpush1.msra.mxu0 %v605
        %607 = vmatprep.subr.mxu0 0.0
        %v608 = vand.u32 %v573, 4294901760
        %609 = vmatpush1.msra.mxu0 %v608
        %610 = vmatprep.subr.mxu0 0.0
        %v611 = vand.u32 %v574, 4294901760
        %612 = vmatpush1.msra.mxu0 %v611
        %613 = vmatprep.subr.mxu0 0.0
        %v614 = vand.u32 %v575, 4294901760
        %615 = vmatpush1.msra.mxu0 %v614
        %616 = vmatprep.subr.mxu0 0.0
        %v617 = vand.u32 %v576, 4294901760
        %618 = vmatpush1.msra.mxu0 %v617
        %619 = vmatprep.subr.mxu0 0.0
        %v620 = vand.u32 %v577, 4294901760
        %621 = vmatpush1.msra.mxu0 %v620
        %622 = vmatprep.subr.mxu0 0.0
        %v623 = vand.u32 %v578, 4294901760
        %624 = vmatpush1.msra.mxu0 %v623
        %625 = vmatprep.subr.mxu0 0.0
        %v626 = vand.u32 %v579, 4294901760
        %627 = vmatpush1.msra.mxu0 %v626
        %628 = vmatprep.subr.mxu0 0.0
        %v629 = vand.u32 %v580, 4294901760
        %630 = vmatpush1.msra.mxu0 %v629
        %631 = vmatprep.subr.mxu0 0.0
        %v632 = vand.u32 %v581, 4294901760
        %633 = vmatpush1.msra.mxu0 %v632
        %634 = vmatprep.subr.mxu0 0.0
        %635 = vmatpush1.msra.mxu0 0.0
        %636 = vmatprep.subr.mxu0 0.0
        %637 = vmatpush1.msra.mxu0 0.0
        %638 = vmatprep.subr.mxu0 0.0
        %639 = vmatpush1.msra.mxu0 0.0
        %640 = vmatprep.subr.mxu0 0.0
        %641 = vmatpush1.msra.mxu0 0.0
        %642 = vmatprep.subr.mxu0 0.0
        %643 = vmatpush1.msra.mxu0 0.0
        %644 = vmatprep.subr.mxu0 0.0
        %645 = vmatpush1.msra.mxu0 0.0
        %646 = vmatprep.subr.mxu0 0.0
        %647 = vmatpush1.msra.mxu0 0.0
        %648 = vmatprep.subr.mxu0 0.0
        %649 = vmatpush1.msra.mxu0 0.0
        %650 = vmatprep.subr.mxu0 0.0
        %651 = vmatpush1.msra.mxu0 0.0
        %652 = vmatprep.subr.mxu0 0.0
        %653 = vmatpush1.msra.mxu0 0.0
        %654 = vmatprep.subr.mxu0 0.0
        %655 = vmatpush1.msra.mxu0 0.0
        %656 = vmatprep.subr.mxu0 0.0
        %657 = vmatpush1.msra.mxu0 0.0
        %658 = vmatprep.subr.mxu0 0.0
        %659 = vmatpush1.msra.mxu0 0.0
        %660 = vmatprep.subr.mxu0 0.0
        %661 = vmatpush1.msra.mxu0 0.0
        %662 = vmatprep.subr.mxu0 0.0
        %663 = vmatpush1.msra.mxu0 0.0
        %664 = vmatprep.subr.mxu0 0.0
        %665 = vmatpush1.msra.mxu0 0.0
        %666 = vmatprep.mubr.f32.mxu0 0.0
        %v667 = vand.u32 %v556, 4294901760
        %v668 = vsub.f32 %v556, %v667
        %v669 = vand.u32 %v668, 4294901760
        %v670 = vsub.f32 %v668, %v669
        %v671 = vand.u32 %v670, 4294901760
        %672 = vmatmul.mubr.f32.gmra.mrb[0].mxu0 %v671
        %v673 = vpop.f32.mrb[0].mxu0
        %v674 = vadd.f32 %v585, %v673
        %v675 = vpop.f32.mrb[0].mxu0
        %676 = vmatprep.mubr.f32.mxu0 0.0
        %v677 = vand.u32 %v557, 4294901760
        %v678 = vsub.f32 %v557, %v677
        %v679 = vand.u32 %v678, 4294901760
        %v680 = vsub.f32 %v678, %v679
        %v681 = vand.u32 %v680, 4294901760
        %682 = vmatmul.mubr.f32.gmra.mrb[0].mxu0 %v681
        %v683 = vpop.f32.mrb[0].mxu0
        %v684 = vadd.f32 %v585, %v683
        %v685 = vpop.f32.mrb[0].mxu0
        %686 = vdwg.mxu0
        %687 = vmatprep.subr.mxu0 0.0
        %v688 = vand.u32 %v566, 4294901760
        %v689 = vsub.f32 %v566, %v688
        %v690 = vand.u32 %v689, 4294901760
        %v691 = vsub.f32 %v689, %v690
        %v692 = vand.u32 %v691, 4294901760
        %693 = vmatpush1.msra.mxu0 %v692
        %694 = vmatprep.subr.mxu0 0.0
        %v695 = vand.u32 %v567, 4294901760
        %v696 = vsub.f32 %v567, %v695
        %v697 = vand.u32 %v696, 4294901760
        %v698 = vsub.f32 %v696, %v697
        %v699 = vand.u32 %v698, 4294901760
        %700 = vmatpush1.msra.mxu0 %v699
        %701 = vmatprep.subr.mxu0 0.0
        %v702 = vand.u32 %v568, 4294901760
        %v703 = vsub.f32 %v568, %v702
        %v704 = vand.u32 %v703, 4294901760
        %v705 = vsub.f32 %v703, %v704
        %v706 = vand.u32 %v705, 4294901760
        %707 = vmatpush1.msra.mxu0 %v706
        %708 = vmatprep.subr.mxu0 0.0
        %v709 = vand.u32 %v569, 4294901760
        %v710 = vsub.f32 %v569, %v709
        %v711 = vand.u32 %v710, 4294901760
        %v712 = vsub.f32 %v710, %v711
        %v713 = vand.u32 %v712, 4294901760
        %714 = vmatpush1.msra.mxu0 %v713
        %715 = vmatprep.subr.mxu0 0.0
        %v716 = vand.u32 %v570, 4294901760
        %v717 = vsub.f32 %v570, %v716
        %v718 = vand.u32 %v717, 4294901760
        %v719 = vsub.f32 %v717, %v718
        %v720 = vand.u32 %v719, 4294901760
        %721 = vmatpush1.msra.mxu0 %v720
        %722 = vmatprep.subr.mxu0 0.0
        %v723 = vand.u32 %v571, 4294901760
        %v724 = vsub.f32 %v571, %v723
        %v725 = vand.u32 %v724, 4294901760
        %v726 = vsub.f32 %v724, %v725
        %v727 = vand.u32 %v726, 4294901760
        %728 = vmatpush1.msra.mxu0 %v727
        %729 = vmatprep.subr.mxu0 0.0
        %v730 = vand.u32 %v572, 4294901760
        %v731 = vsub.f32 %v572, %v730
        %v732 = vand.u32 %v731, 4294901760
        %v733 = vsub.f32 %v731, %v732
        %v734 = vand.u32 %v733, 4294901760
        %735 = vmatpush1.msra.mxu0 %v734
        %736 = vmatprep.subr.mxu0 0.0
        %v737 = vand.u32 %v573, 4294901760
        %v738 = vsub.f32 %v573, %v737
        %v739 = vand.u32 %v738, 4294901760
        %v740 = vsub.f32 %v738, %v739
        %v741 = vand.u32 %v740, 4294901760
        %742 = vmatpush1.msra.mxu0 %v741
        %743 = vmatprep.subr.mxu0 0.0
        %v744 = vand.u32 %v574, 4294901760
        %v745 = vsub.f32 %v574, %v744
        %v746 = vand.u32 %v745, 4294901760
        %v747 = vsub.f32 %v745, %v746
        %v748 = vand.u32 %v747, 4294901760
        %749 = vmatpush1.msra.mxu0 %v748
        %750 = vmatprep.subr.mxu0 0.0
        %v751 = vand.u32 %v575, 4294901760
        %v752 = vsub.f32 %v575, %v751
        %v753 = vand.u32 %v752, 4294901760
        %v754 = vsub.f32 %v752, %v753
        %v755 = vand.u32 %v754, 4294901760
        %756 = vmatpush1.msra.mxu0 %v755
        %757 = vmatprep.subr.mxu0 0.0
        %v758 = vand.u32 %v576, 4294901760
        %v759 = vsub.f32 %v576, %v758
        %v760 = vand.u32 %v759, 4294901760
        %v761 = vsub.f32 %v759, %v760
        %v762 = vand.u32 %v761, 4294901760
        %763 = vmatpush1.msra.mxu0 %v762
        %764 = vmatprep.subr.mxu0 0.0
        %v765 = vand.u32 %v577, 4294901760
        %v766 = vsub.f32 %v577, %v765
        %v767 = vand.u32 %v766, 4294901760
        %v768 = vsub.f32 %v766, %v767
        %v769 = vand.u32 %v768, 4294901760
        %770 = vmatpush1.msra.mxu0 %v769
        %771 = vmatprep.subr.mxu0 0.0
        %v772 = vand.u32 %v578, 4294901760
        %v773 = vsub.f32 %v578, %v772
        %v774 = vand.u32 %v773, 4294901760
        %v775 = vsub.f32 %v773, %v774
        %v776 = vand.u32 %v775, 4294901760
        %777 = vmatpush1.msra.mxu0 %v776
        %778 = vmatprep.subr.mxu0 0.0
        %v779 = vand.u32 %v579, 4294901760
        %v780 = vsub.f32 %v579, %v779
        %v781 = vand.u32 %v780, 4294901760
        %v782 = vsub.f32 %v780, %v781
        %v783 = vand.u32 %v782, 4294901760
        %784 = vmatpush1.msra.mxu0 %v783
        %785 = vmatprep.subr.mxu0 0.0
        %v786 = vand.u32 %v580, 4294901760
        %v787 = vsub.f32 %v580, %v786
        %v788 = vand.u32 %v787, 4294901760
        %v789 = vsub.f32 %v787, %v788
        %v790 = vand.u32 %v789, 4294901760
        %791 = vmatpush1.msra.mxu0 %v790
        %792 = vmatprep.subr.mxu0 0.0
        %v793 = vand.u32 %v581, 4294901760
        %v794 = vsub.f32 %v581, %v793
        %v795 = vand.u32 %v794, 4294901760
        %v796 = vsub.f32 %v794, %v795
        %v797 = vand.u32 %v796, 4294901760
        %798 = vmatpush1.msra.mxu0 %v797
        %799 = vmatprep.subr.mxu0 0.0
        %800 = vmatpush1.msra.mxu0 0.0
        %801 = vmatprep.subr.mxu0 0.0
        %802 = vmatpush1.msra.mxu0 0.0
        %803 = vmatprep.subr.mxu0 0.0
        %804 = vmatpush1.msra.mxu0 0.0
        %805 = vmatprep.subr.mxu0 0.0
        %806 = vmatpush1.msra.mxu0 0.0
        %807 = vmatprep.subr.mxu0 0.0
        %808 = vmatpush1.msra.mxu0 0.0
        %809 = vmatprep.subr.mxu0 0.0
        %810 = vmatpush1.msra.mxu0 0.0
        %811 = vmatprep.subr.mxu0 0.0
        %812 = vmatpush1.msra.mxu0 0.0
        %813 = vmatprep.subr.mxu0 0.0
        %814 = vmatpush1.msra.mxu0 0.0
        %815 = vmatprep.subr.mxu0 0.0
        %816 = vmatpush1.msra.mxu0 0.0
        %817 = vmatprep.subr.mxu0 0.0
        %818 = vmatpush1.msra.mxu0 0.0
        %819 = vmatprep.subr.mxu0 0.0
        %820 = vmatpush1.msra.mxu0 0.0
        %821 = vmatprep.subr.mxu0 0.0
        %822 = vmatpush1.msra.mxu0 0.0
        %823 = vmatprep.subr.mxu0 0.0
        %824 = vmatpush1.msra.mxu0 0.0
        %825 = vmatprep.subr.mxu0 0.0
        %826 = vmatpush1.msra.mxu0 0.0
        %827 = vmatprep.subr.mxu0 0.0
        %828 = vmatpush1.msra.mxu0 0.0
        %829 = vmatprep.subr.mxu0 0.0
        %830 = vmatpush1.msra.mxu0 0.0
        %831 = vmatprep.mubr.f32.mxu0 0.0
        %v832 = vand.u32 %v556, 4294901760
        %833 = vmatmul.mubr.f32.gmra.mrb[0].mxu0 %v832
        %v834 = vpop.f32.mrb[0].mxu0
        %v835 = vadd.f32 %v674, %v834
        %v836 = vpop.f32.mrb[0].mxu0
        %837 = vmatprep.mubr.f32.mxu0 0.0
        %v838 = vand.u32 %v557, 4294901760
        %839 = vmatmul.mubr.f32.gmra.mrb[0].mxu0 %v838
        %v840 = vpop.f32.mrb[0].mxu0
        %v841 = vadd.f32 %v684, %v840
        %v842 = vpop.f32.mrb[0].mxu0
        %843 = vdwg.mxu0
        %844 = vmatprep.subr.mxu0 0.0
        %v845 = vand.u32 %v566, 4294901760
        %v846 = vsub.f32 %v566, %v845
        %847 = vmatpush1.msra.mxu0 %v846
        %848 = vmatprep.subr.mxu0 0.0
        %v849 = vand.u32 %v567, 4294901760
        %v850 = vsub.f32 %v567, %v849
        %851 = vmatpush1.msra.mxu0 %v850
        %852 = vmatprep.subr.mxu0 0.0
        %v853 = vand.u32 %v568, 4294901760
        %v854 = vsub.f32 %v568, %v853
        %855 = vmatpush1.msra.mxu0 %v854
        %856 = vmatprep.subr.mxu0 0.0
        %v857 = vand.u32 %v569, 4294901760
        %v858 = vsub.f32 %v569, %v857
        %859 = vmatpush1.msra.mxu0 %v858
        %860 = vmatprep.subr.mxu0 0.0
        %v861 = vand.u32 %v570, 4294901760
        %v862 = vsub.f32 %v570, %v861
        %863 = vmatpush1.msra.mxu0 %v862
        %864 = vmatprep.subr.mxu0 0.0
        %v865 = vand.u32 %v571, 4294901760
        %v866 = vsub.f32 %v571, %v865
        %867 = vmatpush1.msra.mxu0 %v866
        %868 = vmatprep.subr.mxu0 0.0
        %v869 = vand.u32 %v572, 4294901760
        %v870 = vsub.f32 %v572, %v869
        %871 = vmatpush1.msra.mxu0 %v870
        %872 = vmatprep.subr.mxu0 0.0
        %v873 = vand.u32 %v573, 4294901760
        %v874 = vsub.f32 %v573, %v873
        %875 = vmatpush1.msra.mxu0 %v874
        %876 = vmatprep.subr.mxu0 0.0
        %v877 = vand.u32 %v574, 4294901760
        %v878 = vsub.f32 %v574, %v877
        %879 = vmatpush1.msra.mxu0 %v878
        %880 = vmatprep.subr.mxu0 0.0
        %v881 = vand.u32 %v575, 4294901760
        %v882 = vsub.f32 %v575, %v881
        %883 = vmatpush1.msra.mxu0 %v882
        %884 = vmatprep.subr.mxu0 0.0
        %v885 = vand.u32 %v576, 4294901760
        %v886 = vsub.f32 %v576, %v885
        %887 = vmatpush1.msra.mxu0 %v886
        %888 = vmatprep.subr.mxu0 0.0
        %v889 = vand.u32 %v577, 4294901760
        %v890 = vsub.f32 %v577, %v889
        %891 = vmatpush1.msra.mxu0 %v890
        %892 = vmatprep.subr.mxu0 0.0
        %v893 = vand.u32 %v578, 4294901760
        %v894 = vsub.f32 %v578, %v893
        %895 = vmatpush1.msra.mxu0 %v894
        %896 = vmatprep.subr.mxu0 0.0
        %v897 = vand.u32 %v579, 4294901760
        %v898 = vsub.f32 %v579, %v897
        %899 = vmatpush1.msra.mxu0 %v898
        %900 = vmatprep.subr.mxu0 0.0
        %v901 = vand.u32 %v580, 4294901760
        %v902 = vsub.f32 %v580, %v901
        %903 = vmatpush1.msra.mxu0 %v902
        %904 = vmatprep.subr.mxu0 0.0
        %v905 = vand.u32 %v581, 4294901760
        %v906 = vsub.f32 %v581, %v905
        %907 = vmatpush1.msra.mxu0 %v906
        %908 = vmatprep.subr.mxu0 0.0
        %909 = vmatpush1.msra.mxu0 0.0
        %910 = vmatprep.subr.mxu0 0.0
        %911 = vmatpush1.msra.mxu0 0.0
        %912 = vmatprep.subr.mxu0 0.0
        %913 = vmatpush1.msra.mxu0 0.0
        %914 = vmatprep.subr.mxu0 0.0
        %915 = vmatpush1.msra.mxu0 0.0
        %916 = vmatprep.subr.mxu0 0.0
        %917 = vmatpush1.msra.mxu0 0.0
        %918 = vmatprep.subr.mxu0 0.0
        %919 = vmatpush1.msra.mxu0 0.0
        %920 = vmatprep.subr.mxu0 0.0
        %921 = vmatpush1.msra.mxu0 0.0
        %922 = vmatprep.subr.mxu0 0.0
        %923 = vmatpush1.msra.mxu0 0.0
        %924 = vmatprep.subr.mxu0 0.0
        %925 = vmatpush1.msra.mxu0 0.0
        %926 = vmatprep.subr.mxu0 0.0
        %927 = vmatpush1.msra.mxu0 0.0
        %928 = vmatprep.subr.mxu0 0.0
        %929 = vmatpush1.msra.mxu0 0.0
        %930 = vmatprep.subr.mxu0 0.0
        %931 = vmatpush1.msra.mxu0 0.0
        %932 = vmatprep.subr.mxu0 0.0
        %933 = vmatpush1.msra.mxu0 0.0
        %934 = vmatprep.subr.mxu0 0.0
        %935 = vmatpush1.msra.mxu0 0.0
        %936 = vmatprep.subr.mxu0 0.0
        %937 = vmatpush1.msra.mxu0 0.0
        %938 = vmatprep.subr.mxu0 0.0
        %939 = vmatpush1.msra.mxu0 0.0
        %940 = vmatprep.mubr.f32.mxu0 0.0
        %v941 = vand.u32 %v556, 4294901760
        %v942 = vsub.f32 %v556, %v941
        %943 = vmatmul.mubr.f32.gmra.mrb[0].mxu0 %v942
        %v944 = vpop.f32.mrb[0].mxu0
        %v945 = vadd.f32 %v835, %v944
        %v946 = vpop.f32.mrb[0].mxu0
        %947 = vmatprep.mubr.f32.mxu0 0.0
        %v948 = vand.u32 %v557, 4294901760
        %v949 = vsub.f32 %v557, %v948
        %950 = vmatmul.mubr.f32.gmra.mrb[0].mxu0 %v949
        %v951 = vpop.f32.mrb[0].mxu0
        %v952 = vadd.f32 %v841, %v951
        %v953 = vpop.f32.mrb[0].mxu0
        %954 = vdwg.mxu0
        %955 = vmatprep.subr.mxu0 0.0
        %v956 = vand.u32 %v566, 4294901760
        %957 = vmatpush1.msra.mxu0 %v956
        %958 = vmatprep.subr.mxu0 0.0
        %v959 = vand.u32 %v567, 4294901760
        %960 = vmatpush1.msra.mxu0 %v959
        %961 = vmatprep.subr.mxu0 0.0
        %v962 = vand.u32 %v568, 4294901760
        %963 = vmatpush1.msra.mxu0 %v962
        %964 = vmatprep.subr.mxu0 0.0
        %v965 = vand.u32 %v569, 4294901760
        %966 = vmatpush1.msra.mxu0 %v965
        %967 = vmatprep.subr.mxu0 0.0
        %v968 = vand.u32 %v570, 4294901760
        %969 = vmatpush1.msra.mxu0 %v968
        %970 = vmatprep.subr.mxu0 0.0
        %v971 = vand.u32 %v571, 4294901760
        %972 = vmatpush1.msra.mxu0 %v971
        %973 = vmatprep.subr.mxu0 0.0
        %v974 = vand.u32 %v572, 4294901760
        %975 = vmatpush1.msra.mxu0 %v974
        %976 = vmatprep.subr.mxu0 0.0
        %v977 = vand.u32 %v573, 4294901760
        %978 = vmatpush1.msra.mxu0 %v977
        %979 = vmatprep.subr.mxu0 0.0
        %v980 = vand.u32 %v574, 4294901760
        %981 = vmatpush1.msra.mxu0 %v980
        %982 = vmatprep.subr.mxu0 0.0
        %v983 = vand.u32 %v575, 4294901760
        %984 = vmatpush1.msra.mxu0 %v983
        %985 = vmatprep.subr.mxu0 0.0
        %v986 = vand.u32 %v576, 4294901760
        %987 = vmatpush1.msra.mxu0 %v986
        %988 = vmatprep.subr.mxu0 0.0
        %v989 = vand.u32 %v577, 4294901760
        %990 = vmatpush1.msra.mxu0 %v989
        %991 = vmatprep.subr.mxu0 0.0
        %v992 = vand.u32 %v578, 4294901760
        %993 = vmatpush1.msra.mxu0 %v992
        %994 = vmatprep.subr.mxu0 0.0
        %v995 = vand.u32 %v579, 4294901760
        %996 = vmatpush1.msra.mxu0 %v995
        %997 = vmatprep.subr.mxu0 0.0
        %v998 = vand.u32 %v580, 4294901760
        %999 = vmatpush1.msra.mxu0 %v998
        %1000 = vmatprep.subr.mxu0 0.0
        %v1001 = vand.u32 %v581, 4294901760
        %1002 = vmatpush1.msra.mxu0 %v1001
        %1003 = vmatprep.subr.mxu0 0.0
        %1004 = vmatpush1.msra.mxu0 0.0
        %1005 = vmatprep.subr.mxu0 0.0
        %1006 = vmatpush1.msra.mxu0 0.0
        %1007 = vmatprep.subr.mxu0 0.0
        %1008 = vmatpush1.msra.mxu0 0.0
        %1009 = vmatprep.subr.mxu0 0.0
        %1010 = vmatpush1.msra.mxu0 0.0
        %1011 = vmatprep.subr.mxu0 0.0
        %1012 = vmatpush1.msra.mxu0 0.0
        %1013 = vmatprep.subr.mxu0 0.0
        %1014 = vmatpush1.msra.mxu0 0.0
        %1015 = vmatprep.subr.mxu0 0.0
        %1016 = vmatpush1.msra.mxu0 0.0
        %1017 = vmatprep.subr.mxu0 0.0
        %1018 = vmatpush1.msra.mxu0 0.0
        %1019 = vmatprep.subr.mxu0 0.0
        %1020 = vmatpush1.msra.mxu0 0.0
        %1021 = vmatprep.subr.mxu0 0.0
        %1022 = vmatpush1.msra.mxu0 0.0
        %1023 = vmatprep.subr.mxu0 0.0
        %1024 = vmatpush1.msra.mxu0 0.0
        %1025 = vmatprep.subr.mxu0 0.0
        %1026 = vmatpush1.msra.mxu0 0.0
        %1027 = vmatprep.subr.mxu0 0.0
        %1028 = vmatpush1.msra.mxu0 0.0
        %1029 = vmatprep.subr.mxu0 0.0
        %1030 = vmatpush1.msra.mxu0 0.0
        %1031 = vmatprep.subr.mxu0 0.0
        %1032 = vmatpush1.msra.mxu0 0.0
        %1033 = vmatprep.subr.mxu0 0.0
        %1034 = vmatpush1.msra.mxu0 0.0
        %1035 = vmatprep.mubr.f32.mxu0 0.0
        %v1036 = vand.u32 %v556, 4294901760
        %v1037 = vsub.f32 %v556, %v1036
        %v1038 = vand.u32 %v1037, 4294901760
        %1039 = vmatmul.mubr.f32.gmra.mrb[0].mxu0 %v1038
        %v1040 = vpop.f32.mrb[0].mxu0
        %v1041 = vadd.f32 %v945, %v1040
        %v1042 = vpop.f32.mrb[0].mxu0
        %1043 = vmatprep.mubr.f32.mxu0 0.0
        %v1044 = vand.u32 %v557, 4294901760
        %v1045 = vsub.f32 %v557, %v1044
        %v1046 = vand.u32 %v1045, 4294901760
        %1047 = vmatmul.mubr.f32.gmra.mrb[0].mxu0 %v1046
        %v1048 = vpop.f32.mrb[0].mxu0
        %v1049 = vadd.f32 %v952, %v1048
        %v1050 = vpop.f32.mrb[0].mxu0
        %1051 = vdwg.mxu0
        %1052 = vmatprep.subr.mxu0 0.0
        %v1053 = vand.u32 %v566, 4294901760
        %v1054 = vsub.f32 %v566, %v1053
        %v1055 = vand.u32 %v1054, 4294901760
        %1056 = vmatpush1.msra.mxu0 %v1055
        %1057 = vmatprep.subr.mxu0 0.0
        %v1058 = vand.u32 %v567, 4294901760
        %v1059 = vsub.f32 %v567, %v1058
        %v1060 = vand.u32 %v1059, 4294901760
        %1061 = vmatpush1.msra.mxu0 %v1060
        %1062 = vmatprep.subr.mxu0 0.0
        %v1063 = vand.u32 %v568, 4294901760
        %v1064 = vsub.f32 %v568, %v1063
        %v1065 = vand.u32 %v1064, 4294901760
        %1066 = vmatpush1.msra.mxu0 %v1065
        %1067 = vmatprep.subr.mxu0 0.0
        %v1068 = vand.u32 %v569, 4294901760
        %v1069 = vsub.f32 %v569, %v1068
        %v1070 = vand.u32 %v1069, 4294901760
        %1071 = vmatpush1.msra.mxu0 %v1070
        %1072 = vmatprep.subr.mxu0 0.0
        %v1073 = vand.u32 %v570, 4294901760
        %v1074 = vsub.f32 %v570, %v1073
        %v1075 = vand.u32 %v1074, 4294901760
        %1076 = vmatpush1.msra.mxu0 %v1075
        %1077 = vmatprep.subr.mxu0 0.0
        %v1078 = vand.u32 %v571, 4294901760
        %v1079 = vsub.f32 %v571, %v1078
        %v1080 = vand.u32 %v1079, 4294901760
        %1081 = vmatpush1.msra.mxu0 %v1080
        %1082 = vmatprep.subr.mxu0 0.0
        %v1083 = vand.u32 %v572, 4294901760
        %v1084 = vsub.f32 %v572, %v1083
        %v1085 = vand.u32 %v1084, 4294901760
        %1086 = vmatpush1.msra.mxu0 %v1085
        %1087 = vmatprep.subr.mxu0 0.0
        %v1088 = vand.u32 %v573, 4294901760
        %v1089 = vsub.f32 %v573, %v1088
        %v1090 = vand.u32 %v1089, 4294901760
        %1091 = vmatpush1.msra.mxu0 %v1090
        %1092 = vmatprep.subr.mxu0 0.0
        %v1093 = vand.u32 %v574, 4294901760
        %v1094 = vsub.f32 %v574, %v1093
        %v1095 = vand.u32 %v1094, 4294901760
        %1096 = vmatpush1.msra.mxu0 %v1095
        %1097 = vmatprep.subr.mxu0 0.0
        %v1098 = vand.u32 %v575, 4294901760
        %v1099 = vsub.f32 %v575, %v1098
        %v1100 = vand.u32 %v1099, 4294901760
        %1101 = vmatpush1.msra.mxu0 %v1100
        %1102 = vmatprep.subr.mxu0 0.0
        %v1103 = vand.u32 %v576, 4294901760
        %v1104 = vsub.f32 %v576, %v1103
        %v1105 = vand.u32 %v1104, 4294901760
        %1106 = vmatpush1.msra.mxu0 %v1105
        %1107 = vmatprep.subr.mxu0 0.0
        %v1108 = vand.u32 %v577, 4294901760
        %v1109 = vsub.f32 %v577, %v1108
        %v1110 = vand.u32 %v1109, 4294901760
        %1111 = vmatpush1.msra.mxu0 %v1110
        %1112 = vmatprep.subr.mxu0 0.0
        %v1113 = vand.u32 %v578, 4294901760
        %v1114 = vsub.f32 %v578, %v1113
        %v1115 = vand.u32 %v1114, 4294901760
        %1116 = vmatpush1.msra.mxu0 %v1115
        %1117 = vmatprep.subr.mxu0 0.0
        %v1118 = vand.u32 %v579, 4294901760
        %v1119 = vsub.f32 %v579, %v1118
        %v1120 = vand.u32 %v1119, 4294901760
        %1121 = vmatpush1.msra.mxu0 %v1120
        %1122 = vmatprep.subr.mxu0 0.0
        %v1123 = vand.u32 %v580, 4294901760
        %v1124 = vsub.f32 %v580, %v1123
        %v1125 = vand.u32 %v1124, 4294901760
        %1126 = vmatpush1.msra.mxu0 %v1125
        %1127 = vmatprep.subr.mxu0 0.0
        %v1128 = vand.u32 %v581, 4294901760
        %v1129 = vsub.f32 %v581, %v1128
        %v1130 = vand.u32 %v1129, 4294901760
        %1131 = vmatpush1.msra.mxu0 %v1130
        %1132 = vmatprep.subr.mxu0 0.0
        %1133 = vmatpush1.msra.mxu0 0.0
        %1134 = vmatprep.subr.mxu0 0.0
        %1135 = vmatpush1.msra.mxu0 0.0
        %1136 = vmatprep.subr.mxu0 0.0
        %1137 = vmatpush1.msra.mxu0 0.0
        %1138 = vmatprep.subr.mxu0 0.0
        %1139 = vmatpush1.msra.mxu0 0.0
        %1140 = vmatprep.subr.mxu0 0.0
        %1141 = vmatpush1.msra.mxu0 0.0
        %1142 = vmatprep.subr.mxu0 0.0
        %1143 = vmatpush1.msra.mxu0 0.0
        %1144 = vmatprep.subr.mxu0 0.0
        %1145 = vmatpush1.msra.mxu0 0.0
        %1146 = vmatprep.subr.mxu0 0.0
        %1147 = vmatpush1.msra.mxu0 0.0
        %1148 = vmatprep.subr.mxu0 0.0
        %1149 = vmatpush1.msra.mxu0 0.0
        %1150 = vmatprep.subr.mxu0 0.0
        %1151 = vmatpush1.msra.mxu0 0.0
        %1152 = vmatprep.subr.mxu0 0.0
        %1153 = vmatpush1.msra.mxu0 0.0
        %1154 = vmatprep.subr.mxu0 0.0
        %1155 = vmatpush1.msra.mxu0 0.0
        %1156 = vmatprep.subr.mxu0 0.0
        %1157 = vmatpush1.msra.mxu0 0.0
        %1158 = vmatprep.subr.mxu0 0.0
        %1159 = vmatpush1.msra.mxu0 0.0
        %1160 = vmatprep.subr.mxu0 0.0
        %1161 = vmatpush1.msra.mxu0 0.0
        %1162 = vmatprep.subr.mxu0 0.0
        %1163 = vmatpush1.msra.mxu0 0.0
        %1164 = vmatprep.mubr.f32.mxu0 0.0
        %v1165 = vand.u32 %v556, 4294901760
        %1166 = vmatmul.mubr.f32.gmra.mrb[0].mxu0 %v1165
        %v1167 = vpop.f32.mrb[0].mxu0
        %v1168 = vadd.f32 %v1041, %v1167
        %v1169 = vpop.f32.mrb[0].mxu0
        %1170 = vmatprep.mubr.f32.mxu0 0.0
        %v1171 = vand.u32 %v557, 4294901760
        %1172 = vmatmul.mubr.f32.gmra.mrb[0].mxu0 %v1171
        %v1173 = vpop.f32.mrb[0].mxu0
        %v1174 = vadd.f32 %v1049, %v1173
        %v1175 = vpop.f32.mrb[0].mxu0
        %1176 = vdwg.mxu0
        %1177 = vmatprep.subr.mxu0 0.0
        %v1178 = vand.u32 %v566, 4294901760
        %1179 = vmatpush1.msra.mxu0 %v1178
        %1180 = vmatprep.subr.mxu0 0.0
        %v1181 = vand.u32 %v567, 4294901760
        %1182 = vmatpush1.msra.mxu0 %v1181
        %1183 = vmatprep.subr.mxu0 0.0
        %v1184 = vand.u32 %v568, 4294901760
        %1185 = vmatpush1.msra.mxu0 %v1184
        %1186 = vmatprep.subr.mxu0 0.0
        %v1187 = vand.u32 %v569, 4294901760
        %1188 = vmatpush1.msra.mxu0 %v1187
        %1189 = vmatprep.subr.mxu0 0.0
        %v1190 = vand.u32 %v570, 4294901760
        %1191 = vmatpush1.msra.mxu0 %v1190
        %1192 = vmatprep.subr.mxu0 0.0
        %v1193 = vand.u32 %v571, 4294901760
        %1194 = vmatpush1.msra.mxu0 %v1193
        %1195 = vmatprep.subr.mxu0 0.0
        %v1196 = vand.u32 %v572, 4294901760
        %1197 = vmatpush1.msra.mxu0 %v1196
        %1198 = vmatprep.subr.mxu0 0.0
        %v1199 = vand.u32 %v573, 4294901760
        %1200 = vmatpush1.msra.mxu0 %v1199
        %1201 = vmatprep.subr.mxu0 0.0
        %v1202 = vand.u32 %v574, 4294901760
        %1203 = vmatpush1.msra.mxu0 %v1202
        %1204 = vmatprep.subr.mxu0 0.0
        %v1205 = vand.u32 %v575, 4294901760
        %1206 = vmatpush1.msra.mxu0 %v1205
        %1207 = vmatprep.subr.mxu0 0.0
        %v1208 = vand.u32 %v576, 4294901760
        %1209 = vmatpush1.msra.mxu0 %v1208
        %1210 = vmatprep.subr.mxu0 0.0
        %v1211 = vand.u32 %v577, 4294901760
        %1212 = vmatpush1.msra.mxu0 %v1211
        %1213 = vmatprep.subr.mxu0 0.0
        %v1214 = vand.u32 %v578, 4294901760
        %1215 = vmatpush1.msra.mxu0 %v1214
        %1216 = vmatprep.subr.mxu0 0.0
        %v1217 = vand.u32 %v579, 4294901760
        %1218 = vmatpush1.msra.mxu0 %v1217
        %1219 = vmatprep.subr.mxu0 0.0
        %v1220 = vand.u32 %v580, 4294901760
        %1221 = vmatpush1.msra.mxu0 %v1220
        %1222 = vmatprep.subr.mxu0 0.0
        %v1223 = vand.u32 %v581, 4294901760
        %1224 = vmatpush1.msra.mxu0 %v1223
        %1225 = vmatprep.subr.mxu0 0.0
        %1226 = vmatpush1.msra.mxu0 0.0
        %1227 = vmatprep.subr.mxu0 0.0
        %1228 = vmatpush1.msra.mxu0 0.0
        %1229 = vmatprep.subr.mxu0 0.0
        %1230 = vmatpush1.msra.mxu0 0.0
        %1231 = vmatprep.subr.mxu0 0.0
        %1232 = vmatpush1.msra.mxu0 0.0
        %1233 = vmatprep.subr.mxu0 0.0
        %1234 = vmatpush1.msra.mxu0 0.0
        %1235 = vmatprep.subr.mxu0 0.0
        %1236 = vmatpush1.msra.mxu0 0.0
        %1237 = vmatprep.subr.mxu0 0.0
        %1238 = vmatpush1.msra.mxu0 0.0
        %1239 = vmatprep.subr.mxu0 0.0
        %1240 = vmatpush1.msra.mxu0 0.0
        %1241 = vmatprep.subr.mxu0 0.0
        %1242 = vmatpush1.msra.mxu0 0.0
        %1243 = vmatprep.subr.mxu0 0.0
        %1244 = vmatpush1.msra.mxu0 0.0
        %1245 = vmatprep.subr.mxu0 0.0
        %1246 = vmatpush1.msra.mxu0 0.0
        %1247 = vmatprep.subr.mxu0 0.0
        %1248 = vmatpush1.msra.mxu0 0.0
        %1249 = vmatprep.subr.mxu0 0.0
        %1250 = vmatpush1.msra.mxu0 0.0
        %1251 = vmatprep.subr.mxu0 0.0
        %1252 = vmatpush1.msra.mxu0 0.0
        %1253 = vmatprep.subr.mxu0 0.0
        %1254 = vmatpush1.msra.mxu0 0.0
        %1255 = vmatprep.subr.mxu0 0.0
        %1256 = vmatpush1.msra.mxu0 0.0
        %1257 = vmatprep.mubr.f32.mxu0 0.0
        %v1258 = vand.u32 %v556, 4294901760
        %1259 = vmatmul.mubr.f32.gmra.mrb[0].mxu0 %v1258
        %v1260 = vpop.f32.mrb[0].mxu0
        %v1261 = vadd.f32 %v1168, %v1260
        %v1262 = vpop.f32.mrb[0].mxu0
        %1263 = vmatprep.mubr.f32.mxu0 0.0
        %v1264 = vand.u32 %v557, 4294901760
        %1265 = vmatmul.mubr.f32.gmra.mrb[0].mxu0 %v1264
        %v1266 = vpop.f32.mrb[0].mxu0
        %v1267 = vadd.f32 %v1174, %v1266
        %v1268 = vpop.f32.mrb[0].mxu0
        %1269 = vdwg.mxu0
        %1271 = vset.pattern.permute.xlu0 0
        %1272 = vperm.xlu0 %1271, %v534
        %v1273 = vpop.permute.xlu0 %1272
        %1276 = vset.pattern.permute.xlu0 0
        %1277 = vperm.xlu0 %1276, %v535
        %v1278 = vpop.permute.xlu0 %1277
        %v1280 = vmul.f32 %v1261, %v1273
        %v1281 = vmul.f32 %v1267, %v1278
        %vm1284 = vcmask 1040384
        %v1285 = vrot.slane %v1280, 7
        %v1286 = vrot.slane %v1281, 7
        %v1287 = vsel %vm1284, %v1285, %v1286
        %v1291 = vsel %vm1284, 0.0, %v1285
        %v1292 = vsel %vm1284, %v1286, 0.0
        %vm1295 = vcmask 1046528
        %v1296 = vrot.slane %v1291, 1
        %v1297 = vrot.slane %v1287, 1
        %v1298 = vsel %vm1295, %v1296, %v1297
        %v1299 = vrot.slane %v1292, 1
        %v1300 = vsel %vm1295, %v1297, %v1299
        %1301 = vrot.lane.b32.xlu0 %v1298, 32
        %v1302 = vpop.permute.xlu0 %1301
        %1303 = vrot.lane.b32.xlu0 %v1300, 32
        %v1304 = vpop.permute.xlu0 %1303
        %vm1307 = vcmask 1045504
        %v1308 = vrot.slane %v1291, 2
        %v1309 = vrot.slane %v1287, 2
        %v1310 = vsel %vm1307, %v1308, %v1309
        %v1311 = vrot.slane %v1292, 2
        %v1312 = vsel %vm1307, %v1309, %v1311
        %1313 = vrot.lane.b32.xlu0 %v1310, 64
        %v1314 = vpop.permute.xlu0 %1313
        %1315 = vrot.lane.b32.xlu0 %v1312, 64
        %v1316 = vpop.permute.xlu0 %1315
        %vm1319 = vcmask 261120
        %v1320 = vsel %vm1319, %v1291, %v1302
        %v1321 = vsel %vm1319, %v1287, %v1304
        %vm1322 = vcmask 523264
        %v1323 = vsel %vm1322, %v1320, %v1314
        %v1324 = vsel %vm1322, %v1321, %v1316
        %s1325 = smul.u32 %s36, 2
        %s1326 = smul.u32 %s1325, 96
        %s1327 = scalar_lea.vmem %s7, %s1326
        %v1328 = vld [vmem:[%s1327] sm:$0xff]
        %v1329 = vld [vmem:[%s1327 + $0x8] sm:$0xff]
        %v1330 = vld [vmem:[%s1327 + $0x10] sm:$0xff]
        %v1331 = vld [vmem:[%s1327 + $0x18] sm:$0xff]
        %v1332 = vld [vmem:[%s1327 + $0x20] sm:$0xff]
        %v1333 = vld [vmem:[%s1327 + $0x28] sm:$0xff]
        %v1334 = vld [vmem:[%s1327 + $0x30] sm:$0xff]
        %v1335 = vld [vmem:[%s1327 + $0x38] sm:$0xff]
        %v1336 = vld [vmem:[%s1327 + $0x40] sm:$0xff]
        %v1337 = vld [vmem:[%s1327 + $0x48] sm:$0xff]
        %v1338 = vld [vmem:[%s1327 + $0x50] sm:$0xff]
        %v1339 = vld [vmem:[%s1327 + $0x58] sm:$0xff]
        %v1340 = vlaneseq
        %v1341 = vshrl.u32 %v1340, 7
        %v1342 = vsub.s32 0, %v1341
        %v1343 = vrot.slane %v563, %v1342
        %vm1344 = vcmask 785408
        %v1346 = vsel %vm1344, %v1323, 0
        %v1349 = vsel %vm1344, %v1324, 0
        %1351 = vmatprep.subr.mxu0 0.0
        %v1352 = vand.u32 %v1328, 4294901760
        %1353 = vmatpush1.msra.mxu0 %v1352
        %1354 = vmatprep.subr.mxu0 0.0
        %v1355 = vand.u32 %v1329, 4294901760
        %1356 = vmatpush1.msra.mxu0 %v1355
        %1357 = vmatprep.subr.mxu0 0.0
        %v1358 = vand.u32 %v1330, 4294901760
        %1359 = vmatpush1.msra.mxu0 %v1358
        %1360 = vmatprep.subr.mxu0 0.0
        %v1361 = vand.u32 %v1331, 4294901760
        %1362 = vmatpush1.msra.mxu0 %v1361
        %1363 = vmatprep.subr.mxu0 0.0
        %v1364 = vand.u32 %v1332, 4294901760
        %1365 = vmatpush1.msra.mxu0 %v1364
        %1366 = vmatprep.subr.mxu0 0.0
        %v1367 = vand.u32 %v1333, 4294901760
        %1368 = vmatpush1.msra.mxu0 %v1367
        %1369 = vmatprep.subr.mxu0 0.0
        %v1370 = vand.u32 %v1334, 4294901760
        %1371 = vmatpush1.msra.mxu0 %v1370
        %1372 = vmatprep.subr.mxu0 0.0
        %v1373 = vand.u32 %v1335, 4294901760
        %1374 = vmatpush1.msra.mxu0 %v1373
        %1375 = vmatprep.subr.mxu0 0.0
        %v1376 = vand.u32 %v1336, 4294901760
        %1377 = vmatpush1.msra.mxu0 %v1376
        %1378 = vmatprep.subr.mxu0 0.0
        %v1379 = vand.u32 %v1337, 4294901760
        %1380 = vmatpush1.msra.mxu0 %v1379
        %1381 = vmatprep.subr.mxu0 0.0
        %v1382 = vand.u32 %v1338, 4294901760
        %1383 = vmatpush1.msra.mxu0 %v1382
        %1384 = vmatprep.subr.mxu0 0.0
        %v1385 = vand.u32 %v1339, 4294901760
        %1386 = vmatpush1.msra.mxu0 %v1385
        %1387 = vmatprep.subr.mxu0 0.0
        %1388 = vmatpush1.msra.mxu0 0.0
        %1389 = vmatprep.subr.mxu0 0.0
        %1390 = vmatpush1.msra.mxu0 0.0
        %1391 = vmatprep.subr.mxu0 0.0
        %1392 = vmatpush1.msra.mxu0 0.0
        %1393 = vmatprep.subr.mxu0 0.0
        %1394 = vmatpush1.msra.mxu0 0.0
        %1395 = vmatprep.subr.mxu0 0.0
        %1396 = vmatpush1.msra.mxu0 0.0
        %1397 = vmatprep.subr.mxu0 0.0
        %1398 = vmatpush1.msra.mxu0 0.0
        %1399 = vmatprep.subr.mxu0 0.0
        %1400 = vmatpush1.msra.mxu0 0.0
        %1401 = vmatprep.subr.mxu0 0.0
        %1402 = vmatpush1.msra.mxu0 0.0
        %1403 = vmatprep.subr.mxu0 0.0
        %1404 = vmatpush1.msra.mxu0 0.0
        %1405 = vmatprep.subr.mxu0 0.0
        %1406 = vmatpush1.msra.mxu0 0.0
        %1407 = vmatprep.subr.mxu0 0.0
        %1408 = vmatpush1.msra.mxu0 0.0
        %1409 = vmatprep.subr.mxu0 0.0
        %1410 = vmatpush1.msra.mxu0 0.0
        %1411 = vmatprep.subr.mxu0 0.0
        %1412 = vmatpush1.msra.mxu0 0.0
        %1413 = vmatprep.subr.mxu0 0.0
        %1414 = vmatpush1.msra.mxu0 0.0
        %1415 = vmatprep.subr.mxu0 0.0
        %1416 = vmatpush1.msra.mxu0 0.0
        %1417 = vmatprep.subr.mxu0 0.0
        %1418 = vmatpush1.msra.mxu0 0.0
        %1419 = vmatprep.subr.mxu0 0.0
        %1420 = vmatpush1.msra.mxu0 0.0
        %1421 = vmatprep.subr.mxu0 0.0
        %1422 = vmatpush1.msra.mxu0 0.0
        %1423 = vmatprep.subr.mxu0 0.0
        %1424 = vmatpush1.msra.mxu0 0.0
        %1425 = vmatprep.subr.mxu0 0.0
        %1426 = vmatpush1.msra.mxu0 0.0
        %1427 = vmatprep.mubr.f32.mxu0 0.0
        %v1428 = vand.u32 %v1346, 4294901760
        %v1429 = vsub.f32 %v1346, %v1428
        %v1430 = vand.u32 %v1429, 4294901760
        %v1431 = vsub.f32 %v1429, %v1430
        %v1432 = vand.u32 %v1431, 4294901760
        %1433 = vmatmul.mubr.f32.gmra.mrb[0].mxu0 %v1432
        %v1434 = vpop.f32.mrb[0].mxu0
        %v1435 = vadd.f32 %v1343, %v1434
        %v1436 = vpop.f32.mrb[0].mxu0
        %1437 = vmatprep.mubr.f32.mxu0 0.0
        %v1438 = vand.u32 %v1349, 4294901760
        %v1439 = vsub.f32 %v1349, %v1438
        %v1440 = vand.u32 %v1439, 4294901760
        %v1441 = vsub.f32 %v1439, %v1440
        %v1442 = vand.u32 %v1441, 4294901760
        %1443 = vmatmul.mubr.f32.gmra.mrb[0].mxu0 %v1442
        %v1444 = vpop.f32.mrb[0].mxu0
        %v1445 = vadd.f32 %v1343, %v1444
        %v1446 = vpop.f32.mrb[0].mxu0
        %1447 = vdwg.mxu0
        %1448 = vmatprep.subr.mxu0 0.0
        %v1449 = vand.u32 %v1328, 4294901760
        %v1450 = vsub.f32 %v1328, %v1449
        %v1451 = vand.u32 %v1450, 4294901760
        %v1452 = vsub.f32 %v1450, %v1451
        %v1453 = vand.u32 %v1452, 4294901760
        %1454 = vmatpush1.msra.mxu0 %v1453
        %1455 = vmatprep.subr.mxu0 0.0
        %v1456 = vand.u32 %v1329, 4294901760
        %v1457 = vsub.f32 %v1329, %v1456
        %v1458 = vand.u32 %v1457, 4294901760
        %v1459 = vsub.f32 %v1457, %v1458
        %v1460 = vand.u32 %v1459, 4294901760
        %1461 = vmatpush1.msra.mxu0 %v1460
        %1462 = vmatprep.subr.mxu0 0.0
        %v1463 = vand.u32 %v1330, 4294901760
        %v1464 = vsub.f32 %v1330, %v1463
        %v1465 = vand.u32 %v1464, 4294901760
        %v1466 = vsub.f32 %v1464, %v1465
        %v1467 = vand.u32 %v1466, 4294901760
        %1468 = vmatpush1.msra.mxu0 %v1467
        %1469 = vmatprep.subr.mxu0 0.0
        %v1470 = vand.u32 %v1331, 4294901760
        %v1471 = vsub.f32 %v1331, %v1470
        %v1472 = vand.u32 %v1471, 4294901760
        %v1473 = vsub.f32 %v1471, %v1472
        %v1474 = vand.u32 %v1473, 4294901760
        %1475 = vmatpush1.msra.mxu0 %v1474
        %1476 = vmatprep.subr.mxu0 0.0
        %v1477 = vand.u32 %v1332, 4294901760
        %v1478 = vsub.f32 %v1332, %v1477
        %v1479 = vand.u32 %v1478, 4294901760
        %v1480 = vsub.f32 %v1478, %v1479
        %v1481 = vand.u32 %v1480, 4294901760
        %1482 = vmatpush1.msra.mxu0 %v1481
        %1483 = vmatprep.subr.mxu0 0.0
        %v1484 = vand.u32 %v1333, 4294901760
        %v1485 = vsub.f32 %v1333, %v1484
        %v1486 = vand.u32 %v1485, 4294901760
        %v1487 = vsub.f32 %v1485, %v1486
        %v1488 = vand.u32 %v1487, 4294901760
        %1489 = vmatpush1.msra.mxu0 %v1488
        %1490 = vmatprep.subr.mxu0 0.0
        %v1491 = vand.u32 %v1334, 4294901760
        %v1492 = vsub.f32 %v1334, %v1491
        %v1493 = vand.u32 %v1492, 4294901760
        %v1494 = vsub.f32 %v1492, %v1493
        %v1495 = vand.u32 %v1494, 4294901760
        %1496 = vmatpush1.msra.mxu0 %v1495
        %1497 = vmatprep.subr.mxu0 0.0
        %v1498 = vand.u32 %v1335, 4294901760
        %v1499 = vsub.f32 %v1335, %v1498
        %v1500 = vand.u32 %v1499, 4294901760
        %v1501 = vsub.f32 %v1499, %v1500
        %v1502 = vand.u32 %v1501, 4294901760
        %1503 = vmatpush1.msra.mxu0 %v1502
        %1504 = vmatprep.subr.mxu0 0.0
        %v1505 = vand.u32 %v1336, 4294901760
        %v1506 = vsub.f32 %v1336, %v1505
        %v1507 = vand.u32 %v1506, 4294901760
        %v1508 = vsub.f32 %v1506, %v1507
        %v1509 = vand.u32 %v1508, 4294901760
        %1510 = vmatpush1.msra.mxu0 %v1509
        %1511 = vmatprep.subr.mxu0 0.0
        %v1512 = vand.u32 %v1337, 4294901760
        %v1513 = vsub.f32 %v1337, %v1512
        %v1514 = vand.u32 %v1513, 4294901760
        %v1515 = vsub.f32 %v1513, %v1514
        %v1516 = vand.u32 %v1515, 4294901760
        %1517 = vmatpush1.msra.mxu0 %v1516
        %1518 = vmatprep.subr.mxu0 0.0
        %v1519 = vand.u32 %v1338, 4294901760
        %v1520 = vsub.f32 %v1338, %v1519
        %v1521 = vand.u32 %v1520, 4294901760
        %v1522 = vsub.f32 %v1520, %v1521
        %v1523 = vand.u32 %v1522, 4294901760
        %1524 = vmatpush1.msra.mxu0 %v1523
        %1525 = vmatprep.subr.mxu0 0.0
        %v1526 = vand.u32 %v1339, 4294901760
        %v1527 = vsub.f32 %v1339, %v1526
        %v1528 = vand.u32 %v1527, 4294901760
        %v1529 = vsub.f32 %v1527, %v1528
        %v1530 = vand.u32 %v1529, 4294901760
        %1531 = vmatpush1.msra.mxu0 %v1530
        %1532 = vmatprep.subr.mxu0 0.0
        %1533 = vmatpush1.msra.mxu0 0.0
        %1534 = vmatprep.subr.mxu0 0.0
        %1535 = vmatpush1.msra.mxu0 0.0
        %1536 = vmatprep.subr.mxu0 0.0
        %1537 = vmatpush1.msra.mxu0 0.0
        %1538 = vmatprep.subr.mxu0 0.0
        %1539 = vmatpush1.msra.mxu0 0.0
        %1540 = vmatprep.subr.mxu0 0.0
        %1541 = vmatpush1.msra.mxu0 0.0
        %1542 = vmatprep.subr.mxu0 0.0
        %1543 = vmatpush1.msra.mxu0 0.0
        %1544 = vmatprep.subr.mxu0 0.0
        %1545 = vmatpush1.msra.mxu0 0.0
        %1546 = vmatprep.subr.mxu0 0.0
        %1547 = vmatpush1.msra.mxu0 0.0
        %1548 = vmatprep.subr.mxu0 0.0
        %1549 = vmatpush1.msra.mxu0 0.0
        %1550 = vmatprep.subr.mxu0 0.0
        %1551 = vmatpush1.msra.mxu0 0.0
        %1552 = vmatprep.subr.mxu0 0.0
        %1553 = vmatpush1.msra.mxu0 0.0
        %1554 = vmatprep.subr.mxu0 0.0
        %1555 = vmatpush1.msra.mxu0 0.0
        %1556 = vmatprep.subr.mxu0 0.0
        %1557 = vmatpush1.msra.mxu0 0.0
        %1558 = vmatprep.subr.mxu0 0.0
        %1559 = vmatpush1.msra.mxu0 0.0
        %1560 = vmatprep.subr.mxu0 0.0
        %1561 = vmatpush1.msra.mxu0 0.0
        %1562 = vmatprep.subr.mxu0 0.0
        %1563 = vmatpush1.msra.mxu0 0.0
        %1564 = vmatprep.subr.mxu0 0.0
        %1565 = vmatpush1.msra.mxu0 0.0
        %1566 = vmatprep.subr.mxu0 0.0
        %1567 = vmatpush1.msra.mxu0 0.0
        %1568 = vmatprep.subr.mxu0 0.0
        %1569 = vmatpush1.msra.mxu0 0.0
        %1570 = vmatprep.subr.mxu0 0.0
        %1571 = vmatpush1.msra.mxu0 0.0
        %1572 = vmatprep.mubr.f32.mxu0 0.0
        %v1573 = vand.u32 %v1346, 4294901760
        %1574 = vmatmul.mubr.f32.gmra.mrb[0].mxu0 %v1573
        %v1575 = vpop.f32.mrb[0].mxu0
        %v1576 = vadd.f32 %v1435, %v1575
        %v1577 = vpop.f32.mrb[0].mxu0
        %1578 = vmatprep.mubr.f32.mxu0 0.0
        %v1579 = vand.u32 %v1349, 4294901760
        %1580 = vmatmul.mubr.f32.gmra.mrb[0].mxu0 %v1579
        %v1581 = vpop.f32.mrb[0].mxu0
        %v1582 = vadd.f32 %v1445, %v1581
        %v1583 = vpop.f32.mrb[0].mxu0
        %1584 = vdwg.mxu0
        %1585 = vmatprep.subr.mxu0 0.0
        %v1586 = vand.u32 %v1328, 4294901760
        %v1587 = vsub.f32 %v1328, %v1586
        %1588 = vmatpush1.msra.mxu0 %v1587
        %1589 = vmatprep.subr.mxu0 0.0
        %v1590 = vand.u32 %v1329, 4294901760
        %v1591 = vsub.f32 %v1329, %v1590
        %1592 = vmatpush1.msra.mxu0 %v1591
        %1593 = vmatprep.subr.mxu0 0.0
        %v1594 = vand.u32 %v1330, 4294901760
        %v1595 = vsub.f32 %v1330, %v1594
        %1596 = vmatpush1.msra.mxu0 %v1595
        %1597 = vmatprep.subr.mxu0 0.0
        %v1598 = vand.u32 %v1331, 4294901760
        %v1599 = vsub.f32 %v1331, %v1598
        %1600 = vmatpush1.msra.mxu0 %v1599
        %1601 = vmatprep.subr.mxu0 0.0
        %v1602 = vand.u32 %v1332, 4294901760
        %v1603 = vsub.f32 %v1332, %v1602
        %1604 = vmatpush1.msra.mxu0 %v1603
        %1605 = vmatprep.subr.mxu0 0.0
        %v1606 = vand.u32 %v1333, 4294901760
        %v1607 = vsub.f32 %v1333, %v1606
        %1608 = vmatpush1.msra.mxu0 %v1607
        %1609 = vmatprep.subr.mxu0 0.0
        %v1610 = vand.u32 %v1334, 4294901760
        %v1611 = vsub.f32 %v1334, %v1610
        %1612 = vmatpush1.msra.mxu0 %v1611
        %1613 = vmatprep.subr.mxu0 0.0
        %v1614 = vand.u32 %v1335, 4294901760
        %v1615 = vsub.f32 %v1335, %v1614
        %1616 = vmatpush1.msra.mxu0 %v1615
        %1617 = vmatprep.subr.mxu0 0.0
        %v1618 = vand.u32 %v1336, 4294901760
        %v1619 = vsub.f32 %v1336, %v1618
        %1620 = vmatpush1.msra.mxu0 %v1619
        %1621 = vmatprep.subr.mxu0 0.0
        %v1622 = vand.u32 %v1337, 4294901760
        %v1623 = vsub.f32 %v1337, %v1622
        %1624 = vmatpush1.msra.mxu0 %v1623
        %1625 = vmatprep.subr.mxu0 0.0
        %v1626 = vand.u32 %v1338, 4294901760
        %v1627 = vsub.f32 %v1338, %v1626
        %1628 = vmatpush1.msra.mxu0 %v1627
        %1629 = vmatprep.subr.mxu0 0.0
        %v1630 = vand.u32 %v1339, 4294901760
        %v1631 = vsub.f32 %v1339, %v1630
        %1632 = vmatpush1.msra.mxu0 %v1631
        %1633 = vmatprep.subr.mxu0 0.0
        %1634 = vmatpush1.msra.mxu0 0.0
        %1635 = vmatprep.subr.mxu0 0.0
        %1636 = vmatpush1.msra.mxu0 0.0
        %1637 = vmatprep.subr.mxu0 0.0
        %1638 = vmatpush1.msra.mxu0 0.0
        %1639 = vmatprep.subr.mxu0 0.0
        %1640 = vmatpush1.msra.mxu0 0.0
        %1641 = vmatprep.subr.mxu0 0.0
        %1642 = vmatpush1.msra.mxu0 0.0
        %1643 = vmatprep.subr.mxu0 0.0
        %1644 = vmatpush1.msra.mxu0 0.0
        %1645 = vmatprep.subr.mxu0 0.0
        %1646 = vmatpush1.msra.mxu0 0.0
        %1647 = vmatprep.subr.mxu0 0.0
        %1648 = vmatpush1.msra.mxu0 0.0
        %1649 = vmatprep.subr.mxu0 0.0
        %1650 = vmatpush1.msra.mxu0 0.0
        %1651 = vmatprep.subr.mxu0 0.0
        %1652 = vmatpush1.msra.mxu0 0.0
        %1653 = vmatprep.subr.mxu0 0.0
        %1654 = vmatpush1.msra.mxu0 0.0
        %1655 = vmatprep.subr.mxu0 0.0
        %1656 = vmatpush1.msra.mxu0 0.0
        %1657 = vmatprep.subr.mxu0 0.0
        %1658 = vmatpush1.msra.mxu0 0.0
        %1659 = vmatprep.subr.mxu0 0.0
        %1660 = vmatpush1.msra.mxu0 0.0
        %1661 = vmatprep.subr.mxu0 0.0
        %1662 = vmatpush1.msra.mxu0 0.0
        %1663 = vmatprep.subr.mxu0 0.0
        %1664 = vmatpush1.msra.mxu0 0.0
        %1665 = vmatprep.subr.mxu0 0.0
        %1666 = vmatpush1.msra.mxu0 0.0
        %1667 = vmatprep.subr.mxu0 0.0
        %1668 = vmatpush1.msra.mxu0 0.0
        %1669 = vmatprep.subr.mxu0 0.0
        %1670 = vmatpush1.msra.mxu0 0.0
        %1671 = vmatprep.subr.mxu0 0.0
        %1672 = vmatpush1.msra.mxu0 0.0
        %1673 = vmatprep.mubr.f32.mxu0 0.0
        %v1674 = vand.u32 %v1346, 4294901760
        %v1675 = vsub.f32 %v1346, %v1674
        %1676 = vmatmul.mubr.f32.gmra.mrb[0].mxu0 %v1675
        %v1677 = vpop.f32.mrb[0].mxu0
        %v1678 = vadd.f32 %v1576, %v1677
        %v1679 = vpop.f32.mrb[0].mxu0
        %1680 = vmatprep.mubr.f32.mxu0 0.0
        %v1681 = vand.u32 %v1349, 4294901760
        %v1682 = vsub.f32 %v1349, %v1681
        %1683 = vmatmul.mubr.f32.gmra.mrb[0].mxu0 %v1682
        %v1684 = vpop.f32.mrb[0].mxu0
        %v1685 = vadd.f32 %v1582, %v1684
        %v1686 = vpop.f32.mrb[0].mxu0
        %1687 = vdwg.mxu0
        %1688 = vmatprep.subr.mxu0 0.0
        %v1689 = vand.u32 %v1328, 4294901760
        %1690 = vmatpush1.msra.mxu0 %v1689
        %1691 = vmatprep.subr.mxu0 0.0
        %v1692 = vand.u32 %v1329, 4294901760
        %1693 = vmatpush1.msra.mxu0 %v1692
        %1694 = vmatprep.subr.mxu0 0.0
        %v1695 = vand.u32 %v1330, 4294901760
        %1696 = vmatpush1.msra.mxu0 %v1695
        %1697 = vmatprep.subr.mxu0 0.0
        %v1698 = vand.u32 %v1331, 4294901760
        %1699 = vmatpush1.msra.mxu0 %v1698
        %1700 = vmatprep.subr.mxu0 0.0
        %v1701 = vand.u32 %v1332, 4294901760
        %1702 = vmatpush1.msra.mxu0 %v1701
        %1703 = vmatprep.subr.mxu0 0.0
        %v1704 = vand.u32 %v1333, 4294901760
        %1705 = vmatpush1.msra.mxu0 %v1704
        %1706 = vmatprep.subr.mxu0 0.0
        %v1707 = vand.u32 %v1334, 4294901760
        %1708 = vmatpush1.msra.mxu0 %v1707
        %1709 = vmatprep.subr.mxu0 0.0
        %v1710 = vand.u32 %v1335, 4294901760
        %1711 = vmatpush1.msra.mxu0 %v1710
        %1712 = vmatprep.subr.mxu0 0.0
        %v1713 = vand.u32 %v1336, 4294901760
        %1714 = vmatpush1.msra.mxu0 %v1713
        %1715 = vmatprep.subr.mxu0 0.0
        %v1716 = vand.u32 %v1337, 4294901760
        %1717 = vmatpush1.msra.mxu0 %v1716
        %1718 = vmatprep.subr.mxu0 0.0
        %v1719 = vand.u32 %v1338, 4294901760
        %1720 = vmatpush1.msra.mxu0 %v1719
        %1721 = vmatprep.subr.mxu0 0.0
        %v1722 = vand.u32 %v1339, 4294901760
        %1723 = vmatpush1.msra.mxu0 %v1722
        %1724 = vmatprep.subr.mxu0 0.0
        %1725 = vmatpush1.msra.mxu0 0.0
        %1726 = vmatprep.subr.mxu0 0.0
        %1727 = vmatpush1.msra.mxu0 0.0
        %1728 = vmatprep.subr.mxu0 0.0
        %1729 = vmatpush1.msra.mxu0 0.0
        %1730 = vmatprep.subr.mxu0 0.0
        %1731 = vmatpush1.msra.mxu0 0.0
        %1732 = vmatprep.subr.mxu0 0.0
        %1733 = vmatpush1.msra.mxu0 0.0
        %1734 = vmatprep.subr.mxu0 0.0
        %1735 = vmatpush1.msra.mxu0 0.0
        %1736 = vmatprep.subr.mxu0 0.0
        %1737 = vmatpush1.msra.mxu0 0.0
        %1738 = vmatprep.subr.mxu0 0.0
        %1739 = vmatpush1.msra.mxu0 0.0
        %1740 = vmatprep.subr.mxu0 0.0
        %1741 = vmatpush1.msra.mxu0 0.0
        %1742 = vmatprep.subr.mxu0 0.0
        %1743 = vmatpush1.msra.mxu0 0.0
        %1744 = vmatprep.subr.mxu0 0.0
        %1745 = vmatpush1.msra.mxu0 0.0
        %1746 = vmatprep.subr.mxu0 0.0
        %1747 = vmatpush1.msra.mxu0 0.0
        %1748 = vmatprep.subr.mxu0 0.0
        %1749 = vmatpush1.msra.mxu0 0.0
        %1750 = vmatprep.subr.mxu0 0.0
        %1751 = vmatpush1.msra.mxu0 0.0
        %1752 = vmatprep.subr.mxu0 0.0
        %1753 = vmatpush1.msra.mxu0 0.0
        %1754 = vmatprep.subr.mxu0 0.0
        %1755 = vmatpush1.msra.mxu0 0.0
        %1756 = vmatprep.subr.mxu0 0.0
        %1757 = vmatpush1.msra.mxu0 0.0
        %1758 = vmatprep.subr.mxu0 0.0
        %1759 = vmatpush1.msra.mxu0 0.0
        %1760 = vmatprep.subr.mxu0 0.0
        %1761 = vmatpush1.msra.mxu0 0.0
        %1762 = vmatprep.subr.mxu0 0.0
        %1763 = vmatpush1.msra.mxu0 0.0
        %1764 = vmatprep.mubr.f32.mxu0 0.0
        %v1765 = vand.u32 %v1346, 4294901760
        %v1766 = vsub.f32 %v1346, %v1765
        %v1767 = vand.u32 %v1766, 4294901760
        %1768 = vmatmul.mubr.f32.gmra.mrb[0].mxu0 %v1767
        %v1769 = vpop.f32.mrb[0].mxu0
        %v1770 = vadd.f32 %v1678, %v1769
        %v1771 = vpop.f32.mrb[0].mxu0
        %1772 = vmatprep.mubr.f32.mxu0 0.0
        %v1773 = vand.u32 %v1349, 4294901760
        %v1774 = vsub.f32 %v1349, %v1773
        %v1775 = vand.u32 %v1774, 4294901760
        %1776 = vmatmul.mubr.f32.gmra.mrb[0].mxu0 %v1775
        %v1777 = vpop.f32.mrb[0].mxu0
        %v1778 = vadd.f32 %v1685, %v1777
        %v1779 = vpop.f32.mrb[0].mxu0
        %1780 = vdwg.mxu0
        %1781 = vmatprep.subr.mxu0 0.0
        %v1782 = vand.u32 %v1328, 4294901760
        %v1783 = vsub.f32 %v1328, %v1782
        %v1784 = vand.u32 %v1783, 4294901760
        %1785 = vmatpush1.msra.mxu0 %v1784
        %1786 = vmatprep.subr.mxu0 0.0
        %v1787 = vand.u32 %v1329, 4294901760
        %v1788 = vsub.f32 %v1329, %v1787
        %v1789 = vand.u32 %v1788, 4294901760
        %1790 = vmatpush1.msra.mxu0 %v1789
        %1791 = vmatprep.subr.mxu0 0.0
        %v1792 = vand.u32 %v1330, 4294901760
        %v1793 = vsub.f32 %v1330, %v1792
        %v1794 = vand.u32 %v1793, 4294901760
        %1795 = vmatpush1.msra.mxu0 %v1794
        %1796 = vmatprep.subr.mxu0 0.0
        %v1797 = vand.u32 %v1331, 4294901760
        %v1798 = vsub.f32 %v1331, %v1797
        %v1799 = vand.u32 %v1798, 4294901760
        %1800 = vmatpush1.msra.mxu0 %v1799
        %1801 = vmatprep.subr.mxu0 0.0
        %v1802 = vand.u32 %v1332, 4294901760
        %v1803 = vsub.f32 %v1332, %v1802
        %v1804 = vand.u32 %v1803, 4294901760
        %1805 = vmatpush1.msra.mxu0 %v1804
        %1806 = vmatprep.subr.mxu0 0.0
        %v1807 = vand.u32 %v1333, 4294901760
        %v1808 = vsub.f32 %v1333, %v1807
        %v1809 = vand.u32 %v1808, 4294901760
        %1810 = vmatpush1.msra.mxu0 %v1809
        %1811 = vmatprep.subr.mxu0 0.0
        %v1812 = vand.u32 %v1334, 4294901760
        %v1813 = vsub.f32 %v1334, %v1812
        %v1814 = vand.u32 %v1813, 4294901760
        %1815 = vmatpush1.msra.mxu0 %v1814
        %1816 = vmatprep.subr.mxu0 0.0
        %v1817 = vand.u32 %v1335, 4294901760
        %v1818 = vsub.f32 %v1335, %v1817
        %v1819 = vand.u32 %v1818, 4294901760
        %1820 = vmatpush1.msra.mxu0 %v1819
        %1821 = vmatprep.subr.mxu0 0.0
        %v1822 = vand.u32 %v1336, 4294901760
        %v1823 = vsub.f32 %v1336, %v1822
        %v1824 = vand.u32 %v1823, 4294901760
        %1825 = vmatpush1.msra.mxu0 %v1824
        %1826 = vmatprep.subr.mxu0 0.0
        %v1827 = vand.u32 %v1337, 4294901760
        %v1828 = vsub.f32 %v1337, %v1827
        %v1829 = vand.u32 %v1828, 4294901760
        %1830 = vmatpush1.msra.mxu0 %v1829
        %1831 = vmatprep.subr.mxu0 0.0
        %v1832 = vand.u32 %v1338, 4294901760
        %v1833 = vsub.f32 %v1338, %v1832
        %v1834 = vand.u32 %v1833, 4294901760
        %1835 = vmatpush1.msra.mxu0 %v1834
        %1836 = vmatprep.subr.mxu0 0.0
        %v1837 = vand.u32 %v1339, 4294901760
        %v1838 = vsub.f32 %v1339, %v1837
        %v1839 = vand.u32 %v1838, 4294901760
        %1840 = vmatpush1.msra.mxu0 %v1839
        %1841 = vmatprep.subr.mxu0 0.0
        %1842 = vmatpush1.msra.mxu0 0.0
        %1843 = vmatprep.subr.mxu0 0.0
        %1844 = vmatpush1.msra.mxu0 0.0
        %1845 = vmatprep.subr.mxu0 0.0
        %1846 = vmatpush1.msra.mxu0 0.0
        %1847 = vmatprep.subr.mxu0 0.0
        %1848 = vmatpush1.msra.mxu0 0.0
        %1849 = vmatprep.subr.mxu0 0.0
        %1850 = vmatpush1.msra.mxu0 0.0
        %1851 = vmatprep.subr.mxu0 0.0
        %1852 = vmatpush1.msra.mxu0 0.0
        %1853 = vmatprep.subr.mxu0 0.0
        %1854 = vmatpush1.msra.mxu0 0.0
        %1855 = vmatprep.subr.mxu0 0.0
        %1856 = vmatpush1.msra.mxu0 0.0
        %1857 = vmatprep.subr.mxu0 0.0
        %1858 = vmatpush1.msra.mxu0 0.0
        %1859 = vmatprep.subr.mxu0 0.0
        %1860 = vmatpush1.msra.mxu0 0.0
        %1861 = vmatprep.subr.mxu0 0.0
        %1862 = vmatpush1.msra.mxu0 0.0
        %1863 = vmatprep.subr.mxu0 0.0
        %1864 = vmatpush1.msra.mxu0 0.0
        %1865 = vmatprep.subr.mxu0 0.0
        %1866 = vmatpush1.msra.mxu0 0.0
        %1867 = vmatprep.subr.mxu0 0.0
        %1868 = vmatpush1.msra.mxu0 0.0
        %1869 = vmatprep.subr.mxu0 0.0
        %1870 = vmatpush1.msra.mxu0 0.0
        %1871 = vmatprep.subr.mxu0 0.0
        %1872 = vmatpush1.msra.mxu0 0.0
        %1873 = vmatprep.subr.mxu0 0.0
        %1874 = vmatpush1.msra.mxu0 0.0
        %1875 = vmatprep.subr.mxu0 0.0
        %1876 = vmatpush1.msra.mxu0 0.0
        %1877 = vmatprep.subr.mxu0 0.0
        %1878 = vmatpush1.msra.mxu0 0.0
        %1879 = vmatprep.subr.mxu0 0.0
        %1880 = vmatpush1.msra.mxu0 0.0
        %1881 = vmatprep.mubr.f32.mxu0 0.0
        %v1882 = vand.u32 %v1346, 4294901760
        %1883 = vmatmul.mubr.f32.gmra.mrb[0].mxu0 %v1882
        %v1884 = vpop.f32.mrb[0].mxu0
        %v1885 = vadd.f32 %v1770, %v1884
        %v1886 = vpop.f32.mrb[0].mxu0
        %1887 = vmatprep.mubr.f32.mxu0 0.0
        %v1888 = vand.u32 %v1349, 4294901760
        %1889 = vmatmul.mubr.f32.gmra.mrb[0].mxu0 %v1888
        %v1890 = vpop.f32.mrb[0].mxu0
        %v1891 = vadd.f32 %v1778, %v1890
        %v1892 = vpop.f32.mrb[0].mxu0
        %1893 = vdwg.mxu0
        %1894 = vmatprep.subr.mxu0 0.0
        %v1895 = vand.u32 %v1328, 4294901760
        %1896 = vmatpush1.msra.mxu0 %v1895
        %1897 = vmatprep.subr.mxu0 0.0
        %v1898 = vand.u32 %v1329, 4294901760
        %1899 = vmatpush1.msra.mxu0 %v1898
        %1900 = vmatprep.subr.mxu0 0.0
        %v1901 = vand.u32 %v1330, 4294901760
        %1902 = vmatpush1.msra.mxu0 %v1901
        %1903 = vmatprep.subr.mxu0 0.0
        %v1904 = vand.u32 %v1331, 4294901760
        %1905 = vmatpush1.msra.mxu0 %v1904
        %1906 = vmatprep.subr.mxu0 0.0
        %v1907 = vand.u32 %v1332, 4294901760
        %1908 = vmatpush1.msra.mxu0 %v1907
        %1909 = vmatprep.subr.mxu0 0.0
        %v1910 = vand.u32 %v1333, 4294901760
        %1911 = vmatpush1.msra.mxu0 %v1910
        %1912 = vmatprep.subr.mxu0 0.0
        %v1913 = vand.u32 %v1334, 4294901760
        %1914 = vmatpush1.msra.mxu0 %v1913
        %1915 = vmatprep.subr.mxu0 0.0
        %v1916 = vand.u32 %v1335, 4294901760
        %1917 = vmatpush1.msra.mxu0 %v1916
        %1918 = vmatprep.subr.mxu0 0.0
        %v1919 = vand.u32 %v1336, 4294901760
        %1920 = vmatpush1.msra.mxu0 %v1919
        %1921 = vmatprep.subr.mxu0 0.0
        %v1922 = vand.u32 %v1337, 4294901760
        %1923 = vmatpush1.msra.mxu0 %v1922
        %1924 = vmatprep.subr.mxu0 0.0
        %v1925 = vand.u32 %v1338, 4294901760
        %1926 = vmatpush1.msra.mxu0 %v1925
        %1927 = vmatprep.subr.mxu0 0.0
        %v1928 = vand.u32 %v1339, 4294901760
        %1929 = vmatpush1.msra.mxu0 %v1928
        %1930 = vmatprep.subr.mxu0 0.0
        %1931 = vmatpush1.msra.mxu0 0.0
        %1932 = vmatprep.subr.mxu0 0.0
        %1933 = vmatpush1.msra.mxu0 0.0
        %1934 = vmatprep.subr.mxu0 0.0
        %1935 = vmatpush1.msra.mxu0 0.0
        %1936 = vmatprep.subr.mxu0 0.0
        %1937 = vmatpush1.msra.mxu0 0.0
        %1938 = vmatprep.subr.mxu0 0.0
        %1939 = vmatpush1.msra.mxu0 0.0
        %1940 = vmatprep.subr.mxu0 0.0
        %1941 = vmatpush1.msra.mxu0 0.0
        %1942 = vmatprep.subr.mxu0 0.0
        %1943 = vmatpush1.msra.mxu0 0.0
        %1944 = vmatprep.subr.mxu0 0.0
        %1945 = vmatpush1.msra.mxu0 0.0
        %1946 = vmatprep.subr.mxu0 0.0
        %1947 = vmatpush1.msra.mxu0 0.0
        %1948 = vmatprep.subr.mxu0 0.0
        %1949 = vmatpush1.msra.mxu0 0.0
        %1950 = vmatprep.subr.mxu0 0.0
        %1951 = vmatpush1.msra.mxu0 0.0
        %1952 = vmatprep.subr.mxu0 0.0
        %1953 = vmatpush1.msra.mxu0 0.0
        %1954 = vmatprep.subr.mxu0 0.0
        %1955 = vmatpush1.msra.mxu0 0.0
        %1956 = vmatprep.subr.mxu0 0.0
        %1957 = vmatpush1.msra.mxu0 0.0
        %1958 = vmatprep.subr.mxu0 0.0
        %1959 = vmatpush1.msra.mxu0 0.0
        %1960 = vmatprep.subr.mxu0 0.0
        %1961 = vmatpush1.msra.mxu0 0.0
        %1962 = vmatprep.subr.mxu0 0.0
        %1963 = vmatpush1.msra.mxu0 0.0
        %1964 = vmatprep.subr.mxu0 0.0
        %1965 = vmatpush1.msra.mxu0 0.0
        %1966 = vmatprep.subr.mxu0 0.0
        %1967 = vmatpush1.msra.mxu0 0.0
        %1968 = vmatprep.subr.mxu0 0.0
        %1969 = vmatpush1.msra.mxu0 0.0
        %1970 = vmatprep.mubr.f32.mxu0 0.0
        %v1971 = vand.u32 %v1346, 4294901760
        %1972 = vmatmul.mubr.f32.gmra.mrb[0].mxu0 %v1971
        %v1973 = vpop.f32.mrb[0].mxu0
        %v1974 = vadd.f32 %v1885, %v1973
        %v1975 = vpop.f32.mrb[0].mxu0
        %1976 = vmatprep.mubr.f32.mxu0 0.0
        %v1977 = vand.u32 %v1349, 4294901760
        %1978 = vmatmul.mubr.f32.gmra.mrb[0].mxu0 %v1977
        %v1979 = vpop.f32.mrb[0].mxu0
        %v1980 = vadd.f32 %v1891, %v1979
        %v1981 = vpop.f32.mrb[0].mxu0
        %1982 = vdwg.mxu0
        %s1983 = scalar_lea.vmem %s8, %s1326
        %v1984 = vld [vmem:[%s1983] sm:$0xff]
        %v1985 = vld [vmem:[%s1983 + $0x8] sm:$0xff]
        %v1986 = vld [vmem:[%s1983 + $0x10] sm:$0xff]
        %v1987 = vld [vmem:[%s1983 + $0x18] sm:$0xff]
        %v1988 = vld [vmem:[%s1983 + $0x20] sm:$0xff]
        %v1989 = vld [vmem:[%s1983 + $0x28] sm:$0xff]
        %v1990 = vld [vmem:[%s1983 + $0x30] sm:$0xff]
        %v1991 = vld [vmem:[%s1983 + $0x38] sm:$0xff]
        %v1992 = vld [vmem:[%s1983 + $0x40] sm:$0xff]
        %v1993 = vld [vmem:[%s1983 + $0x48] sm:$0xff]
        %v1994 = vld [vmem:[%s1983 + $0x50] sm:$0xff]
        %v1995 = vld [vmem:[%s1983 + $0x58] sm:$0xff]
        %v1996 = vlaneseq
        %v1997 = vshrl.u32 %v1996, 7
        %v1998 = vsub.s32 2, %v1997
        %v1999 = vrot.slane %v563, %v1998
        %2000 = vmatprep.subr.mxu0 0.0
        %v2001 = vand.u32 %v1984, 4294901760
        %2002 = vmatpush1.msra.mxu0 %v2001
        %2003 = vmatprep.subr.mxu0 0.0
        %v2004 = vand.u32 %v1985, 4294901760
        %2005 = vmatpush1.msra.mxu0 %v2004
        %2006 = vmatprep.subr.mxu0 0.0
        %v2007 = vand.u32 %v1986, 4294901760
        %2008 = vmatpush1.msra.mxu0 %v2007
        %2009 = vmatprep.subr.mxu0 0.0
        %v2010 = vand.u32 %v1987, 4294901760
        %2011 = vmatpush1.msra.mxu0 %v2010
        %2012 = vmatprep.subr.mxu0 0.0
        %v2013 = vand.u32 %v1988, 4294901760
        %2014 = vmatpush1.msra.mxu0 %v2013
        %2015 = vmatprep.subr.mxu0 0.0
        %v2016 = vand.u32 %v1989, 4294901760
        %2017 = vmatpush1.msra.mxu0 %v2016
        %2018 = vmatprep.subr.mxu0 0.0
        %v2019 = vand.u32 %v1990, 4294901760
        %2020 = vmatpush1.msra.mxu0 %v2019
        %2021 = vmatprep.subr.mxu0 0.0
        %v2022 = vand.u32 %v1991, 4294901760
        %2023 = vmatpush1.msra.mxu0 %v2022
        %2024 = vmatprep.subr.mxu0 0.0
        %v2025 = vand.u32 %v1992, 4294901760
        %2026 = vmatpush1.msra.mxu0 %v2025
        %2027 = vmatprep.subr.mxu0 0.0
        %v2028 = vand.u32 %v1993, 4294901760
        %2029 = vmatpush1.msra.mxu0 %v2028
        %2030 = vmatprep.subr.mxu0 0.0
        %v2031 = vand.u32 %v1994, 4294901760
        %2032 = vmatpush1.msra.mxu0 %v2031
        %2033 = vmatprep.subr.mxu0 0.0
        %v2034 = vand.u32 %v1995, 4294901760
        %2035 = vmatpush1.msra.mxu0 %v2034
        %2036 = vmatprep.subr.mxu0 0.0
        %2037 = vmatpush1.msra.mxu0 0.0
        %2038 = vmatprep.subr.mxu0 0.0
        %2039 = vmatpush1.msra.mxu0 0.0
        %2040 = vmatprep.subr.mxu0 0.0
        %2041 = vmatpush1.msra.mxu0 0.0
        %2042 = vmatprep.subr.mxu0 0.0
        %2043 = vmatpush1.msra.mxu0 0.0
        %2044 = vmatprep.subr.mxu0 0.0
        %2045 = vmatpush1.msra.mxu0 0.0
        %2046 = vmatprep.subr.mxu0 0.0
        %2047 = vmatpush1.msra.mxu0 0.0
        %2048 = vmatprep.subr.mxu0 0.0
        %2049 = vmatpush1.msra.mxu0 0.0
        %2050 = vmatprep.subr.mxu0 0.0
        %2051 = vmatpush1.msra.mxu0 0.0
        %2052 = vmatprep.subr.mxu0 0.0
        %2053 = vmatpush1.msra.mxu0 0.0
        %2054 = vmatprep.subr.mxu0 0.0
        %2055 = vmatpush1.msra.mxu0 0.0
        %2056 = vmatprep.subr.mxu0 0.0
        %2057 = vmatpush1.msra.mxu0 0.0
        %2058 = vmatprep.subr.mxu0 0.0
        %2059 = vmatpush1.msra.mxu0 0.0
        %2060 = vmatprep.subr.mxu0 0.0
        %2061 = vmatpush1.msra.mxu0 0.0
        %2062 = vmatprep.subr.mxu0 0.0
        %2063 = vmatpush1.msra.mxu0 0.0
        %2064 = vmatprep.subr.mxu0 0.0
        %2065 = vmatpush1.msra.mxu0 0.0
        %2066 = vmatprep.subr.mxu0 0.0
        %2067 = vmatpush1.msra.mxu0 0.0
        %2068 = vmatprep.subr.mxu0 0.0
        %2069 = vmatpush1.msra.mxu0 0.0
        %2070 = vmatprep.subr.mxu0 0.0
        %2071 = vmatpush1.msra.mxu0 0.0
        %2072 = vmatprep.subr.mxu0 0.0
        %2073 = vmatpush1.msra.mxu0 0.0
        %2074 = vmatprep.subr.mxu0 0.0
        %2075 = vmatpush1.msra.mxu0 0.0
        %2076 = vmatprep.mubr.f32.mxu0 0.0
        %v2077 = vand.u32 %v1346, 4294901760
        %v2078 = vsub.f32 %v1346, %v2077
        %v2079 = vand.u32 %v2078, 4294901760
        %v2080 = vsub.f32 %v2078, %v2079
        %v2081 = vand.u32 %v2080, 4294901760
        %2082 = vmatmul.mubr.f32.gmra.mrb[0].mxu0 %v2081
        %v2083 = vpop.f32.mrb[0].mxu0
        %v2084 = vadd.f32 %v1999, %v2083
        %v2085 = vpop.f32.mrb[0].mxu0
        %2086 = vmatprep.mubr.f32.mxu0 0.0
        %v2087 = vand.u32 %v1349, 4294901760
        %v2088 = vsub.f32 %v1349, %v2087
        %v2089 = vand.u32 %v2088, 4294901760
        %v2090 = vsub.f32 %v2088, %v2089
        %v2091 = vand.u32 %v2090, 4294901760
        %2092 = vmatmul.mubr.f32.gmra.mrb[0].mxu0 %v2091
        %v2093 = vpop.f32.mrb[0].mxu0
        %v2094 = vadd.f32 %v1999, %v2093
        %v2095 = vpop.f32.mrb[0].mxu0
        %2096 = vdwg.mxu0
        %2097 = vmatprep.subr.mxu0 0.0
        %v2098 = vand.u32 %v1984, 4294901760
        %v2099 = vsub.f32 %v1984, %v2098
        %v2100 = vand.u32 %v2099, 4294901760
        %v2101 = vsub.f32 %v2099, %v2100
        %v2102 = vand.u32 %v2101, 4294901760
        %2103 = vmatpush1.msra.mxu0 %v2102
        %2104 = vmatprep.subr.mxu0 0.0
        %v2105 = vand.u32 %v1985, 4294901760
        %v2106 = vsub.f32 %v1985, %v2105
        %v2107 = vand.u32 %v2106, 4294901760
        %v2108 = vsub.f32 %v2106, %v2107
        %v2109 = vand.u32 %v2108, 4294901760
        %2110 = vmatpush1.msra.mxu0 %v2109
        %2111 = vmatprep.subr.mxu0 0.0
        %v2112 = vand.u32 %v1986, 4294901760
        %v2113 = vsub.f32 %v1986, %v2112
        %v2114 = vand.u32 %v2113, 4294901760
        %v2115 = vsub.f32 %v2113, %v2114
        %v2116 = vand.u32 %v2115, 4294901760
        %2117 = vmatpush1.msra.mxu0 %v2116
        %2118 = vmatprep.subr.mxu0 0.0
        %v2119 = vand.u32 %v1987, 4294901760
        %v2120 = vsub.f32 %v1987, %v2119
        %v2121 = vand.u32 %v2120, 4294901760
        %v2122 = vsub.f32 %v2120, %v2121
        %v2123 = vand.u32 %v2122, 4294901760
        %2124 = vmatpush1.msra.mxu0 %v2123
        %2125 = vmatprep.subr.mxu0 0.0
        %v2126 = vand.u32 %v1988, 4294901760
        %v2127 = vsub.f32 %v1988, %v2126
        %v2128 = vand.u32 %v2127, 4294901760
        %v2129 = vsub.f32 %v2127, %v2128
        %v2130 = vand.u32 %v2129, 4294901760
        %2131 = vmatpush1.msra.mxu0 %v2130
        %2132 = vmatprep.subr.mxu0 0.0
        %v2133 = vand.u32 %v1989, 4294901760
        %v2134 = vsub.f32 %v1989, %v2133
        %v2135 = vand.u32 %v2134, 4294901760
        %v2136 = vsub.f32 %v2134, %v2135
        %v2137 = vand.u32 %v2136, 4294901760
        %2138 = vmatpush1.msra.mxu0 %v2137
        %2139 = vmatprep.subr.mxu0 0.0
        %v2140 = vand.u32 %v1990, 4294901760
        %v2141 = vsub.f32 %v1990, %v2140
        %v2142 = vand.u32 %v2141, 4294901760
        %v2143 = vsub.f32 %v2141, %v2142
        %v2144 = vand.u32 %v2143, 4294901760
        %2145 = vmatpush1.msra.mxu0 %v2144
        %2146 = vmatprep.subr.mxu0 0.0
        %v2147 = vand.u32 %v1991, 4294901760
        %v2148 = vsub.f32 %v1991, %v2147
        %v2149 = vand.u32 %v2148, 4294901760
        %v2150 = vsub.f32 %v2148, %v2149
        %v2151 = vand.u32 %v2150, 4294901760
        %2152 = vmatpush1.msra.mxu0 %v2151
        %2153 = vmatprep.subr.mxu0 0.0
        %v2154 = vand.u32 %v1992, 4294901760
        %v2155 = vsub.f32 %v1992, %v2154
        %v2156 = vand.u32 %v2155, 4294901760
        %v2157 = vsub.f32 %v2155, %v2156
        %v2158 = vand.u32 %v2157, 4294901760
        %2159 = vmatpush1.msra.mxu0 %v2158
        %2160 = vmatprep.subr.mxu0 0.0
        %v2161 = vand.u32 %v1993, 4294901760
        %v2162 = vsub.f32 %v1993, %v2161
        %v2163 = vand.u32 %v2162, 4294901760
        %v2164 = vsub.f32 %v2162, %v2163
        %v2165 = vand.u32 %v2164, 4294901760
        %2166 = vmatpush1.msra.mxu0 %v2165
        %2167 = vmatprep.subr.mxu0 0.0
        %v2168 = vand.u32 %v1994, 4294901760
        %v2169 = vsub.f32 %v1994, %v2168
        %v2170 = vand.u32 %v2169, 4294901760
        %v2171 = vsub.f32 %v2169, %v2170
        %v2172 = vand.u32 %v2171, 4294901760
        %2173 = vmatpush1.msra.mxu0 %v2172
        %2174 = vmatprep.subr.mxu0 0.0
        %v2175 = vand.u32 %v1995, 4294901760
        %v2176 = vsub.f32 %v1995, %v2175
        %v2177 = vand.u32 %v2176, 4294901760
        %v2178 = vsub.f32 %v2176, %v2177
        %v2179 = vand.u32 %v2178, 4294901760
        %2180 = vmatpush1.msra.mxu0 %v2179
        %2181 = vmatprep.subr.mxu0 0.0
        %2182 = vmatpush1.msra.mxu0 0.0
        %2183 = vmatprep.subr.mxu0 0.0
        %2184 = vmatpush1.msra.mxu0 0.0
        %2185 = vmatprep.subr.mxu0 0.0
        %2186 = vmatpush1.msra.mxu0 0.0
        %2187 = vmatprep.subr.mxu0 0.0
        %2188 = vmatpush1.msra.mxu0 0.0
        %2189 = vmatprep.subr.mxu0 0.0
        %2190 = vmatpush1.msra.mxu0 0.0
        %2191 = vmatprep.subr.mxu0 0.0
        %2192 = vmatpush1.msra.mxu0 0.0
        %2193 = vmatprep.subr.mxu0 0.0
        %2194 = vmatpush1.msra.mxu0 0.0
        %2195 = vmatprep.subr.mxu0 0.0
        %2196 = vmatpush1.msra.mxu0 0.0
        %2197 = vmatprep.subr.mxu0 0.0
        %2198 = vmatpush1.msra.mxu0 0.0
        %2199 = vmatprep.subr.mxu0 0.0
        %2200 = vmatpush1.msra.mxu0 0.0
        %2201 = vmatprep.subr.mxu0 0.0
        %2202 = vmatpush1.msra.mxu0 0.0
        %2203 = vmatprep.subr.mxu0 0.0
        %2204 = vmatpush1.msra.mxu0 0.0
        %2205 = vmatprep.subr.mxu0 0.0
        %2206 = vmatpush1.msra.mxu0 0.0
        %2207 = vmatprep.subr.mxu0 0.0
        %2208 = vmatpush1.msra.mxu0 0.0
        %2209 = vmatprep.subr.mxu0 0.0
        %2210 = vmatpush1.msra.mxu0 0.0
        %2211 = vmatprep.subr.mxu0 0.0
        %2212 = vmatpush1.msra.mxu0 0.0
        %2213 = vmatprep.subr.mxu0 0.0
        %2214 = vmatpush1.msra.mxu0 0.0
        %2215 = vmatprep.subr.mxu0 0.0
        %2216 = vmatpush1.msra.mxu0 0.0
        %2217 = vmatprep.subr.mxu0 0.0
        %2218 = vmatpush1.msra.mxu0 0.0
        %2219 = vmatprep.subr.mxu0 0.0
        %2220 = vmatpush1.msra.mxu0 0.0
        %2221 = vmatprep.mubr.f32.mxu0 0.0
        %v2222 = vand.u32 %v1346, 4294901760
        %2223 = vmatmul.mubr.f32.gmra.mrb[0].mxu0 %v2222
        %v2224 = vpop.f32.mrb[0].mxu0
        %v2225 = vadd.f32 %v2084, %v2224
        %v2226 = vpop.f32.mrb[0].mxu0
        %2227 = vmatprep.mubr.f32.mxu0 0.0
        %v2228 = vand.u32 %v1349, 4294901760
        %2229 = vmatmul.mubr.f32.gmra.mrb[0].mxu0 %v2228
        %v2230 = vpop.f32.mrb[0].mxu0
        %v2231 = vadd.f32 %v2094, %v2230
        %v2232 = vpop.f32.mrb[0].mxu0
        %2233 = vdwg.mxu0
        %2234 = vmatprep.subr.mxu0 0.0
        %v2235 = vand.u32 %v1984, 4294901760
        %v2236 = vsub.f32 %v1984, %v2235
        %2237 = vmatpush1.msra.mxu0 %v2236
        %2238 = vmatprep.subr.mxu0 0.0
        %v2239 = vand.u32 %v1985, 4294901760
        %v2240 = vsub.f32 %v1985, %v2239
        %2241 = vmatpush1.msra.mxu0 %v2240
        %2242 = vmatprep.subr.mxu0 0.0
        %v2243 = vand.u32 %v1986, 4294901760
        %v2244 = vsub.f32 %v1986, %v2243
        %2245 = vmatpush1.msra.mxu0 %v2244
        %2246 = vmatprep.subr.mxu0 0.0
        %v2247 = vand.u32 %v1987, 4294901760
        %v2248 = vsub.f32 %v1987, %v2247
        %2249 = vmatpush1.msra.mxu0 %v2248
        %2250 = vmatprep.subr.mxu0 0.0
        %v2251 = vand.u32 %v1988, 4294901760
        %v2252 = vsub.f32 %v1988, %v2251
        %2253 = vmatpush1.msra.mxu0 %v2252
        %2254 = vmatprep.subr.mxu0 0.0
        %v2255 = vand.u32 %v1989, 4294901760
        %v2256 = vsub.f32 %v1989, %v2255
        %2257 = vmatpush1.msra.mxu0 %v2256
        %2258 = vmatprep.subr.mxu0 0.0
        %v2259 = vand.u32 %v1990, 4294901760
        %v2260 = vsub.f32 %v1990, %v2259
        %2261 = vmatpush1.msra.mxu0 %v2260
        %2262 = vmatprep.subr.mxu0 0.0
        %v2263 = vand.u32 %v1991, 4294901760
        %v2264 = vsub.f32 %v1991, %v2263
        %2265 = vmatpush1.msra.mxu0 %v2264
        %2266 = vmatprep.subr.mxu0 0.0
        %v2267 = vand.u32 %v1992, 4294901760
        %v2268 = vsub.f32 %v1992, %v2267
        %2269 = vmatpush1.msra.mxu0 %v2268
        %2270 = vmatprep.subr.mxu0 0.0
        %v2271 = vand.u32 %v1993, 4294901760
        %v2272 = vsub.f32 %v1993, %v2271
        %2273 = vmatpush1.msra.mxu0 %v2272
        %2274 = vmatprep.subr.mxu0 0.0
        %v2275 = vand.u32 %v1994, 4294901760
        %v2276 = vsub.f32 %v1994, %v2275
        %2277 = vmatpush1.msra.mxu0 %v2276
        %2278 = vmatprep.subr.mxu0 0.0
        %v2279 = vand.u32 %v1995, 4294901760
        %v2280 = vsub.f32 %v1995, %v2279
        %2281 = vmatpush1.msra.mxu0 %v2280
        %2282 = vmatprep.subr.mxu0 0.0
        %2283 = vmatpush1.msra.mxu0 0.0
        %2284 = vmatprep.subr.mxu0 0.0
        %2285 = vmatpush1.msra.mxu0 0.0
        %2286 = vmatprep.subr.mxu0 0.0
        %2287 = vmatpush1.msra.mxu0 0.0
        %2288 = vmatprep.subr.mxu0 0.0
        %2289 = vmatpush1.msra.mxu0 0.0
        %2290 = vmatprep.subr.mxu0 0.0
        %2291 = vmatpush1.msra.mxu0 0.0
        %2292 = vmatprep.subr.mxu0 0.0
        %2293 = vmatpush1.msra.mxu0 0.0
        %2294 = vmatprep.subr.mxu0 0.0
        %2295 = vmatpush1.msra.mxu0 0.0
        %2296 = vmatprep.subr.mxu0 0.0
        %2297 = vmatpush1.msra.mxu0 0.0
        %2298 = vmatprep.subr.mxu0 0.0
        %2299 = vmatpush1.msra.mxu0 0.0
        %2300 = vmatprep.subr.mxu0 0.0
        %2301 = vmatpush1.msra.mxu0 0.0
        %2302 = vmatprep.subr.mxu0 0.0
        %2303 = vmatpush1.msra.mxu0 0.0
        %2304 = vmatprep.subr.mxu0 0.0
        %2305 = vmatpush1.msra.mxu0 0.0
        %2306 = vmatprep.subr.mxu0 0.0
        %2307 = vmatpush1.msra.mxu0 0.0
        %2308 = vmatprep.subr.mxu0 0.0
        %2309 = vmatpush1.msra.mxu0 0.0
        %2310 = vmatprep.subr.mxu0 0.0
        %2311 = vmatpush1.msra.mxu0 0.0
        %2312 = vmatprep.subr.mxu0 0.0
        %2313 = vmatpush1.msra.mxu0 0.0
        %2314 = vmatprep.subr.mxu0 0.0
        %2315 = vmatpush1.msra.mxu0 0.0
        %2316 = vmatprep.subr.mxu0 0.0
        %2317 = vmatpush1.msra.mxu0 0.0
        %2318 = vmatprep.subr.mxu0 0.0
        %2319 = vmatpush1.msra.mxu0 0.0
        %2320 = vmatprep.subr.mxu0 0.0
        %2321 = vmatpush1.msra.mxu0 0.0
        %2322 = vmatprep.mubr.f32.mxu0 0.0
        %v2323 = vand.u32 %v1346, 4294901760
        %v2324 = vsub.f32 %v1346, %v2323
        %2325 = vmatmul.mubr.f32.gmra.mrb[0].mxu0 %v2324
        %v2326 = vpop.f32.mrb[0].mxu0
        %v2327 = vadd.f32 %v2225, %v2326
        %v2328 = vpop.f32.mrb[0].mxu0
        %2329 = vmatprep.mubr.f32.mxu0 0.0
        %v2330 = vand.u32 %v1349, 4294901760
        %v2331 = vsub.f32 %v1349, %v2330
        %2332 = vmatmul.mubr.f32.gmra.mrb[0].mxu0 %v2331
        %v2333 = vpop.f32.mrb[0].mxu0
        %v2334 = vadd.f32 %v2231, %v2333
        %v2335 = vpop.f32.mrb[0].mxu0
        %2336 = vdwg.mxu0
        %2337 = vmatprep.subr.mxu0 0.0
        %v2338 = vand.u32 %v1984, 4294901760
        %2339 = vmatpush1.msra.mxu0 %v2338
        %2340 = vmatprep.subr.mxu0 0.0
        %v2341 = vand.u32 %v1985, 4294901760
        %2342 = vmatpush1.msra.mxu0 %v2341
        %2343 = vmatprep.subr.mxu0 0.0
        %v2344 = vand.u32 %v1986, 4294901760
        %2345 = vmatpush1.msra.mxu0 %v2344
        %2346 = vmatprep.subr.mxu0 0.0
        %v2347 = vand.u32 %v1987, 4294901760
        %2348 = vmatpush1.msra.mxu0 %v2347
        %2349 = vmatprep.subr.mxu0 0.0
        %v2350 = vand.u32 %v1988, 4294901760
        %2351 = vmatpush1.msra.mxu0 %v2350
        %2352 = vmatprep.subr.mxu0 0.0
        %v2353 = vand.u32 %v1989, 4294901760
        %2354 = vmatpush1.msra.mxu0 %v2353
        %2355 = vmatprep.subr.mxu0 0.0
        %v2356 = vand.u32 %v1990, 4294901760
        %2357 = vmatpush1.msra.mxu0 %v2356
        %2358 = vmatprep.subr.mxu0 0.0
        %v2359 = vand.u32 %v1991, 4294901760
        %2360 = vmatpush1.msra.mxu0 %v2359
        %2361 = vmatprep.subr.mxu0 0.0
        %v2362 = vand.u32 %v1992, 4294901760
        %2363 = vmatpush1.msra.mxu0 %v2362
        %2364 = vmatprep.subr.mxu0 0.0
        %v2365 = vand.u32 %v1993, 4294901760
        %2366 = vmatpush1.msra.mxu0 %v2365
        %2367 = vmatprep.subr.mxu0 0.0
        %v2368 = vand.u32 %v1994, 4294901760
        %2369 = vmatpush1.msra.mxu0 %v2368
        %2370 = vmatprep.subr.mxu0 0.0
        %v2371 = vand.u32 %v1995, 4294901760
        %2372 = vmatpush1.msra.mxu0 %v2371
        %2373 = vmatprep.subr.mxu0 0.0
        %2374 = vmatpush1.msra.mxu0 0.0
        %2375 = vmatprep.subr.mxu0 0.0
        %2376 = vmatpush1.msra.mxu0 0.0
        %2377 = vmatprep.subr.mxu0 0.0
        %2378 = vmatpush1.msra.mxu0 0.0
        %2379 = vmatprep.subr.mxu0 0.0
        %2380 = vmatpush1.msra.mxu0 0.0
        %2381 = vmatprep.subr.mxu0 0.0
        %2382 = vmatpush1.msra.mxu0 0.0
        %2383 = vmatprep.subr.mxu0 0.0
        %2384 = vmatpush1.msra.mxu0 0.0
        %2385 = vmatprep.subr.mxu0 0.0
        %2386 = vmatpush1.msra.mxu0 0.0
        %2387 = vmatprep.subr.mxu0 0.0
        %2388 = vmatpush1.msra.mxu0 0.0
        %2389 = vmatprep.subr.mxu0 0.0
        %2390 = vmatpush1.msra.mxu0 0.0
        %2391 = vmatprep.subr.mxu0 0.0
        %2392 = vmatpush1.msra.mxu0 0.0
        %2393 = vmatprep.subr.mxu0 0.0
        %2394 = vmatpush1.msra.mxu0 0.0
        %2395 = vmatprep.subr.mxu0 0.0
        %2396 = vmatpush1.msra.mxu0 0.0
        %2397 = vmatprep.subr.mxu0 0.0
        %2398 = vmatpush1.msra.mxu0 0.0
        %2399 = vmatprep.subr.mxu0 0.0
        %2400 = vmatpush1.msra.mxu0 0.0
        %2401 = vmatprep.subr.mxu0 0.0
        %2402 = vmatpush1.msra.mxu0 0.0
        %2403 = vmatprep.subr.mxu0 0.0
        %2404 = vmatpush1.msra.mxu0 0.0
        %2405 = vmatprep.subr.mxu0 0.0
        %2406 = vmatpush1.msra.mxu0 0.0
        %2407 = vmatprep.subr.mxu0 0.0
        %2408 = vmatpush1.msra.mxu0 0.0
        %2409 = vmatprep.subr.mxu0 0.0
        %2410 = vmatpush1.msra.mxu0 0.0
        %2411 = vmatprep.subr.mxu0 0.0
        %2412 = vmatpush1.msra.mxu0 0.0
        %2413 = vmatprep.mubr.f32.mxu0 0.0
        %v2414 = vand.u32 %v1346, 4294901760
        %v2415 = vsub.f32 %v1346, %v2414
        %v2416 = vand.u32 %v2415, 4294901760
        %2417 = vmatmul.mubr.f32.gmra.mrb[0].mxu0 %v2416
        %v2418 = vpop.f32.mrb[0].mxu0
        %v2419 = vadd.f32 %v2327, %v2418
        %v2420 = vpop.f32.mrb[0].mxu0
        %2421 = vmatprep.mubr.f32.mxu0 0.0
        %v2422 = vand.u32 %v1349, 4294901760
        %v2423 = vsub.f32 %v1349, %v2422
        %v2424 = vand.u32 %v2423, 4294901760
        %2425 = vmatmul.mubr.f32.gmra.mrb[0].mxu0 %v2424
        %v2426 = vpop.f32.mrb[0].mxu0
        %v2427 = vadd.f32 %v2334, %v2426
        %v2428 = vpop.f32.mrb[0].mxu0
        %2429 = vdwg.mxu0
        %2430 = vmatprep.subr.mxu0 0.0
        %v2431 = vand.u32 %v1984, 4294901760
        %v2432 = vsub.f32 %v1984, %v2431
        %v2433 = vand.u32 %v2432, 4294901760
        %2434 = vmatpush1.msra.mxu0 %v2433
        %2435 = vmatprep.subr.mxu0 0.0
        %v2436 = vand.u32 %v1985, 4294901760
        %v2437 = vsub.f32 %v1985, %v2436
        %v2438 = vand.u32 %v2437, 4294901760
        %2439 = vmatpush1.msra.mxu0 %v2438
        %2440 = vmatprep.subr.mxu0 0.0
        %v2441 = vand.u32 %v1986, 4294901760
        %v2442 = vsub.f32 %v1986, %v2441
        %v2443 = vand.u32 %v2442, 4294901760
        %2444 = vmatpush1.msra.mxu0 %v2443
        %2445 = vmatprep.subr.mxu0 0.0
        %v2446 = vand.u32 %v1987, 4294901760
        %v2447 = vsub.f32 %v1987, %v2446
        %v2448 = vand.u32 %v2447, 4294901760
        %2449 = vmatpush1.msra.mxu0 %v2448
        %2450 = vmatprep.subr.mxu0 0.0
        %v2451 = vand.u32 %v1988, 4294901760
        %v2452 = vsub.f32 %v1988, %v2451
        %v2453 = vand.u32 %v2452, 4294901760
        %2454 = vmatpush1.msra.mxu0 %v2453
        %2455 = vmatprep.subr.mxu0 0.0
        %v2456 = vand.u32 %v1989, 4294901760
        %v2457 = vsub.f32 %v1989, %v2456
        %v2458 = vand.u32 %v2457, 4294901760
        %2459 = vmatpush1.msra.mxu0 %v2458
        %2460 = vmatprep.subr.mxu0 0.0
        %v2461 = vand.u32 %v1990, 4294901760
        %v2462 = vsub.f32 %v1990, %v2461
        %v2463 = vand.u32 %v2462, 4294901760
        %2464 = vmatpush1.msra.mxu0 %v2463
        %2465 = vmatprep.subr.mxu0 0.0
        %v2466 = vand.u32 %v1991, 4294901760
        %v2467 = vsub.f32 %v1991, %v2466
        %v2468 = vand.u32 %v2467, 4294901760
        %2469 = vmatpush1.msra.mxu0 %v2468
        %2470 = vmatprep.subr.mxu0 0.0
        %v2471 = vand.u32 %v1992, 4294901760
        %v2472 = vsub.f32 %v1992, %v2471
        %v2473 = vand.u32 %v2472, 4294901760
        %2474 = vmatpush1.msra.mxu0 %v2473
        %2475 = vmatprep.subr.mxu0 0.0
        %v2476 = vand.u32 %v1993, 4294901760
        %v2477 = vsub.f32 %v1993, %v2476
        %v2478 = vand.u32 %v2477, 4294901760
        %2479 = vmatpush1.msra.mxu0 %v2478
        %2480 = vmatprep.subr.mxu0 0.0
        %v2481 = vand.u32 %v1994, 4294901760
        %v2482 = vsub.f32 %v1994, %v2481
        %v2483 = vand.u32 %v2482, 4294901760
        %2484 = vmatpush1.msra.mxu0 %v2483
        %2485 = vmatprep.subr.mxu0 0.0
        %v2486 = vand.u32 %v1995, 4294901760
        %v2487 = vsub.f32 %v1995, %v2486
        %v2488 = vand.u32 %v2487, 4294901760
        %2489 = vmatpush1.msra.mxu0 %v2488
        %2490 = vmatprep.subr.mxu0 0.0
        %2491 = vmatpush1.msra.mxu0 0.0
        %2492 = vmatprep.subr.mxu0 0.0
        %2493 = vmatpush1.msra.mxu0 0.0
        %2494 = vmatprep.subr.mxu0 0.0
        %2495 = vmatpush1.msra.mxu0 0.0
        %2496 = vmatprep.subr.mxu0 0.0
        %2497 = vmatpush1.msra.mxu0 0.0
        %2498 = vmatprep.subr.mxu0 0.0
        %2499 = vmatpush1.msra.mxu0 0.0
        %2500 = vmatprep.subr.mxu0 0.0
        %2501 = vmatpush1.msra.mxu0 0.0
        %2502 = vmatprep.subr.mxu0 0.0
        %2503 = vmatpush1.msra.mxu0 0.0
        %2504 = vmatprep.subr.mxu0 0.0
        %2505 = vmatpush1.msra.mxu0 0.0
        %2506 = vmatprep.subr.mxu0 0.0
        %2507 = vmatpush1.msra.mxu0 0.0
        %2508 = vmatprep.subr.mxu0 0.0
        %2509 = vmatpush1.msra.mxu0 0.0
        %2510 = vmatprep.subr.mxu0 0.0
        %2511 = vmatpush1.msra.mxu0 0.0
        %2512 = vmatprep.subr.mxu0 0.0
        %2513 = vmatpush1.msra.mxu0 0.0
        %2514 = vmatprep.subr.mxu0 0.0
        %2515 = vmatpush1.msra.mxu0 0.0
        %2516 = vmatprep.subr.mxu0 0.0
        %2517 = vmatpush1.msra.mxu0 0.0
        %2518 = vmatprep.subr.mxu0 0.0
        %2519 = vmatpush1.msra.mxu0 0.0
        %2520 = vmatprep.subr.mxu0 0.0
        %2521 = vmatpush1.msra.mxu0 0.0
        %2522 = vmatprep.subr.mxu0 0.0
        %2523 = vmatpush1.msra.mxu0 0.0
        %2524 = vmatprep.subr.mxu0 0.0
        %2525 = vmatpush1.msra.mxu0 0.0
        %2526 = vmatprep.subr.mxu0 0.0
        %2527 = vmatpush1.msra.mxu0 0.0
        %2528 = vmatprep.subr.mxu0 0.0
        %2529 = vmatpush1.msra.mxu0 0.0
        %2530 = vmatprep.mubr.f32.mxu0 0.0
        %v2531 = vand.u32 %v1346, 4294901760
        %2532 = vmatmul.mubr.f32.gmra.mrb[0].mxu0 %v2531
        %v2533 = vpop.f32.mrb[0].mxu0
        %v2534 = vadd.f32 %v2419, %v2533
        %v2535 = vpop.f32.mrb[0].mxu0
        %2536 = vmatprep.mubr.f32.mxu0 0.0
        %v2537 = vand.u32 %v1349, 4294901760
        %2538 = vmatmul.mubr.f32.gmra.mrb[0].mxu0 %v2537
        %v2539 = vpop.f32.mrb[0].mxu0
        %v2540 = vadd.f32 %v2427, %v2539
        %v2541 = vpop.f32.mrb[0].mxu0
        %2542 = vdwg.mxu0
        %2543 = vmatprep.subr.mxu0 0.0
        %v2544 = vand.u32 %v1984, 4294901760
        %2545 = vmatpush1.msra.mxu0 %v2544
        %2546 = vmatprep.subr.mxu0 0.0
        %v2547 = vand.u32 %v1985, 4294901760
        %2548 = vmatpush1.msra.mxu0 %v2547
        %2549 = vmatprep.subr.mxu0 0.0
        %v2550 = vand.u32 %v1986, 4294901760
        %2551 = vmatpush1.msra.mxu0 %v2550
        %2552 = vmatprep.subr.mxu0 0.0
        %v2553 = vand.u32 %v1987, 4294901760
        %2554 = vmatpush1.msra.mxu0 %v2553
        %2555 = vmatprep.subr.mxu0 0.0
        %v2556 = vand.u32 %v1988, 4294901760
        %2557 = vmatpush1.msra.mxu0 %v2556
        %2558 = vmatprep.subr.mxu0 0.0
        %v2559 = vand.u32 %v1989, 4294901760
        %2560 = vmatpush1.msra.mxu0 %v2559
        %2561 = vmatprep.subr.mxu0 0.0
        %v2562 = vand.u32 %v1990, 4294901760
        %2563 = vmatpush1.msra.mxu0 %v2562
        %2564 = vmatprep.subr.mxu0 0.0
        %v2565 = vand.u32 %v1991, 4294901760
        %2566 = vmatpush1.msra.mxu0 %v2565
        %2567 = vmatprep.subr.mxu0 0.0
        %v2568 = vand.u32 %v1992, 4294901760
        %2569 = vmatpush1.msra.mxu0 %v2568
        %2570 = vmatprep.subr.mxu0 0.0
        %v2571 = vand.u32 %v1993, 4294901760
        %2572 = vmatpush1.msra.mxu0 %v2571
        %2573 = vmatprep.subr.mxu0 0.0
        %v2574 = vand.u32 %v1994, 4294901760
        %2575 = vmatpush1.msra.mxu0 %v2574
        %2576 = vmatprep.subr.mxu0 0.0
        %v2577 = vand.u32 %v1995, 4294901760
        %2578 = vmatpush1.msra.mxu0 %v2577
        %2579 = vmatprep.subr.mxu0 0.0
        %2580 = vmatpush1.msra.mxu0 0.0
        %2581 = vmatprep.subr.mxu0 0.0
        %2582 = vmatpush1.msra.mxu0 0.0
        %2583 = vmatprep.subr.mxu0 0.0
        %2584 = vmatpush1.msra.mxu0 0.0
        %2585 = vmatprep.subr.mxu0 0.0
        %2586 = vmatpush1.msra.mxu0 0.0
        %2587 = vmatprep.subr.mxu0 0.0
        %2588 = vmatpush1.msra.mxu0 0.0
        %2589 = vmatprep.subr.mxu0 0.0
        %2590 = vmatpush1.msra.mxu0 0.0
        %2591 = vmatprep.subr.mxu0 0.0
        %2592 = vmatpush1.msra.mxu0 0.0
        %2593 = vmatprep.subr.mxu0 0.0
        %2594 = vmatpush1.msra.mxu0 0.0
        %2595 = vmatprep.subr.mxu0 0.0
        %2596 = vmatpush1.msra.mxu0 0.0
        %2597 = vmatprep.subr.mxu0 0.0
        %2598 = vmatpush1.msra.mxu0 0.0
        %2599 = vmatprep.subr.mxu0 0.0
        %2600 = vmatpush1.msra.mxu0 0.0
        %2601 = vmatprep.subr.mxu0 0.0
        %2602 = vmatpush1.msra.mxu0 0.0
        %2603 = vmatprep.subr.mxu0 0.0
        %2604 = vmatpush1.msra.mxu0 0.0
        %2605 = vmatprep.subr.mxu0 0.0
        %2606 = vmatpush1.msra.mxu0 0.0
        %2607 = vmatprep.subr.mxu0 0.0
        %2608 = vmatpush1.msra.mxu0 0.0
        %2609 = vmatprep.subr.mxu0 0.0
        %2610 = vmatpush1.msra.mxu0 0.0
        %2611 = vmatprep.subr.mxu0 0.0
        %2612 = vmatpush1.msra.mxu0 0.0
        %2613 = vmatprep.subr.mxu0 0.0
        %2614 = vmatpush1.msra.mxu0 0.0
        %2615 = vmatprep.subr.mxu0 0.0
        %2616 = vmatpush1.msra.mxu0 0.0
        %2617 = vmatprep.subr.mxu0 0.0
        %2618 = vmatpush1.msra.mxu0 0.0
        %2619 = vmatprep.mubr.f32.mxu0 0.0
        %v2620 = vand.u32 %v1346, 4294901760
        %2621 = vmatmul.mubr.f32.gmra.mrb[0].mxu0 %v2620
        %v2622 = vpop.f32.mrb[0].mxu0
        %v2623 = vadd.f32 %v2534, %v2622
        %v2624 = vpop.f32.mrb[0].mxu0
        %2625 = vmatprep.mubr.f32.mxu0 0.0
        %v2626 = vand.u32 %v1349, 4294901760
        %2627 = vmatmul.mubr.f32.gmra.mrb[0].mxu0 %v2626
        %v2628 = vpop.f32.mrb[0].mxu0
        %v2629 = vadd.f32 %v2540, %v2628
        %v2630 = vpop.f32.mrb[0].mxu0
        %2631 = vdwg.mxu0
        %v2632 = vtanh.pop %v1974
        %v2633 = vtanh.pop %v1980
        %v2634 = vmul.f32 %v2623, 0.5
        %v2635 = vmul.f32 %v2629, 0.5
        %v2636 = vtanh.pop %v2634
        %v2637 = vtanh.pop %v2635
        %v2638 = vmul.f32 %v2636, 0.5
        %v2639 = vmul.f32 %v2637, 0.5
        %v2640 = vadd.f32 %v2638, 0.5
        %v2641 = vadd.f32 %v2639, 0.5
        %v2642 = vmul.f32 %v2632, %v2640
        %v2643 = vmul.f32 %v2633, %v2641
        %s2644 = smul.u32 %s1325, 32
        %s2645 = scalar_lea.vmem %s10, %s2644
        %v2646 = vld [vmem:[%s2645] sm:$0xff]
        %v2647 = vld [vmem:[%s2645 + $0x8] sm:$0xff]
        %v2648 = vld [vmem:[%s2645 + $0x10] sm:$0xff]
        %v2649 = vld [vmem:[%s2645 + $0x18] sm:$0xff]
        %v2650 = vlaneseq
        %v2651 = vshrl.u32 %v2650, 7
        %v2652 = vsub.s32 3, %v2651
        %v2653 = vrot.slane %v560, %v2652
        %v2655 = vsel %vm1319, %v2642, 0
        %v2658 = vsel %vm1319, %v2643, 0
        %2660 = vmatprep.subr.mxu0 0.0
        %v2661 = vand.u32 %v2646, 4294901760
        %2662 = vmatpush1.msra.mxu0 %v2661
        %2663 = vmatprep.subr.mxu0 0.0
        %v2664 = vand.u32 %v2647, 4294901760
        %2665 = vmatpush1.msra.mxu0 %v2664
        %2666 = vmatprep.subr.mxu0 0.0
        %v2667 = vand.u32 %v2648, 4294901760
        %2668 = vmatpush1.msra.mxu0 %v2667
        %2669 = vmatprep.subr.mxu0 0.0
        %v2670 = vand.u32 %v2649, 4294901760
        %2671 = vmatpush1.msra.mxu0 %v2670
        %2672 = vmatprep.subr.mxu0 0.0
        %2673 = vmatpush1.msra.mxu0 0.0
        %2674 = vmatprep.subr.mxu0 0.0
        %2675 = vmatpush1.msra.mxu0 0.0
        %2676 = vmatprep.subr.mxu0 0.0
        %2677 = vmatpush1.msra.mxu0 0.0
        %2678 = vmatprep.subr.mxu0 0.0
        %2679 = vmatpush1.msra.mxu0 0.0
        %2680 = vmatprep.subr.mxu0 0.0
        %2681 = vmatpush1.msra.mxu0 0.0
        %2682 = vmatprep.subr.mxu0 0.0
        %2683 = vmatpush1.msra.mxu0 0.0
        %2684 = vmatprep.subr.mxu0 0.0
        %2685 = vmatpush1.msra.mxu0 0.0
        %2686 = vmatprep.subr.mxu0 0.0
        %2687 = vmatpush1.msra.mxu0 0.0
        %2688 = vmatprep.subr.mxu0 0.0
        %2689 = vmatpush1.msra.mxu0 0.0
        %2690 = vmatprep.subr.mxu0 0.0
        %2691 = vmatpush1.msra.mxu0 0.0
        %2692 = vmatprep.subr.mxu0 0.0
        %2693 = vmatpush1.msra.mxu0 0.0
        %2694 = vmatprep.subr.mxu0 0.0
        %2695 = vmatpush1.msra.mxu0 0.0
        %2696 = vmatprep.subr.mxu0 0.0
        %2697 = vmatpush1.msra.mxu0 0.0
        %2698 = vmatprep.subr.mxu0 0.0
        %2699 = vmatpush1.msra.mxu0 0.0
        %2700 = vmatprep.subr.mxu0 0.0
        %2701 = vmatpush1.msra.mxu0 0.0
        %2702 = vmatprep.subr.mxu0 0.0
        %2703 = vmatpush1.msra.mxu0 0.0
        %2704 = vmatprep.subr.mxu0 0.0
        %2705 = vmatpush1.msra.mxu0 0.0
        %2706 = vmatprep.subr.mxu0 0.0
        %2707 = vmatpush1.msra.mxu0 0.0
        %2708 = vmatprep.subr.mxu0 0.0
        %2709 = vmatpush1.msra.mxu0 0.0
        %2710 = vmatprep.subr.mxu0 0.0
        %2711 = vmatpush1.msra.mxu0 0.0
        %2712 = vmatprep.subr.mxu0 0.0
        %2713 = vmatpush1.msra.mxu0 0.0
        %2714 = vmatprep.subr.mxu0 0.0
        %2715 = vmatpush1.msra.mxu0 0.0
        %2716 = vmatprep.subr.mxu0 0.0
        %2717 = vmatpush1.msra.mxu0 0.0
        %2718 = vmatprep.subr.mxu0 0.0
        %2719 = vmatpush1.msra.mxu0 0.0
        %2720 = vmatprep.subr.mxu0 0.0
        %2721 = vmatpush1.msra.mxu0 0.0
        %2722 = vmatprep.subr.mxu0 0.0
        %2723 = vmatpush1.msra.mxu0 0.0
        %2724 = vmatprep.subr.mxu0 0.0
        %2725 = vmatpush1.msra.mxu0 0.0
        %2726 = vmatprep.subr.mxu0 0.0
        %2727 = vmatpush1.msra.mxu0 0.0
        %2728 = vmatprep.mubr.f32.mxu0 0.0
        %v2729 = vand.u32 %v2655, 4294901760
        %v2730 = vsub.f32 %v2655, %v2729
        %v2731 = vand.u32 %v2730, 4294901760
        %v2732 = vsub.f32 %v2730, %v2731
        %v2733 = vand.u32 %v2732, 4294901760
        %2734 = vmatmul.mubr.f32.gmra.mrb[0].mxu0 %v2733
        %v2735 = vpop.f32.mrb[0].mxu0
        %v2736 = vadd.f32 %v2653, %v2735
        %v2737 = vpop.f32.mrb[0].mxu0
        %2738 = vmatprep.mubr.f32.mxu0 0.0
        %v2739 = vand.u32 %v2658, 4294901760
        %v2740 = vsub.f32 %v2658, %v2739
        %v2741 = vand.u32 %v2740, 4294901760
        %v2742 = vsub.f32 %v2740, %v2741
        %v2743 = vand.u32 %v2742, 4294901760
        %2744 = vmatmul.mubr.f32.gmra.mrb[0].mxu0 %v2743
        %v2745 = vpop.f32.mrb[0].mxu0
        %v2746 = vadd.f32 %v2653, %v2745
        %v2747 = vpop.f32.mrb[0].mxu0
        %2748 = vdwg.mxu0
        %2749 = vmatprep.subr.mxu0 0.0
        %v2750 = vand.u32 %v2646, 4294901760
        %v2751 = vsub.f32 %v2646, %v2750
        %v2752 = vand.u32 %v2751, 4294901760
        %v2753 = vsub.f32 %v2751, %v2752
        %v2754 = vand.u32 %v2753, 4294901760
        %2755 = vmatpush1.msra.mxu0 %v2754
        %2756 = vmatprep.subr.mxu0 0.0
        %v2757 = vand.u32 %v2647, 4294901760
        %v2758 = vsub.f32 %v2647, %v2757
        %v2759 = vand.u32 %v2758, 4294901760
        %v2760 = vsub.f32 %v2758, %v2759
        %v2761 = vand.u32 %v2760, 4294901760
        %2762 = vmatpush1.msra.mxu0 %v2761
        %2763 = vmatprep.subr.mxu0 0.0
        %v2764 = vand.u32 %v2648, 4294901760
        %v2765 = vsub.f32 %v2648, %v2764
        %v2766 = vand.u32 %v2765, 4294901760
        %v2767 = vsub.f32 %v2765, %v2766
        %v2768 = vand.u32 %v2767, 4294901760
        %2769 = vmatpush1.msra.mxu0 %v2768
        %2770 = vmatprep.subr.mxu0 0.0
        %v2771 = vand.u32 %v2649, 4294901760
        %v2772 = vsub.f32 %v2649, %v2771
        %v2773 = vand.u32 %v2772, 4294901760
        %v2774 = vsub.f32 %v2772, %v2773
        %v2775 = vand.u32 %v2774, 4294901760
        %2776 = vmatpush1.msra.mxu0 %v2775
        %2777 = vmatprep.subr.mxu0 0.0
        %2778 = vmatpush1.msra.mxu0 0.0
        %2779 = vmatprep.subr.mxu0 0.0
        %2780 = vmatpush1.msra.mxu0 0.0
        %2781 = vmatprep.subr.mxu0 0.0
        %2782 = vmatpush1.msra.mxu0 0.0
        %2783 = vmatprep.subr.mxu0 0.0
        %2784 = vmatpush1.msra.mxu0 0.0
        %2785 = vmatprep.subr.mxu0 0.0
        %2786 = vmatpush1.msra.mxu0 0.0
        %2787 = vmatprep.subr.mxu0 0.0
        %2788 = vmatpush1.msra.mxu0 0.0
        %2789 = vmatprep.subr.mxu0 0.0
        %2790 = vmatpush1.msra.mxu0 0.0
        %2791 = vmatprep.subr.mxu0 0.0
        %2792 = vmatpush1.msra.mxu0 0.0
        %2793 = vmatprep.subr.mxu0 0.0
        %2794 = vmatpush1.msra.mxu0 0.0
        %2795 = vmatprep.subr.mxu0 0.0
        %2796 = vmatpush1.msra.mxu0 0.0
        %2797 = vmatprep.subr.mxu0 0.0
        %2798 = vmatpush1.msra.mxu0 0.0
        %2799 = vmatprep.subr.mxu0 0.0
        %2800 = vmatpush1.msra.mxu0 0.0
        %2801 = vmatprep.subr.mxu0 0.0
        %2802 = vmatpush1.msra.mxu0 0.0
        %2803 = vmatprep.subr.mxu0 0.0
        %2804 = vmatpush1.msra.mxu0 0.0
        %2805 = vmatprep.subr.mxu0 0.0
        %2806 = vmatpush1.msra.mxu0 0.0
        %2807 = vmatprep.subr.mxu0 0.0
        %2808 = vmatpush1.msra.mxu0 0.0
        %2809 = vmatprep.subr.mxu0 0.0
        %2810 = vmatpush1.msra.mxu0 0.0
        %2811 = vmatprep.subr.mxu0 0.0
        %2812 = vmatpush1.msra.mxu0 0.0
        %2813 = vmatprep.subr.mxu0 0.0
        %2814 = vmatpush1.msra.mxu0 0.0
        %2815 = vmatprep.subr.mxu0 0.0
        %2816 = vmatpush1.msra.mxu0 0.0
        %2817 = vmatprep.subr.mxu0 0.0
        %2818 = vmatpush1.msra.mxu0 0.0
        %2819 = vmatprep.subr.mxu0 0.0
        %2820 = vmatpush1.msra.mxu0 0.0
        %2821 = vmatprep.subr.mxu0 0.0
        %2822 = vmatpush1.msra.mxu0 0.0
        %2823 = vmatprep.subr.mxu0 0.0
        %2824 = vmatpush1.msra.mxu0 0.0
        %2825 = vmatprep.subr.mxu0 0.0
        %2826 = vmatpush1.msra.mxu0 0.0
        %2827 = vmatprep.subr.mxu0 0.0
        %2828 = vmatpush1.msra.mxu0 0.0
        %2829 = vmatprep.subr.mxu0 0.0
        %2830 = vmatpush1.msra.mxu0 0.0
        %2831 = vmatprep.subr.mxu0 0.0
        %2832 = vmatpush1.msra.mxu0 0.0
        %2833 = vmatprep.mubr.f32.mxu0 0.0
        %v2834 = vand.u32 %v2655, 4294901760
        %2835 = vmatmul.mubr.f32.gmra.mrb[0].mxu0 %v2834
        %v2836 = vpop.f32.mrb[0].mxu0
        %v2837 = vadd.f32 %v2736, %v2836
        %v2838 = vpop.f32.mrb[0].mxu0
        %2839 = vmatprep.mubr.f32.mxu0 0.0
        %v2840 = vand.u32 %v2658, 4294901760
        %2841 = vmatmul.mubr.f32.gmra.mrb[0].mxu0 %v2840
        %v2842 = vpop.f32.mrb[0].mxu0
        %v2843 = vadd.f32 %v2746, %v2842
        %v2844 = vpop.f32.mrb[0].mxu0
        %2845 = vdwg.mxu0
        %2846 = vmatprep.subr.mxu0 0.0
        %v2847 = vand.u32 %v2646, 4294901760
        %v2848 = vsub.f32 %v2646, %v2847
        %2849 = vmatpush1.msra.mxu0 %v2848
        %2850 = vmatprep.subr.mxu0 0.0
        %v2851 = vand.u32 %v2647, 4294901760
        %v2852 = vsub.f32 %v2647, %v2851
        %2853 = vmatpush1.msra.mxu0 %v2852
        %2854 = vmatprep.subr.mxu0 0.0
        %v2855 = vand.u32 %v2648, 4294901760
        %v2856 = vsub.f32 %v2648, %v2855
        %2857 = vmatpush1.msra.mxu0 %v2856
        %2858 = vmatprep.subr.mxu0 0.0
        %v2859 = vand.u32 %v2649, 4294901760
        %v2860 = vsub.f32 %v2649, %v2859
        %2861 = vmatpush1.msra.mxu0 %v2860
        %2862 = vmatprep.subr.mxu0 0.0
        %2863 = vmatpush1.msra.mxu0 0.0
        %2864 = vmatprep.subr.mxu0 0.0
        %2865 = vmatpush1.msra.mxu0 0.0
        %2866 = vmatprep.subr.mxu0 0.0
        %2867 = vmatpush1.msra.mxu0 0.0
        %2868 = vmatprep.subr.mxu0 0.0
        %2869 = vmatpush1.msra.mxu0 0.0
        %2870 = vmatprep.subr.mxu0 0.0
        %2871 = vmatpush1.msra.mxu0 0.0
        %2872 = vmatprep.subr.mxu0 0.0
        %2873 = vmatpush1.msra.mxu0 0.0
        %2874 = vmatprep.subr.mxu0 0.0
        %2875 = vmatpush1.msra.mxu0 0.0
        %2876 = vmatprep.subr.mxu0 0.0
        %2877 = vmatpush1.msra.mxu0 0.0
        %2878 = vmatprep.subr.mxu0 0.0
        %2879 = vmatpush1.msra.mxu0 0.0
        %2880 = vmatprep.subr.mxu0 0.0
        %2881 = vmatpush1.msra.mxu0 0.0
        %2882 = vmatprep.subr.mxu0 0.0
        %2883 = vmatpush1.msra.mxu0 0.0
        %2884 = vmatprep.subr.mxu0 0.0
        %2885 = vmatpush1.msra.mxu0 0.0
        %2886 = vmatprep.subr.mxu0 0.0
        %2887 = vmatpush1.msra.mxu0 0.0
        %2888 = vmatprep.subr.mxu0 0.0
        %2889 = vmatpush1.msra.mxu0 0.0
        %2890 = vmatprep.subr.mxu0 0.0
        %2891 = vmatpush1.msra.mxu0 0.0
        %2892 = vmatprep.subr.mxu0 0.0
        %2893 = vmatpush1.msra.mxu0 0.0
        %2894 = vmatprep.subr.mxu0 0.0
        %2895 = vmatpush1.msra.mxu0 0.0
        %2896 = vmatprep.subr.mxu0 0.0
        %2897 = vmatpush1.msra.mxu0 0.0
        %2898 = vmatprep.subr.mxu0 0.0
        %2899 = vmatpush1.msra.mxu0 0.0
        %2900 = vmatprep.subr.mxu0 0.0
        %2901 = vmatpush1.msra.mxu0 0.0
        %2902 = vmatprep.subr.mxu0 0.0
        %2903 = vmatpush1.msra.mxu0 0.0
        %2904 = vmatprep.subr.mxu0 0.0
        %2905 = vmatpush1.msra.mxu0 0.0
        %2906 = vmatprep.subr.mxu0 0.0
        %2907 = vmatpush1.msra.mxu0 0.0
        %2908 = vmatprep.subr.mxu0 0.0
        %2909 = vmatpush1.msra.mxu0 0.0
        %2910 = vmatprep.subr.mxu0 0.0
        %2911 = vmatpush1.msra.mxu0 0.0
        %2912 = vmatprep.subr.mxu0 0.0
        %2913 = vmatpush1.msra.mxu0 0.0
        %2914 = vmatprep.subr.mxu0 0.0
        %2915 = vmatpush1.msra.mxu0 0.0
        %2916 = vmatprep.subr.mxu0 0.0
        %2917 = vmatpush1.msra.mxu0 0.0
        %2918 = vmatprep.mubr.f32.mxu0 0.0
        %v2919 = vand.u32 %v2655, 4294901760
        %v2920 = vsub.f32 %v2655, %v2919
        %2921 = vmatmul.mubr.f32.gmra.mrb[0].mxu0 %v2920
        %v2922 = vpop.f32.mrb[0].mxu0
        %v2923 = vadd.f32 %v2837, %v2922
        %v2924 = vpop.f32.mrb[0].mxu0
        %2925 = vmatprep.mubr.f32.mxu0 0.0
        %v2926 = vand.u32 %v2658, 4294901760
        %v2927 = vsub.f32 %v2658, %v2926
        %2928 = vmatmul.mubr.f32.gmra.mrb[0].mxu0 %v2927
        %v2929 = vpop.f32.mrb[0].mxu0
        %v2930 = vadd.f32 %v2843, %v2929
        %v2931 = vpop.f32.mrb[0].mxu0
        %2932 = vdwg.mxu0
        %2933 = vmatprep.subr.mxu0 0.0
        %v2934 = vand.u32 %v2646, 4294901760
        %2935 = vmatpush1.msra.mxu0 %v2934
        %2936 = vmatprep.subr.mxu0 0.0
        %v2937 = vand.u32 %v2647, 4294901760
        %2938 = vmatpush1.msra.mxu0 %v2937
        %2939 = vmatprep.subr.mxu0 0.0
        %v2940 = vand.u32 %v2648, 4294901760
        %2941 = vmatpush1.msra.mxu0 %v2940
        %2942 = vmatprep.subr.mxu0 0.0
        %v2943 = vand.u32 %v2649, 4294901760
        %2944 = vmatpush1.msra.mxu0 %v2943
        %2945 = vmatprep.subr.mxu0 0.0
        %2946 = vmatpush1.msra.mxu0 0.0
        %2947 = vmatprep.subr.mxu0 0.0
        %2948 = vmatpush1.msra.mxu0 0.0
        %2949 = vmatprep.subr.mxu0 0.0
        %2950 = vmatpush1.msra.mxu0 0.0
        %2951 = vmatprep.subr.mxu0 0.0
        %2952 = vmatpush1.msra.mxu0 0.0
        %2953 = vmatprep.subr.mxu0 0.0
        %2954 = vmatpush1.msra.mxu0 0.0
        %2955 = vmatprep.subr.mxu0 0.0
        %2956 = vmatpush1.msra.mxu0 0.0
        %2957 = vmatprep.subr.mxu0 0.0
        %2958 = vmatpush1.msra.mxu0 0.0
        %2959 = vmatprep.subr.mxu0 0.0
        %2960 = vmatpush1.msra.mxu0 0.0
        %2961 = vmatprep.subr.mxu0 0.0
        %2962 = vmatpush1.msra.mxu0 0.0
        %2963 = vmatprep.subr.mxu0 0.0
        %2964 = vmatpush1.msra.mxu0 0.0
        %2965 = vmatprep.subr.mxu0 0.0
        %2966 = vmatpush1.msra.mxu0 0.0
        %2967 = vmatprep.subr.mxu0 0.0
        %2968 = vmatpush1.msra.mxu0 0.0
        %2969 = vmatprep.subr.mxu0 0.0
        %2970 = vmatpush1.msra.mxu0 0.0
        %2971 = vmatprep.subr.mxu0 0.0
        %2972 = vmatpush1.msra.mxu0 0.0
        %2973 = vmatprep.subr.mxu0 0.0
        %2974 = vmatpush1.msra.mxu0 0.0
        %2975 = vmatprep.subr.mxu0 0.0
        %2976 = vmatpush1.msra.mxu0 0.0
        %2977 = vmatprep.subr.mxu0 0.0
        %2978 = vmatpush1.msra.mxu0 0.0
        %2979 = vmatprep.subr.mxu0 0.0
        %2980 = vmatpush1.msra.mxu0 0.0
        %2981 = vmatprep.subr.mxu0 0.0
        %2982 = vmatpush1.msra.mxu0 0.0
        %2983 = vmatprep.subr.mxu0 0.0
        %2984 = vmatpush1.msra.mxu0 0.0
        %2985 = vmatprep.subr.mxu0 0.0
        %2986 = vmatpush1.msra.mxu0 0.0
        %2987 = vmatprep.subr.mxu0 0.0
        %2988 = vmatpush1.msra.mxu0 0.0
        %2989 = vmatprep.subr.mxu0 0.0
        %2990 = vmatpush1.msra.mxu0 0.0
        %2991 = vmatprep.subr.mxu0 0.0
        %2992 = vmatpush1.msra.mxu0 0.0
        %2993 = vmatprep.subr.mxu0 0.0
        %2994 = vmatpush1.msra.mxu0 0.0
        %2995 = vmatprep.subr.mxu0 0.0
        %2996 = vmatpush1.msra.mxu0 0.0
        %2997 = vmatprep.subr.mxu0 0.0
        %2998 = vmatpush1.msra.mxu0 0.0
        %2999 = vmatprep.subr.mxu0 0.0
        %3000 = vmatpush1.msra.mxu0 0.0
        %3001 = vmatprep.mubr.f32.mxu0 0.0
        %v3002 = vand.u32 %v2655, 4294901760
        %v3003 = vsub.f32 %v2655, %v3002
        %v3004 = vand.u32 %v3003, 4294901760
        %3005 = vmatmul.mubr.f32.gmra.mrb[0].mxu0 %v3004
        %v3006 = vpop.f32.mrb[0].mxu0
        %v3007 = vadd.f32 %v2923, %v3006
        %v3008 = vpop.f32.mrb[0].mxu0
        %3009 = vmatprep.mubr.f32.mxu0 0.0
        %v3010 = vand.u32 %v2658, 4294901760
        %v3011 = vsub.f32 %v2658, %v3010
        %v3012 = vand.u32 %v3011, 4294901760
        %3013 = vmatmul.mubr.f32.gmra.mrb[0].mxu0 %v3012
        %v3014 = vpop.f32.mrb[0].mxu0
        %v3015 = vadd.f32 %v2930, %v3014
        %v3016 = vpop.f32.mrb[0].mxu0
        %3017 = vdwg.mxu0
        %3018 = vmatprep.subr.mxu0 0.0
        %v3019 = vand.u32 %v2646, 4294901760
        %v3020 = vsub.f32 %v2646, %v3019
        %v3021 = vand.u32 %v3020, 4294901760
        %3022 = vmatpush1.msra.mxu0 %v3021
        %3023 = vmatprep.subr.mxu0 0.0
        %v3024 = vand.u32 %v2647, 4294901760
        %v3025 = vsub.f32 %v2647, %v3024
        %v3026 = vand.u32 %v3025, 4294901760
        %3027 = vmatpush1.msra.mxu0 %v3026
        %3028 = vmatprep.subr.mxu0 0.0
        %v3029 = vand.u32 %v2648, 4294901760
        %v3030 = vsub.f32 %v2648, %v3029
        %v3031 = vand.u32 %v3030, 4294901760
        %3032 = vmatpush1.msra.mxu0 %v3031
        %3033 = vmatprep.subr.mxu0 0.0
        %v3034 = vand.u32 %v2649, 4294901760
        %v3035 = vsub.f32 %v2649, %v3034
        %v3036 = vand.u32 %v3035, 4294901760
        %3037 = vmatpush1.msra.mxu0 %v3036
        %3038 = vmatprep.subr.mxu0 0.0
        %3039 = vmatpush1.msra.mxu0 0.0
        %3040 = vmatprep.subr.mxu0 0.0
        %3041 = vmatpush1.msra.mxu0 0.0
        %3042 = vmatprep.subr.mxu0 0.0
        %3043 = vmatpush1.msra.mxu0 0.0
        %3044 = vmatprep.subr.mxu0 0.0
        %3045 = vmatpush1.msra.mxu0 0.0
        %3046 = vmatprep.subr.mxu0 0.0
        %3047 = vmatpush1.msra.mxu0 0.0
        %3048 = vmatprep.subr.mxu0 0.0
        %3049 = vmatpush1.msra.mxu0 0.0
        %3050 = vmatprep.subr.mxu0 0.0
        %3051 = vmatpush1.msra.mxu0 0.0
        %3052 = vmatprep.subr.mxu0 0.0
        %3053 = vmatpush1.msra.mxu0 0.0
        %3054 = vmatprep.subr.mxu0 0.0
        %3055 = vmatpush1.msra.mxu0 0.0
        %3056 = vmatprep.subr.mxu0 0.0
        %3057 = vmatpush1.msra.mxu0 0.0
        %3058 = vmatprep.subr.mxu0 0.0
        %3059 = vmatpush1.msra.mxu0 0.0
        %3060 = vmatprep.subr.mxu0 0.0
        %3061 = vmatpush1.msra.mxu0 0.0
        %3062 = vmatprep.subr.mxu0 0.0
        %3063 = vmatpush1.msra.mxu0 0.0
        %3064 = vmatprep.subr.mxu0 0.0
        %3065 = vmatpush1.msra.mxu0 0.0
        %3066 = vmatprep.subr.mxu0 0.0
        %3067 = vmatpush1.msra.mxu0 0.0
        %3068 = vmatprep.subr.mxu0 0.0
        %3069 = vmatpush1.msra.mxu0 0.0
        %3070 = vmatprep.subr.mxu0 0.0
        %3071 = vmatpush1.msra.mxu0 0.0
        %3072 = vmatprep.subr.mxu0 0.0
        %3073 = vmatpush1.msra.mxu0 0.0
        %3074 = vmatprep.subr.mxu0 0.0
        %3075 = vmatpush1.msra.mxu0 0.0
        %3076 = vmatprep.subr.mxu0 0.0
        %3077 = vmatpush1.msra.mxu0 0.0
        %3078 = vmatprep.subr.mxu0 0.0
        %3079 = vmatpush1.msra.mxu0 0.0
        %3080 = vmatprep.subr.mxu0 0.0
        %3081 = vmatpush1.msra.mxu0 0.0
        %3082 = vmatprep.subr.mxu0 0.0
        %3083 = vmatpush1.msra.mxu0 0.0
        %3084 = vmatprep.subr.mxu0 0.0
        %3085 = vmatpush1.msra.mxu0 0.0
        %3086 = vmatprep.subr.mxu0 0.0
        %3087 = vmatpush1.msra.mxu0 0.0
        %3088 = vmatprep.subr.mxu0 0.0
        %3089 = vmatpush1.msra.mxu0 0.0
        %3090 = vmatprep.subr.mxu0 0.0
        %3091 = vmatpush1.msra.mxu0 0.0
        %3092 = vmatprep.subr.mxu0 0.0
        %3093 = vmatpush1.msra.mxu0 0.0
        %3094 = vmatprep.mubr.f32.mxu0 0.0
        %v3095 = vand.u32 %v2655, 4294901760
        %3096 = vmatmul.mubr.f32.gmra.mrb[0].mxu0 %v3095
        %v3097 = vpop.f32.mrb[0].mxu0
        %v3098 = vadd.f32 %v3007, %v3097
        %v3099 = vpop.f32.mrb[0].mxu0
        %3100 = vmatprep.mubr.f32.mxu0 0.0
        %v3101 = vand.u32 %v2658, 4294901760
        %3102 = vmatmul.mubr.f32.gmra.mrb[0].mxu0 %v3101
        %v3103 = vpop.f32.mrb[0].mxu0
        %v3104 = vadd.f32 %v3015, %v3103
        %v3105 = vpop.f32.mrb[0].mxu0
        %3106 = vdwg.mxu0
        %3107 = vmatprep.subr.mxu0 0.0
        %v3108 = vand.u32 %v2646, 4294901760
        %3109 = vmatpush1.msra.mxu0 %v3108
        %3110 = vmatprep.subr.mxu0 0.0
        %v3111 = vand.u32 %v2647, 4294901760
        %3112 = vmatpush1.msra.mxu0 %v3111
        %3113 = vmatprep.subr.mxu0 0.0
        %v3114 = vand.u32 %v2648, 4294901760
        %3115 = vmatpush1.msra.mxu0 %v3114
        %3116 = vmatprep.subr.mxu0 0.0
        %v3117 = vand.u32 %v2649, 4294901760
        %3118 = vmatpush1.msra.mxu0 %v3117
        %3119 = vmatprep.subr.mxu0 0.0
        %3120 = vmatpush1.msra.mxu0 0.0
        %3121 = vmatprep.subr.mxu0 0.0
        %3122 = vmatpush1.msra.mxu0 0.0
        %3123 = vmatprep.subr.mxu0 0.0
        %3124 = vmatpush1.msra.mxu0 0.0
        %3125 = vmatprep.subr.mxu0 0.0
        %3126 = vmatpush1.msra.mxu0 0.0
        %3127 = vmatprep.subr.mxu0 0.0
        %3128 = vmatpush1.msra.mxu0 0.0
        %3129 = vmatprep.subr.mxu0 0.0
        %3130 = vmatpush1.msra.mxu0 0.0
        %3131 = vmatprep.subr.mxu0 0.0
        %3132 = vmatpush1.msra.mxu0 0.0
        %3133 = vmatprep.subr.mxu0 0.0
        %3134 = vmatpush1.msra.mxu0 0.0
        %3135 = vmatprep.subr.mxu0 0.0
        %3136 = vmatpush1.msra.mxu0 0.0
        %3137 = vmatprep.subr.mxu0 0.0
        %3138 = vmatpush1.msra.mxu0 0.0
        %3139 = vmatprep.subr.mxu0 0.0
        %3140 = vmatpush1.msra.mxu0 0.0
        %3141 = vmatprep.subr.mxu0 0.0
        %3142 = vmatpush1.msra.mxu0 0.0
        %3143 = vmatprep.subr.mxu0 0.0
        %3144 = vmatpush1.msra.mxu0 0.0
        %3145 = vmatprep.subr.mxu0 0.0
        %3146 = vmatpush1.msra.mxu0 0.0
        %3147 = vmatprep.subr.mxu0 0.0
        %3148 = vmatpush1.msra.mxu0 0.0
        %3149 = vmatprep.subr.mxu0 0.0
        %3150 = vmatpush1.msra.mxu0 0.0
        %3151 = vmatprep.subr.mxu0 0.0
        %3152 = vmatpush1.msra.mxu0 0.0
        %3153 = vmatprep.subr.mxu0 0.0
        %3154 = vmatpush1.msra.mxu0 0.0
        %3155 = vmatprep.subr.mxu0 0.0
        %3156 = vmatpush1.msra.mxu0 0.0
        %3157 = vmatprep.subr.mxu0 0.0
        %3158 = vmatpush1.msra.mxu0 0.0
        %3159 = vmatprep.subr.mxu0 0.0
        %3160 = vmatpush1.msra.mxu0 0.0
        %3161 = vmatprep.subr.mxu0 0.0
        %3162 = vmatpush1.msra.mxu0 0.0
        %3163 = vmatprep.subr.mxu0 0.0
        %3164 = vmatpush1.msra.mxu0 0.0
        %3165 = vmatprep.subr.mxu0 0.0
        %3166 = vmatpush1.msra.mxu0 0.0
        %3167 = vmatprep.subr.mxu0 0.0
        %3168 = vmatpush1.msra.mxu0 0.0
        %3169 = vmatprep.subr.mxu0 0.0
        %3170 = vmatpush1.msra.mxu0 0.0
        %3171 = vmatprep.subr.mxu0 0.0
        %3172 = vmatpush1.msra.mxu0 0.0
        %3173 = vmatprep.subr.mxu0 0.0
        %3174 = vmatpush1.msra.mxu0 0.0
        %3175 = vmatprep.mubr.f32.mxu0 0.0
        %v3176 = vand.u32 %v2655, 4294901760
        %3177 = vmatmul.mubr.f32.gmra.mrb[0].mxu0 %v3176
        %v3178 = vpop.f32.mrb[0].mxu0
        %v3179 = vadd.f32 %v3098, %v3178
        %v3180 = vpop.f32.mrb[0].mxu0
        %3181 = vmatprep.mubr.f32.mxu0 0.0
        %v3182 = vand.u32 %v2658, 4294901760
        %3183 = vmatmul.mubr.f32.gmra.mrb[0].mxu0 %v3182
        %v3184 = vpop.f32.mrb[0].mxu0
        %v3185 = vadd.f32 %v3104, %v3184
        %v3186 = vpop.f32.mrb[0].mxu0
        %3187 = vdwg.mxu0
        %v3188 = vadd.f32 %v3179, 0.0
        %v3189 = vadd.f32 %v3185, 0.0
        %s3190 = scalar_lea.vmem %s9, %s2644
        %v3191 = vld [vmem:[%s3190] sm:$0xff]
        %v3192 = vld [vmem:[%s3190 + $0x8] sm:$0xff]
        %v3193 = vld [vmem:[%s3190 + $0x10] sm:$0xff]
        %v3194 = vld [vmem:[%s3190 + $0x18] sm:$0xff]
        %v3195 = vlaneseq
        %v3196 = vshrl.u32 %v3195, 7
        %v3197 = vsub.s32 1, %v3196
        %v3198 = vrot.slane %v560, %v3197
        %3199 = vmatprep.subr.mxu0 0.0
        %v3200 = vand.u32 %v3191, 4294901760
        %3201 = vmatpush1.msra.mxu0 %v3200
        %3202 = vmatprep.subr.mxu0 0.0
        %v3203 = vand.u32 %v3192, 4294901760
        %3204 = vmatpush1.msra.mxu0 %v3203
        %3205 = vmatprep.subr.mxu0 0.0
        %v3206 = vand.u32 %v3193, 4294901760
        %3207 = vmatpush1.msra.mxu0 %v3206
        %3208 = vmatprep.subr.mxu0 0.0
        %v3209 = vand.u32 %v3194, 4294901760
        %3210 = vmatpush1.msra.mxu0 %v3209
        %3211 = vmatprep.subr.mxu0 0.0
        %3212 = vmatpush1.msra.mxu0 0.0
        %3213 = vmatprep.subr.mxu0 0.0
        %3214 = vmatpush1.msra.mxu0 0.0
        %3215 = vmatprep.subr.mxu0 0.0
        %3216 = vmatpush1.msra.mxu0 0.0
        %3217 = vmatprep.subr.mxu0 0.0
        %3218 = vmatpush1.msra.mxu0 0.0
        %3219 = vmatprep.subr.mxu0 0.0
        %3220 = vmatpush1.msra.mxu0 0.0
        %3221 = vmatprep.subr.mxu0 0.0
        %3222 = vmatpush1.msra.mxu0 0.0
        %3223 = vmatprep.subr.mxu0 0.0
        %3224 = vmatpush1.msra.mxu0 0.0
        %3225 = vmatprep.subr.mxu0 0.0
        %3226 = vmatpush1.msra.mxu0 0.0
        %3227 = vmatprep.subr.mxu0 0.0
        %3228 = vmatpush1.msra.mxu0 0.0
        %3229 = vmatprep.subr.mxu0 0.0
        %3230 = vmatpush1.msra.mxu0 0.0
        %3231 = vmatprep.subr.mxu0 0.0
        %3232 = vmatpush1.msra.mxu0 0.0
        %3233 = vmatprep.subr.mxu0 0.0
        %3234 = vmatpush1.msra.mxu0 0.0
        %3235 = vmatprep.subr.mxu0 0.0
        %3236 = vmatpush1.msra.mxu0 0.0
        %3237 = vmatprep.subr.mxu0 0.0
        %3238 = vmatpush1.msra.mxu0 0.0
        %3239 = vmatprep.subr.mxu0 0.0
        %3240 = vmatpush1.msra.mxu0 0.0
        %3241 = vmatprep.subr.mxu0 0.0
        %3242 = vmatpush1.msra.mxu0 0.0
        %3243 = vmatprep.subr.mxu0 0.0
        %3244 = vmatpush1.msra.mxu0 0.0
        %3245 = vmatprep.subr.mxu0 0.0
        %3246 = vmatpush1.msra.mxu0 0.0
        %3247 = vmatprep.subr.mxu0 0.0
        %3248 = vmatpush1.msra.mxu0 0.0
        %3249 = vmatprep.subr.mxu0 0.0
        %3250 = vmatpush1.msra.mxu0 0.0
        %3251 = vmatprep.subr.mxu0 0.0
        %3252 = vmatpush1.msra.mxu0 0.0
        %3253 = vmatprep.subr.mxu0 0.0
        %3254 = vmatpush1.msra.mxu0 0.0
        %3255 = vmatprep.subr.mxu0 0.0
        %3256 = vmatpush1.msra.mxu0 0.0
        %3257 = vmatprep.subr.mxu0 0.0
        %3258 = vmatpush1.msra.mxu0 0.0
        %3259 = vmatprep.subr.mxu0 0.0
        %3260 = vmatpush1.msra.mxu0 0.0
        %3261 = vmatprep.subr.mxu0 0.0
        %3262 = vmatpush1.msra.mxu0 0.0
        %3263 = vmatprep.subr.mxu0 0.0
        %3264 = vmatpush1.msra.mxu0 0.0
        %3265 = vmatprep.subr.mxu0 0.0
        %3266 = vmatpush1.msra.mxu0 0.0
        %3267 = vmatprep.mubr.f32.mxu0 0.0
        %v3268 = vand.u32 %v2655, 4294901760
        %v3269 = vsub.f32 %v2655, %v3268
        %v3270 = vand.u32 %v3269, 4294901760
        %v3271 = vsub.f32 %v3269, %v3270
        %v3272 = vand.u32 %v3271, 4294901760
        %3273 = vmatmul.mubr.f32.gmra.mrb[0].mxu0 %v3272
        %v3274 = vpop.f32.mrb[0].mxu0
        %v3275 = vadd.f32 %v3198, %v3274
        %v3276 = vpop.f32.mrb[0].mxu0
        %3277 = vmatprep.mubr.f32.mxu0 0.0
        %v3278 = vand.u32 %v2658, 4294901760
        %v3279 = vsub.f32 %v2658, %v3278
        %v3280 = vand.u32 %v3279, 4294901760
        %v3281 = vsub.f32 %v3279, %v3280
        %v3282 = vand.u32 %v3281, 4294901760
        %3283 = vmatmul.mubr.f32.gmra.mrb[0].mxu0 %v3282
        %v3284 = vpop.f32.mrb[0].mxu0
        %v3285 = vadd.f32 %v3198, %v3284
        %v3286 = vpop.f32.mrb[0].mxu0
        %3287 = vdwg.mxu0
        %3288 = vmatprep.subr.mxu0 0.0
        %v3289 = vand.u32 %v3191, 4294901760
        %v3290 = vsub.f32 %v3191, %v3289
        %v3291 = vand.u32 %v3290, 4294901760
        %v3292 = vsub.f32 %v3290, %v3291
        %v3293 = vand.u32 %v3292, 4294901760
        %3294 = vmatpush1.msra.mxu0 %v3293
        %3295 = vmatprep.subr.mxu0 0.0
        %v3296 = vand.u32 %v3192, 4294901760
        %v3297 = vsub.f32 %v3192, %v3296
        %v3298 = vand.u32 %v3297, 4294901760
        %v3299 = vsub.f32 %v3297, %v3298
        %v3300 = vand.u32 %v3299, 4294901760
        %3301 = vmatpush1.msra.mxu0 %v3300
        %3302 = vmatprep.subr.mxu0 0.0
        %v3303 = vand.u32 %v3193, 4294901760
        %v3304 = vsub.f32 %v3193, %v3303
        %v3305 = vand.u32 %v3304, 4294901760
        %v3306 = vsub.f32 %v3304, %v3305
        %v3307 = vand.u32 %v3306, 4294901760
        %3308 = vmatpush1.msra.mxu0 %v3307
        %3309 = vmatprep.subr.mxu0 0.0
        %v3310 = vand.u32 %v3194, 4294901760
        %v3311 = vsub.f32 %v3194, %v3310
        %v3312 = vand.u32 %v3311, 4294901760
        %v3313 = vsub.f32 %v3311, %v3312
        %v3314 = vand.u32 %v3313, 4294901760
        %3315 = vmatpush1.msra.mxu0 %v3314
        %3316 = vmatprep.subr.mxu0 0.0
        %3317 = vmatpush1.msra.mxu0 0.0
        %3318 = vmatprep.subr.mxu0 0.0
        %3319 = vmatpush1.msra.mxu0 0.0
        %3320 = vmatprep.subr.mxu0 0.0
        %3321 = vmatpush1.msra.mxu0 0.0
        %3322 = vmatprep.subr.mxu0 0.0
        %3323 = vmatpush1.msra.mxu0 0.0
        %3324 = vmatprep.subr.mxu0 0.0
        %3325 = vmatpush1.msra.mxu0 0.0
        %3326 = vmatprep.subr.mxu0 0.0
        %3327 = vmatpush1.msra.mxu0 0.0
        %3328 = vmatprep.subr.mxu0 0.0
        %3329 = vmatpush1.msra.mxu0 0.0
        %3330 = vmatprep.subr.mxu0 0.0
        %3331 = vmatpush1.msra.mxu0 0.0
        %3332 = vmatprep.subr.mxu0 0.0
        %3333 = vmatpush1.msra.mxu0 0.0
        %3334 = vmatprep.subr.mxu0 0.0
        %3335 = vmatpush1.msra.mxu0 0.0
        %3336 = vmatprep.subr.mxu0 0.0
        %3337 = vmatpush1.msra.mxu0 0.0
        %3338 = vmatprep.subr.mxu0 0.0
        %3339 = vmatpush1.msra.mxu0 0.0
        %3340 = vmatprep.subr.mxu0 0.0
        %3341 = vmatpush1.msra.mxu0 0.0
        %3342 = vmatprep.subr.mxu0 0.0
        %3343 = vmatpush1.msra.mxu0 0.0
        %3344 = vmatprep.subr.mxu0 0.0
        %3345 = vmatpush1.msra.mxu0 0.0
        %3346 = vmatprep.subr.mxu0 0.0
        %3347 = vmatpush1.msra.mxu0 0.0
        %3348 = vmatprep.subr.mxu0 0.0
        %3349 = vmatpush1.msra.mxu0 0.0
        %3350 = vmatprep.subr.mxu0 0.0
        %3351 = vmatpush1.msra.mxu0 0.0
        %3352 = vmatprep.subr.mxu0 0.0
        %3353 = vmatpush1.msra.mxu0 0.0
        %3354 = vmatprep.subr.mxu0 0.0
        %3355 = vmatpush1.msra.mxu0 0.0
        %3356 = vmatprep.subr.mxu0 0.0
        %3357 = vmatpush1.msra.mxu0 0.0
        %3358 = vmatprep.subr.mxu0 0.0
        %3359 = vmatpush1.msra.mxu0 0.0
        %3360 = vmatprep.subr.mxu0 0.0
        %3361 = vmatpush1.msra.mxu0 0.0
        %3362 = vmatprep.subr.mxu0 0.0
        %3363 = vmatpush1.msra.mxu0 0.0
        %3364 = vmatprep.subr.mxu0 0.0
        %3365 = vmatpush1.msra.mxu0 0.0
        %3366 = vmatprep.subr.mxu0 0.0
        %3367 = vmatpush1.msra.mxu0 0.0
        %3368 = vmatprep.subr.mxu0 0.0
        %3369 = vmatpush1.msra.mxu0 0.0
        %3370 = vmatprep.subr.mxu0 0.0
        %3371 = vmatpush1.msra.mxu0 0.0
        %3372 = vmatprep.mubr.f32.mxu0 0.0
        %v3373 = vand.u32 %v2655, 4294901760
        %3374 = vmatmul.mubr.f32.gmra.mrb[0].mxu0 %v3373
        %v3375 = vpop.f32.mrb[0].mxu0
        %v3376 = vadd.f32 %v3275, %v3375
        %v3377 = vpop.f32.mrb[0].mxu0
        %3378 = vmatprep.mubr.f32.mxu0 0.0
        %v3379 = vand.u32 %v2658, 4294901760
        %3380 = vmatmul.mubr.f32.gmra.mrb[0].mxu0 %v3379
        %v3381 = vpop.f32.mrb[0].mxu0
        %v3382 = vadd.f32 %v3285, %v3381
        %v3383 = vpop.f32.mrb[0].mxu0
        %3384 = vdwg.mxu0
        %3385 = vmatprep.subr.mxu0 0.0
        %v3386 = vand.u32 %v3191, 4294901760
        %v3387 = vsub.f32 %v3191, %v3386
        %3388 = vmatpush1.msra.mxu0 %v3387
        %3389 = vmatprep.subr.mxu0 0.0
        %v3390 = vand.u32 %v3192, 4294901760
        %v3391 = vsub.f32 %v3192, %v3390
        %3392 = vmatpush1.msra.mxu0 %v3391
        %3393 = vmatprep.subr.mxu0 0.0
        %v3394 = vand.u32 %v3193, 4294901760
        %v3395 = vsub.f32 %v3193, %v3394
        %3396 = vmatpush1.msra.mxu0 %v3395
        %3397 = vmatprep.subr.mxu0 0.0
        %v3398 = vand.u32 %v3194, 4294901760
        %v3399 = vsub.f32 %v3194, %v3398
        %3400 = vmatpush1.msra.mxu0 %v3399
        %3401 = vmatprep.subr.mxu0 0.0
        %3402 = vmatpush1.msra.mxu0 0.0
        %3403 = vmatprep.subr.mxu0 0.0
        %3404 = vmatpush1.msra.mxu0 0.0
        %3405 = vmatprep.subr.mxu0 0.0
        %3406 = vmatpush1.msra.mxu0 0.0
        %3407 = vmatprep.subr.mxu0 0.0
        %3408 = vmatpush1.msra.mxu0 0.0
        %3409 = vmatprep.subr.mxu0 0.0
        %3410 = vmatpush1.msra.mxu0 0.0
        %3411 = vmatprep.subr.mxu0 0.0
        %3412 = vmatpush1.msra.mxu0 0.0
        %3413 = vmatprep.subr.mxu0 0.0
        %3414 = vmatpush1.msra.mxu0 0.0
        %3415 = vmatprep.subr.mxu0 0.0
        %3416 = vmatpush1.msra.mxu0 0.0
        %3417 = vmatprep.subr.mxu0 0.0
        %3418 = vmatpush1.msra.mxu0 0.0
        %3419 = vmatprep.subr.mxu0 0.0
        %3420 = vmatpush1.msra.mxu0 0.0
        %3421 = vmatprep.subr.mxu0 0.0
        %3422 = vmatpush1.msra.mxu0 0.0
        %3423 = vmatprep.subr.mxu0 0.0
        %3424 = vmatpush1.msra.mxu0 0.0
        %3425 = vmatprep.subr.mxu0 0.0
        %3426 = vmatpush1.msra.mxu0 0.0
        %3427 = vmatprep.subr.mxu0 0.0
        %3428 = vmatpush1.msra.mxu0 0.0
        %3429 = vmatprep.subr.mxu0 0.0
        %3430 = vmatpush1.msra.mxu0 0.0
        %3431 = vmatprep.subr.mxu0 0.0
        %3432 = vmatpush1.msra.mxu0 0.0
        %3433 = vmatprep.subr.mxu0 0.0
        %3434 = vmatpush1.msra.mxu0 0.0
        %3435 = vmatprep.subr.mxu0 0.0
        %3436 = vmatpush1.msra.mxu0 0.0
        %3437 = vmatprep.subr.mxu0 0.0
        %3438 = vmatpush1.msra.mxu0 0.0
        %3439 = vmatprep.subr.mxu0 0.0
        %3440 = vmatpush1.msra.mxu0 0.0
        %3441 = vmatprep.subr.mxu0 0.0
        %3442 = vmatpush1.msra.mxu0 0.0
        %3443 = vmatprep.subr.mxu0 0.0
        %3444 = vmatpush1.msra.mxu0 0.0
        %3445 = vmatprep.subr.mxu0 0.0
        %3446 = vmatpush1.msra.mxu0 0.0
        %3447 = vmatprep.subr.mxu0 0.0
        %3448 = vmatpush1.msra.mxu0 0.0
        %3449 = vmatprep.subr.mxu0 0.0
        %3450 = vmatpush1.msra.mxu0 0.0
        %3451 = vmatprep.subr.mxu0 0.0
        %3452 = vmatpush1.msra.mxu0 0.0
        %3453 = vmatprep.subr.mxu0 0.0
        %3454 = vmatpush1.msra.mxu0 0.0
        %3455 = vmatprep.subr.mxu0 0.0
        %3456 = vmatpush1.msra.mxu0 0.0
        %3457 = vmatprep.mubr.f32.mxu0 0.0
        %v3458 = vand.u32 %v2655, 4294901760
        %v3459 = vsub.f32 %v2655, %v3458
        %3460 = vmatmul.mubr.f32.gmra.mrb[0].mxu0 %v3459
        %v3461 = vpop.f32.mrb[0].mxu0
        %v3462 = vadd.f32 %v3376, %v3461
        %v3463 = vpop.f32.mrb[0].mxu0
        %3464 = vmatprep.mubr.f32.mxu0 0.0
        %v3465 = vand.u32 %v2658, 4294901760
        %v3466 = vsub.f32 %v2658, %v3465
        %3467 = vmatmul.mubr.f32.gmra.mrb[0].mxu0 %v3466
        %v3468 = vpop.f32.mrb[0].mxu0
        %v3469 = vadd.f32 %v3382, %v3468
        %v3470 = vpop.f32.mrb[0].mxu0
        %3471 = vdwg.mxu0
        %3472 = vmatprep.subr.mxu0 0.0
        %v3473 = vand.u32 %v3191, 4294901760
        %3474 = vmatpush1.msra.mxu0 %v3473
        %3475 = vmatprep.subr.mxu0 0.0
        %v3476 = vand.u32 %v3192, 4294901760
        %3477 = vmatpush1.msra.mxu0 %v3476
        %3478 = vmatprep.subr.mxu0 0.0
        %v3479 = vand.u32 %v3193, 4294901760
        %3480 = vmatpush1.msra.mxu0 %v3479
        %3481 = vmatprep.subr.mxu0 0.0
        %v3482 = vand.u32 %v3194, 4294901760
        %3483 = vmatpush1.msra.mxu0 %v3482
        %3484 = vmatprep.subr.mxu0 0.0
        %3485 = vmatpush1.msra.mxu0 0.0
        %3486 = vmatprep.subr.mxu0 0.0
        %3487 = vmatpush1.msra.mxu0 0.0
        %3488 = vmatprep.subr.mxu0 0.0
        %3489 = vmatpush1.msra.mxu0 0.0
        %3490 = vmatprep.subr.mxu0 0.0
        %3491 = vmatpush1.msra.mxu0 0.0
        %3492 = vmatprep.subr.mxu0 0.0
        %3493 = vmatpush1.msra.mxu0 0.0
        %3494 = vmatprep.subr.mxu0 0.0
        %3495 = vmatpush1.msra.mxu0 0.0
        %3496 = vmatprep.subr.mxu0 0.0
        %3497 = vmatpush1.msra.mxu0 0.0
        %3498 = vmatprep.subr.mxu0 0.0
        %3499 = vmatpush1.msra.mxu0 0.0
        %3500 = vmatprep.subr.mxu0 0.0
        %3501 = vmatpush1.msra.mxu0 0.0
        %3502 = vmatprep.subr.mxu0 0.0
        %3503 = vmatpush1.msra.mxu0 0.0
        %3504 = vmatprep.subr.mxu0 0.0
        %3505 = vmatpush1.msra.mxu0 0.0
        %3506 = vmatprep.subr.mxu0 0.0
        %3507 = vmatpush1.msra.mxu0 0.0
        %3508 = vmatprep.subr.mxu0 0.0
        %3509 = vmatpush1.msra.mxu0 0.0
        %3510 = vmatprep.subr.mxu0 0.0
        %3511 = vmatpush1.msra.mxu0 0.0
        %3512 = vmatprep.subr.mxu0 0.0
        %3513 = vmatpush1.msra.mxu0 0.0
        %3514 = vmatprep.subr.mxu0 0.0
        %3515 = vmatpush1.msra.mxu0 0.0
        %3516 = vmatprep.subr.mxu0 0.0
        %3517 = vmatpush1.msra.mxu0 0.0
        %3518 = vmatprep.subr.mxu0 0.0
        %3519 = vmatpush1.msra.mxu0 0.0
        %3520 = vmatprep.subr.mxu0 0.0
        %3521 = vmatpush1.msra.mxu0 0.0
        %3522 = vmatprep.subr.mxu0 0.0
        %3523 = vmatpush1.msra.mxu0 0.0
        %3524 = vmatprep.subr.mxu0 0.0
        %3525 = vmatpush1.msra.mxu0 0.0
        %3526 = vmatprep.subr.mxu0 0.0
        %3527 = vmatpush1.msra.mxu0 0.0
        %3528 = vmatprep.subr.mxu0 0.0
        %3529 = vmatpush1.msra.mxu0 0.0
        %3530 = vmatprep.subr.mxu0 0.0
        %3531 = vmatpush1.msra.mxu0 0.0
        %3532 = vmatprep.subr.mxu0 0.0
        %3533 = vmatpush1.msra.mxu0 0.0
        %3534 = vmatprep.subr.mxu0 0.0
        %3535 = vmatpush1.msra.mxu0 0.0
        %3536 = vmatprep.subr.mxu0 0.0
        %3537 = vmatpush1.msra.mxu0 0.0
        %3538 = vmatprep.subr.mxu0 0.0
        %3539 = vmatpush1.msra.mxu0 0.0
        %3540 = vmatprep.mubr.f32.mxu0 0.0
        %v3541 = vand.u32 %v2655, 4294901760
        %v3542 = vsub.f32 %v2655, %v3541
        %v3543 = vand.u32 %v3542, 4294901760
        %3544 = vmatmul.mubr.f32.gmra.mrb[0].mxu0 %v3543
        %v3545 = vpop.f32.mrb[0].mxu0
        %v3546 = vadd.f32 %v3462, %v3545
        %v3547 = vpop.f32.mrb[0].mxu0
        %3548 = vmatprep.mubr.f32.mxu0 0.0
        %v3549 = vand.u32 %v2658, 4294901760
        %v3550 = vsub.f32 %v2658, %v3549
        %v3551 = vand.u32 %v3550, 4294901760
        %3552 = vmatmul.mubr.f32.gmra.mrb[0].mxu0 %v3551
        %v3553 = vpop.f32.mrb[0].mxu0
        %v3554 = vadd.f32 %v3469, %v3553
        %v3555 = vpop.f32.mrb[0].mxu0
        %3556 = vdwg.mxu0
        %3557 = vmatprep.subr.mxu0 0.0
        %v3558 = vand.u32 %v3191, 4294901760
        %v3559 = vsub.f32 %v3191, %v3558
        %v3560 = vand.u32 %v3559, 4294901760
        %3561 = vmatpush1.msra.mxu0 %v3560
        %3562 = vmatprep.subr.mxu0 0.0
        %v3563 = vand.u32 %v3192, 4294901760
        %v3564 = vsub.f32 %v3192, %v3563
        %v3565 = vand.u32 %v3564, 4294901760
        %3566 = vmatpush1.msra.mxu0 %v3565
        %3567 = vmatprep.subr.mxu0 0.0
        %v3568 = vand.u32 %v3193, 4294901760
        %v3569 = vsub.f32 %v3193, %v3568
        %v3570 = vand.u32 %v3569, 4294901760
        %3571 = vmatpush1.msra.mxu0 %v3570
        %3572 = vmatprep.subr.mxu0 0.0
        %v3573 = vand.u32 %v3194, 4294901760
        %v3574 = vsub.f32 %v3194, %v3573
        %v3575 = vand.u32 %v3574, 4294901760
        %3576 = vmatpush1.msra.mxu0 %v3575
        %3577 = vmatprep.subr.mxu0 0.0
        %3578 = vmatpush1.msra.mxu0 0.0
        %3579 = vmatprep.subr.mxu0 0.0
        %3580 = vmatpush1.msra.mxu0 0.0
        %3581 = vmatprep.subr.mxu0 0.0
        %3582 = vmatpush1.msra.mxu0 0.0
        %3583 = vmatprep.subr.mxu0 0.0
        %3584 = vmatpush1.msra.mxu0 0.0
        %3585 = vmatprep.subr.mxu0 0.0
        %3586 = vmatpush1.msra.mxu0 0.0
        %3587 = vmatprep.subr.mxu0 0.0
        %3588 = vmatpush1.msra.mxu0 0.0
        %3589 = vmatprep.subr.mxu0 0.0
        %3590 = vmatpush1.msra.mxu0 0.0
        %3591 = vmatprep.subr.mxu0 0.0
        %3592 = vmatpush1.msra.mxu0 0.0
        %3593 = vmatprep.subr.mxu0 0.0
        %3594 = vmatpush1.msra.mxu0 0.0
        %3595 = vmatprep.subr.mxu0 0.0
        %3596 = vmatpush1.msra.mxu0 0.0
        %3597 = vmatprep.subr.mxu0 0.0
        %3598 = vmatpush1.msra.mxu0 0.0
        %3599 = vmatprep.subr.mxu0 0.0
        %3600 = vmatpush1.msra.mxu0 0.0
        %3601 = vmatprep.subr.mxu0 0.0
        %3602 = vmatpush1.msra.mxu0 0.0
        %3603 = vmatprep.subr.mxu0 0.0
        %3604 = vmatpush1.msra.mxu0 0.0
        %3605 = vmatprep.subr.mxu0 0.0
        %3606 = vmatpush1.msra.mxu0 0.0
        %3607 = vmatprep.subr.mxu0 0.0
        %3608 = vmatpush1.msra.mxu0 0.0
        %3609 = vmatprep.subr.mxu0 0.0
        %3610 = vmatpush1.msra.mxu0 0.0
        %3611 = vmatprep.subr.mxu0 0.0
        %3612 = vmatpush1.msra.mxu0 0.0
        %3613 = vmatprep.subr.mxu0 0.0
        %3614 = vmatpush1.msra.mxu0 0.0
        %3615 = vmatprep.subr.mxu0 0.0
        %3616 = vmatpush1.msra.mxu0 0.0
        %3617 = vmatprep.subr.mxu0 0.0
        %3618 = vmatpush1.msra.mxu0 0.0
        %3619 = vmatprep.subr.mxu0 0.0
        %3620 = vmatpush1.msra.mxu0 0.0
        %3621 = vmatprep.subr.mxu0 0.0
        %3622 = vmatpush1.msra.mxu0 0.0
        %3623 = vmatprep.subr.mxu0 0.0
        %3624 = vmatpush1.msra.mxu0 0.0
        %3625 = vmatprep.subr.mxu0 0.0
        %3626 = vmatpush1.msra.mxu0 0.0
        %3627 = vmatprep.subr.mxu0 0.0
        %3628 = vmatpush1.msra.mxu0 0.0
        %3629 = vmatprep.subr.mxu0 0.0
        %3630 = vmatpush1.msra.mxu0 0.0
        %3631 = vmatprep.subr.mxu0 0.0
        %3632 = vmatpush1.msra.mxu0 0.0
        %3633 = vmatprep.mubr.f32.mxu0 0.0
        %v3634 = vand.u32 %v2655, 4294901760
        %3635 = vmatmul.mubr.f32.gmra.mrb[0].mxu0 %v3634
        %v3636 = vpop.f32.mrb[0].mxu0
        %v3637 = vadd.f32 %v3546, %v3636
        %v3638 = vpop.f32.mrb[0].mxu0
        %3639 = vmatprep.mubr.f32.mxu0 0.0
        %v3640 = vand.u32 %v2658, 4294901760
        %3641 = vmatmul.mubr.f32.gmra.mrb[0].mxu0 %v3640
        %v3642 = vpop.f32.mrb[0].mxu0
        %v3643 = vadd.f32 %v3554, %v3642
        %v3644 = vpop.f32.mrb[0].mxu0
        %3645 = vdwg.mxu0
        %3646 = vmatprep.subr.mxu0 0.0
        %v3647 = vand.u32 %v3191, 4294901760
        %3648 = vmatpush1.msra.mxu0 %v3647
        %3649 = vmatprep.subr.mxu0 0.0
        %v3650 = vand.u32 %v3192, 4294901760
        %3651 = vmatpush1.msra.mxu0 %v3650
        %3652 = vmatprep.subr.mxu0 0.0
        %v3653 = vand.u32 %v3193, 4294901760
        %3654 = vmatpush1.msra.mxu0 %v3653
        %3655 = vmatprep.subr.mxu0 0.0
        %v3656 = vand.u32 %v3194, 4294901760
        %3657 = vmatpush1.msra.mxu0 %v3656
        %3658 = vmatprep.subr.mxu0 0.0
        %3659 = vmatpush1.msra.mxu0 0.0
        %3660 = vmatprep.subr.mxu0 0.0
        %3661 = vmatpush1.msra.mxu0 0.0
        %3662 = vmatprep.subr.mxu0 0.0
        %3663 = vmatpush1.msra.mxu0 0.0
        %3664 = vmatprep.subr.mxu0 0.0
        %3665 = vmatpush1.msra.mxu0 0.0
        %3666 = vmatprep.subr.mxu0 0.0
        %3667 = vmatpush1.msra.mxu0 0.0
        %3668 = vmatprep.subr.mxu0 0.0
        %3669 = vmatpush1.msra.mxu0 0.0
        %3670 = vmatprep.subr.mxu0 0.0
        %3671 = vmatpush1.msra.mxu0 0.0
        %3672 = vmatprep.subr.mxu0 0.0
        %3673 = vmatpush1.msra.mxu0 0.0
        %3674 = vmatprep.subr.mxu0 0.0
        %3675 = vmatpush1.msra.mxu0 0.0
        %3676 = vmatprep.subr.mxu0 0.0
        %3677 = vmatpush1.msra.mxu0 0.0
        %3678 = vmatprep.subr.mxu0 0.0
        %3679 = vmatpush1.msra.mxu0 0.0
        %3680 = vmatprep.subr.mxu0 0.0
        %3681 = vmatpush1.msra.mxu0 0.0
        %3682 = vmatprep.subr.mxu0 0.0
        %3683 = vmatpush1.msra.mxu0 0.0
        %3684 = vmatprep.subr.mxu0 0.0
        %3685 = vmatpush1.msra.mxu0 0.0
        %3686 = vmatprep.subr.mxu0 0.0
        %3687 = vmatpush1.msra.mxu0 0.0
        %3688 = vmatprep.subr.mxu0 0.0
        %3689 = vmatpush1.msra.mxu0 0.0
        %3690 = vmatprep.subr.mxu0 0.0
        %3691 = vmatpush1.msra.mxu0 0.0
        %3692 = vmatprep.subr.mxu0 0.0
        %3693 = vmatpush1.msra.mxu0 0.0
        %3694 = vmatprep.subr.mxu0 0.0
        %3695 = vmatpush1.msra.mxu0 0.0
        %3696 = vmatprep.subr.mxu0 0.0
        %3697 = vmatpush1.msra.mxu0 0.0
        %3698 = vmatprep.subr.mxu0 0.0
        %3699 = vmatpush1.msra.mxu0 0.0
        %3700 = vmatprep.subr.mxu0 0.0
        %3701 = vmatpush1.msra.mxu0 0.0
        %3702 = vmatprep.subr.mxu0 0.0
        %3703 = vmatpush1.msra.mxu0 0.0
        %3704 = vmatprep.subr.mxu0 0.0
        %3705 = vmatpush1.msra.mxu0 0.0
        %3706 = vmatprep.subr.mxu0 0.0
        %3707 = vmatpush1.msra.mxu0 0.0
        %3708 = vmatprep.subr.mxu0 0.0
        %3709 = vmatpush1.msra.mxu0 0.0
        %3710 = vmatprep.subr.mxu0 0.0
        %3711 = vmatpush1.msra.mxu0 0.0
        %3712 = vmatprep.subr.mxu0 0.0
        %3713 = vmatpush1.msra.mxu0 0.0
        %3714 = vmatprep.mubr.f32.mxu0 0.0
        %v3715 = vand.u32 %v2655, 4294901760
        %3716 = vmatmul.mubr.f32.gmra.mrb[0].mxu0 %v3715
        %v3717 = vpop.f32.mrb[0].mxu0
        %v3718 = vadd.f32 %v3637, %v3717
        %v3719 = vpop.f32.mrb[0].mxu0
        %3720 = vmatprep.mubr.f32.mxu0 0.0
        %v3721 = vand.u32 %v2658, 4294901760
        %3722 = vmatmul.mubr.f32.gmra.mrb[0].mxu0 %v3721
        %v3723 = vpop.f32.mrb[0].mxu0
        %v3724 = vadd.f32 %v3643, %v3723
        %v3725 = vpop.f32.mrb[0].mxu0
        %3726 = vdwg.mxu0
        %v3727 = vadd.f32 %v1280, %v3718
        %v3728 = vadd.f32 %v1281, %v3724
        %v3729 = vmul.f32 %v3727, %v1273
        %v3730 = vmul.f32 %v3728, %v1278
        %v3733 = vrot.slane %v3729, 7
        %v3734 = vrot.slane %v3730, 7
        %v3735 = vsel %vm1284, %v3733, %v3734
        %v3739 = vsel %vm1284, 0.0, %v3733
        %v3740 = vsel %vm1284, %v3734, 0.0
        %v3743 = vrot.slane %v3739, 1
        %v3744 = vrot.slane %v3735, 1
        %v3745 = vsel %vm1295, %v3743, %v3744
        %v3746 = vrot.slane %v3740, 1
        %v3747 = vsel %vm1295, %v3744, %v3746
        %3748 = vrot.lane.b32.xlu0 %v3745, 32
        %v3749 = vpop.permute.xlu0 %3748
        %3750 = vrot.lane.b32.xlu0 %v3747, 32
        %v3751 = vpop.permute.xlu0 %3750
        %v3754 = vrot.slane %v3739, 2
        %v3755 = vrot.slane %v3735, 2
        %v3756 = vsel %vm1307, %v3754, %v3755
        %v3757 = vrot.slane %v3740, 2
        %v3758 = vsel %vm1307, %v3755, %v3757
        %3759 = vrot.lane.b32.xlu0 %v3756, 64
        %v3760 = vpop.permute.xlu0 %3759
        %3761 = vrot.lane.b32.xlu0 %v3758, 64
        %v3762 = vpop.permute.xlu0 %3761
        %v3765 = vsel %vm1319, %v3739, %v3749
        %v3766 = vsel %vm1319, %v3735, %v3751
        %v3767 = vsel %vm1322, %v3765, %v3760
        %v3768 = vsel %vm1322, %v3766, %v3762
        %s3769 = sadd.s32 %s1325, 1
        %s3770 = smul.u32 %s3769, 96
        %s3771 = scalar_lea.vmem %s7, %s3770
        %v3772 = vld [vmem:[%s3771] sm:$0xff]
        %v3773 = vld [vmem:[%s3771 + $0x8] sm:$0xff]
        %v3774 = vld [vmem:[%s3771 + $0x10] sm:$0xff]
        %v3775 = vld [vmem:[%s3771 + $0x18] sm:$0xff]
        %v3776 = vld [vmem:[%s3771 + $0x20] sm:$0xff]
        %v3777 = vld [vmem:[%s3771 + $0x28] sm:$0xff]
        %v3778 = vld [vmem:[%s3771 + $0x30] sm:$0xff]
        %v3779 = vld [vmem:[%s3771 + $0x38] sm:$0xff]
        %v3780 = vld [vmem:[%s3771 + $0x40] sm:$0xff]
        %v3781 = vld [vmem:[%s3771 + $0x48] sm:$0xff]
        %v3782 = vld [vmem:[%s3771 + $0x50] sm:$0xff]
        %v3783 = vld [vmem:[%s3771 + $0x58] sm:$0xff]
        %v3784 = vlaneseq
        %v3785 = vshrl.u32 %v3784, 7
        %v3786 = vsub.s32 1, %v3785
        %v3787 = vrot.slane %v563, %v3786
        %v3789 = vsel %vm1344, %v3767, 0
        %v3792 = vsel %vm1344, %v3768, 0
        %3794 = vmatprep.subr.mxu0 0.0
        %v3795 = vand.u32 %v3772, 4294901760
        %3796 = vmatpush1.msra.mxu0 %v3795
        %3797 = vmatprep.subr.mxu0 0.0
        %v3798 = vand.u32 %v3773, 4294901760
        %3799 = vmatpush1.msra.mxu0 %v3798
        %3800 = vmatprep.subr.mxu0 0.0
        %v3801 = vand.u32 %v3774, 4294901760
        %3802 = vmatpush1.msra.mxu0 %v3801
        %3803 = vmatprep.subr.mxu0 0.0
        %v3804 = vand.u32 %v3775, 4294901760
        %3805 = vmatpush1.msra.mxu0 %v3804
        %3806 = vmatprep.subr.mxu0 0.0
        %v3807 = vand.u32 %v3776, 4294901760
        %3808 = vmatpush1.msra.mxu0 %v3807
        %3809 = vmatprep.subr.mxu0 0.0
        %v3810 = vand.u32 %v3777, 4294901760
        %3811 = vmatpush1.msra.mxu0 %v3810
        %3812 = vmatprep.subr.mxu0 0.0
        %v3813 = vand.u32 %v3778, 4294901760
        %3814 = vmatpush1.msra.mxu0 %v3813
        %3815 = vmatprep.subr.mxu0 0.0
        %v3816 = vand.u32 %v3779, 4294901760
        %3817 = vmatpush1.msra.mxu0 %v3816
        %3818 = vmatprep.subr.mxu0 0.0
        %v3819 = vand.u32 %v3780, 4294901760
        %3820 = vmatpush1.msra.mxu0 %v3819
        %3821 = vmatprep.subr.mxu0 0.0
        %v3822 = vand.u32 %v3781, 4294901760
        %3823 = vmatpush1.msra.mxu0 %v3822
        %3824 = vmatprep.subr.mxu0 0.0
        %v3825 = vand.u32 %v3782, 4294901760
        %3826 = vmatpush1.msra.mxu0 %v3825
        %3827 = vmatprep.subr.mxu0 0.0
        %v3828 = vand.u32 %v3783, 4294901760
        %3829 = vmatpush1.msra.mxu0 %v3828
        %3830 = vmatprep.subr.mxu0 0.0
        %3831 = vmatpush1.msra.mxu0 0.0
        %3832 = vmatprep.subr.mxu0 0.0
        %3833 = vmatpush1.msra.mxu0 0.0
        %3834 = vmatprep.subr.mxu0 0.0
        %3835 = vmatpush1.msra.mxu0 0.0
        %3836 = vmatprep.subr.mxu0 0.0
        %3837 = vmatpush1.msra.mxu0 0.0
        %3838 = vmatprep.subr.mxu0 0.0
        %3839 = vmatpush1.msra.mxu0 0.0
        %3840 = vmatprep.subr.mxu0 0.0
        %3841 = vmatpush1.msra.mxu0 0.0
        %3842 = vmatprep.subr.mxu0 0.0
        %3843 = vmatpush1.msra.mxu0 0.0
        %3844 = vmatprep.subr.mxu0 0.0
        %3845 = vmatpush1.msra.mxu0 0.0
        %3846 = vmatprep.subr.mxu0 0.0
        %3847 = vmatpush1.msra.mxu0 0.0
        %3848 = vmatprep.subr.mxu0 0.0
        %3849 = vmatpush1.msra.mxu0 0.0
        %3850 = vmatprep.subr.mxu0 0.0
        %3851 = vmatpush1.msra.mxu0 0.0
        %3852 = vmatprep.subr.mxu0 0.0
        %3853 = vmatpush1.msra.mxu0 0.0
        %3854 = vmatprep.subr.mxu0 0.0
        %3855 = vmatpush1.msra.mxu0 0.0
        %3856 = vmatprep.subr.mxu0 0.0
        %3857 = vmatpush1.msra.mxu0 0.0
        %3858 = vmatprep.subr.mxu0 0.0
        %3859 = vmatpush1.msra.mxu0 0.0
        %3860 = vmatprep.subr.mxu0 0.0
        %3861 = vmatpush1.msra.mxu0 0.0
        %3862 = vmatprep.subr.mxu0 0.0
        %3863 = vmatpush1.msra.mxu0 0.0
        %3864 = vmatprep.subr.mxu0 0.0
        %3865 = vmatpush1.msra.mxu0 0.0
        %3866 = vmatprep.subr.mxu0 0.0
        %3867 = vmatpush1.msra.mxu0 0.0
        %3868 = vmatprep.subr.mxu0 0.0
        %3869 = vmatpush1.msra.mxu0 0.0
        %3870 = vmatprep.mubr.f32.mxu0 0.0
        %v3871 = vand.u32 %v3789, 4294901760
        %v3872 = vsub.f32 %v3789, %v3871
        %v3873 = vand.u32 %v3872, 4294901760
        %v3874 = vsub.f32 %v3872, %v3873
        %v3875 = vand.u32 %v3874, 4294901760
        %3876 = vmatmul.mubr.f32.gmra.mrb[0].mxu0 %v3875
        %v3877 = vpop.f32.mrb[0].mxu0
        %v3878 = vadd.f32 %v3787, %v3877
        %v3879 = vpop.f32.mrb[0].mxu0
        %3880 = vmatprep.mubr.f32.mxu0 0.0
        %v3881 = vand.u32 %v3792, 4294901760
        %v3882 = vsub.f32 %v3792, %v3881
        %v3883 = vand.u32 %v3882, 4294901760
        %v3884 = vsub.f32 %v3882, %v3883
        %v3885 = vand.u32 %v3884, 4294901760
        %3886 = vmatmul.mubr.f32.gmra.mrb[0].mxu0 %v3885
        %v3887 = vpop.f32.mrb[0].mxu0
        %v3888 = vadd.f32 %v3787, %v3887
        %v3889 = vpop.f32.mrb[0].mxu0
        %3890 = vdwg.mxu0
        %3891 = vmatprep.subr.mxu0 0.0
        %v3892 = vand.u32 %v3772, 4294901760
        %v3893 = vsub.f32 %v3772, %v3892
        %v3894 = vand.u32 %v3893, 4294901760
        %v3895 = vsub.f32 %v3893, %v3894
        %v3896 = vand.u32 %v3895, 4294901760
        %3897 = vmatpush1.msra.mxu0 %v3896
        %3898 = vmatprep.subr.mxu0 0.0
        %v3899 = vand.u32 %v3773, 4294901760
        %v3900 = vsub.f32 %v3773, %v3899
        %v3901 = vand.u32 %v3900, 4294901760
        %v3902 = vsub.f32 %v3900, %v3901
        %v3903 = vand.u32 %v3902, 4294901760
        %3904 = vmatpush1.msra.mxu0 %v3903
        %3905 = vmatprep.subr.mxu0 0.0
        %v3906 = vand.u32 %v3774, 4294901760
        %v3907 = vsub.f32 %v3774, %v3906
        %v3908 = vand.u32 %v3907, 4294901760
        %v3909 = vsub.f32 %v3907, %v3908
        %v3910 = vand.u32 %v3909, 4294901760
        %3911 = vmatpush1.msra.mxu0 %v3910
        %3912 = vmatprep.subr.mxu0 0.0
        %v3913 = vand.u32 %v3775, 4294901760
        %v3914 = vsub.f32 %v3775, %v3913
        %v3915 = vand.u32 %v3914, 4294901760
        %v3916 = vsub.f32 %v3914, %v3915
        %v3917 = vand.u32 %v3916, 4294901760
        %3918 = vmatpush1.msra.mxu0 %v3917
        %3919 = vmatprep.subr.mxu0 0.0
        %v3920 = vand.u32 %v3776, 4294901760
        %v3921 = vsub.f32 %v3776, %v3920
        %v3922 = vand.u32 %v3921, 4294901760
        %v3923 = vsub.f32 %v3921, %v3922
        %v3924 = vand.u32 %v3923, 4294901760
        %3925 = vmatpush1.msra.mxu0 %v3924
        %3926 = vmatprep.subr.mxu0 0.0
        %v3927 = vand.u32 %v3777, 4294901760
        %v3928 = vsub.f32 %v3777, %v3927
        %v3929 = vand.u32 %v3928, 4294901760
        %v3930 = vsub.f32 %v3928, %v3929
        %v3931 = vand.u32 %v3930, 4294901760
        %3932 = vmatpush1.msra.mxu0 %v3931
        %3933 = vmatprep.subr.mxu0 0.0
        %v3934 = vand.u32 %v3778, 4294901760
        %v3935 = vsub.f32 %v3778, %v3934
        %v3936 = vand.u32 %v3935, 4294901760
        %v3937 = vsub.f32 %v3935, %v3936
        %v3938 = vand.u32 %v3937, 4294901760
        %3939 = vmatpush1.msra.mxu0 %v3938
        %3940 = vmatprep.subr.mxu0 0.0
        %v3941 = vand.u32 %v3779, 4294901760
        %v3942 = vsub.f32 %v3779, %v3941
        %v3943 = vand.u32 %v3942, 4294901760
        %v3944 = vsub.f32 %v3942, %v3943
        %v3945 = vand.u32 %v3944, 4294901760
        %3946 = vmatpush1.msra.mxu0 %v3945
        %3947 = vmatprep.subr.mxu0 0.0
        %v3948 = vand.u32 %v3780, 4294901760
        %v3949 = vsub.f32 %v3780, %v3948
        %v3950 = vand.u32 %v3949, 4294901760
        %v3951 = vsub.f32 %v3949, %v3950
        %v3952 = vand.u32 %v3951, 4294901760
        %3953 = vmatpush1.msra.mxu0 %v3952
        %3954 = vmatprep.subr.mxu0 0.0
        %v3955 = vand.u32 %v3781, 4294901760
        %v3956 = vsub.f32 %v3781, %v3955
        %v3957 = vand.u32 %v3956, 4294901760
        %v3958 = vsub.f32 %v3956, %v3957
        %v3959 = vand.u32 %v3958, 4294901760
        %3960 = vmatpush1.msra.mxu0 %v3959
        %3961 = vmatprep.subr.mxu0 0.0
        %v3962 = vand.u32 %v3782, 4294901760
        %v3963 = vsub.f32 %v3782, %v3962
        %v3964 = vand.u32 %v3963, 4294901760
        %v3965 = vsub.f32 %v3963, %v3964
        %v3966 = vand.u32 %v3965, 4294901760
        %3967 = vmatpush1.msra.mxu0 %v3966
        %3968 = vmatprep.subr.mxu0 0.0
        %v3969 = vand.u32 %v3783, 4294901760
        %v3970 = vsub.f32 %v3783, %v3969
        %v3971 = vand.u32 %v3970, 4294901760
        %v3972 = vsub.f32 %v3970, %v3971
        %v3973 = vand.u32 %v3972, 4294901760
        %3974 = vmatpush1.msra.mxu0 %v3973
        %3975 = vmatprep.subr.mxu0 0.0
        %3976 = vmatpush1.msra.mxu0 0.0
        %3977 = vmatprep.subr.mxu0 0.0
        %3978 = vmatpush1.msra.mxu0 0.0
        %3979 = vmatprep.subr.mxu0 0.0
        %3980 = vmatpush1.msra.mxu0 0.0
        %3981 = vmatprep.subr.mxu0 0.0
        %3982 = vmatpush1.msra.mxu0 0.0
        %3983 = vmatprep.subr.mxu0 0.0
        %3984 = vmatpush1.msra.mxu0 0.0
        %3985 = vmatprep.subr.mxu0 0.0
        %3986 = vmatpush1.msra.mxu0 0.0
        %3987 = vmatprep.subr.mxu0 0.0
        %3988 = vmatpush1.msra.mxu0 0.0
        %3989 = vmatprep.subr.mxu0 0.0
        %3990 = vmatpush1.msra.mxu0 0.0
        %3991 = vmatprep.subr.mxu0 0.0
        %3992 = vmatpush1.msra.mxu0 0.0
        %3993 = vmatprep.subr.mxu0 0.0
        %3994 = vmatpush1.msra.mxu0 0.0
        %3995 = vmatprep.subr.mxu0 0.0
        %3996 = vmatpush1.msra.mxu0 0.0
        %3997 = vmatprep.subr.mxu0 0.0
        %3998 = vmatpush1.msra.mxu0 0.0
        %3999 = vmatprep.subr.mxu0 0.0
        %4000 = vmatpush1.msra.mxu0 0.0
        %4001 = vmatprep.subr.mxu0 0.0
        %4002 = vmatpush1.msra.mxu0 0.0
        %4003 = vmatprep.subr.mxu0 0.0
        %4004 = vmatpush1.msra.mxu0 0.0
        %4005 = vmatprep.subr.mxu0 0.0
        %4006 = vmatpush1.msra.mxu0 0.0
        %4007 = vmatprep.subr.mxu0 0.0
        %4008 = vmatpush1.msra.mxu0 0.0
        %4009 = vmatprep.subr.mxu0 0.0
        %4010 = vmatpush1.msra.mxu0 0.0
        %4011 = vmatprep.subr.mxu0 0.0
        %4012 = vmatpush1.msra.mxu0 0.0
        %4013 = vmatprep.subr.mxu0 0.0
        %4014 = vmatpush1.msra.mxu0 0.0
        %4015 = vmatprep.mubr.f32.mxu0 0.0
        %v4016 = vand.u32 %v3789, 4294901760
        %4017 = vmatmul.mubr.f32.gmra.mrb[0].mxu0 %v4016
        %v4018 = vpop.f32.mrb[0].mxu0
        %v4019 = vadd.f32 %v3878, %v4018
        %v4020 = vpop.f32.mrb[0].mxu0
        %4021 = vmatprep.mubr.f32.mxu0 0.0
        %v4022 = vand.u32 %v3792, 4294901760
        %4023 = vmatmul.mubr.f32.gmra.mrb[0].mxu0 %v4022
        %v4024 = vpop.f32.mrb[0].mxu0
        %v4025 = vadd.f32 %v3888, %v4024
        %v4026 = vpop.f32.mrb[0].mxu0
        %4027 = vdwg.mxu0
        %4028 = vmatprep.subr.mxu0 0.0
        %v4029 = vand.u32 %v3772, 4294901760
        %v4030 = vsub.f32 %v3772, %v4029
        %4031 = vmatpush1.msra.mxu0 %v4030
        %4032 = vmatprep.subr.mxu0 0.0
        %v4033 = vand.u32 %v3773, 4294901760
        %v4034 = vsub.f32 %v3773, %v4033
        %4035 = vmatpush1.msra.mxu0 %v4034
        %4036 = vmatprep.subr.mxu0 0.0
        %v4037 = vand.u32 %v3774, 4294901760
        %v4038 = vsub.f32 %v3774, %v4037
        %4039 = vmatpush1.msra.mxu0 %v4038
        %4040 = vmatprep.subr.mxu0 0.0
        %v4041 = vand.u32 %v3775, 4294901760
        %v4042 = vsub.f32 %v3775, %v4041
        %4043 = vmatpush1.msra.mxu0 %v4042
        %4044 = vmatprep.subr.mxu0 0.0
        %v4045 = vand.u32 %v3776, 4294901760
        %v4046 = vsub.f32 %v3776, %v4045
        %4047 = vmatpush1.msra.mxu0 %v4046
        %4048 = vmatprep.subr.mxu0 0.0
        %v4049 = vand.u32 %v3777, 4294901760
        %v4050 = vsub.f32 %v3777, %v4049
        %4051 = vmatpush1.msra.mxu0 %v4050
        %4052 = vmatprep.subr.mxu0 0.0
        %v4053 = vand.u32 %v3778, 4294901760
        %v4054 = vsub.f32 %v3778, %v4053
        %4055 = vmatpush1.msra.mxu0 %v4054
        %4056 = vmatprep.subr.mxu0 0.0
        %v4057 = vand.u32 %v3779, 4294901760
        %v4058 = vsub.f32 %v3779, %v4057
        %4059 = vmatpush1.msra.mxu0 %v4058
        %4060 = vmatprep.subr.mxu0 0.0
        %v4061 = vand.u32 %v3780, 4294901760
        %v4062 = vsub.f32 %v3780, %v4061
        %4063 = vmatpush1.msra.mxu0 %v4062
        %4064 = vmatprep.subr.mxu0 0.0
        %v4065 = vand.u32 %v3781, 4294901760
        %v4066 = vsub.f32 %v3781, %v4065
        %4067 = vmatpush1.msra.mxu0 %v4066
        %4068 = vmatprep.subr.mxu0 0.0
        %v4069 = vand.u32 %v3782, 4294901760
        %v4070 = vsub.f32 %v3782, %v4069
        %4071 = vmatpush1.msra.mxu0 %v4070
        %4072 = vmatprep.subr.mxu0 0.0
        %v4073 = vand.u32 %v3783, 4294901760
        %v4074 = vsub.f32 %v3783, %v4073
        %4075 = vmatpush1.msra.mxu0 %v4074
        %4076 = vmatprep.subr.mxu0 0.0
        %4077 = vmatpush1.msra.mxu0 0.0
        %4078 = vmatprep.subr.mxu0 0.0
        %4079 = vmatpush1.msra.mxu0 0.0
        %4080 = vmatprep.subr.mxu0 0.0
        %4081 = vmatpush1.msra.mxu0 0.0
        %4082 = vmatprep.subr.mxu0 0.0
        %4083 = vmatpush1.msra.mxu0 0.0
        %4084 = vmatprep.subr.mxu0 0.0
        %4085 = vmatpush1.msra.mxu0 0.0
        %4086 = vmatprep.subr.mxu0 0.0
        %4087 = vmatpush1.msra.mxu0 0.0
        %4088 = vmatprep.subr.mxu0 0.0
        %4089 = vmatpush1.msra.mxu0 0.0
        %4090 = vmatprep.subr.mxu0 0.0
        %4091 = vmatpush1.msra.mxu0 0.0
        %4092 = vmatprep.subr.mxu0 0.0
        %4093 = vmatpush1.msra.mxu0 0.0
        %4094 = vmatprep.subr.mxu0 0.0
        %4095 = vmatpush1.msra.mxu0 0.0
        %4096 = vmatprep.subr.mxu0 0.0
        %4097 = vmatpush1.msra.mxu0 0.0
        %4098 = vmatprep.subr.mxu0 0.0
        %4099 = vmatpush1.msra.mxu0 0.0
        %4100 = vmatprep.subr.mxu0 0.0
        %4101 = vmatpush1.msra.mxu0 0.0
        %4102 = vmatprep.subr.mxu0 0.0
        %4103 = vmatpush1.msra.mxu0 0.0
        %4104 = vmatprep.subr.mxu0 0.0
        %4105 = vmatpush1.msra.mxu0 0.0
        %4106 = vmatprep.subr.mxu0 0.0
        %4107 = vmatpush1.msra.mxu0 0.0
        %4108 = vmatprep.subr.mxu0 0.0
        %4109 = vmatpush1.msra.mxu0 0.0
        %4110 = vmatprep.subr.mxu0 0.0
        %4111 = vmatpush1.msra.mxu0 0.0
        %4112 = vmatprep.subr.mxu0 0.0
        %4113 = vmatpush1.msra.mxu0 0.0
        %4114 = vmatprep.subr.mxu0 0.0
        %4115 = vmatpush1.msra.mxu0 0.0
        %4116 = vmatprep.mubr.f32.mxu0 0.0
        %v4117 = vand.u32 %v3789, 4294901760
        %v4118 = vsub.f32 %v3789, %v4117
        %4119 = vmatmul.mubr.f32.gmra.mrb[0].mxu0 %v4118
        %v4120 = vpop.f32.mrb[0].mxu0
        %v4121 = vadd.f32 %v4019, %v4120
        %v4122 = vpop.f32.mrb[0].mxu0
        %4123 = vmatprep.mubr.f32.mxu0 0.0
        %v4124 = vand.u32 %v3792, 4294901760
        %v4125 = vsub.f32 %v3792, %v4124
        %4126 = vmatmul.mubr.f32.gmra.mrb[0].mxu0 %v4125
        %v4127 = vpop.f32.mrb[0].mxu0
        %v4128 = vadd.f32 %v4025, %v4127
        %v4129 = vpop.f32.mrb[0].mxu0
        %4130 = vdwg.mxu0
        %4131 = vmatprep.subr.mxu0 0.0
        %v4132 = vand.u32 %v3772, 4294901760
        %4133 = vmatpush1.msra.mxu0 %v4132
        %4134 = vmatprep.subr.mxu0 0.0
        %v4135 = vand.u32 %v3773, 4294901760
        %4136 = vmatpush1.msra.mxu0 %v4135
        %4137 = vmatprep.subr.mxu0 0.0
        %v4138 = vand.u32 %v3774, 4294901760
        %4139 = vmatpush1.msra.mxu0 %v4138
        %4140 = vmatprep.subr.mxu0 0.0
        %v4141 = vand.u32 %v3775, 4294901760
        %4142 = vmatpush1.msra.mxu0 %v4141
        %4143 = vmatprep.subr.mxu0 0.0
        %v4144 = vand.u32 %v3776, 4294901760
        %4145 = vmatpush1.msra.mxu0 %v4144
        %4146 = vmatprep.subr.mxu0 0.0
        %v4147 = vand.u32 %v3777, 4294901760
        %4148 = vmatpush1.msra.mxu0 %v4147
        %4149 = vmatprep.subr.mxu0 0.0
        %v4150 = vand.u32 %v3778, 4294901760
        %4151 = vmatpush1.msra.mxu0 %v4150
        %4152 = vmatprep.subr.mxu0 0.0
        %v4153 = vand.u32 %v3779, 4294901760
        %4154 = vmatpush1.msra.mxu0 %v4153
        %4155 = vmatprep.subr.mxu0 0.0
        %v4156 = vand.u32 %v3780, 4294901760
        %4157 = vmatpush1.msra.mxu0 %v4156
        %4158 = vmatprep.subr.mxu0 0.0
        %v4159 = vand.u32 %v3781, 4294901760
        %4160 = vmatpush1.msra.mxu0 %v4159
        %4161 = vmatprep.subr.mxu0 0.0
        %v4162 = vand.u32 %v3782, 4294901760
        %4163 = vmatpush1.msra.mxu0 %v4162
        %4164 = vmatprep.subr.mxu0 0.0
        %v4165 = vand.u32 %v3783, 4294901760
        %4166 = vmatpush1.msra.mxu0 %v4165
        %4167 = vmatprep.subr.mxu0 0.0
        %4168 = vmatpush1.msra.mxu0 0.0
        %4169 = vmatprep.subr.mxu0 0.0
        %4170 = vmatpush1.msra.mxu0 0.0
        %4171 = vmatprep.subr.mxu0 0.0
        %4172 = vmatpush1.msra.mxu0 0.0
        %4173 = vmatprep.subr.mxu0 0.0
        %4174 = vmatpush1.msra.mxu0 0.0
        %4175 = vmatprep.subr.mxu0 0.0
        %4176 = vmatpush1.msra.mxu0 0.0
        %4177 = vmatprep.subr.mxu0 0.0
        %4178 = vmatpush1.msra.mxu0 0.0
        %4179 = vmatprep.subr.mxu0 0.0
        %4180 = vmatpush1.msra.mxu0 0.0
        %4181 = vmatprep.subr.mxu0 0.0
        %4182 = vmatpush1.msra.mxu0 0.0
        %4183 = vmatprep.subr.mxu0 0.0
        %4184 = vmatpush1.msra.mxu0 0.0
        %4185 = vmatprep.subr.mxu0 0.0
        %4186 = vmatpush1.msra.mxu0 0.0
        %4187 = vmatprep.subr.mxu0 0.0
        %4188 = vmatpush1.msra.mxu0 0.0
        %4189 = vmatprep.subr.mxu0 0.0
        %4190 = vmatpush1.msra.mxu0 0.0
        %4191 = vmatprep.subr.mxu0 0.0
        %4192 = vmatpush1.msra.mxu0 0.0
        %4193 = vmatprep.subr.mxu0 0.0
        %4194 = vmatpush1.msra.mxu0 0.0
        %4195 = vmatprep.subr.mxu0 0.0
        %4196 = vmatpush1.msra.mxu0 0.0
        %4197 = vmatprep.subr.mxu0 0.0
        %4198 = vmatpush1.msra.mxu0 0.0
        %4199 = vmatprep.subr.mxu0 0.0
        %4200 = vmatpush1.msra.mxu0 0.0
        %4201 = vmatprep.subr.mxu0 0.0
        %4202 = vmatpush1.msra.mxu0 0.0
        %4203 = vmatprep.subr.mxu0 0.0
        %4204 = vmatpush1.msra.mxu0 0.0
        %4205 = vmatprep.subr.mxu0 0.0
        %4206 = vmatpush1.msra.mxu0 0.0
        %4207 = vmatprep.mubr.f32.mxu0 0.0
        %v4208 = vand.u32 %v3789, 4294901760
        %v4209 = vsub.f32 %v3789, %v4208
        %v4210 = vand.u32 %v4209, 4294901760
        %4211 = vmatmul.mubr.f32.gmra.mrb[0].mxu0 %v4210
        %v4212 = vpop.f32.mrb[0].mxu0
        %v4213 = vadd.f32 %v4121, %v4212
        %v4214 = vpop.f32.mrb[0].mxu0
        %4215 = vmatprep.mubr.f32.mxu0 0.0
        %v4216 = vand.u32 %v3792, 4294901760
        %v4217 = vsub.f32 %v3792, %v4216
        %v4218 = vand.u32 %v4217, 4294901760
        %4219 = vmatmul.mubr.f32.gmra.mrb[0].mxu0 %v4218
        %v4220 = vpop.f32.mrb[0].mxu0
        %v4221 = vadd.f32 %v4128, %v4220
        %v4222 = vpop.f32.mrb[0].mxu0
        %4223 = vdwg.mxu0
        %4224 = vmatprep.subr.mxu0 0.0
        %v4225 = vand.u32 %v3772, 4294901760
        %v4226 = vsub.f32 %v3772, %v4225
        %v4227 = vand.u32 %v4226, 4294901760
        %4228 = vmatpush1.msra.mxu0 %v4227
        %4229 = vmatprep.subr.mxu0 0.0
        %v4230 = vand.u32 %v3773, 4294901760
        %v4231 = vsub.f32 %v3773, %v4230
        %v4232 = vand.u32 %v4231, 4294901760
        %4233 = vmatpush1.msra.mxu0 %v4232
        %4234 = vmatprep.subr.mxu0 0.0
        %v4235 = vand.u32 %v3774, 4294901760
        %v4236 = vsub.f32 %v3774, %v4235
        %v4237 = vand.u32 %v4236, 4294901760
        %4238 = vmatpush1.msra.mxu0 %v4237
        %4239 = vmatprep.subr.mxu0 0.0
        %v4240 = vand.u32 %v3775, 4294901760
        %v4241 = vsub.f32 %v3775, %v4240
        %v4242 = vand.u32 %v4241, 4294901760
        %4243 = vmatpush1.msra.mxu0 %v4242
        %4244 = vmatprep.subr.mxu0 0.0
        %v4245 = vand.u32 %v3776, 4294901760
        %v4246 = vsub.f32 %v3776, %v4245
        %v4247 = vand.u32 %v4246, 4294901760
        %4248 = vmatpush1.msra.mxu0 %v4247
        %4249 = vmatprep.subr.mxu0 0.0
        %v4250 = vand.u32 %v3777, 4294901760
        %v4251 = vsub.f32 %v3777, %v4250
        %v4252 = vand.u32 %v4251, 4294901760
        %4253 = vmatpush1.msra.mxu0 %v4252
        %4254 = vmatprep.subr.mxu0 0.0
        %v4255 = vand.u32 %v3778, 4294901760
        %v4256 = vsub.f32 %v3778, %v4255
        %v4257 = vand.u32 %v4256, 4294901760
        %4258 = vmatpush1.msra.mxu0 %v4257
        %4259 = vmatprep.subr.mxu0 0.0
        %v4260 = vand.u32 %v3779, 4294901760
        %v4261 = vsub.f32 %v3779, %v4260
        %v4262 = vand.u32 %v4261, 4294901760
        %4263 = vmatpush1.msra.mxu0 %v4262
        %4264 = vmatprep.subr.mxu0 0.0
        %v4265 = vand.u32 %v3780, 4294901760
        %v4266 = vsub.f32 %v3780, %v4265
        %v4267 = vand.u32 %v4266, 4294901760
        %4268 = vmatpush1.msra.mxu0 %v4267
        %4269 = vmatprep.subr.mxu0 0.0
        %v4270 = vand.u32 %v3781, 4294901760
        %v4271 = vsub.f32 %v3781, %v4270
        %v4272 = vand.u32 %v4271, 4294901760
        %4273 = vmatpush1.msra.mxu0 %v4272
        %4274 = vmatprep.subr.mxu0 0.0
        %v4275 = vand.u32 %v3782, 4294901760
        %v4276 = vsub.f32 %v3782, %v4275
        %v4277 = vand.u32 %v4276, 4294901760
        %4278 = vmatpush1.msra.mxu0 %v4277
        %4279 = vmatprep.subr.mxu0 0.0
        %v4280 = vand.u32 %v3783, 4294901760
        %v4281 = vsub.f32 %v3783, %v4280
        %v4282 = vand.u32 %v4281, 4294901760
        %4283 = vmatpush1.msra.mxu0 %v4282
        %4284 = vmatprep.subr.mxu0 0.0
        %4285 = vmatpush1.msra.mxu0 0.0
        %4286 = vmatprep.subr.mxu0 0.0
        %4287 = vmatpush1.msra.mxu0 0.0
        %4288 = vmatprep.subr.mxu0 0.0
        %4289 = vmatpush1.msra.mxu0 0.0
        %4290 = vmatprep.subr.mxu0 0.0
        %4291 = vmatpush1.msra.mxu0 0.0
        %4292 = vmatprep.subr.mxu0 0.0
        %4293 = vmatpush1.msra.mxu0 0.0
        %4294 = vmatprep.subr.mxu0 0.0
        %4295 = vmatpush1.msra.mxu0 0.0
        %4296 = vmatprep.subr.mxu0 0.0
        %4297 = vmatpush1.msra.mxu0 0.0
        %4298 = vmatprep.subr.mxu0 0.0
        %4299 = vmatpush1.msra.mxu0 0.0
        %4300 = vmatprep.subr.mxu0 0.0
        %4301 = vmatpush1.msra.mxu0 0.0
        %4302 = vmatprep.subr.mxu0 0.0
        %4303 = vmatpush1.msra.mxu0 0.0
        %4304 = vmatprep.subr.mxu0 0.0
        %4305 = vmatpush1.msra.mxu0 0.0
        %4306 = vmatprep.subr.mxu0 0.0
        %4307 = vmatpush1.msra.mxu0 0.0
        %4308 = vmatprep.subr.mxu0 0.0
        %4309 = vmatpush1.msra.mxu0 0.0
        %4310 = vmatprep.subr.mxu0 0.0
        %4311 = vmatpush1.msra.mxu0 0.0
        %4312 = vmatprep.subr.mxu0 0.0
        %4313 = vmatpush1.msra.mxu0 0.0
        %4314 = vmatprep.subr.mxu0 0.0
        %4315 = vmatpush1.msra.mxu0 0.0
        %4316 = vmatprep.subr.mxu0 0.0
        %4317 = vmatpush1.msra.mxu0 0.0
        %4318 = vmatprep.subr.mxu0 0.0
        %4319 = vmatpush1.msra.mxu0 0.0
        %4320 = vmatprep.subr.mxu0 0.0
        %4321 = vmatpush1.msra.mxu0 0.0
        %4322 = vmatprep.subr.mxu0 0.0
        %4323 = vmatpush1.msra.mxu0 0.0
        %4324 = vmatprep.mubr.f32.mxu0 0.0
        %v4325 = vand.u32 %v3789, 4294901760
        %4326 = vmatmul.mubr.f32.gmra.mrb[0].mxu0 %v4325
        %v4327 = vpop.f32.mrb[0].mxu0
        %v4328 = vadd.f32 %v4213, %v4327
        %v4329 = vpop.f32.mrb[0].mxu0
        %4330 = vmatprep.mubr.f32.mxu0 0.0
        %v4331 = vand.u32 %v3792, 4294901760
        %4332 = vmatmul.mubr.f32.gmra.mrb[0].mxu0 %v4331
        %v4333 = vpop.f32.mrb[0].mxu0
        %v4334 = vadd.f32 %v4221, %v4333
        %v4335 = vpop.f32.mrb[0].mxu0
        %4336 = vdwg.mxu0
        %4337 = vmatprep.subr.mxu0 0.0
        %v4338 = vand.u32 %v3772, 4294901760
        %4339 = vmatpush1.msra.mxu0 %v4338
        %4340 = vmatprep.subr.mxu0 0.0
        %v4341 = vand.u32 %v3773, 4294901760
        %4342 = vmatpush1.msra.mxu0 %v4341
        %4343 = vmatprep.subr.mxu0 0.0
        %v4344 = vand.u32 %v3774, 4294901760
        %4345 = vmatpush1.msra.mxu0 %v4344
        %4346 = vmatprep.subr.mxu0 0.0
        %v4347 = vand.u32 %v3775, 4294901760
        %4348 = vmatpush1.msra.mxu0 %v4347
        %4349 = vmatprep.subr.mxu0 0.0
        %v4350 = vand.u32 %v3776, 4294901760
        %4351 = vmatpush1.msra.mxu0 %v4350
        %4352 = vmatprep.subr.mxu0 0.0
        %v4353 = vand.u32 %v3777, 4294901760
        %4354 = vmatpush1.msra.mxu0 %v4353
        %4355 = vmatprep.subr.mxu0 0.0
        %v4356 = vand.u32 %v3778, 4294901760
        %4357 = vmatpush1.msra.mxu0 %v4356
        %4358 = vmatprep.subr.mxu0 0.0
        %v4359 = vand.u32 %v3779, 4294901760
        %4360 = vmatpush1.msra.mxu0 %v4359
        %4361 = vmatprep.subr.mxu0 0.0
        %v4362 = vand.u32 %v3780, 4294901760
        %4363 = vmatpush1.msra.mxu0 %v4362
        %4364 = vmatprep.subr.mxu0 0.0
        %v4365 = vand.u32 %v3781, 4294901760
        %4366 = vmatpush1.msra.mxu0 %v4365
        %4367 = vmatprep.subr.mxu0 0.0
        %v4368 = vand.u32 %v3782, 4294901760
        %4369 = vmatpush1.msra.mxu0 %v4368
        %4370 = vmatprep.subr.mxu0 0.0
        %v4371 = vand.u32 %v3783, 4294901760
        %4372 = vmatpush1.msra.mxu0 %v4371
        %4373 = vmatprep.subr.mxu0 0.0
        %4374 = vmatpush1.msra.mxu0 0.0
        %4375 = vmatprep.subr.mxu0 0.0
        %4376 = vmatpush1.msra.mxu0 0.0
        %4377 = vmatprep.subr.mxu0 0.0
        %4378 = vmatpush1.msra.mxu0 0.0
        %4379 = vmatprep.subr.mxu0 0.0
        %4380 = vmatpush1.msra.mxu0 0.0
        %4381 = vmatprep.subr.mxu0 0.0
        %4382 = vmatpush1.msra.mxu0 0.0
        %4383 = vmatprep.subr.mxu0 0.0
        %4384 = vmatpush1.msra.mxu0 0.0
        %4385 = vmatprep.subr.mxu0 0.0
        %4386 = vmatpush1.msra.mxu0 0.0
        %4387 = vmatprep.subr.mxu0 0.0
        %4388 = vmatpush1.msra.mxu0 0.0
        %4389 = vmatprep.subr.mxu0 0.0
        %4390 = vmatpush1.msra.mxu0 0.0
        %4391 = vmatprep.subr.mxu0 0.0
        %4392 = vmatpush1.msra.mxu0 0.0
        %4393 = vmatprep.subr.mxu0 0.0
        %4394 = vmatpush1.msra.mxu0 0.0
        %4395 = vmatprep.subr.mxu0 0.0
        %4396 = vmatpush1.msra.mxu0 0.0
        %4397 = vmatprep.subr.mxu0 0.0
        %4398 = vmatpush1.msra.mxu0 0.0
        %4399 = vmatprep.subr.mxu0 0.0
        %4400 = vmatpush1.msra.mxu0 0.0
        %4401 = vmatprep.subr.mxu0 0.0
        %4402 = vmatpush1.msra.mxu0 0.0
        %4403 = vmatprep.subr.mxu0 0.0
        %4404 = vmatpush1.msra.mxu0 0.0
        %4405 = vmatprep.subr.mxu0 0.0
        %4406 = vmatpush1.msra.mxu0 0.0
        %4407 = vmatprep.subr.mxu0 0.0
        %4408 = vmatpush1.msra.mxu0 0.0
        %4409 = vmatprep.subr.mxu0 0.0
        %4410 = vmatpush1.msra.mxu0 0.0
        %4411 = vmatprep.subr.mxu0 0.0
        %4412 = vmatpush1.msra.mxu0 0.0
        %4413 = vmatprep.mubr.f32.mxu0 0.0
        %v4414 = vand.u32 %v3789, 4294901760
        %4415 = vmatmul.mubr.f32.gmra.mrb[0].mxu0 %v4414
        %v4416 = vpop.f32.mrb[0].mxu0
        %v4417 = vadd.f32 %v4328, %v4416
        %v4418 = vpop.f32.mrb[0].mxu0
        %4419 = vmatprep.mubr.f32.mxu0 0.0
        %v4420 = vand.u32 %v3792, 4294901760
        %4421 = vmatmul.mubr.f32.gmra.mrb[0].mxu0 %v4420
        %v4422 = vpop.f32.mrb[0].mxu0
        %v4423 = vadd.f32 %v4334, %v4422
        %v4424 = vpop.f32.mrb[0].mxu0
        %4425 = vdwg.mxu0
        %s4426 = scalar_lea.vmem %s8, %s3770
        %v4427 = vld [vmem:[%s4426] sm:$0xff]
        %v4428 = vld [vmem:[%s4426 + $0x8] sm:$0xff]
        %v4429 = vld [vmem:[%s4426 + $0x10] sm:$0xff]
        %v4430 = vld [vmem:[%s4426 + $0x18] sm:$0xff]
        %v4431 = vld [vmem:[%s4426 + $0x20] sm:$0xff]
        %v4432 = vld [vmem:[%s4426 + $0x28] sm:$0xff]
        %v4433 = vld [vmem:[%s4426 + $0x30] sm:$0xff]
        %v4434 = vld [vmem:[%s4426 + $0x38] sm:$0xff]
        %v4435 = vld [vmem:[%s4426 + $0x40] sm:$0xff]
        %v4436 = vld [vmem:[%s4426 + $0x48] sm:$0xff]
        %v4437 = vld [vmem:[%s4426 + $0x50] sm:$0xff]
        %v4438 = vld [vmem:[%s4426 + $0x58] sm:$0xff]
        %v4439 = vlaneseq
        %v4440 = vshrl.u32 %v4439, 7
        %v4441 = vsub.s32 3, %v4440
        %v4442 = vrot.slane %v563, %v4441
        %4443 = vmatprep.subr.mxu0 0.0
        %v4444 = vand.u32 %v4427, 4294901760
        %4445 = vmatpush1.msra.mxu0 %v4444
        %4446 = vmatprep.subr.mxu0 0.0
        %v4447 = vand.u32 %v4428, 4294901760
        %4448 = vmatpush1.msra.mxu0 %v4447
        %4449 = vmatprep.subr.mxu0 0.0
        %v4450 = vand.u32 %v4429, 4294901760
        %4451 = vmatpush1.msra.mxu0 %v4450
        %4452 = vmatprep.subr.mxu0 0.0
        %v4453 = vand.u32 %v4430, 4294901760
        %4454 = vmatpush1.msra.mxu0 %v4453
        %4455 = vmatprep.subr.mxu0 0.0
        %v4456 = vand.u32 %v4431, 4294901760
        %4457 = vmatpush1.msra.mxu0 %v4456
        %4458 = vmatprep.subr.mxu0 0.0
        %v4459 = vand.u32 %v4432, 4294901760
        %4460 = vmatpush1.msra.mxu0 %v4459
        %4461 = vmatprep.subr.mxu0 0.0
        %v4462 = vand.u32 %v4433, 4294901760
        %4463 = vmatpush1.msra.mxu0 %v4462
        %4464 = vmatprep.subr.mxu0 0.0
        %v4465 = vand.u32 %v4434, 4294901760
        %4466 = vmatpush1.msra.mxu0 %v4465
        %4467 = vmatprep.subr.mxu0 0.0
        %v4468 = vand.u32 %v4435, 4294901760
        %4469 = vmatpush1.msra.mxu0 %v4468
        %4470 = vmatprep.subr.mxu0 0.0
        %v4471 = vand.u32 %v4436, 4294901760
        %4472 = vmatpush1.msra.mxu0 %v4471
        %4473 = vmatprep.subr.mxu0 0.0
        %v4474 = vand.u32 %v4437, 4294901760
        %4475 = vmatpush1.msra.mxu0 %v4474
        %4476 = vmatprep.subr.mxu0 0.0
        %v4477 = vand.u32 %v4438, 4294901760
        %4478 = vmatpush1.msra.mxu0 %v4477
        %4479 = vmatprep.subr.mxu0 0.0
        %4480 = vmatpush1.msra.mxu0 0.0
        %4481 = vmatprep.subr.mxu0 0.0
        %4482 = vmatpush1.msra.mxu0 0.0
        %4483 = vmatprep.subr.mxu0 0.0
        %4484 = vmatpush1.msra.mxu0 0.0
        %4485 = vmatprep.subr.mxu0 0.0
        %4486 = vmatpush1.msra.mxu0 0.0
        %4487 = vmatprep.subr.mxu0 0.0
        %4488 = vmatpush1.msra.mxu0 0.0
        %4489 = vmatprep.subr.mxu0 0.0
        %4490 = vmatpush1.msra.mxu0 0.0
        %4491 = vmatprep.subr.mxu0 0.0
        %4492 = vmatpush1.msra.mxu0 0.0
        %4493 = vmatprep.subr.mxu0 0.0
        %4494 = vmatpush1.msra.mxu0 0.0
        %4495 = vmatprep.subr.mxu0 0.0
        %4496 = vmatpush1.msra.mxu0 0.0
        %4497 = vmatprep.subr.mxu0 0.0
        %4498 = vmatpush1.msra.mxu0 0.0
        %4499 = vmatprep.subr.mxu0 0.0
        %4500 = vmatpush1.msra.mxu0 0.0
        %4501 = vmatprep.subr.mxu0 0.0
        %4502 = vmatpush1.msra.mxu0 0.0
        %4503 = vmatprep.subr.mxu0 0.0
        %4504 = vmatpush1.msra.mxu0 0.0
        %4505 = vmatprep.subr.mxu0 0.0
        %4506 = vmatpush1.msra.mxu0 0.0
        %4507 = vmatprep.subr.mxu0 0.0
        %4508 = vmatpush1.msra.mxu0 0.0
        %4509 = vmatprep.subr.mxu0 0.0
        %4510 = vmatpush1.msra.mxu0 0.0
        %4511 = vmatprep.subr.mxu0 0.0
        %4512 = vmatpush1.msra.mxu0 0.0
        %4513 = vmatprep.subr.mxu0 0.0
        %4514 = vmatpush1.msra.mxu0 0.0
        %4515 = vmatprep.subr.mxu0 0.0
        %4516 = vmatpush1.msra.mxu0 0.0
        %4517 = vmatprep.subr.mxu0 0.0
        %4518 = vmatpush1.msra.mxu0 0.0
        %4519 = vmatprep.mubr.f32.mxu0 0.0
        %v4520 = vand.u32 %v3789, 4294901760
        %v4521 = vsub.f32 %v3789, %v4520
        %v4522 = vand.u32 %v4521, 4294901760
        %v4523 = vsub.f32 %v4521, %v4522
        %v4524 = vand.u32 %v4523, 4294901760
        %4525 = vmatmul.mubr.f32.gmra.mrb[0].mxu0 %v4524
        %v4526 = vpop.f32.mrb[0].mxu0
        %v4527 = vadd.f32 %v4442, %v4526
        %v4528 = vpop.f32.mrb[0].mxu0
        %4529 = vmatprep.mubr.f32.mxu0 0.0
        %v4530 = vand.u32 %v3792, 4294901760
        %v4531 = vsub.f32 %v3792, %v4530
        %v4532 = vand.u32 %v4531, 4294901760
        %v4533 = vsub.f32 %v4531, %v4532
        %v4534 = vand.u32 %v4533, 4294901760
        %4535 = vmatmul.mubr.f32.gmra.mrb[0].mxu0 %v4534
        %v4536 = vpop.f32.mrb[0].mxu0
        %v4537 = vadd.f32 %v4442, %v4536
        %v4538 = vpop.f32.mrb[0].mxu0
        %4539 = vdwg.mxu0
        %4540 = vmatprep.subr.mxu0 0.0
        %v4541 = vand.u32 %v4427, 4294901760
        %v4542 = vsub.f32 %v4427, %v4541
        %v4543 = vand.u32 %v4542, 4294901760
        %v4544 = vsub.f32 %v4542, %v4543
        %v4545 = vand.u32 %v4544, 4294901760
        %4546 = vmatpush1.msra.mxu0 %v4545
        %4547 = vmatprep.subr.mxu0 0.0
        %v4548 = vand.u32 %v4428, 4294901760
        %v4549 = vsub.f32 %v4428, %v4548
        %v4550 = vand.u32 %v4549, 4294901760
        %v4551 = vsub.f32 %v4549, %v4550
        %v4552 = vand.u32 %v4551, 4294901760
        %4553 = vmatpush1.msra.mxu0 %v4552
        %4554 = vmatprep.subr.mxu0 0.0
        %v4555 = vand.u32 %v4429, 4294901760
        %v4556 = vsub.f32 %v4429, %v4555
        %v4557 = vand.u32 %v4556, 4294901760
        %v4558 = vsub.f32 %v4556, %v4557
        %v4559 = vand.u32 %v4558, 4294901760
        %4560 = vmatpush1.msra.mxu0 %v4559
        %4561 = vmatprep.subr.mxu0 0.0
        %v4562 = vand.u32 %v4430, 4294901760
        %v4563 = vsub.f32 %v4430, %v4562
        %v4564 = vand.u32 %v4563, 4294901760
        %v4565 = vsub.f32 %v4563, %v4564
        %v4566 = vand.u32 %v4565, 4294901760
        %4567 = vmatpush1.msra.mxu0 %v4566
        %4568 = vmatprep.subr.mxu0 0.0
        %v4569 = vand.u32 %v4431, 4294901760
        %v4570 = vsub.f32 %v4431, %v4569
        %v4571 = vand.u32 %v4570, 4294901760
        %v4572 = vsub.f32 %v4570, %v4571
        %v4573 = vand.u32 %v4572, 4294901760
        %4574 = vmatpush1.msra.mxu0 %v4573
        %4575 = vmatprep.subr.mxu0 0.0
        %v4576 = vand.u32 %v4432, 4294901760
        %v4577 = vsub.f32 %v4432, %v4576
        %v4578 = vand.u32 %v4577, 4294901760
        %v4579 = vsub.f32 %v4577, %v4578
        %v4580 = vand.u32 %v4579, 4294901760
        %4581 = vmatpush1.msra.mxu0 %v4580
        %4582 = vmatprep.subr.mxu0 0.0
        %v4583 = vand.u32 %v4433, 4294901760
        %v4584 = vsub.f32 %v4433, %v4583
        %v4585 = vand.u32 %v4584, 4294901760
        %v4586 = vsub.f32 %v4584, %v4585
        %v4587 = vand.u32 %v4586, 4294901760
        %4588 = vmatpush1.msra.mxu0 %v4587
        %4589 = vmatprep.subr.mxu0 0.0
        %v4590 = vand.u32 %v4434, 4294901760
        %v4591 = vsub.f32 %v4434, %v4590
        %v4592 = vand.u32 %v4591, 4294901760
        %v4593 = vsub.f32 %v4591, %v4592
        %v4594 = vand.u32 %v4593, 4294901760
        %4595 = vmatpush1.msra.mxu0 %v4594
        %4596 = vmatprep.subr.mxu0 0.0
        %v4597 = vand.u32 %v4435, 4294901760
        %v4598 = vsub.f32 %v4435, %v4597
        %v4599 = vand.u32 %v4598, 4294901760
        %v4600 = vsub.f32 %v4598, %v4599
        %v4601 = vand.u32 %v4600, 4294901760
        %4602 = vmatpush1.msra.mxu0 %v4601
        %4603 = vmatprep.subr.mxu0 0.0
        %v4604 = vand.u32 %v4436, 4294901760
        %v4605 = vsub.f32 %v4436, %v4604
        %v4606 = vand.u32 %v4605, 4294901760
        %v4607 = vsub.f32 %v4605, %v4606
        %v4608 = vand.u32 %v4607, 4294901760
        %4609 = vmatpush1.msra.mxu0 %v4608
        %4610 = vmatprep.subr.mxu0 0.0
        %v4611 = vand.u32 %v4437, 4294901760
        %v4612 = vsub.f32 %v4437, %v4611
        %v4613 = vand.u32 %v4612, 4294901760
        %v4614 = vsub.f32 %v4612, %v4613
        %v4615 = vand.u32 %v4614, 4294901760
        %4616 = vmatpush1.msra.mxu0 %v4615
        %4617 = vmatprep.subr.mxu0 0.0
        %v4618 = vand.u32 %v4438, 4294901760
        %v4619 = vsub.f32 %v4438, %v4618
        %v4620 = vand.u32 %v4619, 4294901760
        %v4621 = vsub.f32 %v4619, %v4620
        %v4622 = vand.u32 %v4621, 4294901760
        %4623 = vmatpush1.msra.mxu0 %v4622
        %4624 = vmatprep.subr.mxu0 0.0
        %4625 = vmatpush1.msra.mxu0 0.0
        %4626 = vmatprep.subr.mxu0 0.0
        %4627 = vmatpush1.msra.mxu0 0.0
        %4628 = vmatprep.subr.mxu0 0.0
        %4629 = vmatpush1.msra.mxu0 0.0
        %4630 = vmatprep.subr.mxu0 0.0
        %4631 = vmatpush1.msra.mxu0 0.0
        %4632 = vmatprep.subr.mxu0 0.0
        %4633 = vmatpush1.msra.mxu0 0.0
        %4634 = vmatprep.subr.mxu0 0.0
        %4635 = vmatpush1.msra.mxu0 0.0
        %4636 = vmatprep.subr.mxu0 0.0
        %4637 = vmatpush1.msra.mxu0 0.0
        %4638 = vmatprep.subr.mxu0 0.0
        %4639 = vmatpush1.msra.mxu0 0.0
        %4640 = vmatprep.subr.mxu0 0.0
        %4641 = vmatpush1.msra.mxu0 0.0
        %4642 = vmatprep.subr.mxu0 0.0
        %4643 = vmatpush1.msra.mxu0 0.0
        %4644 = vmatprep.subr.mxu0 0.0
        %4645 = vmatpush1.msra.mxu0 0.0
        %4646 = vmatprep.subr.mxu0 0.0
        %4647 = vmatpush1.msra.mxu0 0.0
        %4648 = vmatprep.subr.mxu0 0.0
        %4649 = vmatpush1.msra.mxu0 0.0
        %4650 = vmatprep.subr.mxu0 0.0
        %4651 = vmatpush1.msra.mxu0 0.0
        %4652 = vmatprep.subr.mxu0 0.0
        %4653 = vmatpush1.msra.mxu0 0.0
        %4654 = vmatprep.subr.mxu0 0.0
        %4655 = vmatpush1.msra.mxu0 0.0
        %4656 = vmatprep.subr.mxu0 0.0
        %4657 = vmatpush1.msra.mxu0 0.0
        %4658 = vmatprep.subr.mxu0 0.0
        %4659 = vmatpush1.msra.mxu0 0.0
        %4660 = vmatprep.subr.mxu0 0.0
        %4661 = vmatpush1.msra.mxu0 0.0
        %4662 = vmatprep.subr.mxu0 0.0
        %4663 = vmatpush1.msra.mxu0 0.0
        %4664 = vmatprep.mubr.f32.mxu0 0.0
        %v4665 = vand.u32 %v3789, 4294901760
        %4666 = vmatmul.mubr.f32.gmra.mrb[0].mxu0 %v4665
        %v4667 = vpop.f32.mrb[0].mxu0
        %v4668 = vadd.f32 %v4527, %v4667
        %v4669 = vpop.f32.mrb[0].mxu0
        %4670 = vmatprep.mubr.f32.mxu0 0.0
        %v4671 = vand.u32 %v3792, 4294901760
        %4672 = vmatmul.mubr.f32.gmra.mrb[0].mxu0 %v4671
        %v4673 = vpop.f32.mrb[0].mxu0
        %v4674 = vadd.f32 %v4537, %v4673
        %v4675 = vpop.f32.mrb[0].mxu0
        %4676 = vdwg.mxu0
        %4677 = vmatprep.subr.mxu0 0.0
        %v4678 = vand.u32 %v4427, 4294901760
        %v4679 = vsub.f32 %v4427, %v4678
        %4680 = vmatpush1.msra.mxu0 %v4679
        %4681 = vmatprep.subr.mxu0 0.0
        %v4682 = vand.u32 %v4428, 4294901760
        %v4683 = vsub.f32 %v4428, %v4682
        %4684 = vmatpush1.msra.mxu0 %v4683
        %4685 = vmatprep.subr.mxu0 0.0
        %v4686 = vand.u32 %v4429, 4294901760
        %v4687 = vsub.f32 %v4429, %v4686
        %4688 = vmatpush1.msra.mxu0 %v4687
        %4689 = vmatprep.subr.mxu0 0.0
        %v4690 = vand.u32 %v4430, 4294901760
        %v4691 = vsub.f32 %v4430, %v4690
        %4692 = vmatpush1.msra.mxu0 %v4691
        %4693 = vmatprep.subr.mxu0 0.0
        %v4694 = vand.u32 %v4431, 4294901760
        %v4695 = vsub.f32 %v4431, %v4694
        %4696 = vmatpush1.msra.mxu0 %v4695
        %4697 = vmatprep.subr.mxu0 0.0
        %v4698 = vand.u32 %v4432, 4294901760
        %v4699 = vsub.f32 %v4432, %v4698
        %4700 = vmatpush1.msra.mxu0 %v4699
        %4701 = vmatprep.subr.mxu0 0.0
        %v4702 = vand.u32 %v4433, 4294901760
        %v4703 = vsub.f32 %v4433, %v4702
        %4704 = vmatpush1.msra.mxu0 %v4703
        %4705 = vmatprep.subr.mxu0 0.0
        %v4706 = vand.u32 %v4434, 4294901760
        %v4707 = vsub.f32 %v4434, %v4706
        %4708 = vmatpush1.msra.mxu0 %v4707
        %4709 = vmatprep.subr.mxu0 0.0
        %v4710 = vand.u32 %v4435, 4294901760
        %v4711 = vsub.f32 %v4435, %v4710
        %4712 = vmatpush1.msra.mxu0 %v4711
        %4713 = vmatprep.subr.mxu0 0.0
        %v4714 = vand.u32 %v4436, 4294901760
        %v4715 = vsub.f32 %v4436, %v4714
        %4716 = vmatpush1.msra.mxu0 %v4715
        %4717 = vmatprep.subr.mxu0 0.0
        %v4718 = vand.u32 %v4437, 4294901760
        %v4719 = vsub.f32 %v4437, %v4718
        %4720 = vmatpush1.msra.mxu0 %v4719
        %4721 = vmatprep.subr.mxu0 0.0
        %v4722 = vand.u32 %v4438, 4294901760
        %v4723 = vsub.f32 %v4438, %v4722
        %4724 = vmatpush1.msra.mxu0 %v4723
        %4725 = vmatprep.subr.mxu0 0.0
        %4726 = vmatpush1.msra.mxu0 0.0
        %4727 = vmatprep.subr.mxu0 0.0
        %4728 = vmatpush1.msra.mxu0 0.0
        %4729 = vmatprep.subr.mxu0 0.0
        %4730 = vmatpush1.msra.mxu0 0.0
        %4731 = vmatprep.subr.mxu0 0.0
        %4732 = vmatpush1.msra.mxu0 0.0
        %4733 = vmatprep.subr.mxu0 0.0
        %4734 = vmatpush1.msra.mxu0 0.0
        %4735 = vmatprep.subr.mxu0 0.0
        %4736 = vmatpush1.msra.mxu0 0.0
        %4737 = vmatprep.subr.mxu0 0.0
        %4738 = vmatpush1.msra.mxu0 0.0
        %4739 = vmatprep.subr.mxu0 0.0
        %4740 = vmatpush1.msra.mxu0 0.0
        %4741 = vmatprep.subr.mxu0 0.0
        %4742 = vmatpush1.msra.mxu0 0.0
        %4743 = vmatprep.subr.mxu0 0.0
        %4744 = vmatpush1.msra.mxu0 0.0
        %4745 = vmatprep.subr.mxu0 0.0
        %4746 = vmatpush1.msra.mxu0 0.0
        %4747 = vmatprep.subr.mxu0 0.0
        %4748 = vmatpush1.msra.mxu0 0.0
        %4749 = vmatprep.subr.mxu0 0.0
        %4750 = vmatpush1.msra.mxu0 0.0
        %4751 = vmatprep.subr.mxu0 0.0
        %4752 = vmatpush1.msra.mxu0 0.0
        %4753 = vmatprep.subr.mxu0 0.0
        %4754 = vmatpush1.msra.mxu0 0.0
        %4755 = vmatprep.subr.mxu0 0.0
        %4756 = vmatpush1.msra.mxu0 0.0
        %4757 = vmatprep.subr.mxu0 0.0
        %4758 = vmatpush1.msra.mxu0 0.0
        %4759 = vmatprep.subr.mxu0 0.0
        %4760 = vmatpush1.msra.mxu0 0.0
        %4761 = vmatprep.subr.mxu0 0.0
        %4762 = vmatpush1.msra.mxu0 0.0
        %4763 = vmatprep.subr.mxu0 0.0
        %4764 = vmatpush1.msra.mxu0 0.0
        %4765 = vmatprep.mubr.f32.mxu0 0.0
        %v4766 = vand.u32 %v3789, 4294901760
        %v4767 = vsub.f32 %v3789, %v4766
        %4768 = vmatmul.mubr.f32.gmra.mrb[0].mxu0 %v4767
        %v4769 = vpop.f32.mrb[0].mxu0
        %v4770 = vadd.f32 %v4668, %v4769
        %v4771 = vpop.f32.mrb[0].mxu0
        %4772 = vmatprep.mubr.f32.mxu0 0.0
        %v4773 = vand.u32 %v3792, 4294901760
        %v4774 = vsub.f32 %v3792, %v4773
        %4775 = vmatmul.mubr.f32.gmra.mrb[0].mxu0 %v4774
        %v4776 = vpop.f32.mrb[0].mxu0
        %v4777 = vadd.f32 %v4674, %v4776
        %v4778 = vpop.f32.mrb[0].mxu0
        %4779 = vdwg.mxu0
        %4780 = vmatprep.subr.mxu0 0.0
        %v4781 = vand.u32 %v4427, 4294901760
        %4782 = vmatpush1.msra.mxu0 %v4781
        %4783 = vmatprep.subr.mxu0 0.0
        %v4784 = vand.u32 %v4428, 4294901760
        %4785 = vmatpush1.msra.mxu0 %v4784
        %4786 = vmatprep.subr.mxu0 0.0
        %v4787 = vand.u32 %v4429, 4294901760
        %4788 = vmatpush1.msra.mxu0 %v4787
        %4789 = vmatprep.subr.mxu0 0.0
        %v4790 = vand.u32 %v4430, 4294901760
        %4791 = vmatpush1.msra.mxu0 %v4790
        %4792 = vmatprep.subr.mxu0 0.0
        %v4793 = vand.u32 %v4431, 4294901760
        %4794 = vmatpush1.msra.mxu0 %v4793
        %4795 = vmatprep.subr.mxu0 0.0
        %v4796 = vand.u32 %v4432, 4294901760
        %4797 = vmatpush1.msra.mxu0 %v4796
        %4798 = vmatprep.subr.mxu0 0.0
        %v4799 = vand.u32 %v4433, 4294901760
        %4800 = vmatpush1.msra.mxu0 %v4799
        %4801 = vmatprep.subr.mxu0 0.0
        %v4802 = vand.u32 %v4434, 4294901760
        %4803 = vmatpush1.msra.mxu0 %v4802
        %4804 = vmatprep.subr.mxu0 0.0
        %v4805 = vand.u32 %v4435, 4294901760
        %4806 = vmatpush1.msra.mxu0 %v4805
        %4807 = vmatprep.subr.mxu0 0.0
        %v4808 = vand.u32 %v4436, 4294901760
        %4809 = vmatpush1.msra.mxu0 %v4808
        %4810 = vmatprep.subr.mxu0 0.0
        %v4811 = vand.u32 %v4437, 4294901760
        %4812 = vmatpush1.msra.mxu0 %v4811
        %4813 = vmatprep.subr.mxu0 0.0
        %v4814 = vand.u32 %v4438, 4294901760
        %4815 = vmatpush1.msra.mxu0 %v4814
        %4816 = vmatprep.subr.mxu0 0.0
        %4817 = vmatpush1.msra.mxu0 0.0
        %4818 = vmatprep.subr.mxu0 0.0
        %4819 = vmatpush1.msra.mxu0 0.0
        %4820 = vmatprep.subr.mxu0 0.0
        %4821 = vmatpush1.msra.mxu0 0.0
        %4822 = vmatprep.subr.mxu0 0.0
        %4823 = vmatpush1.msra.mxu0 0.0
        %4824 = vmatprep.subr.mxu0 0.0
        %4825 = vmatpush1.msra.mxu0 0.0
        %4826 = vmatprep.subr.mxu0 0.0
        %4827 = vmatpush1.msra.mxu0 0.0
        %4828 = vmatprep.subr.mxu0 0.0
        %4829 = vmatpush1.msra.mxu0 0.0
        %4830 = vmatprep.subr.mxu0 0.0
        %4831 = vmatpush1.msra.mxu0 0.0
        %4832 = vmatprep.subr.mxu0 0.0
        %4833 = vmatpush1.msra.mxu0 0.0
        %4834 = vmatprep.subr.mxu0 0.0
        %4835 = vmatpush1.msra.mxu0 0.0
        %4836 = vmatprep.subr.mxu0 0.0
        %4837 = vmatpush1.msra.mxu0 0.0
        %4838 = vmatprep.subr.mxu0 0.0
        %4839 = vmatpush1.msra.mxu0 0.0
        %4840 = vmatprep.subr.mxu0 0.0
        %4841 = vmatpush1.msra.mxu0 0.0
        %4842 = vmatprep.subr.mxu0 0.0
        %4843 = vmatpush1.msra.mxu0 0.0
        %4844 = vmatprep.subr.mxu0 0.0
        %4845 = vmatpush1.msra.mxu0 0.0
        %4846 = vmatprep.subr.mxu0 0.0
        %4847 = vmatpush1.msra.mxu0 0.0
        %4848 = vmatprep.subr.mxu0 0.0
        %4849 = vmatpush1.msra.mxu0 0.0
        %4850 = vmatprep.subr.mxu0 0.0
        %4851 = vmatpush1.msra.mxu0 0.0
        %4852 = vmatprep.subr.mxu0 0.0
        %4853 = vmatpush1.msra.mxu0 0.0
        %4854 = vmatprep.subr.mxu0 0.0
        %4855 = vmatpush1.msra.mxu0 0.0
        %4856 = vmatprep.mubr.f32.mxu0 0.0
        %v4857 = vand.u32 %v3789, 4294901760
        %v4858 = vsub.f32 %v3789, %v4857
        %v4859 = vand.u32 %v4858, 4294901760
        %4860 = vmatmul.mubr.f32.gmra.mrb[0].mxu0 %v4859
        %v4861 = vpop.f32.mrb[0].mxu0
        %v4862 = vadd.f32 %v4770, %v4861
        %v4863 = vpop.f32.mrb[0].mxu0
        %4864 = vmatprep.mubr.f32.mxu0 0.0
        %v4865 = vand.u32 %v3792, 4294901760
        %v4866 = vsub.f32 %v3792, %v4865
        %v4867 = vand.u32 %v4866, 4294901760
        %4868 = vmatmul.mubr.f32.gmra.mrb[0].mxu0 %v4867
        %v4869 = vpop.f32.mrb[0].mxu0
        %v4870 = vadd.f32 %v4777, %v4869
        %v4871 = vpop.f32.mrb[0].mxu0
        %4872 = vdwg.mxu0
        %4873 = vmatprep.subr.mxu0 0.0
        %v4874 = vand.u32 %v4427, 4294901760
        %v4875 = vsub.f32 %v4427, %v4874
        %v4876 = vand.u32 %v4875, 4294901760
        %4877 = vmatpush1.msra.mxu0 %v4876
        %4878 = vmatprep.subr.mxu0 0.0
        %v4879 = vand.u32 %v4428, 4294901760
        %v4880 = vsub.f32 %v4428, %v4879
        %v4881 = vand.u32 %v4880, 4294901760
        %4882 = vmatpush1.msra.mxu0 %v4881
        %4883 = vmatprep.subr.mxu0 0.0
        %v4884 = vand.u32 %v4429, 4294901760
        %v4885 = vsub.f32 %v4429, %v4884
        %v4886 = vand.u32 %v4885, 4294901760
        %4887 = vmatpush1.msra.mxu0 %v4886
        %4888 = vmatprep.subr.mxu0 0.0
        %v4889 = vand.u32 %v4430, 4294901760
        %v4890 = vsub.f32 %v4430, %v4889
        %v4891 = vand.u32 %v4890, 4294901760
        %4892 = vmatpush1.msra.mxu0 %v4891
        %4893 = vmatprep.subr.mxu0 0.0
        %v4894 = vand.u32 %v4431, 4294901760
        %v4895 = vsub.f32 %v4431, %v4894
        %v4896 = vand.u32 %v4895, 4294901760
        %4897 = vmatpush1.msra.mxu0 %v4896
        %4898 = vmatprep.subr.mxu0 0.0
        %v4899 = vand.u32 %v4432, 4294901760
        %v4900 = vsub.f32 %v4432, %v4899
        %v4901 = vand.u32 %v4900, 4294901760
        %4902 = vmatpush1.msra.mxu0 %v4901
        %4903 = vmatprep.subr.mxu0 0.0
        %v4904 = vand.u32 %v4433, 4294901760
        %v4905 = vsub.f32 %v4433, %v4904
        %v4906 = vand.u32 %v4905, 4294901760
        %4907 = vmatpush1.msra.mxu0 %v4906
        %4908 = vmatprep.subr.mxu0 0.0
        %v4909 = vand.u32 %v4434, 4294901760
        %v4910 = vsub.f32 %v4434, %v4909
        %v4911 = vand.u32 %v4910, 4294901760
        %4912 = vmatpush1.msra.mxu0 %v4911
        %4913 = vmatprep.subr.mxu0 0.0
        %v4914 = vand.u32 %v4435, 4294901760
        %v4915 = vsub.f32 %v4435, %v4914
        %v4916 = vand.u32 %v4915, 4294901760
        %4917 = vmatpush1.msra.mxu0 %v4916
        %4918 = vmatprep.subr.mxu0 0.0
        %v4919 = vand.u32 %v4436, 4294901760
        %v4920 = vsub.f32 %v4436, %v4919
        %v4921 = vand.u32 %v4920, 4294901760
        %4922 = vmatpush1.msra.mxu0 %v4921
        %4923 = vmatprep.subr.mxu0 0.0
        %v4924 = vand.u32 %v4437, 4294901760
        %v4925 = vsub.f32 %v4437, %v4924
        %v4926 = vand.u32 %v4925, 4294901760
        %4927 = vmatpush1.msra.mxu0 %v4926
        %4928 = vmatprep.subr.mxu0 0.0
        %v4929 = vand.u32 %v4438, 4294901760
        %v4930 = vsub.f32 %v4438, %v4929
        %v4931 = vand.u32 %v4930, 4294901760
        %4932 = vmatpush1.msra.mxu0 %v4931
        %4933 = vmatprep.subr.mxu0 0.0
        %4934 = vmatpush1.msra.mxu0 0.0
        %4935 = vmatprep.subr.mxu0 0.0
        %4936 = vmatpush1.msra.mxu0 0.0
        %4937 = vmatprep.subr.mxu0 0.0
        %4938 = vmatpush1.msra.mxu0 0.0
        %4939 = vmatprep.subr.mxu0 0.0
        %4940 = vmatpush1.msra.mxu0 0.0
        %4941 = vmatprep.subr.mxu0 0.0
        %4942 = vmatpush1.msra.mxu0 0.0
        %4943 = vmatprep.subr.mxu0 0.0
        %4944 = vmatpush1.msra.mxu0 0.0
        %4945 = vmatprep.subr.mxu0 0.0
        %4946 = vmatpush1.msra.mxu0 0.0
        %4947 = vmatprep.subr.mxu0 0.0
        %4948 = vmatpush1.msra.mxu0 0.0
        %4949 = vmatprep.subr.mxu0 0.0
        %4950 = vmatpush1.msra.mxu0 0.0
        %4951 = vmatprep.subr.mxu0 0.0
        %4952 = vmatpush1.msra.mxu0 0.0
        %4953 = vmatprep.subr.mxu0 0.0
        %4954 = vmatpush1.msra.mxu0 0.0
        %4955 = vmatprep.subr.mxu0 0.0
        %4956 = vmatpush1.msra.mxu0 0.0
        %4957 = vmatprep.subr.mxu0 0.0
        %4958 = vmatpush1.msra.mxu0 0.0
        %4959 = vmatprep.subr.mxu0 0.0
        %4960 = vmatpush1.msra.mxu0 0.0
        %4961 = vmatprep.subr.mxu0 0.0
        %4962 = vmatpush1.msra.mxu0 0.0
        %4963 = vmatprep.subr.mxu0 0.0
        %4964 = vmatpush1.msra.mxu0 0.0
        %4965 = vmatprep.subr.mxu0 0.0
        %4966 = vmatpush1.msra.mxu0 0.0
        %4967 = vmatprep.subr.mxu0 0.0
        %4968 = vmatpush1.msra.mxu0 0.0
        %4969 = vmatprep.subr.mxu0 0.0
        %4970 = vmatpush1.msra.mxu0 0.0
        %4971 = vmatprep.subr.mxu0 0.0
        %4972 = vmatpush1.msra.mxu0 0.0
        %4973 = vmatprep.mubr.f32.mxu0 0.0
        %v4974 = vand.u32 %v3789, 4294901760
        %4975 = vmatmul.mubr.f32.gmra.mrb[0].mxu0 %v4974
        %v4976 = vpop.f32.mrb[0].mxu0
        %v4977 = vadd.f32 %v4862, %v4976
        %v4978 = vpop.f32.mrb[0].mxu0
        %4979 = vmatprep.mubr.f32.mxu0 0.0
        %v4980 = vand.u32 %v3792, 4294901760
        %4981 = vmatmul.mubr.f32.gmra.mrb[0].mxu0 %v4980
        %v4982 = vpop.f32.mrb[0].mxu0
        %v4983 = vadd.f32 %v4870, %v4982
        %v4984 = vpop.f32.mrb[0].mxu0
        %4985 = vdwg.mxu0
        %4986 = vmatprep.subr.mxu0 0.0
        %v4987 = vand.u32 %v4427, 4294901760
        %4988 = vmatpush1.msra.mxu0 %v4987
        %4989 = vmatprep.subr.mxu0 0.0
        %v4990 = vand.u32 %v4428, 4294901760
        %4991 = vmatpush1.msra.mxu0 %v4990
        %4992 = vmatprep.subr.mxu0 0.0
        %v4993 = vand.u32 %v4429, 4294901760
        %4994 = vmatpush1.msra.mxu0 %v4993
        %4995 = vmatprep.subr.mxu0 0.0
        %v4996 = vand.u32 %v4430, 4294901760
        %4997 = vmatpush1.msra.mxu0 %v4996
        %4998 = vmatprep.subr.mxu0 0.0
        %v4999 = vand.u32 %v4431, 4294901760
        %5000 = vmatpush1.msra.mxu0 %v4999
        %5001 = vmatprep.subr.mxu0 0.0
        %v5002 = vand.u32 %v4432, 4294901760
        %5003 = vmatpush1.msra.mxu0 %v5002
        %5004 = vmatprep.subr.mxu0 0.0
        %v5005 = vand.u32 %v4433, 4294901760
        %5006 = vmatpush1.msra.mxu0 %v5005
        %5007 = vmatprep.subr.mxu0 0.0
        %v5008 = vand.u32 %v4434, 4294901760
        %5009 = vmatpush1.msra.mxu0 %v5008
        %5010 = vmatprep.subr.mxu0 0.0
        %v5011 = vand.u32 %v4435, 4294901760
        %5012 = vmatpush1.msra.mxu0 %v5011
        %5013 = vmatprep.subr.mxu0 0.0
        %v5014 = vand.u32 %v4436, 4294901760
        %5015 = vmatpush1.msra.mxu0 %v5014
        %5016 = vmatprep.subr.mxu0 0.0
        %v5017 = vand.u32 %v4437, 4294901760
        %5018 = vmatpush1.msra.mxu0 %v5017
        %5019 = vmatprep.subr.mxu0 0.0
        %v5020 = vand.u32 %v4438, 4294901760
        %5021 = vmatpush1.msra.mxu0 %v5020
        %5022 = vmatprep.subr.mxu0 0.0
        %5023 = vmatpush1.msra.mxu0 0.0
        %5024 = vmatprep.subr.mxu0 0.0
        %5025 = vmatpush1.msra.mxu0 0.0
        %5026 = vmatprep.subr.mxu0 0.0
        %5027 = vmatpush1.msra.mxu0 0.0
        %5028 = vmatprep.subr.mxu0 0.0
        %5029 = vmatpush1.msra.mxu0 0.0
        %5030 = vmatprep.subr.mxu0 0.0
        %5031 = vmatpush1.msra.mxu0 0.0
        %5032 = vmatprep.subr.mxu0 0.0
        %5033 = vmatpush1.msra.mxu0 0.0
        %5034 = vmatprep.subr.mxu0 0.0
        %5035 = vmatpush1.msra.mxu0 0.0
        %5036 = vmatprep.subr.mxu0 0.0
        %5037 = vmatpush1.msra.mxu0 0.0
        %5038 = vmatprep.subr.mxu0 0.0
        %5039 = vmatpush1.msra.mxu0 0.0
        %5040 = vmatprep.subr.mxu0 0.0
        %5041 = vmatpush1.msra.mxu0 0.0
        %5042 = vmatprep.subr.mxu0 0.0
        %5043 = vmatpush1.msra.mxu0 0.0
        %5044 = vmatprep.subr.mxu0 0.0
        %5045 = vmatpush1.msra.mxu0 0.0
        %5046 = vmatprep.subr.mxu0 0.0
        %5047 = vmatpush1.msra.mxu0 0.0
        %5048 = vmatprep.subr.mxu0 0.0
        %5049 = vmatpush1.msra.mxu0 0.0
        %5050 = vmatprep.subr.mxu0 0.0
        %5051 = vmatpush1.msra.mxu0 0.0
        %5052 = vmatprep.subr.mxu0 0.0
        %5053 = vmatpush1.msra.mxu0 0.0
        %5054 = vmatprep.subr.mxu0 0.0
        %5055 = vmatpush1.msra.mxu0 0.0
        %5056 = vmatprep.subr.mxu0 0.0
        %5057 = vmatpush1.msra.mxu0 0.0
        %5058 = vmatprep.subr.mxu0 0.0
        %5059 = vmatpush1.msra.mxu0 0.0
        %5060 = vmatprep.subr.mxu0 0.0
        %5061 = vmatpush1.msra.mxu0 0.0
        %5062 = vmatprep.mubr.f32.mxu0 0.0
        %v5063 = vand.u32 %v3789, 4294901760
        %5064 = vmatmul.mubr.f32.gmra.mrb[0].mxu0 %v5063
        %v5065 = vpop.f32.mrb[0].mxu0
        %v5066 = vadd.f32 %v4977, %v5065
        %v5067 = vpop.f32.mrb[0].mxu0
        %5068 = vmatprep.mubr.f32.mxu0 0.0
        %v5069 = vand.u32 %v3792, 4294901760
        %5070 = vmatmul.mubr.f32.gmra.mrb[0].mxu0 %v5069
        %v5071 = vpop.f32.mrb[0].mxu0
        %v5072 = vadd.f32 %v4983, %v5071
        %v5073 = vpop.f32.mrb[0].mxu0
        %5074 = vdwg.mxu0
        %v5075 = vtanh.pop %v4417
        %v5076 = vtanh.pop %v4423
        %v5077 = vmul.f32 %v5066, 0.5
        %v5078 = vmul.f32 %v5072, 0.5
        %v5079 = vtanh.pop %v5077
        %v5080 = vtanh.pop %v5078
        %v5081 = vmul.f32 %v5079, 0.5
        %v5082 = vmul.f32 %v5080, 0.5
        %v5083 = vadd.f32 %v5081, 0.5
        %v5084 = vadd.f32 %v5082, 0.5
        %v5085 = vmul.f32 %v5075, %v5083
        %v5086 = vmul.f32 %v5076, %v5084
        %s5087 = smul.u32 %s3769, 32
        %s5088 = scalar_lea.vmem %s10, %s5087
        %v5089 = vld [vmem:[%s5088] sm:$0xff]
        %v5090 = vld [vmem:[%s5088 + $0x8] sm:$0xff]
        %v5091 = vld [vmem:[%s5088 + $0x10] sm:$0xff]
        %v5092 = vld [vmem:[%s5088 + $0x18] sm:$0xff]
        %v5093 = vlaneseq
        %v5094 = vshrl.u32 %v5093, 7
        %v5095 = vsub.s32 4, %v5094
        %v5096 = vrot.slane %v560, %v5095
        %v5098 = vsel %vm1319, %v5085, 0
        %v5101 = vsel %vm1319, %v5086, 0
        %5103 = vmatprep.subr.mxu0 0.0
        %v5104 = vand.u32 %v5089, 4294901760
        %5105 = vmatpush1.msra.mxu0 %v5104
        %5106 = vmatprep.subr.mxu0 0.0
        %v5107 = vand.u32 %v5090, 4294901760
        %5108 = vmatpush1.msra.mxu0 %v5107
        %5109 = vmatprep.subr.mxu0 0.0
        %v5110 = vand.u32 %v5091, 4294901760
        %5111 = vmatpush1.msra.mxu0 %v5110
        %5112 = vmatprep.subr.mxu0 0.0
        %v5113 = vand.u32 %v5092, 4294901760
        %5114 = vmatpush1.msra.mxu0 %v5113
        %5115 = vmatprep.subr.mxu0 0.0
        %5116 = vmatpush1.msra.mxu0 0.0
        %5117 = vmatprep.subr.mxu0 0.0
        %5118 = vmatpush1.msra.mxu0 0.0
        %5119 = vmatprep.subr.mxu0 0.0
        %5120 = vmatpush1.msra.mxu0 0.0
        %5121 = vmatprep.subr.mxu0 0.0
        %5122 = vmatpush1.msra.mxu0 0.0
        %5123 = vmatprep.subr.mxu0 0.0
        %5124 = vmatpush1.msra.mxu0 0.0
        %5125 = vmatprep.subr.mxu0 0.0
        %5126 = vmatpush1.msra.mxu0 0.0
        %5127 = vmatprep.subr.mxu0 0.0
        %5128 = vmatpush1.msra.mxu0 0.0
        %5129 = vmatprep.subr.mxu0 0.0
        %5130 = vmatpush1.msra.mxu0 0.0
        %5131 = vmatprep.subr.mxu0 0.0
        %5132 = vmatpush1.msra.mxu0 0.0
        %5133 = vmatprep.subr.mxu0 0.0
        %5134 = vmatpush1.msra.mxu0 0.0
        %5135 = vmatprep.subr.mxu0 0.0
        %5136 = vmatpush1.msra.mxu0 0.0
        %5137 = vmatprep.subr.mxu0 0.0
        %5138 = vmatpush1.msra.mxu0 0.0
        %5139 = vmatprep.subr.mxu0 0.0
        %5140 = vmatpush1.msra.mxu0 0.0
        %5141 = vmatprep.subr.mxu0 0.0
        %5142 = vmatpush1.msra.mxu0 0.0
        %5143 = vmatprep.subr.mxu0 0.0
        %5144 = vmatpush1.msra.mxu0 0.0
        %5145 = vmatprep.subr.mxu0 0.0
        %5146 = vmatpush1.msra.mxu0 0.0
        %5147 = vmatprep.subr.mxu0 0.0
        %5148 = vmatpush1.msra.mxu0 0.0
        %5149 = vmatprep.subr.mxu0 0.0
        %5150 = vmatpush1.msra.mxu0 0.0
        %5151 = vmatprep.subr.mxu0 0.0
        %5152 = vmatpush1.msra.mxu0 0.0
        %5153 = vmatprep.subr.mxu0 0.0
        %5154 = vmatpush1.msra.mxu0 0.0
        %5155 = vmatprep.subr.mxu0 0.0
        %5156 = vmatpush1.msra.mxu0 0.0
        %5157 = vmatprep.subr.mxu0 0.0
        %5158 = vmatpush1.msra.mxu0 0.0
        %5159 = vmatprep.subr.mxu0 0.0
        %5160 = vmatpush1.msra.mxu0 0.0
        %5161 = vmatprep.subr.mxu0 0.0
        %5162 = vmatpush1.msra.mxu0 0.0
        %5163 = vmatprep.subr.mxu0 0.0
        %5164 = vmatpush1.msra.mxu0 0.0
        %5165 = vmatprep.subr.mxu0 0.0
        %5166 = vmatpush1.msra.mxu0 0.0
        %5167 = vmatprep.subr.mxu0 0.0
        %5168 = vmatpush1.msra.mxu0 0.0
        %5169 = vmatprep.subr.mxu0 0.0
        %5170 = vmatpush1.msra.mxu0 0.0
        %5171 = vmatprep.mubr.f32.mxu0 0.0
        %v5172 = vand.u32 %v5098, 4294901760
        %v5173 = vsub.f32 %v5098, %v5172
        %v5174 = vand.u32 %v5173, 4294901760
        %v5175 = vsub.f32 %v5173, %v5174
        %v5176 = vand.u32 %v5175, 4294901760
        %5177 = vmatmul.mubr.f32.gmra.mrb[0].mxu0 %v5176
        %v5178 = vpop.f32.mrb[0].mxu0
        %v5179 = vadd.f32 %v5096, %v5178
        %v5180 = vpop.f32.mrb[0].mxu0
        %5181 = vmatprep.mubr.f32.mxu0 0.0
        %v5182 = vand.u32 %v5101, 4294901760
        %v5183 = vsub.f32 %v5101, %v5182
        %v5184 = vand.u32 %v5183, 4294901760
        %v5185 = vsub.f32 %v5183, %v5184
        %v5186 = vand.u32 %v5185, 4294901760
        %5187 = vmatmul.mubr.f32.gmra.mrb[0].mxu0 %v5186
        %v5188 = vpop.f32.mrb[0].mxu0
        %v5189 = vadd.f32 %v5096, %v5188
        %v5190 = vpop.f32.mrb[0].mxu0
        %5191 = vdwg.mxu0
        %5192 = vmatprep.subr.mxu0 0.0
        %v5193 = vand.u32 %v5089, 4294901760
        %v5194 = vsub.f32 %v5089, %v5193
        %v5195 = vand.u32 %v5194, 4294901760
        %v5196 = vsub.f32 %v5194, %v5195
        %v5197 = vand.u32 %v5196, 4294901760
        %5198 = vmatpush1.msra.mxu0 %v5197
        %5199 = vmatprep.subr.mxu0 0.0
        %v5200 = vand.u32 %v5090, 4294901760
        %v5201 = vsub.f32 %v5090, %v5200
        %v5202 = vand.u32 %v5201, 4294901760
        %v5203 = vsub.f32 %v5201, %v5202
        %v5204 = vand.u32 %v5203, 4294901760
        %5205 = vmatpush1.msra.mxu0 %v5204
        %5206 = vmatprep.subr.mxu0 0.0
        %v5207 = vand.u32 %v5091, 4294901760
        %v5208 = vsub.f32 %v5091, %v5207
        %v5209 = vand.u32 %v5208, 4294901760
        %v5210 = vsub.f32 %v5208, %v5209
        %v5211 = vand.u32 %v5210, 4294901760
        %5212 = vmatpush1.msra.mxu0 %v5211
        %5213 = vmatprep.subr.mxu0 0.0
        %v5214 = vand.u32 %v5092, 4294901760
        %v5215 = vsub.f32 %v5092, %v5214
        %v5216 = vand.u32 %v5215, 4294901760
        %v5217 = vsub.f32 %v5215, %v5216
        %v5218 = vand.u32 %v5217, 4294901760
        %5219 = vmatpush1.msra.mxu0 %v5218
        %5220 = vmatprep.subr.mxu0 0.0
        %5221 = vmatpush1.msra.mxu0 0.0
        %5222 = vmatprep.subr.mxu0 0.0
        %5223 = vmatpush1.msra.mxu0 0.0
        %5224 = vmatprep.subr.mxu0 0.0
        %5225 = vmatpush1.msra.mxu0 0.0
        %5226 = vmatprep.subr.mxu0 0.0
        %5227 = vmatpush1.msra.mxu0 0.0
        %5228 = vmatprep.subr.mxu0 0.0
        %5229 = vmatpush1.msra.mxu0 0.0
        %5230 = vmatprep.subr.mxu0 0.0
        %5231 = vmatpush1.msra.mxu0 0.0
        %5232 = vmatprep.subr.mxu0 0.0
        %5233 = vmatpush1.msra.mxu0 0.0
        %5234 = vmatprep.subr.mxu0 0.0
        %5235 = vmatpush1.msra.mxu0 0.0
        %5236 = vmatprep.subr.mxu0 0.0
        %5237 = vmatpush1.msra.mxu0 0.0
        %5238 = vmatprep.subr.mxu0 0.0
        %5239 = vmatpush1.msra.mxu0 0.0
        %5240 = vmatprep.subr.mxu0 0.0
        %5241 = vmatpush1.msra.mxu0 0.0
        %5242 = vmatprep.subr.mxu0 0.0
        %5243 = vmatpush1.msra.mxu0 0.0
        %5244 = vmatprep.subr.mxu0 0.0
        %5245 = vmatpush1.msra.mxu0 0.0
        %5246 = vmatprep.subr.mxu0 0.0
        %5247 = vmatpush1.msra.mxu0 0.0
        %5248 = vmatprep.subr.mxu0 0.0
        %5249 = vmatpush1.msra.mxu0 0.0
        %5250 = vmatprep.subr.mxu0 0.0
        %5251 = vmatpush1.msra.mxu0 0.0
        %5252 = vmatprep.subr.mxu0 0.0
        %5253 = vmatpush1.msra.mxu0 0.0
        %5254 = vmatprep.subr.mxu0 0.0
        %5255 = vmatpush1.msra.mxu0 0.0
        %5256 = vmatprep.subr.mxu0 0.0
        %5257 = vmatpush1.msra.mxu0 0.0
        %5258 = vmatprep.subr.mxu0 0.0
        %5259 = vmatpush1.msra.mxu0 0.0
        %5260 = vmatprep.subr.mxu0 0.0
        %5261 = vmatpush1.msra.mxu0 0.0
        %5262 = vmatprep.subr.mxu0 0.0
        %5263 = vmatpush1.msra.mxu0 0.0
        %5264 = vmatprep.subr.mxu0 0.0
        %5265 = vmatpush1.msra.mxu0 0.0
        %5266 = vmatprep.subr.mxu0 0.0
        %5267 = vmatpush1.msra.mxu0 0.0
        %5268 = vmatprep.subr.mxu0 0.0
        %5269 = vmatpush1.msra.mxu0 0.0
        %5270 = vmatprep.subr.mxu0 0.0
        %5271 = vmatpush1.msra.mxu0 0.0
        %5272 = vmatprep.subr.mxu0 0.0
        %5273 = vmatpush1.msra.mxu0 0.0
        %5274 = vmatprep.subr.mxu0 0.0
        %5275 = vmatpush1.msra.mxu0 0.0
        %5276 = vmatprep.mubr.f32.mxu0 0.0
        %v5277 = vand.u32 %v5098, 4294901760
        %5278 = vmatmul.mubr.f32.gmra.mrb[0].mxu0 %v5277
        %v5279 = vpop.f32.mrb[0].mxu0
        %v5280 = vadd.f32 %v5179, %v5279
        %v5281 = vpop.f32.mrb[0].mxu0
        %5282 = vmatprep.mubr.f32.mxu0 0.0
        %v5283 = vand.u32 %v5101, 4294901760
        %5284 = vmatmul.mubr.f32.gmra.mrb[0].mxu0 %v5283
        %v5285 = vpop.f32.mrb[0].mxu0
        %v5286 = vadd.f32 %v5189, %v5285
        %v5287 = vpop.f32.mrb[0].mxu0
        %5288 = vdwg.mxu0
        %5289 = vmatprep.subr.mxu0 0.0
        %v5290 = vand.u32 %v5089, 4294901760
        %v5291 = vsub.f32 %v5089, %v5290
        %5292 = vmatpush1.msra.mxu0 %v5291
        %5293 = vmatprep.subr.mxu0 0.0
        %v5294 = vand.u32 %v5090, 4294901760
        %v5295 = vsub.f32 %v5090, %v5294
        %5296 = vmatpush1.msra.mxu0 %v5295
        %5297 = vmatprep.subr.mxu0 0.0
        %v5298 = vand.u32 %v5091, 4294901760
        %v5299 = vsub.f32 %v5091, %v5298
        %5300 = vmatpush1.msra.mxu0 %v5299
        %5301 = vmatprep.subr.mxu0 0.0
        %v5302 = vand.u32 %v5092, 4294901760
        %v5303 = vsub.f32 %v5092, %v5302
        %5304 = vmatpush1.msra.mxu0 %v5303
        %5305 = vmatprep.subr.mxu0 0.0
        %5306 = vmatpush1.msra.mxu0 0.0
        %5307 = vmatprep.subr.mxu0 0.0
        %5308 = vmatpush1.msra.mxu0 0.0
        %5309 = vmatprep.subr.mxu0 0.0
        %5310 = vmatpush1.msra.mxu0 0.0
        %5311 = vmatprep.subr.mxu0 0.0
        %5312 = vmatpush1.msra.mxu0 0.0
        %5313 = vmatprep.subr.mxu0 0.0
        %5314 = vmatpush1.msra.mxu0 0.0
        %5315 = vmatprep.subr.mxu0 0.0
        %5316 = vmatpush1.msra.mxu0 0.0
        %5317 = vmatprep.subr.mxu0 0.0
        %5318 = vmatpush1.msra.mxu0 0.0
        %5319 = vmatprep.subr.mxu0 0.0
        %5320 = vmatpush1.msra.mxu0 0.0
        %5321 = vmatprep.subr.mxu0 0.0
        %5322 = vmatpush1.msra.mxu0 0.0
        %5323 = vmatprep.subr.mxu0 0.0
        %5324 = vmatpush1.msra.mxu0 0.0
        %5325 = vmatprep.subr.mxu0 0.0
        %5326 = vmatpush1.msra.mxu0 0.0
        %5327 = vmatprep.subr.mxu0 0.0
        %5328 = vmatpush1.msra.mxu0 0.0
        %5329 = vmatprep.subr.mxu0 0.0
        %5330 = vmatpush1.msra.mxu0 0.0
        %5331 = vmatprep.subr.mxu0 0.0
        %5332 = vmatpush1.msra.mxu0 0.0
        %5333 = vmatprep.subr.mxu0 0.0
        %5334 = vmatpush1.msra.mxu0 0.0
        %5335 = vmatprep.subr.mxu0 0.0
        %5336 = vmatpush1.msra.mxu0 0.0
        %5337 = vmatprep.subr.mxu0 0.0
        %5338 = vmatpush1.msra.mxu0 0.0
        %5339 = vmatprep.subr.mxu0 0.0
        %5340 = vmatpush1.msra.mxu0 0.0
        %5341 = vmatprep.subr.mxu0 0.0
        %5342 = vmatpush1.msra.mxu0 0.0
        %5343 = vmatprep.subr.mxu0 0.0
        %5344 = vmatpush1.msra.mxu0 0.0
        %5345 = vmatprep.subr.mxu0 0.0
        %5346 = vmatpush1.msra.mxu0 0.0
        %5347 = vmatprep.subr.mxu0 0.0
        %5348 = vmatpush1.msra.mxu0 0.0
        %5349 = vmatprep.subr.mxu0 0.0
        %5350 = vmatpush1.msra.mxu0 0.0
        %5351 = vmatprep.subr.mxu0 0.0
        %5352 = vmatpush1.msra.mxu0 0.0
        %5353 = vmatprep.subr.mxu0 0.0
        %5354 = vmatpush1.msra.mxu0 0.0
        %5355 = vmatprep.subr.mxu0 0.0
        %5356 = vmatpush1.msra.mxu0 0.0
        %5357 = vmatprep.subr.mxu0 0.0
        %5358 = vmatpush1.msra.mxu0 0.0
        %5359 = vmatprep.subr.mxu0 0.0
        %5360 = vmatpush1.msra.mxu0 0.0
        %5361 = vmatprep.mubr.f32.mxu0 0.0
        %v5362 = vand.u32 %v5098, 4294901760
        %v5363 = vsub.f32 %v5098, %v5362
        %5364 = vmatmul.mubr.f32.gmra.mrb[0].mxu0 %v5363
        %v5365 = vpop.f32.mrb[0].mxu0
        %v5366 = vadd.f32 %v5280, %v5365
        %v5367 = vpop.f32.mrb[0].mxu0
        %5368 = vmatprep.mubr.f32.mxu0 0.0
        %v5369 = vand.u32 %v5101, 4294901760
        %v5370 = vsub.f32 %v5101, %v5369
        %5371 = vmatmul.mubr.f32.gmra.mrb[0].mxu0 %v5370
        %v5372 = vpop.f32.mrb[0].mxu0
        %v5373 = vadd.f32 %v5286, %v5372
        %v5374 = vpop.f32.mrb[0].mxu0
        %5375 = vdwg.mxu0
        %5376 = vmatprep.subr.mxu0 0.0
        %v5377 = vand.u32 %v5089, 4294901760
        %5378 = vmatpush1.msra.mxu0 %v5377
        %5379 = vmatprep.subr.mxu0 0.0
        %v5380 = vand.u32 %v5090, 4294901760
        %5381 = vmatpush1.msra.mxu0 %v5380
        %5382 = vmatprep.subr.mxu0 0.0
        %v5383 = vand.u32 %v5091, 4294901760
        %5384 = vmatpush1.msra.mxu0 %v5383
        %5385 = vmatprep.subr.mxu0 0.0
        %v5386 = vand.u32 %v5092, 4294901760
        %5387 = vmatpush1.msra.mxu0 %v5386
        %5388 = vmatprep.subr.mxu0 0.0
        %5389 = vmatpush1.msra.mxu0 0.0
        %5390 = vmatprep.subr.mxu0 0.0
        %5391 = vmatpush1.msra.mxu0 0.0
        %5392 = vmatprep.subr.mxu0 0.0
        %5393 = vmatpush1.msra.mxu0 0.0
        %5394 = vmatprep.subr.mxu0 0.0
        %5395 = vmatpush1.msra.mxu0 0.0
        %5396 = vmatprep.subr.mxu0 0.0
        %5397 = vmatpush1.msra.mxu0 0.0
        %5398 = vmatprep.subr.mxu0 0.0
        %5399 = vmatpush1.msra.mxu0 0.0
        %5400 = vmatprep.subr.mxu0 0.0
        %5401 = vmatpush1.msra.mxu0 0.0
        %5402 = vmatprep.subr.mxu0 0.0
        %5403 = vmatpush1.msra.mxu0 0.0
        %5404 = vmatprep.subr.mxu0 0.0
        %5405 = vmatpush1.msra.mxu0 0.0
        %5406 = vmatprep.subr.mxu0 0.0
        %5407 = vmatpush1.msra.mxu0 0.0
        %5408 = vmatprep.subr.mxu0 0.0
        %5409 = vmatpush1.msra.mxu0 0.0
        %5410 = vmatprep.subr.mxu0 0.0
        %5411 = vmatpush1.msra.mxu0 0.0
        %5412 = vmatprep.subr.mxu0 0.0
        %5413 = vmatpush1.msra.mxu0 0.0
        %5414 = vmatprep.subr.mxu0 0.0
        %5415 = vmatpush1.msra.mxu0 0.0
        %5416 = vmatprep.subr.mxu0 0.0
        %5417 = vmatpush1.msra.mxu0 0.0
        %5418 = vmatprep.subr.mxu0 0.0
        %5419 = vmatpush1.msra.mxu0 0.0
        %5420 = vmatprep.subr.mxu0 0.0
        %5421 = vmatpush1.msra.mxu0 0.0
        %5422 = vmatprep.subr.mxu0 0.0
        %5423 = vmatpush1.msra.mxu0 0.0
        %5424 = vmatprep.subr.mxu0 0.0
        %5425 = vmatpush1.msra.mxu0 0.0
        %5426 = vmatprep.subr.mxu0 0.0
        %5427 = vmatpush1.msra.mxu0 0.0
        %5428 = vmatprep.subr.mxu0 0.0
        %5429 = vmatpush1.msra.mxu0 0.0
        %5430 = vmatprep.subr.mxu0 0.0
        %5431 = vmatpush1.msra.mxu0 0.0
        %5432 = vmatprep.subr.mxu0 0.0
        %5433 = vmatpush1.msra.mxu0 0.0
        %5434 = vmatprep.subr.mxu0 0.0
        %5435 = vmatpush1.msra.mxu0 0.0
        %5436 = vmatprep.subr.mxu0 0.0
        %5437 = vmatpush1.msra.mxu0 0.0
        %5438 = vmatprep.subr.mxu0 0.0
        %5439 = vmatpush1.msra.mxu0 0.0
        %5440 = vmatprep.subr.mxu0 0.0
        %5441 = vmatpush1.msra.mxu0 0.0
        %5442 = vmatprep.subr.mxu0 0.0
        %5443 = vmatpush1.msra.mxu0 0.0
        %5444 = vmatprep.mubr.f32.mxu0 0.0
        %v5445 = vand.u32 %v5098, 4294901760
        %v5446 = vsub.f32 %v5098, %v5445
        %v5447 = vand.u32 %v5446, 4294901760
        %5448 = vmatmul.mubr.f32.gmra.mrb[0].mxu0 %v5447
        %v5449 = vpop.f32.mrb[0].mxu0
        %v5450 = vadd.f32 %v5366, %v5449
        %v5451 = vpop.f32.mrb[0].mxu0
        %5452 = vmatprep.mubr.f32.mxu0 0.0
        %v5453 = vand.u32 %v5101, 4294901760
        %v5454 = vsub.f32 %v5101, %v5453
        %v5455 = vand.u32 %v5454, 4294901760
        %5456 = vmatmul.mubr.f32.gmra.mrb[0].mxu0 %v5455
        %v5457 = vpop.f32.mrb[0].mxu0
        %v5458 = vadd.f32 %v5373, %v5457
        %v5459 = vpop.f32.mrb[0].mxu0
        %5460 = vdwg.mxu0
        %5461 = vmatprep.subr.mxu0 0.0
        %v5462 = vand.u32 %v5089, 4294901760
        %v5463 = vsub.f32 %v5089, %v5462
        %v5464 = vand.u32 %v5463, 4294901760
        %5465 = vmatpush1.msra.mxu0 %v5464
        %5466 = vmatprep.subr.mxu0 0.0
        %v5467 = vand.u32 %v5090, 4294901760
        %v5468 = vsub.f32 %v5090, %v5467
        %v5469 = vand.u32 %v5468, 4294901760
        %5470 = vmatpush1.msra.mxu0 %v5469
        %5471 = vmatprep.subr.mxu0 0.0
        %v5472 = vand.u32 %v5091, 4294901760
        %v5473 = vsub.f32 %v5091, %v5472
        %v5474 = vand.u32 %v5473, 4294901760
        %5475 = vmatpush1.msra.mxu0 %v5474
        %5476 = vmatprep.subr.mxu0 0.0
        %v5477 = vand.u32 %v5092, 4294901760
        %v5478 = vsub.f32 %v5092, %v5477
        %v5479 = vand.u32 %v5478, 4294901760
        %5480 = vmatpush1.msra.mxu0 %v5479
        %5481 = vmatprep.subr.mxu0 0.0
        %5482 = vmatpush1.msra.mxu0 0.0
        %5483 = vmatprep.subr.mxu0 0.0
        %5484 = vmatpush1.msra.mxu0 0.0
        %5485 = vmatprep.subr.mxu0 0.0
        %5486 = vmatpush1.msra.mxu0 0.0
        %5487 = vmatprep.subr.mxu0 0.0
        %5488 = vmatpush1.msra.mxu0 0.0
        %5489 = vmatprep.subr.mxu0 0.0
        %5490 = vmatpush1.msra.mxu0 0.0
        %5491 = vmatprep.subr.mxu0 0.0
        %5492 = vmatpush1.msra.mxu0 0.0
        %5493 = vmatprep.subr.mxu0 0.0
        %5494 = vmatpush1.msra.mxu0 0.0
        %5495 = vmatprep.subr.mxu0 0.0
        %5496 = vmatpush1.msra.mxu0 0.0
        %5497 = vmatprep.subr.mxu0 0.0
        %5498 = vmatpush1.msra.mxu0 0.0
        %5499 = vmatprep.subr.mxu0 0.0
        %5500 = vmatpush1.msra.mxu0 0.0
        %5501 = vmatprep.subr.mxu0 0.0
        %5502 = vmatpush1.msra.mxu0 0.0
        %5503 = vmatprep.subr.mxu0 0.0
        %5504 = vmatpush1.msra.mxu0 0.0
        %5505 = vmatprep.subr.mxu0 0.0
        %5506 = vmatpush1.msra.mxu0 0.0
        %5507 = vmatprep.subr.mxu0 0.0
        %5508 = vmatpush1.msra.mxu0 0.0
        %5509 = vmatprep.subr.mxu0 0.0
        %5510 = vmatpush1.msra.mxu0 0.0
        %5511 = vmatprep.subr.mxu0 0.0
        %5512 = vmatpush1.msra.mxu0 0.0
        %5513 = vmatprep.subr.mxu0 0.0
        %5514 = vmatpush1.msra.mxu0 0.0
        %5515 = vmatprep.subr.mxu0 0.0
        %5516 = vmatpush1.msra.mxu0 0.0
        %5517 = vmatprep.subr.mxu0 0.0
        %5518 = vmatpush1.msra.mxu0 0.0
        %5519 = vmatprep.subr.mxu0 0.0
        %5520 = vmatpush1.msra.mxu0 0.0
        %5521 = vmatprep.subr.mxu0 0.0
        %5522 = vmatpush1.msra.mxu0 0.0
        %5523 = vmatprep.subr.mxu0 0.0
        %5524 = vmatpush1.msra.mxu0 0.0
        %5525 = vmatprep.subr.mxu0 0.0
        %5526 = vmatpush1.msra.mxu0 0.0
        %5527 = vmatprep.subr.mxu0 0.0
        %5528 = vmatpush1.msra.mxu0 0.0
        %5529 = vmatprep.subr.mxu0 0.0
        %5530 = vmatpush1.msra.mxu0 0.0
        %5531 = vmatprep.subr.mxu0 0.0
        %5532 = vmatpush1.msra.mxu0 0.0
        %5533 = vmatprep.subr.mxu0 0.0
        %5534 = vmatpush1.msra.mxu0 0.0
        %5535 = vmatprep.subr.mxu0 0.0
        %5536 = vmatpush1.msra.mxu0 0.0
        %5537 = vmatprep.mubr.f32.mxu0 0.0
        %v5538 = vand.u32 %v5098, 4294901760
        %5539 = vmatmul.mubr.f32.gmra.mrb[0].mxu0 %v5538
        %v5540 = vpop.f32.mrb[0].mxu0
        %v5541 = vadd.f32 %v5450, %v5540
        %v5542 = vpop.f32.mrb[0].mxu0
        %5543 = vmatprep.mubr.f32.mxu0 0.0
        %v5544 = vand.u32 %v5101, 4294901760
        %5545 = vmatmul.mubr.f32.gmra.mrb[0].mxu0 %v5544
        %v5546 = vpop.f32.mrb[0].mxu0
        %v5547 = vadd.f32 %v5458, %v5546
        %v5548 = vpop.f32.mrb[0].mxu0
        %5549 = vdwg.mxu0
        %5550 = vmatprep.subr.mxu0 0.0
        %v5551 = vand.u32 %v5089, 4294901760
        %5552 = vmatpush1.msra.mxu0 %v5551
        %5553 = vmatprep.subr.mxu0 0.0
        %v5554 = vand.u32 %v5090, 4294901760
        %5555 = vmatpush1.msra.mxu0 %v5554
        %5556 = vmatprep.subr.mxu0 0.0
        %v5557 = vand.u32 %v5091, 4294901760
        %5558 = vmatpush1.msra.mxu0 %v5557
        %5559 = vmatprep.subr.mxu0 0.0
        %v5560 = vand.u32 %v5092, 4294901760
        %5561 = vmatpush1.msra.mxu0 %v5560
        %5562 = vmatprep.subr.mxu0 0.0
        %5563 = vmatpush1.msra.mxu0 0.0
        %5564 = vmatprep.subr.mxu0 0.0
        %5565 = vmatpush1.msra.mxu0 0.0
        %5566 = vmatprep.subr.mxu0 0.0
        %5567 = vmatpush1.msra.mxu0 0.0
        %5568 = vmatprep.subr.mxu0 0.0
        %5569 = vmatpush1.msra.mxu0 0.0
        %5570 = vmatprep.subr.mxu0 0.0
        %5571 = vmatpush1.msra.mxu0 0.0
        %5572 = vmatprep.subr.mxu0 0.0
        %5573 = vmatpush1.msra.mxu0 0.0
        %5574 = vmatprep.subr.mxu0 0.0
        %5575 = vmatpush1.msra.mxu0 0.0
        %5576 = vmatprep.subr.mxu0 0.0
        %5577 = vmatpush1.msra.mxu0 0.0
        %5578 = vmatprep.subr.mxu0 0.0
        %5579 = vmatpush1.msra.mxu0 0.0
        %5580 = vmatprep.subr.mxu0 0.0
        %5581 = vmatpush1.msra.mxu0 0.0
        %5582 = vmatprep.subr.mxu0 0.0
        %5583 = vmatpush1.msra.mxu0 0.0
        %5584 = vmatprep.subr.mxu0 0.0
        %5585 = vmatpush1.msra.mxu0 0.0
        %5586 = vmatprep.subr.mxu0 0.0
        %5587 = vmatpush1.msra.mxu0 0.0
        %5588 = vmatprep.subr.mxu0 0.0
        %5589 = vmatpush1.msra.mxu0 0.0
        %5590 = vmatprep.subr.mxu0 0.0
        %5591 = vmatpush1.msra.mxu0 0.0
        %5592 = vmatprep.subr.mxu0 0.0
        %5593 = vmatpush1.msra.mxu0 0.0
        %5594 = vmatprep.subr.mxu0 0.0
        %5595 = vmatpush1.msra.mxu0 0.0
        %5596 = vmatprep.subr.mxu0 0.0
        %5597 = vmatpush1.msra.mxu0 0.0
        %5598 = vmatprep.subr.mxu0 0.0
        %5599 = vmatpush1.msra.mxu0 0.0
        %5600 = vmatprep.subr.mxu0 0.0
        %5601 = vmatpush1.msra.mxu0 0.0
        %5602 = vmatprep.subr.mxu0 0.0
        %5603 = vmatpush1.msra.mxu0 0.0
        %5604 = vmatprep.subr.mxu0 0.0
        %5605 = vmatpush1.msra.mxu0 0.0
        %5606 = vmatprep.subr.mxu0 0.0
        %5607 = vmatpush1.msra.mxu0 0.0
        %5608 = vmatprep.subr.mxu0 0.0
        %5609 = vmatpush1.msra.mxu0 0.0
        %5610 = vmatprep.subr.mxu0 0.0
        %5611 = vmatpush1.msra.mxu0 0.0
        %5612 = vmatprep.subr.mxu0 0.0
        %5613 = vmatpush1.msra.mxu0 0.0
        %5614 = vmatprep.subr.mxu0 0.0
        %5615 = vmatpush1.msra.mxu0 0.0
        %5616 = vmatprep.subr.mxu0 0.0
        %5617 = vmatpush1.msra.mxu0 0.0
        %5618 = vmatprep.mubr.f32.mxu0 0.0
        %v5619 = vand.u32 %v5098, 4294901760
        %5620 = vmatmul.mubr.f32.gmra.mrb[0].mxu0 %v5619
        %v5621 = vpop.f32.mrb[0].mxu0
        %v5622 = vadd.f32 %v5541, %v5621
        %v5623 = vpop.f32.mrb[0].mxu0
        %5624 = vmatprep.mubr.f32.mxu0 0.0
        %v5625 = vand.u32 %v5101, 4294901760
        %5626 = vmatmul.mubr.f32.gmra.mrb[0].mxu0 %v5625
        %v5627 = vpop.f32.mrb[0].mxu0
        %v5628 = vadd.f32 %v5547, %v5627
        %v5629 = vpop.f32.mrb[0].mxu0
        %5630 = vdwg.mxu0
        %v5631 = vadd.f32 %v3188, %v5622
        %v5632 = vadd.f32 %v3189, %v5628
        %s5633 = smul.u32 %s36, 32
        %s5634 = scalar_lea.vmem %s11, %s5633
        %v5635 = vld [vmem:[%s5634] sm:$0xff]
        %v5636 = vld [vmem:[%s5634 + $0x8] sm:$0xff]
        %v5637 = vld [vmem:[%s5634 + $0x10] sm:$0xff]
        %v5638 = vld [vmem:[%s5634 + $0x18] sm:$0xff]
        %s5639 = scalar_lea.vmem %s5, %s36
        %v5640 = vld [vmem:[%s5639] sm:$0x1]
        %v5642 = vlaneseq
        %v5643 = vshrl.u32 %v5642, 7
        %v5644 = vsub.s32 0, %v5643
        %v5645 = vrot.slane %v5640, %v5644
        %v5648 = vsel %vm1319, %v5631, 0
        %v5651 = vsel %vm1319, %v5632, 0
        %5653 = vmatprep.subr.mxu0 0.0
        %v5654 = vand.u32 %v5635, 4294901760
        %5655 = vmatpush1.msra.mxu0 %v5654
        %5656 = vmatprep.subr.mxu0 0.0
        %v5657 = vand.u32 %v5636, 4294901760
        %5658 = vmatpush1.msra.mxu0 %v5657
        %5659 = vmatprep.subr.mxu0 0.0
        %v5660 = vand.u32 %v5637, 4294901760
        %5661 = vmatpush1.msra.mxu0 %v5660
        %5662 = vmatprep.subr.mxu0 0.0
        %v5663 = vand.u32 %v5638, 4294901760
        %5664 = vmatpush1.msra.mxu0 %v5663
        %5665 = vmatprep.subr.mxu0 0.0
        %5666 = vmatpush1.msra.mxu0 0.0
        %5667 = vmatprep.subr.mxu0 0.0
        %5668 = vmatpush1.msra.mxu0 0.0
        %5669 = vmatprep.subr.mxu0 0.0
        %5670 = vmatpush1.msra.mxu0 0.0
        %5671 = vmatprep.subr.mxu0 0.0
        %5672 = vmatpush1.msra.mxu0 0.0
        %5673 = vmatprep.subr.mxu0 0.0
        %5674 = vmatpush1.msra.mxu0 0.0
        %5675 = vmatprep.subr.mxu0 0.0
        %5676 = vmatpush1.msra.mxu0 0.0
        %5677 = vmatprep.subr.mxu0 0.0
        %5678 = vmatpush1.msra.mxu0 0.0
        %5679 = vmatprep.subr.mxu0 0.0
        %5680 = vmatpush1.msra.mxu0 0.0
        %5681 = vmatprep.subr.mxu0 0.0
        %5682 = vmatpush1.msra.mxu0 0.0
        %5683 = vmatprep.subr.mxu0 0.0
        %5684 = vmatpush1.msra.mxu0 0.0
        %5685 = vmatprep.subr.mxu0 0.0
        %5686 = vmatpush1.msra.mxu0 0.0
        %5687 = vmatprep.subr.mxu0 0.0
        %5688 = vmatpush1.msra.mxu0 0.0
        %5689 = vmatprep.subr.mxu0 0.0
        %5690 = vmatpush1.msra.mxu0 0.0
        %5691 = vmatprep.subr.mxu0 0.0
        %5692 = vmatpush1.msra.mxu0 0.0
        %5693 = vmatprep.subr.mxu0 0.0
        %5694 = vmatpush1.msra.mxu0 0.0
        %5695 = vmatprep.subr.mxu0 0.0
        %5696 = vmatpush1.msra.mxu0 0.0
        %5697 = vmatprep.subr.mxu0 0.0
        %5698 = vmatpush1.msra.mxu0 0.0
        %5699 = vmatprep.subr.mxu0 0.0
        %5700 = vmatpush1.msra.mxu0 0.0
        %5701 = vmatprep.subr.mxu0 0.0
        %5702 = vmatpush1.msra.mxu0 0.0
        %5703 = vmatprep.subr.mxu0 0.0
        %5704 = vmatpush1.msra.mxu0 0.0
        %5705 = vmatprep.subr.mxu0 0.0
        %5706 = vmatpush1.msra.mxu0 0.0
        %5707 = vmatprep.subr.mxu0 0.0
        %5708 = vmatpush1.msra.mxu0 0.0
        %5709 = vmatprep.subr.mxu0 0.0
        %5710 = vmatpush1.msra.mxu0 0.0
        %5711 = vmatprep.subr.mxu0 0.0
        %5712 = vmatpush1.msra.mxu0 0.0
        %5713 = vmatprep.subr.mxu0 0.0
        %5714 = vmatpush1.msra.mxu0 0.0
        %5715 = vmatprep.subr.mxu0 0.0
        %5716 = vmatpush1.msra.mxu0 0.0
        %5717 = vmatprep.subr.mxu0 0.0
        %5718 = vmatpush1.msra.mxu0 0.0
        %5719 = vmatprep.subr.mxu0 0.0
        %5720 = vmatpush1.msra.mxu0 0.0
        %5721 = vmatprep.mubr.f32.mxu0 0.0
        %v5722 = vand.u32 %v5648, 4294901760
        %v5723 = vsub.f32 %v5648, %v5722
        %v5724 = vand.u32 %v5723, 4294901760
        %v5725 = vsub.f32 %v5723, %v5724
        %v5726 = vand.u32 %v5725, 4294901760
        %5727 = vmatmul.mubr.f32.gmra.mrb[0].mxu0 %v5726
        %v5728 = vpop.f32.mrb[0].mxu0
        %v5729 = vadd.f32 %v5645, %v5728
        %v5730 = vpop.f32.mrb[0].mxu0
        %5731 = vmatprep.mubr.f32.mxu0 0.0
        %v5732 = vand.u32 %v5651, 4294901760
        %v5733 = vsub.f32 %v5651, %v5732
        %v5734 = vand.u32 %v5733, 4294901760
        %v5735 = vsub.f32 %v5733, %v5734
        %v5736 = vand.u32 %v5735, 4294901760
        %5737 = vmatmul.mubr.f32.gmra.mrb[0].mxu0 %v5736
        %v5738 = vpop.f32.mrb[0].mxu0
        %v5739 = vadd.f32 %v5645, %v5738
        %v5740 = vpop.f32.mrb[0].mxu0
        %5741 = vdwg.mxu0
        %5742 = vmatprep.subr.mxu0 0.0
        %v5743 = vand.u32 %v5635, 4294901760
        %v5744 = vsub.f32 %v5635, %v5743
        %v5745 = vand.u32 %v5744, 4294901760
        %v5746 = vsub.f32 %v5744, %v5745
        %v5747 = vand.u32 %v5746, 4294901760
        %5748 = vmatpush1.msra.mxu0 %v5747
        %5749 = vmatprep.subr.mxu0 0.0
        %v5750 = vand.u32 %v5636, 4294901760
        %v5751 = vsub.f32 %v5636, %v5750
        %v5752 = vand.u32 %v5751, 4294901760
        %v5753 = vsub.f32 %v5751, %v5752
        %v5754 = vand.u32 %v5753, 4294901760
        %5755 = vmatpush1.msra.mxu0 %v5754
        %5756 = vmatprep.subr.mxu0 0.0
        %v5757 = vand.u32 %v5637, 4294901760
        %v5758 = vsub.f32 %v5637, %v5757
        %v5759 = vand.u32 %v5758, 4294901760
        %v5760 = vsub.f32 %v5758, %v5759
        %v5761 = vand.u32 %v5760, 4294901760
        %5762 = vmatpush1.msra.mxu0 %v5761
        %5763 = vmatprep.subr.mxu0 0.0
        %v5764 = vand.u32 %v5638, 4294901760
        %v5765 = vsub.f32 %v5638, %v5764
        %v5766 = vand.u32 %v5765, 4294901760
        %v5767 = vsub.f32 %v5765, %v5766
        %v5768 = vand.u32 %v5767, 4294901760
        %5769 = vmatpush1.msra.mxu0 %v5768
        %5770 = vmatprep.subr.mxu0 0.0
        %5771 = vmatpush1.msra.mxu0 0.0
        %5772 = vmatprep.subr.mxu0 0.0
        %5773 = vmatpush1.msra.mxu0 0.0
        %5774 = vmatprep.subr.mxu0 0.0
        %5775 = vmatpush1.msra.mxu0 0.0
        %5776 = vmatprep.subr.mxu0 0.0
        %5777 = vmatpush1.msra.mxu0 0.0
        %5778 = vmatprep.subr.mxu0 0.0
        %5779 = vmatpush1.msra.mxu0 0.0
        %5780 = vmatprep.subr.mxu0 0.0
        %5781 = vmatpush1.msra.mxu0 0.0
        %5782 = vmatprep.subr.mxu0 0.0
        %5783 = vmatpush1.msra.mxu0 0.0
        %5784 = vmatprep.subr.mxu0 0.0
        %5785 = vmatpush1.msra.mxu0 0.0
        %5786 = vmatprep.subr.mxu0 0.0
        %5787 = vmatpush1.msra.mxu0 0.0
        %5788 = vmatprep.subr.mxu0 0.0
        %5789 = vmatpush1.msra.mxu0 0.0
        %5790 = vmatprep.subr.mxu0 0.0
        %5791 = vmatpush1.msra.mxu0 0.0
        %5792 = vmatprep.subr.mxu0 0.0
        %5793 = vmatpush1.msra.mxu0 0.0
        %5794 = vmatprep.subr.mxu0 0.0
        %5795 = vmatpush1.msra.mxu0 0.0
        %5796 = vmatprep.subr.mxu0 0.0
        %5797 = vmatpush1.msra.mxu0 0.0
        %5798 = vmatprep.subr.mxu0 0.0
        %5799 = vmatpush1.msra.mxu0 0.0
        %5800 = vmatprep.subr.mxu0 0.0
        %5801 = vmatpush1.msra.mxu0 0.0
        %5802 = vmatprep.subr.mxu0 0.0
        %5803 = vmatpush1.msra.mxu0 0.0
        %5804 = vmatprep.subr.mxu0 0.0
        %5805 = vmatpush1.msra.mxu0 0.0
        %5806 = vmatprep.subr.mxu0 0.0
        %5807 = vmatpush1.msra.mxu0 0.0
        %5808 = vmatprep.subr.mxu0 0.0
        %5809 = vmatpush1.msra.mxu0 0.0
        %5810 = vmatprep.subr.mxu0 0.0
        %5811 = vmatpush1.msra.mxu0 0.0
        %5812 = vmatprep.subr.mxu0 0.0
        %5813 = vmatpush1.msra.mxu0 0.0
        %5814 = vmatprep.subr.mxu0 0.0
        %5815 = vmatpush1.msra.mxu0 0.0
        %5816 = vmatprep.subr.mxu0 0.0
        %5817 = vmatpush1.msra.mxu0 0.0
        %5818 = vmatprep.subr.mxu0 0.0
        %5819 = vmatpush1.msra.mxu0 0.0
        %5820 = vmatprep.subr.mxu0 0.0
        %5821 = vmatpush1.msra.mxu0 0.0
        %5822 = vmatprep.subr.mxu0 0.0
        %5823 = vmatpush1.msra.mxu0 0.0
        %5824 = vmatprep.subr.mxu0 0.0
        %5825 = vmatpush1.msra.mxu0 0.0
        %5826 = vmatprep.mubr.f32.mxu0 0.0
        %v5827 = vand.u32 %v5648, 4294901760
        %5828 = vmatmul.mubr.f32.gmra.mrb[0].mxu0 %v5827
        %v5829 = vpop.f32.mrb[0].mxu0
        %v5830 = vadd.f32 %v5729, %v5829
        %v5831 = vpop.f32.mrb[0].mxu0
        %5832 = vmatprep.mubr.f32.mxu0 0.0
        %v5833 = vand.u32 %v5651, 4294901760
        %5834 = vmatmul.mubr.f32.gmra.mrb[0].mxu0 %v5833
        %v5835 = vpop.f32.mrb[0].mxu0
        %v5836 = vadd.f32 %v5739, %v5835
        %v5837 = vpop.f32.mrb[0].mxu0
        %5838 = vdwg.mxu0
        %5839 = vmatprep.subr.mxu0 0.0
        %v5840 = vand.u32 %v5635, 4294901760
        %v5841 = vsub.f32 %v5635, %v5840
        %5842 = vmatpush1.msra.mxu0 %v5841
        %5843 = vmatprep.subr.mxu0 0.0
        %v5844 = vand.u32 %v5636, 4294901760
        %v5845 = vsub.f32 %v5636, %v5844
        %5846 = vmatpush1.msra.mxu0 %v5845
        %5847 = vmatprep.subr.mxu0 0.0
        %v5848 = vand.u32 %v5637, 4294901760
        %v5849 = vsub.f32 %v5637, %v5848
        %5850 = vmatpush1.msra.mxu0 %v5849
        %5851 = vmatprep.subr.mxu0 0.0
        %v5852 = vand.u32 %v5638, 4294901760
        %v5853 = vsub.f32 %v5638, %v5852
        %5854 = vmatpush1.msra.mxu0 %v5853
        %5855 = vmatprep.subr.mxu0 0.0
        %5856 = vmatpush1.msra.mxu0 0.0
        %5857 = vmatprep.subr.mxu0 0.0
        %5858 = vmatpush1.msra.mxu0 0.0
        %5859 = vmatprep.subr.mxu0 0.0
        %5860 = vmatpush1.msra.mxu0 0.0
        %5861 = vmatprep.subr.mxu0 0.0
        %5862 = vmatpush1.msra.mxu0 0.0
        %5863 = vmatprep.subr.mxu0 0.0
        %5864 = vmatpush1.msra.mxu0 0.0
        %5865 = vmatprep.subr.mxu0 0.0
        %5866 = vmatpush1.msra.mxu0 0.0
        %5867 = vmatprep.subr.mxu0 0.0
        %5868 = vmatpush1.msra.mxu0 0.0
        %5869 = vmatprep.subr.mxu0 0.0
        %5870 = vmatpush1.msra.mxu0 0.0
        %5871 = vmatprep.subr.mxu0 0.0
        %5872 = vmatpush1.msra.mxu0 0.0
        %5873 = vmatprep.subr.mxu0 0.0
        %5874 = vmatpush1.msra.mxu0 0.0
        %5875 = vmatprep.subr.mxu0 0.0
        %5876 = vmatpush1.msra.mxu0 0.0
        %5877 = vmatprep.subr.mxu0 0.0
        %5878 = vmatpush1.msra.mxu0 0.0
        %5879 = vmatprep.subr.mxu0 0.0
        %5880 = vmatpush1.msra.mxu0 0.0
        %5881 = vmatprep.subr.mxu0 0.0
        %5882 = vmatpush1.msra.mxu0 0.0
        %5883 = vmatprep.subr.mxu0 0.0
        %5884 = vmatpush1.msra.mxu0 0.0
        %5885 = vmatprep.subr.mxu0 0.0
        %5886 = vmatpush1.msra.mxu0 0.0
        %5887 = vmatprep.subr.mxu0 0.0
        %5888 = vmatpush1.msra.mxu0 0.0
        %5889 = vmatprep.subr.mxu0 0.0
        %5890 = vmatpush1.msra.mxu0 0.0
        %5891 = vmatprep.subr.mxu0 0.0
        %5892 = vmatpush1.msra.mxu0 0.0
        %5893 = vmatprep.subr.mxu0 0.0
        %5894 = vmatpush1.msra.mxu0 0.0
        %5895 = vmatprep.subr.mxu0 0.0
        %5896 = vmatpush1.msra.mxu0 0.0
        %5897 = vmatprep.subr.mxu0 0.0
        %5898 = vmatpush1.msra.mxu0 0.0
        %5899 = vmatprep.subr.mxu0 0.0
        %5900 = vmatpush1.msra.mxu0 0.0
        %5901 = vmatprep.subr.mxu0 0.0
        %5902 = vmatpush1.msra.mxu0 0.0
        %5903 = vmatprep.subr.mxu0 0.0
        %5904 = vmatpush1.msra.mxu0 0.0
        %5905 = vmatprep.subr.mxu0 0.0
        %5906 = vmatpush1.msra.mxu0 0.0
        %5907 = vmatprep.subr.mxu0 0.0
        %5908 = vmatpush1.msra.mxu0 0.0
        %5909 = vmatprep.subr.mxu0 0.0
        %5910 = vmatpush1.msra.mxu0 0.0
        %5911 = vmatprep.mubr.f32.mxu0 0.0
        %v5912 = vand.u32 %v5648, 4294901760
        %v5913 = vsub.f32 %v5648, %v5912
        %5914 = vmatmul.mubr.f32.gmra.mrb[0].mxu0 %v5913
        %v5915 = vpop.f32.mrb[0].mxu0
        %v5916 = vadd.f32 %v5830, %v5915
        %v5917 = vpop.f32.mrb[0].mxu0
        %5918 = vmatprep.mubr.f32.mxu0 0.0
        %v5919 = vand.u32 %v5651, 4294901760
        %v5920 = vsub.f32 %v5651, %v5919
        %5921 = vmatmul.mubr.f32.gmra.mrb[0].mxu0 %v5920
        %v5922 = vpop.f32.mrb[0].mxu0
        %v5923 = vadd.f32 %v5836, %v5922
        %v5924 = vpop.f32.mrb[0].mxu0
        %5925 = vdwg.mxu0
        %5926 = vmatprep.subr.mxu0 0.0
        %v5927 = vand.u32 %v5635, 4294901760
        %5928 = vmatpush1.msra.mxu0 %v5927
        %5929 = vmatprep.subr.mxu0 0.0
        %v5930 = vand.u32 %v5636, 4294901760
        %5931 = vmatpush1.msra.mxu0 %v5930
        %5932 = vmatprep.subr.mxu0 0.0
        %v5933 = vand.u32 %v5637, 4294901760
        %5934 = vmatpush1.msra.mxu0 %v5933
        %5935 = vmatprep.subr.mxu0 0.0
        %v5936 = vand.u32 %v5638, 4294901760
        %5937 = vmatpush1.msra.mxu0 %v5936
        %5938 = vmatprep.subr.mxu0 0.0
        %5939 = vmatpush1.msra.mxu0 0.0
        %5940 = vmatprep.subr.mxu0 0.0
        %5941 = vmatpush1.msra.mxu0 0.0
        %5942 = vmatprep.subr.mxu0 0.0
        %5943 = vmatpush1.msra.mxu0 0.0
        %5944 = vmatprep.subr.mxu0 0.0
        %5945 = vmatpush1.msra.mxu0 0.0
        %5946 = vmatprep.subr.mxu0 0.0
        %5947 = vmatpush1.msra.mxu0 0.0
        %5948 = vmatprep.subr.mxu0 0.0
        %5949 = vmatpush1.msra.mxu0 0.0
        %5950 = vmatprep.subr.mxu0 0.0
        %5951 = vmatpush1.msra.mxu0 0.0
        %5952 = vmatprep.subr.mxu0 0.0
        %5953 = vmatpush1.msra.mxu0 0.0
        %5954 = vmatprep.subr.mxu0 0.0
        %5955 = vmatpush1.msra.mxu0 0.0
        %5956 = vmatprep.subr.mxu0 0.0
        %5957 = vmatpush1.msra.mxu0 0.0
        %5958 = vmatprep.subr.mxu0 0.0
        %5959 = vmatpush1.msra.mxu0 0.0
        %5960 = vmatprep.subr.mxu0 0.0
        %5961 = vmatpush1.msra.mxu0 0.0
        %5962 = vmatprep.subr.mxu0 0.0
        %5963 = vmatpush1.msra.mxu0 0.0
        %5964 = vmatprep.subr.mxu0 0.0
        %5965 = vmatpush1.msra.mxu0 0.0
        %5966 = vmatprep.subr.mxu0 0.0
        %5967 = vmatpush1.msra.mxu0 0.0
        %5968 = vmatprep.subr.mxu0 0.0
        %5969 = vmatpush1.msra.mxu0 0.0
        %5970 = vmatprep.subr.mxu0 0.0
        %5971 = vmatpush1.msra.mxu0 0.0
        %5972 = vmatprep.subr.mxu0 0.0
        %5973 = vmatpush1.msra.mxu0 0.0
        %5974 = vmatprep.subr.mxu0 0.0
        %5975 = vmatpush1.msra.mxu0 0.0
        %5976 = vmatprep.subr.mxu0 0.0
        %5977 = vmatpush1.msra.mxu0 0.0
        %5978 = vmatprep.subr.mxu0 0.0
        %5979 = vmatpush1.msra.mxu0 0.0
        %5980 = vmatprep.subr.mxu0 0.0
        %5981 = vmatpush1.msra.mxu0 0.0
        %5982 = vmatprep.subr.mxu0 0.0
        %5983 = vmatpush1.msra.mxu0 0.0
        %5984 = vmatprep.subr.mxu0 0.0
        %5985 = vmatpush1.msra.mxu0 0.0
        %5986 = vmatprep.subr.mxu0 0.0
        %5987 = vmatpush1.msra.mxu0 0.0
        %5988 = vmatprep.subr.mxu0 0.0
        %5989 = vmatpush1.msra.mxu0 0.0
        %5990 = vmatprep.subr.mxu0 0.0
        %5991 = vmatpush1.msra.mxu0 0.0
        %5992 = vmatprep.subr.mxu0 0.0
        %5993 = vmatpush1.msra.mxu0 0.0
        %5994 = vmatprep.mubr.f32.mxu0 0.0
        %v5995 = vand.u32 %v5648, 4294901760
        %v5996 = vsub.f32 %v5648, %v5995
        %v5997 = vand.u32 %v5996, 4294901760
        %5998 = vmatmul.mubr.f32.gmra.mrb[0].mxu0 %v5997
        %v5999 = vpop.f32.mrb[0].mxu0
        %v6000 = vadd.f32 %v5916, %v5999
        %v6001 = vpop.f32.mrb[0].mxu0
        %6002 = vmatprep.mubr.f32.mxu0 0.0
        %v6003 = vand.u32 %v5651, 4294901760
        %v6004 = vsub.f32 %v5651, %v6003
        %v6005 = vand.u32 %v6004, 4294901760
        %6006 = vmatmul.mubr.f32.gmra.mrb[0].mxu0 %v6005
        %v6007 = vpop.f32.mrb[0].mxu0
        %v6008 = vadd.f32 %v5923, %v6007
        %v6009 = vpop.f32.mrb[0].mxu0
        %6010 = vdwg.mxu0
        %6011 = vmatprep.subr.mxu0 0.0
        %v6012 = vand.u32 %v5635, 4294901760
        %v6013 = vsub.f32 %v5635, %v6012
        %v6014 = vand.u32 %v6013, 4294901760
        %6015 = vmatpush1.msra.mxu0 %v6014
        %6016 = vmatprep.subr.mxu0 0.0
        %v6017 = vand.u32 %v5636, 4294901760
        %v6018 = vsub.f32 %v5636, %v6017
        %v6019 = vand.u32 %v6018, 4294901760
        %6020 = vmatpush1.msra.mxu0 %v6019
        %6021 = vmatprep.subr.mxu0 0.0
        %v6022 = vand.u32 %v5637, 4294901760
        %v6023 = vsub.f32 %v5637, %v6022
        %v6024 = vand.u32 %v6023, 4294901760
        %6025 = vmatpush1.msra.mxu0 %v6024
        %6026 = vmatprep.subr.mxu0 0.0
        %v6027 = vand.u32 %v5638, 4294901760
        %v6028 = vsub.f32 %v5638, %v6027
        %v6029 = vand.u32 %v6028, 4294901760
        %6030 = vmatpush1.msra.mxu0 %v6029
        %6031 = vmatprep.subr.mxu0 0.0
        %6032 = vmatpush1.msra.mxu0 0.0
        %6033 = vmatprep.subr.mxu0 0.0
        %6034 = vmatpush1.msra.mxu0 0.0
        %6035 = vmatprep.subr.mxu0 0.0
        %6036 = vmatpush1.msra.mxu0 0.0
        %6037 = vmatprep.subr.mxu0 0.0
        %6038 = vmatpush1.msra.mxu0 0.0
        %6039 = vmatprep.subr.mxu0 0.0
        %6040 = vmatpush1.msra.mxu0 0.0
        %6041 = vmatprep.subr.mxu0 0.0
        %6042 = vmatpush1.msra.mxu0 0.0
        %6043 = vmatprep.subr.mxu0 0.0
        %6044 = vmatpush1.msra.mxu0 0.0
        %6045 = vmatprep.subr.mxu0 0.0
        %6046 = vmatpush1.msra.mxu0 0.0
        %6047 = vmatprep.subr.mxu0 0.0
        %6048 = vmatpush1.msra.mxu0 0.0
        %6049 = vmatprep.subr.mxu0 0.0
        %6050 = vmatpush1.msra.mxu0 0.0
        %6051 = vmatprep.subr.mxu0 0.0
        %6052 = vmatpush1.msra.mxu0 0.0
        %6053 = vmatprep.subr.mxu0 0.0
        %6054 = vmatpush1.msra.mxu0 0.0
        %6055 = vmatprep.subr.mxu0 0.0
        %6056 = vmatpush1.msra.mxu0 0.0
        %6057 = vmatprep.subr.mxu0 0.0
        %6058 = vmatpush1.msra.mxu0 0.0
        %6059 = vmatprep.subr.mxu0 0.0
        %6060 = vmatpush1.msra.mxu0 0.0
        %6061 = vmatprep.subr.mxu0 0.0
        %6062 = vmatpush1.msra.mxu0 0.0
        %6063 = vmatprep.subr.mxu0 0.0
        %6064 = vmatpush1.msra.mxu0 0.0
        %6065 = vmatprep.subr.mxu0 0.0
        %6066 = vmatpush1.msra.mxu0 0.0
        %6067 = vmatprep.subr.mxu0 0.0
        %6068 = vmatpush1.msra.mxu0 0.0
        %6069 = vmatprep.subr.mxu0 0.0
        %6070 = vmatpush1.msra.mxu0 0.0
        %6071 = vmatprep.subr.mxu0 0.0
        %6072 = vmatpush1.msra.mxu0 0.0
        %6073 = vmatprep.subr.mxu0 0.0
        %6074 = vmatpush1.msra.mxu0 0.0
        %6075 = vmatprep.subr.mxu0 0.0
        %6076 = vmatpush1.msra.mxu0 0.0
        %6077 = vmatprep.subr.mxu0 0.0
        %6078 = vmatpush1.msra.mxu0 0.0
        %6079 = vmatprep.subr.mxu0 0.0
        %6080 = vmatpush1.msra.mxu0 0.0
        %6081 = vmatprep.subr.mxu0 0.0
        %6082 = vmatpush1.msra.mxu0 0.0
        %6083 = vmatprep.subr.mxu0 0.0
        %6084 = vmatpush1.msra.mxu0 0.0
        %6085 = vmatprep.subr.mxu0 0.0
        %6086 = vmatpush1.msra.mxu0 0.0
        %6087 = vmatprep.mubr.f32.mxu0 0.0
        %v6088 = vand.u32 %v5648, 4294901760
        %6089 = vmatmul.mubr.f32.gmra.mrb[0].mxu0 %v6088
        %v6090 = vpop.f32.mrb[0].mxu0
        %v6091 = vadd.f32 %v6000, %v6090
        %v6092 = vpop.f32.mrb[0].mxu0
        %6093 = vmatprep.mubr.f32.mxu0 0.0
        %v6094 = vand.u32 %v5651, 4294901760
        %6095 = vmatmul.mubr.f32.gmra.mrb[0].mxu0 %v6094
        %v6096 = vpop.f32.mrb[0].mxu0
        %v6097 = vadd.f32 %v6008, %v6096
        %v6098 = vpop.f32.mrb[0].mxu0
        %6099 = vdwg.mxu0
        %6100 = vmatprep.subr.mxu0 0.0
        %v6101 = vand.u32 %v5635, 4294901760
        %6102 = vmatpush1.msra.mxu0 %v6101
        %6103 = vmatprep.subr.mxu0 0.0
        %v6104 = vand.u32 %v5636, 4294901760
        %6105 = vmatpush1.msra.mxu0 %v6104
        %6106 = vmatprep.subr.mxu0 0.0
        %v6107 = vand.u32 %v5637, 4294901760
        %6108 = vmatpush1.msra.mxu0 %v6107
        %6109 = vmatprep.subr.mxu0 0.0
        %v6110 = vand.u32 %v5638, 4294901760
        %6111 = vmatpush1.msra.mxu0 %v6110
        %6112 = vmatprep.subr.mxu0 0.0
        %6113 = vmatpush1.msra.mxu0 0.0
        %6114 = vmatprep.subr.mxu0 0.0
        %6115 = vmatpush1.msra.mxu0 0.0
        %6116 = vmatprep.subr.mxu0 0.0
        %6117 = vmatpush1.msra.mxu0 0.0
        %6118 = vmatprep.subr.mxu0 0.0
        %6119 = vmatpush1.msra.mxu0 0.0
        %6120 = vmatprep.subr.mxu0 0.0
        %6121 = vmatpush1.msra.mxu0 0.0
        %6122 = vmatprep.subr.mxu0 0.0
        %6123 = vmatpush1.msra.mxu0 0.0
        %6124 = vmatprep.subr.mxu0 0.0
        %6125 = vmatpush1.msra.mxu0 0.0
        %6126 = vmatprep.subr.mxu0 0.0
        %6127 = vmatpush1.msra.mxu0 0.0
        %6128 = vmatprep.subr.mxu0 0.0
        %6129 = vmatpush1.msra.mxu0 0.0
        %6130 = vmatprep.subr.mxu0 0.0
        %6131 = vmatpush1.msra.mxu0 0.0
        %6132 = vmatprep.subr.mxu0 0.0
        %6133 = vmatpush1.msra.mxu0 0.0
        %6134 = vmatprep.subr.mxu0 0.0
        %6135 = vmatpush1.msra.mxu0 0.0
        %6136 = vmatprep.subr.mxu0 0.0
        %6137 = vmatpush1.msra.mxu0 0.0
        %6138 = vmatprep.subr.mxu0 0.0
        %6139 = vmatpush1.msra.mxu0 0.0
        %6140 = vmatprep.subr.mxu0 0.0
        %6141 = vmatpush1.msra.mxu0 0.0
        %6142 = vmatprep.subr.mxu0 0.0
        %6143 = vmatpush1.msra.mxu0 0.0
        %6144 = vmatprep.subr.mxu0 0.0
        %6145 = vmatpush1.msra.mxu0 0.0
        %6146 = vmatprep.subr.mxu0 0.0
        %6147 = vmatpush1.msra.mxu0 0.0
        %6148 = vmatprep.subr.mxu0 0.0
        %6149 = vmatpush1.msra.mxu0 0.0
        %6150 = vmatprep.subr.mxu0 0.0
        %6151 = vmatpush1.msra.mxu0 0.0
        %6152 = vmatprep.subr.mxu0 0.0
        %6153 = vmatpush1.msra.mxu0 0.0
        %6154 = vmatprep.subr.mxu0 0.0
        %6155 = vmatpush1.msra.mxu0 0.0
        %6156 = vmatprep.subr.mxu0 0.0
        %6157 = vmatpush1.msra.mxu0 0.0
        %6158 = vmatprep.subr.mxu0 0.0
        %6159 = vmatpush1.msra.mxu0 0.0
        %6160 = vmatprep.subr.mxu0 0.0
        %6161 = vmatpush1.msra.mxu0 0.0
        %6162 = vmatprep.subr.mxu0 0.0
        %6163 = vmatpush1.msra.mxu0 0.0
        %6164 = vmatprep.subr.mxu0 0.0
        %6165 = vmatpush1.msra.mxu0 0.0
        %6166 = vmatprep.subr.mxu0 0.0
        %6167 = vmatpush1.msra.mxu0 0.0
        %6168 = vmatprep.mubr.f32.mxu0 0.0
        %v6169 = vand.u32 %v5648, 4294901760
        %6170 = vmatmul.mubr.f32.gmra.mrb[0].mxu0 %v6169
        %v6171 = vpop.f32.mrb[0].mxu0
        %v6172 = vadd.f32 %v6091, %v6171
        %v6173 = vpop.f32.mrb[0].mxu0
        %6174 = vmatprep.mubr.f32.mxu0 0.0
        %v6175 = vand.u32 %v5651, 4294901760
        %6176 = vmatmul.mubr.f32.gmra.mrb[0].mxu0 %v6175
        %v6177 = vpop.f32.mrb[0].mxu0
        %v6178 = vadd.f32 %v6097, %v6177
        %v6179 = vpop.f32.mrb[0].mxu0
        %6180 = vdwg.mxu0
        %v6181 = vmul.f32 %v6172, %v1273
        %v6182 = vmul.f32 %v6178, %v1278
        // Predicated region
        $region73: #{tpu_custom_call.1} parent=67 // pred_check
          %p6183 = pneg %p548
        $region74: #{tpu_custom_call.1} parent=67 // pred_check_branch
          %6185 = sbr.rel (%p6183) target = $region76
        $region75: #{tpu_custom_call.1} parent=67 // pred_region
          %v6186 = vld [vmem:[%s501] sm:$0xff]
          %v6187 = vld [vmem:[%s501 + $0x8] sm:$0xff]
          %v6188 = vmul.f32 %v6186, %v1273
          %v6189 = vmul.f32 %v6187, %v1278
          %v6190 = vadd.f32 %v6188, %v6181
          %v6191 = vadd.f32 %v6189, %v6182
          %6192 = vst [vmem:[%s501] sm:$0xff] %v6190
          %6193 = vst [vmem:[%s501 + $0x8] sm:$0xff] %v6191
        $region76: #{tpu_custom_call.1} parent=67 // pred_fallthru
          _
        %p6194 = scmp.ne.s32.totalorder %s547, 0
        // Predicated region
        $region77: #{tpu_custom_call.1} parent=67 // pred_check
          %p6195 = pneg %p6194
        $region78: #{tpu_custom_call.1} parent=67 // pred_check_branch
          %6197 = sbr.rel (%p6195) target = $region80
        $region79: #{tpu_custom_call.1} parent=67 // pred_region
          %v6198 = vld [vmem:[%s494] sm:$0xff]
          %v6199 = vld [vmem:[%s494 + $0x8] sm:$0xff]
          %v6200 = vmul.f32 %v6198, %v1273
          %v6201 = vmul.f32 %v6199, %v1278
          %v6202 = vadd.f32 %v6200, %v6181
          %v6203 = vadd.f32 %v6201, %v6182
          %6204 = vst [vmem:[%s494] sm:$0xff] %v6202
          %6205 = vst [vmem:[%s494 + $0x8] sm:$0xff] %v6203
        $region80: #{tpu_custom_call.1} parent=67 // pred_fallthru
          _
        %s6206 = sand.u32 %s323, 1
        %s6207 = scalar_lea.sflag [#allocation3], %s6206
        %s6208 = sand.u32 %s323, 1
        %s6209 = smul.addr %s6208, 16
        %s6210 = scalar_lea.vmem [#allocation2], %s6209
        %s6211 = sand.u32 %s349, 1
        %s6212 = scalar_lea.sflag [#allocation5], %s6211
        %s6213 = sand.u32 %s349, 1
        %s6214 = smul.addr %s6213, 16
        %s6215 = scalar_lea.vmem [#allocation4], %s6214
        // Predicated region
        $region81: #{tpu_custom_call.1} parent=67 // pred_check
          %p6216 = pneg %p333
        $region82: #{tpu_custom_call.1} parent=67 // pred_check_branch
          %6218 = sbr.rel (%p6216) target = $region84
        $region83: #{tpu_custom_call.1} parent=67 // pred_region
          %s6220 = ssub.s32 256, 256
          %6221 = vsyncadd %s6207, %s6220
          %s6222 = smul.addr %s35, 2
          %s6223 = smul.addr %s6222, 128
          %s6224 = scalar_lea.hbm %s12, %s6223
          %s6225 = sshll.u32 %s6210, 4
          %s6226 = int_to_ptr.vmem [resolvable:$true] %s6225
          %6231 = dma.vmem_to_hbm [thread:$0]  %s6226, 256, %s6224, %s6207, 128, 128, 8
        $region84: #{tpu_custom_call.1} parent=67 // pred_fallthru
          _
        // Predicated region
        $region85: #{tpu_custom_call.1} parent=67 // pred_check
          %p6232 = pneg %p359
        $region86: #{tpu_custom_call.1} parent=67 // pred_check_branch
          %6234 = sbr.rel (%p6232) target = $region88
        $region87: #{tpu_custom_call.1} parent=67 // pred_region
          %s6236 = ssub.s32 256, 256
          %6237 = vsyncadd %s6212, %s6236
          %s6238 = smul.addr %s35, 2
          %s6239 = smul.addr %s6238, 128
          %s6240 = scalar_lea.hbm %s13, %s6239
          %s6241 = sshll.u32 %s6215, 4
          %s6242 = int_to_ptr.vmem [resolvable:$true] %s6241
          %6247 = dma.vmem_to_hbm [thread:$0]  %s6242, 256, %s6240, %s6212, 128, 128, 8
        $region88: #{tpu_custom_call.1} parent=67 // pred_fallthru
          _
      $region68: #{tpu_custom_call.1} parent=5 // pred_fallthru
        _
      %p6248 = scmp.le.s32.totalorder 2, %s26
      // Predicated region
      $region89: #{tpu_custom_call.1} parent=5 // pred_check
        %p6249 = pneg %p6248
      $region90: #{tpu_custom_call.1} parent=5 // pred_check_branch
        %6251 = sbr.rel (%p6249) target = $region92
      $region91: #{tpu_custom_call.1} parent=5 // pred_region
        %s6252 = ssub.s32 %s26, 2
        // Predicated region
        $region93: #{tpu_custom_call.1} parent=91 // pred_check
          %p6253 = pneg %p339
        $region94: #{tpu_custom_call.1} parent=91 // pred_check_branch
          %6255 = sbr.rel (%p6253) target = $region96
        $region95: #{tpu_custom_call.1} parent=91 // pred_region
          %s6256 = sand.u32 %s324, 1
          %s6257 = scalar_lea.sflag [#allocation3], %s6256
          %s6258 = sand.u32 %s324, 1
          %s6259 = smul.addr %s6258, 16
          %s6260 = scalar_lea.vmem [#allocation2], %s6259
          %6261 = dma.done %s6257, 256
        $region96: #{tpu_custom_call.1} parent=91 // pred_fallthru
          _
        // Predicated region
        $region97: #{tpu_custom_call.1} parent=91 // pred_check
          %p6262 = pneg %p365
        $region98: #{tpu_custom_call.1} parent=91 // pred_check_branch
          %6264 = sbr.rel (%p6262) target = $region100
        $region99: #{tpu_custom_call.1} parent=91 // pred_region
          %s6265 = sand.u32 %s350, 1
          %s6266 = scalar_lea.sflag [#allocation5], %s6265
          %s6267 = sand.u32 %s350, 1
          %s6268 = smul.addr %s6267, 16
          %s6269 = scalar_lea.vmem [#allocation4], %s6268
          %6270 = dma.done %s6266, 256
        $region100: #{tpu_custom_call.1} parent=91 // pred_fallthru
          _
      $region92: #{tpu_custom_call.1} parent=5 // pred_fallthru
        _
    $region6: #{tpu_custom_call.1} parent=1 // loop_footer
      %s30 = sadd.s32 1, %s26
    $region7: #{tpu_custom_call.1} parent=1 // loop_footer_branch
      %25 = sbr.rel target = $region3
    $region8: #{tpu_custom_call.1} parent=1 // loop_exit
      _
    %6271 = vsyncpa [#allocation3], 1
    %s6272 = scalar_lea.sflag [#allocation3], 1
    %6273 = vsyncpa %s6272, 1
    %6274 = vsyncpa [#allocation5], 1
    %s6275 = scalar_lea.sflag [#allocation5], 1
    %6276 = vsyncpa %s6275, 1

</llo_original>
